<compile_context>
chip_gen: v7x
topology: tpu7x:2x2x1
jax: 0.10.0
libtpu: 0.0.40
codegen_flags: <defaults>
</compile_context>

<pallas_src>
import math
import functools

import jax
import jax.numpy as jnp
from jax.experimental import pallas as pl
from jax.experimental.pallas import tpu as pltpu


# ----------------------------------------------------------------------------
# Small helpers
# ----------------------------------------------------------------------------
def _round_up(x, m):
    return (x + m - 1) // m * m


def _pick_tile(dim, max_tile, quantum):
    """Largest tile <= max_tile that divides `dim` and is a multiple of
    `quantum`; falls back to the full dim (always a legal block size)."""
    if dim <= max_tile:
        return dim
    start = max_tile - (max_tile % quantum)
    for d in range(start, quantum - 1, -quantum):
        if dim % d == 0:
            return d
    return dim


@functools.lru_cache(maxsize=None)
def _vmem_limit_bytes():
    """Per-generation VMEM budget: 3/4 of physical capacity, capped at 96 MiB
    (v5e/v6e have 128 MiB, v7x 64 MiB). Conservative fallback if the query
    is unavailable."""
    cap = 64 * 1024 * 1024
    try:
        info = pltpu.get_tpu_info()
        cap = int(getattr(info, "vmem_capacity_bytes", cap))
    except Exception:
        pass
    return int(min(cap * 3 // 4, 96 * 1024 * 1024))


# ----------------------------------------------------------------------------
# Matmul with fused bias (+ optional LayerNorm prologue, residual add, GELU).
# 1-D grid over M; weight / bias / LN params have constant block indices so
# they stay resident in VMEM across the whole grid.
# ----------------------------------------------------------------------------
def _mm_kernel(*refs, activation, fuse_ln, fuse_res, ln_eps):
    it = iter(refs)
    a_ref = next(it)
    w_ref = next(it)
    bias_ref = next(it)
    if fuse_ln:
        g_ref = next(it)
        beta_ref = next(it)
    if fuse_res:
        res_ref = next(it)
    o_ref = next(it)

    a = a_ref[...]
    if fuse_ln:
        # LayerNorm prologue in f32 (full K resident per block).
        x = a.astype(jnp.float32)
        mu = jnp.mean(x, axis=-1, keepdims=True)
        xc = x - mu
        var = jnp.mean(xc * xc, axis=-1, keepdims=True)
        a = xc * jax.lax.rsqrt(var + ln_eps) * g_ref[...] + beta_ref[...]

    # bf16 MXU operands, f32 accumulation; no scratch accumulator (single K step).
    r = jnp.dot(a.astype(w_ref.dtype), w_ref[...],
                preferred_element_type=jnp.float32)
    r = r + bias_ref[...]
    if fuse_res:
        r = r + res_ref[...]
    if activation == "gelu":
        # TODO(synk): PyTorch nn.GELU uses exact erf; tanh approximation
        # differs at the ~1e-3 level. Computed in the (bf16) output dtype so
        # the polynomial stays hidden under the MXU on v6e/v7x.
        r = r.astype(o_ref.dtype)
        r = 0.5 * r * (1.0 + jnp.tanh(0.7978845608028654 *
                                      (r + 0.044715 * r * r * r)))
    o_ref[...] = r.astype(o_ref.dtype)


def matmul_bias(a, w, bias=None, activation=None, ln=None, residual=None,
                out_dtype=jnp.float32, tm_cap=1024):
    """a:[M,K] @ w:[K,N] + bias[N] (+ LayerNorm(a) prologue, + residual, + GELU)."""
    M, K = a.shape
    K2, N = w.shape
    assert K == K2

    # Pad rows to a multiple of 8 so every block hits the unmasked store path.
    M_pad = _round_up(M, 8)
    if M_pad != M:
        a = jnp.pad(a, ((0, M_pad - M), (0, 0)))
        if residual is not None:
            residual = jnp.pad(residual, ((0, M_pad - M), (0, 0)))

    vmem_limit = _vmem_limit_bytes()
    a_b = jnp.dtype(a.dtype).itemsize
    o_b = jnp.dtype(out_dtype).itemsize
    w_b = jnp.dtype(w.dtype).itemsize
    fixed = 2 * K * N * w_b + 8 * (K + N) * 4          # weight bufs + bias/LN params
    per_row = 2 * (K * a_b + N * o_b)                  # double-buffered A / out tiles
    if residual is not None:
        per_row += 2 * N * jnp.dtype(residual.dtype).itemsize
    budget = max(vmem_limit // 2 - fixed, 8 * per_row)
    tm_fit = max(8, (budget // per_row) // 8 * 8)
    tm_max = min(tm_cap, tm_fit)
    if M_pad >= 16:   # keep >= 2 row blocks so both v7x TensorCores get work
        tm_max = min(tm_max, max(8, (M_pad // 2) // 8 * 8))
    tm = _pick_tile(M_pad, tm_max, 8)
    mt = M_pad // tm

    fuse_ln = ln is not None
    fuse_res = residual is not None
    if bias is None:
        bias = jnp.zeros((N,), jnp.float32)
    bias2 = bias.reshape(1, N).astype(jnp.float32)

    in_specs = [pl.BlockSpec((tm, K), lambda i: (i, 0)),
                pl.BlockSpec((K, N), lambda i: (0, 0)),      # resident weight
                pl.BlockSpec((1, N), lambda i: (0, 0))]
    inputs = [a, w, bias2]
    if fuse_ln:
        in_specs += [pl.BlockSpec((1, K), lambda i: (0, 0)),
                     pl.BlockSpec((1, K), lambda i: (0, 0))]
        inputs += [ln["gamma"].reshape(1, K).astype(jnp.float32),
                   ln["beta"].reshape(1, K).astype(jnp.float32)]
    if fuse_res:
        in_specs += [pl.BlockSpec((tm, N), lambda i: (i, 0))]
        inputs += [residual]

    kern = functools.partial(_mm_kernel, activation=activation,
                             fuse_ln=fuse_ln, fuse_res=fuse_res,
                             ln_eps=ln["eps"] if fuse_ln else 0.0)
    out = pl.pallas_call(
        kern,
        out_shape=jax.ShapeDtypeStruct((M_pad, N), out_dtype),
        grid_spec=pltpu.PrefetchScalarGridSpec(
            num_scalar_prefetch=0,
            grid=(mt,),
            in_specs=in_specs,
            out_specs=pl.BlockSpec((tm, N), lambda i: (i, 0)),
        ),
        compiler_params=pltpu.CompilerParams(
            dimension_semantics=("parallel",),
            vmem_limit_bytes=vmem_limit),
    )(*inputs)
    if M_pad != M:
        out = out[:M]
    return out


# ----------------------------------------------------------------------------
# Attention: all heads of a batch row per grid point, sliced straight out of
# the [B, S, 3D] QKV buffer; output written in [B, S, D] layout, 128-lane
# head-pair chunks at a time.
# ----------------------------------------------------------------------------
def _attn_kernel(q_ref, k_ref, v_ref, o_ref, *, scale, head_dim, hpg, wg,
                 s_valid, s_total):
    q = q_ref[0]   # (S, hpg*head_dim), bf16
    k = k_ref[0]
    v = v_ref[0]
    if s_valid < s_total:
        kidx = jax.lax.broadcasted_iota(jnp.int32, (s_total, s_total), 1)
        key_mask = kidx < s_valid

    for g in range(hpg // wg):
        outs = []
        for hh in range(wg):
            h = g * wg + hh
            sl = slice(h * head_dim, (h + 1) * head_dim)
            qp, kp, vp = q[:, sl], k[:, sl], v[:, sl]
            s = jax.lax.dot_general(qp, kp, (((1,), (1,)), ((), ())),
                                    preferred_element_type=jnp.float32) * scale
            if s_valid < s_total:
                s = jnp.where(key_mask, s, -1e30)        # mask padded keys
            s = s - jnp.max(s, axis=-1, keepdims=True)
            p = jnp.exp(s)                                # f32 softmax stats
            p = p * pl.reciprocal(jnp.sum(p, axis=-1, keepdims=True),
                                  approx=True)
            outs.append(jnp.dot(p.astype(vp.dtype), vp,
                                preferred_element_type=jnp.float32))
        og = outs[0] if wg == 1 else jnp.concatenate(outs, axis=-1)
        lo = g * wg * head_dim
        o_ref[0, :, lo:lo + wg * head_dim] = og.astype(o_ref.dtype)


def attention_fused(qkv, *, batch, seq, heads, head_dim, s_valid,
                    out_dtype=jnp.bfloat16):
    """qkv:[B*S, 3D] (bf16) -> attention output [B*S, D] in token-major layout."""
    D = heads * head_dim
    # write-group: heads per 128-lane output chunk (lane-dense stores)
    if head_dim <= 128 and 128 % head_dim == 0 and heads % (128 // head_dim) == 0:
        wg = 128 // head_dim
    else:
        wg = 1
    # heads per grid point: largest divisor of `heads` that is a multiple of
    # wg and keeps the block <= 512 lanes (wide strided DMA, few grid steps).
    hpg = wg
    for d in range(heads, 0, -1):
        if heads % d == 0 and d % wg == 0 and d * head_dim <= 512:
            hpg = d
            break
    hw = hpg * head_dim
    n_hblk = heads // hpg
    koff = n_hblk            # D // hw
    voff = 2 * n_hblk
    scale = 1.0 / math.sqrt(head_dim)

    qkv3 = qkv.reshape(batch, seq, 3 * D)
    blk = (1, seq, hw)
    q_spec = pl.BlockSpec(blk, lambda b, h: (b, 0, h))
    k_spec = pl.BlockSpec(blk, lambda b, h: (b, 0, koff + h))
    v_spec = pl.BlockSpec(blk, lambda b, h: (b, 0, voff + h))
    o_spec = pl.BlockSpec(blk, lambda b, h: (b, 0, h))

    out = pl.pallas_call(
        functools.partial(_attn_kernel, scale=scale, head_dim=head_dim,
                          hpg=hpg, wg=wg, s_valid=s_valid, s_total=seq),
        out_shape=jax.ShapeDtypeStruct((batch, seq, D), out_dtype),
        grid=(batch, n_hblk),
        in_specs=[q_spec, k_spec, v_spec],
        out_specs=o_spec,
        compiler_params=pltpu.CompilerParams(
            dimension_semantics=("parallel", "parallel"),
            vmem_limit_bytes=_vmem_limit_bytes()),
    )(qkv3, qkv3, qkv3)
    return out.reshape(batch * seq, D)


# ----------------------------------------------------------------------------
# Standalone row-tiled LayerNorm (used only for the neck_feat='before' branch)
# ----------------------------------------------------------------------------
def _ln_kernel(x_ref, g_ref, b_ref, o_ref, *, eps):
    x = x_ref[...].astype(jnp.float32)
    mu = jnp.mean(x, axis=-1, keepdims=True)
    xc = x - mu
    var = jnp.mean(xc * xc, axis=-1, keepdims=True)
    o_ref[...] = xc * jax.lax.rsqrt(var + eps) * g_ref[...] + b_ref[...]


def layernorm(x, gamma, beta, eps=1e-6, tr_max=512):
    R, D = x.shape
    R_pad = _round_up(R, 8)
    if R_pad != R:
        x = jnp.pad(x, ((0, R_pad - R), (0, 0)))
    tr = _pick_tile(R_pad, tr_max, 8)
    out = pl.pallas_call(
        functools.partial(_ln_kernel, eps=eps),
        out_shape=jax.ShapeDtypeStruct((R_pad, D), jnp.float32),
        grid=(R_pad // tr,),
        in_specs=[pl.BlockSpec((tr, D), lambda i: (i, 0)),
                  pl.BlockSpec((1, D), lambda i: (0, 0)),
                  pl.BlockSpec((1, D), lambda i: (0, 0))],
        out_specs=pl.BlockSpec((tr, D), lambda i: (i, 0)),
        compiler_params=pltpu.CompilerParams(
            dimension_semantics=("parallel",),
            vmem_limit_bytes=_vmem_limit_bytes()),
    )(x.astype(jnp.float32),
      gamma.reshape(1, D).astype(jnp.float32),
      beta.reshape(1, D).astype(jnp.float32))
    return out[:R] if R_pad != R else out


# ----------------------------------------------------------------------------
# Fused final LayerNorm + per-cls-token eval-mode BatchNorm1d (one kernel)
# ----------------------------------------------------------------------------
def _ln_bn_kernel(x_ref, lg_ref, lb_ref, g_ref, b_ref, m_ref, v_ref, o_ref, *,
                  ln_eps, bn_eps):
    x = x_ref[0].astype(jnp.float32)                       # (B, D)
    mu = jnp.mean(x, axis=-1, keepdims=True)
    xc = x - mu
    var = jnp.mean(xc * xc, axis=-1, keepdims=True)
    y = xc * jax.lax.rsqrt(var + ln_eps) * lg_ref[...] + lb_ref[...]
    inv = jax.lax.rsqrt(v_ref[0] + bn_eps)                 # (1, D)
    o_ref[0] = (y - m_ref[0]) * inv * g_ref[0] + b_ref[0]


def fused_ln_bn(cls_tokens_cbd, ln_g, ln_b, bn, ln_eps=1e-6, bn_eps=1e-5):
    """cls_tokens_cbd: [cls, B, D] pre-final-LN; bn: stacked [cls, D] params."""
    C, B, D = cls_tokens_cbd.shape
    r3 = lambda a: a.reshape(C, 1, D).astype(jnp.float32)
    x_spec = pl.BlockSpec((1, B, D), lambda i: (i, 0, 0))
    ln_spec = pl.BlockSpec((1, D), lambda i: (0, 0))
    bn_spec = pl.BlockSpec((1, 1, D), lambda i: (i, 0, 0))
    return pl.pallas_call(
        functools.partial(_ln_bn_kernel, ln_eps=ln_eps, bn_eps=bn_eps),
        out_shape=jax.ShapeDtypeStruct((C, B, D), jnp.float32),
        grid=(C,),
        in_specs=[x_spec, ln_spec, ln_spec, bn_spec, bn_spec, bn_spec, bn_spec],
        out_specs=x_spec,
        compiler_params=pltpu.CompilerParams(
            dimension_semantics=("parallel",)),
    )(cls_tokens_cbd.astype(jnp.float32),
      ln_g.reshape(1, D).astype(jnp.float32),
      ln_b.reshape(1, D).astype(jnp.float32),
      r3(bn["gamma"]), r3(bn["beta"]), r3(bn["mean"]), r3(bn["var"]))


# ----------------------------------------------------------------------------
# Parameter init (deterministic, mirrors shapes implied by __init__)
# ----------------------------------------------------------------------------
def init_params(key, *, img, patch, in_chans, dim, depth, heads, mlp_ratio,
                cls_token_num, num_classes):
    n_patches = (img // patch) ** 2
    hidden = int(dim * mlp_ratio)
    keys = iter(jax.random.split(key, 16 + 8 * depth))
    bf = jnp.bfloat16

    def nrm(shape, std=0.02, dtype=jnp.float32):
        return (jax.random.normal(next(keys), shape, jnp.float32) * std).astype(dtype)

    params = dict(
        # patch embedding conv (kernel=stride=patch) as a matmul over patches
        patch_w=nrm((in_chans * patch * patch, dim), dtype=bf),
        patch_b=jnp.zeros((dim,), jnp.float32),
        cls=nrm((cls_token_num, dim)),
        pos=nrm((cls_token_num + n_patches, dim)),
        ln_f_g=jnp.ones((dim,), jnp.float32),
        ln_f_b=jnp.zeros((dim,), jnp.float32),
        blocks=[],
        # bottleneck BatchNorm1d params stacked over cls tokens: [cls, D]
        bottlenecks=dict(
            gamma=jnp.ones((cls_token_num, dim), jnp.float32),
            beta=jnp.zeros((cls_token_num, dim), jnp.float32),
            mean=jnp.zeros((cls_token_num, dim), jnp.float32),
            var=jnp.ones((cls_token_num, dim), jnp.float32)),
        # classifiers: Linear(in_planes, num_classes, bias=False), std=0.001
        # (only used by the training branch, kept for parity)
        classifiers=[nrm((dim, num_classes), std=0.001)
                     for _ in range(cls_token_num)],
    )
    for _ in range(depth):
        params["blocks"].append(dict(
            ln1_g=jnp.ones((dim,), jnp.float32),
            ln1_b=jnp.zeros((dim,), jnp.float32),
            qkv_w=nrm((dim, 3 * dim), dtype=bf),
            qkv_b=jnp.zeros((3 * dim,), jnp.float32),
            proj_w=nrm((dim, dim), dtype=bf),
            proj_b=jnp.zeros((dim,), jnp.float32),
            ln2_g=jnp.ones((dim,), jnp.float32),
            ln2_b=jnp.zeros((dim,), jnp.float32),
            fc1_w=nrm((dim, hidden), dtype=bf),
            fc1_b=jnp.zeros((hidden,), jnp.float32),
            fc2_w=nrm((hidden, dim), dtype=bf),
            fc2_b=jnp.zeros((dim,), jnp.float32),
        ))
    return params


# ----------------------------------------------------------------------------
# Forward pass (glue in JAX, hot path in Pallas kernels above)
# ----------------------------------------------------------------------------
def vit_backbone(params, x, *, patch, heads, cls_token_num):
    """TransReID-style ViT base: returns pre-final-LN cls tokens [B, cls, D]."""
    B, C, H, W = x.shape
    hp, wp = H // patch, W // patch
    n_patches = hp * wp
    D = params["patch_w"].shape[1]
    hd = D // heads

    # patch extraction (NCHW, (c, ph, pw) ordering matches Conv2d weight flatten)
    patches = x.reshape(B, C, hp, patch, wp, patch)
    patches = patches.transpose(0, 2, 4, 1, 3, 5).reshape(
        B * n_patches, C * patch * patch)

    tok = matmul_bias(patches.astype(jnp.bfloat16), params["patch_w"],
                      params["patch_b"], out_dtype=jnp.float32)
    tok = tok.reshape(B, n_patches, D)
    cls = jnp.broadcast_to(params["cls"][None], (B, cls_token_num, D))
    h = jnp.concatenate([cls, tok], axis=1) + params["pos"][None]  # [B, S, D]

    # pad the token axis once so every downstream block is 8-row aligned
    S = cls_token_num + n_patches
    S_pad = _round_up(S, 8)
    if S_pad != S:
        h = jnp.pad(h, ((0, 0), (0, S_pad - S), (0, 0)))
    M = B * S_pad
    h = h.reshape(M, D)                                    # f32 residual stream

    for blk in params["blocks"]:
        # --- MHSA (LN fused into QKV matmul; residual fused into proj) ---
        qkv = matmul_bias(h, blk["qkv_w"], blk["qkv_b"],
                          ln=dict(gamma=blk["ln1_g"], beta=blk["ln1_b"], eps=1e-6),
                          out_dtype=jnp.bfloat16)
        o = attention_fused(qkv, batch=B, seq=S_pad, heads=heads, head_dim=hd,
                            s_valid=S)                     # [M, D] bf16
        h = matmul_bias(o, blk["proj_w"], blk["proj_b"], residual=h,
                        out_dtype=jnp.float32)
        # --- MLP (LN fused into fc1, GELU epilogue, residual fused into fc2) ---
        m = matmul_bias(h, blk["fc1_w"], blk["fc1_b"], activation="gelu",
                        ln=dict(gamma=blk["ln2_g"], beta=blk["ln2_b"], eps=1e-6),
                        out_dtype=jnp.bfloat16)
        h = matmul_bias(m, blk["fc2_w"], blk["fc2_b"], residual=h,
                        out_dtype=jnp.float32)

    # final LayerNorm is applied downstream (fused with the BN bottlenecks);
    # LN is per-row so selecting the cls tokens first is equivalent.
    return h.reshape(B, S_pad, D)[:, :cls_token_num]


def build_transformer_forward(params, x, *, patch, heads, cls_token_num,
                              neck_feat="after", feat_mean=False):
    """Eval-mode (self.training == False) forward of build_transformer."""
    # TODO(synk): training branch (batch-stat BN + classifier cls_scores /
    # PartSoftmax / ID hard-mining weight export) not implemented here.
    cls_pre = vit_backbone(params, x, patch=patch, heads=heads,
                           cls_token_num=cls_token_num)    # [B, cls, D]
    B, C, D = cls_pre.shape
    if neck_feat == "after":
        feats = fused_ln_bn(cls_pre.transpose(1, 0, 2),
                            params["ln_f_g"], params["ln_f_b"],
                            params["bottlenecks"])          # [cls, B, D]
        feats = feats.transpose(1, 0, 2)                     # [B, cls, D]
        if feat_mean:
            return jnp.mean(feats, axis=1)
        return feats.reshape(B, C * D)
    # 'before' path: plain final LayerNorm on the cls tokens
    gf = layernorm(cls_pre.reshape(B * C, D),
                   params["ln_f_g"], params["ln_f_b"]).reshape(B, C, D)
    if feat_mean:
        return jnp.mean(gf, axis=1)
    return gf.reshape(B, C * D)


# ----------------------------------------------------------------------------
if __name__ == "__main__":
    B, C, IMG = 2, 3, 32
    PATCH = 16                 # -> 2x2 = 4 patches
    DIM = 384                  # deit_small_patch16_224_TransReID -> in_planes=384
    DEPTH = 2
    HEADS = 6                  # head_dim = 64
    CLS_TOKENS = 2             # cfg.MODEL.CLS_TOKEN_NUM
    NUM_CLASSES = 16

    key = jax.random.PRNGKey(0)
    pkey, xkey = jax.random.split(key)
    params = init_params(pkey, img=IMG, patch=PATCH, in_chans=C, dim=DIM,
                         depth=DEPTH, heads=HEADS, mlp_ratio=4.0,
                         cls_token_num=CLS_TOKENS, num_classes=NUM_CLASSES)
    x = jax.random.normal(xkey, (B, C, IMG, IMG), jnp.float32)

    fwd = jax.jit(functools.partial(build_transformer_forward,
                                    patch=PATCH, heads=HEADS,
                                    cls_token_num=CLS_TOKENS,
                                    neck_feat="after", feat_mean=False))
    out = jax.block_until_ready(fwd(params, x))
    assert out.shape == (B, CLS_TOKENS * DIM), out.shape
    assert bool(jnp.all(jnp.isfinite(out)))
    print("KERNEL_OK")
</pallas_src>

<mosaic_0001>
module attributes {stable_mosaic.version = 11 : i64} {
  func.func @_mm_kernel(%arg0: i32, %arg1: memref<8x768xbf16, #tpu.memory_space<vmem>>, %arg2: memref<768x384xbf16, #tpu.memory_space<vmem>>, %arg3: memref<1x384xf32, #tpu.memory_space<vmem>>, %arg4: memref<8x384xf32, #tpu.memory_space<vmem>>) attributes {dimension_semantics = [#tpu.dimension_semantics<parallel>], iteration_bounds = array<i64: 1>, scalar_prefetch = 0 : i64, scratch_operands = 0 : i64, tpu.core_type = #tpu.core_type<tc>, window_params = [{transform_indices = @transform_0, window_bounds = array<i64: 8, 768>}, {pipeline_mode = #tpu.pipeline_mode<synchronous>, transform_indices = @transform_1, window_bounds = array<i64: 768, 384>}, {pipeline_mode = #tpu.pipeline_mode<synchronous>, transform_indices = @transform_2, window_bounds = array<i64: 1, 384>}, {transform_indices = @transform_3, window_bounds = array<i64: 8, 384>}]} {
    %c0 = arith.constant 0 : index
    %c0_0 = arith.constant 0 : index
    %0 = vector.load %arg1[%c0, %c0_0] : memref<8x768xbf16, #tpu.memory_space<vmem>>, vector<8x768xbf16>
    %c0_1 = arith.constant 0 : index
    %c0_2 = arith.constant 0 : index
    %1 = vector.load %arg2[%c0_1, %c0_2] : memref<768x384xbf16, #tpu.memory_space<vmem>>, vector<768x384xbf16>
    %cst = arith.constant dense<0.000000e+00> : vector<8x384xf32>
    %2 = tpu.matmul %0, %1, %cst {dimension_numbers = #tpu.dot_dimension_numbers<[1], [0], [0], [1], [0, 0, 1, 1], [], []>} : vector<8x768xbf16>, vector<768x384xbf16>, vector<8x384xf32> -> vector<8x384xf32>
    %c0_3 = arith.constant 0 : index
    %c0_4 = arith.constant 0 : index
    %3 = vector.load %arg3[%c0_3, %c0_4] : memref<1x384xf32, #tpu.memory_space<vmem>>, vector<1x384xf32>
    %4 = vector.broadcast %3 : vector<1x384xf32> to vector<8x384xf32>
    %5 = arith.addf %2, %4 : vector<8x384xf32>
    %c0_5 = arith.constant 0 : index
    %c0_6 = arith.constant 0 : index
    %6 = vector.load %arg4[%c0_5, %c0_6] : memref<8x384xf32, #tpu.memory_space<vmem>>, vector<8x384xf32>
    tpu.vector_store %arg4[%c0_5, %c0_6], %5 {strides = array<i32>} : memref<8x384xf32, #tpu.memory_space<vmem>>, vector<8x384xf32>,
    return
  }
  func.func @transform_0(%arg0: i32) -> (i32, i32) {
    %c0_i32 = arith.constant 0 : i32
    %c0_i32_0 = arith.constant 0 : i32
    return %arg0, %c0_i32 : i32, i32
  }
  func.func @transform_1(%arg0: i32) -> (i32, i32) {
    %c0_i32 = arith.constant 0 : i32
    %c0_i32_0 = arith.constant 0 : i32
    %c0_i32_1 = arith.constant 0 : i32
    return %c0_i32, %c0_i32_0 : i32, i32
  }
  func.func @transform_2(%arg0: i32) -> (i32, i32) {
    %c0_i32 = arith.constant 0 : i32
    %c0_i32_0 = arith.constant 0 : i32
    %c0_i32_1 = arith.constant 0 : i32
    return %c0_i32, %c0_i32_0 : i32, i32
  }
  func.func @transform_3(%arg0: i32) -> (i32, i32) {
    %c0_i32 = arith.constant 0 : i32
    %c0_i32_0 = arith.constant 0 : i32
    return %arg0, %c0_i32 : i32, i32
  }
}

module attributes {stable_mosaic.version = 11 : i64} {
  func.func @_mm_kernel(%arg0: i32, %arg1: memref<8x384xf32, #tpu.memory_space<vmem>>, %arg2: memref<384x1152xbf16, #tpu.memory_space<vmem>>, %arg3: memref<1x1152xf32, #tpu.memory_space<vmem>>, %arg4: memref<1x384xf32, #tpu.memory_space<vmem>>, %arg5: memref<1x384xf32, #tpu.memory_space<vmem>>, %arg6: memref<8x1152xbf16, #tpu.memory_space<vmem>>) attributes {dimension_semantics = [#tpu.dimension_semantics<parallel>], iteration_bounds = array<i64: 2>, scalar_prefetch = 0 : i64, scratch_operands = 0 : i64, tpu.core_type = #tpu.core_type<tc>, window_params = [{transform_indices = @transform_0, window_bounds = array<i64: 8, 384>}, {pipeline_mode = #tpu.pipeline_mode<synchronous>, transform_indices = @transform_1, window_bounds = array<i64: 384, 1152>}, {pipeline_mode = #tpu.pipeline_mode<synchronous>, transform_indices = @transform_2, window_bounds = array<i64: 1, 1152>}, {pipeline_mode = #tpu.pipeline_mode<synchronous>, transform_indices = @transform_3, window_bounds = array<i64: 1, 384>}, {pipeline_mode = #tpu.pipeline_mode<synchronous>, transform_indices = @transform_4, window_bounds = array<i64: 1, 384>}, {transform_indices = @transform_5, window_bounds = array<i64: 8, 1152>}]} {
    %c0 = arith.constant 0 : index
    %c0_0 = arith.constant 0 : index
    %0 = vector.load %arg1[%c0, %c0_0] : memref<8x384xf32, #tpu.memory_space<vmem>>, vector<8x384xf32>
    %cst = arith.constant dense<0.000000e+00> : vector<8xf32>
    %1 = vector.multi_reduction <add>, %0, %cst [1] : vector<8x384xf32> to vector<8xf32>
    %2 = vector.shape_cast %1 : vector<8xf32> to vector<8x1xf32>
    %cst_1 = arith.constant 3.840000e+02 : f32
    %3 = vector.broadcast %cst_1 : f32 to vector<8x1xf32>
    %4 = arith.divf %2, %3 : vector<8x1xf32>
    %5 = vector.broadcast %4 : vector<8x1xf32> to vector<8x384xf32>
    %6 = arith.subf %0, %5 : vector<8x384xf32>
    %7 = arith.mulf %6, %6 : vector<8x384xf32>
    %cst_2 = arith.constant dense<0.000000e+00> : vector<8xf32>
    %8 = vector.multi_reduction <add>, %7, %cst_2 [1] : vector<8x384xf32> to vector<8xf32>
    %9 = vector.shape_cast %8 : vector<8xf32> to vector<8x1xf32>
    %cst_3 = arith.constant 3.840000e+02 : f32
    %10 = vector.broadcast %cst_3 : f32 to vector<8x1xf32>
    %11 = arith.divf %9, %10 : vector<8x1xf32>
    %cst_4 = arith.constant 9.99999997E-7 : f32
    %12 = vector.broadcast %cst_4 : f32 to vector<8x1xf32>
    %13 = arith.addf %11, %12 : vector<8x1xf32>
    %14 = math.rsqrt %13 : vector<8x1xf32>
    %15 = vector.broadcast %14 : vector<8x1xf32> to vector<8x384xf32>
    %16 = arith.mulf %6, %15 : vector<8x384xf32>
    %c0_5 = arith.constant 0 : index
    %c0_6 = arith.constant 0 : index
    %17 = vector.load %arg4[%c0_5, %c0_6] : memref<1x384xf32, #tpu.memory_space<vmem>>, vector<1x384xf32>
    %18 = vector.broadcast %17 : vector<1x384xf32> to vector<8x384xf32>
    %19 = arith.mulf %16, %18 : vector<8x384xf32>
    %c0_7 = arith.constant 0 : index
    %c0_8 = arith.constant 0 : index
    %20 = vector.load %arg5[%c0_7, %c0_8] : memref<1x384xf32, #tpu.memory_space<vmem>>, vector<1x384xf32>
    %21 = vector.broadcast %20 : vector<1x384xf32> to vector<8x384xf32>
    %22 = arith.addf %19, %21 : vector<8x384xf32>
    %23 = arith.truncf %22 : vector<8x384xf32> to vector<8x384xbf16>
    %c0_9 = arith.constant 0 : index
    %c0_10 = arith.constant 0 : index
    %24 = vector.load %arg2[%c0_9, %c0_10] : memref<384x1152xbf16, #tpu.memory_space<vmem>>, vector<384x1152xbf16>
    %cst_11 = arith.constant dense<0.000000e+00> : vector<8x1152xf32>
    %25 = tpu.matmul %23, %24, %cst_11 {dimension_numbers = #tpu.dot_dimension_numbers<[1], [0], [0], [1], [0, 0, 1, 1], [], []>} : vector<8x384xbf16>, vector<384x1152xbf16>, vector<8x1152xf32> -> vector<8x1152xf32>
    %c0_12 = arith.constant 0 : index
    %c0_13 = arith.constant 0 : index
    %26 = vector.load %arg3[%c0_12, %c0_13] : memref<1x1152xf32, #tpu.memory_space<vmem>>, vector<1x1152xf32>
    %27 = vector.broadcast %26 : vector<1x1152xf32> to vector<8x1152xf32>
    %28 = arith.addf %25, %27 : vector<8x1152xf32>
    %29 = arith.truncf %28 : vector<8x1152xf32> to vector<8x1152xbf16>
    %c0_14 = arith.constant 0 : index
    %c0_15 = arith.constant 0 : index
    %30 = vector.load %arg6[%c0_14, %c0_15] : memref<8x1152xbf16, #tpu.memory_space<vmem>>, vector<8x1152xbf16>
    tpu.vector_store %arg6[%c0_14, %c0_15], %29 {strides = array<i32>} : memref<8x1152xbf16, #tpu.memory_space<vmem>>, vector<8x1152xbf16>,
    return
  }
  func.func @transform_0(%arg0: i32) -> (i32, i32) {
    %c0_i32 = arith.constant 0 : i32
    %c0_i32_0 = arith.constant 0 : i32
    return %arg0, %c0_i32 : i32, i32
  }
  func.func @transform_1(%arg0: i32) -> (i32, i32) {
    %c0_i32 = arith.constant 0 : i32
    %c0_i32_0 = arith.constant 0 : i32
    %c0_i32_1 = arith.constant 0 : i32
    return %c0_i32, %c0_i32_0 : i32, i32
  }
  func.func @transform_2(%arg0: i32) -> (i32, i32) {
    %c0_i32 = arith.constant 0 : i32
    %c0_i32_0 = arith.constant 0 : i32
    %c0_i32_1 = arith.constant 0 : i32
    return %c0_i32, %c0_i32_0 : i32, i32
  }
  func.func @transform_3(%arg0: i32) -> (i32, i32) {
    %c0_i32 = arith.constant 0 : i32
    %c0_i32_0 = arith.constant 0 : i32
    %c0_i32_1 = arith.constant 0 : i32
    return %c0_i32, %c0_i32_0 : i32, i32
  }
  func.func @transform_4(%arg0: i32) -> (i32, i32) {
    %c0_i32 = arith.constant 0 : i32
    %c0_i32_0 = arith.constant 0 : i32
    %c0_i32_1 = arith.constant 0 : i32
    return %c0_i32, %c0_i32_0 : i32, i32
  }
  func.func @transform_5(%arg0: i32) -> (i32, i32) {
    %c0_i32 = arith.constant 0 : i32
    %c0_i32_0 = arith.constant 0 : i32
    return %arg0, %c0_i32 : i32, i32
  }
}

module attributes {stable_mosaic.version = 11 : i64} {
  func.func @_mm_kernel(%arg0: i32, %arg1: memref<8x384xbf16, #tpu.memory_space<vmem>>, %arg2: memref<384x384xbf16, #tpu.memory_space<vmem>>, %arg3: memref<1x384xf32, #tpu.memory_space<vmem>>, %arg4: memref<8x384xf32, #tpu.memory_space<vmem>>, %arg5: memref<8x384xf32, #tpu.memory_space<vmem>>) attributes {dimension_semantics = [#tpu.dimension_semantics<parallel>], iteration_bounds = array<i64: 2>, scalar_prefetch = 0 : i64, scratch_operands = 0 : i64, tpu.core_type = #tpu.core_type<tc>, window_params = [{transform_indices = @transform_0, window_bounds = array<i64: 8, 384>}, {pipeline_mode = #tpu.pipeline_mode<synchronous>, transform_indices = @transform_1, window_bounds = array<i64: 384, 384>}, {pipeline_mode = #tpu.pipeline_mode<synchronous>, transform_indices = @transform_2, window_bounds = array<i64: 1, 384>}, {transform_indices = @transform_3, window_bounds = array<i64: 8, 384>}, {transform_indices = @transform_4, window_bounds = array<i64: 8, 384>}]} {
    %c0 = arith.constant 0 : index
    %c0_0 = arith.constant 0 : index
    %0 = vector.load %arg1[%c0, %c0_0] : memref<8x384xbf16, #tpu.memory_space<vmem>>, vector<8x384xbf16>
    %c0_1 = arith.constant 0 : index
    %c0_2 = arith.constant 0 : index
    %1 = vector.load %arg2[%c0_1, %c0_2] : memref<384x384xbf16, #tpu.memory_space<vmem>>, vector<384x384xbf16>
    %cst = arith.constant dense<0.000000e+00> : vector<8x384xf32>
    %2 = tpu.matmul %0, %1, %cst {dimension_numbers = #tpu.dot_dimension_numbers<[1], [0], [0], [1], [0, 0, 1, 1], [], []>} : vector<8x384xbf16>, vector<384x384xbf16>, vector<8x384xf32> -> vector<8x384xf32>
    %c0_3 = arith.constant 0 : index
    %c0_4 = arith.constant 0 : index
    %3 = vector.load %arg3[%c0_3, %c0_4] : memref<1x384xf32, #tpu.memory_space<vmem>>, vector<1x384xf32>
    %4 = vector.broadcast %3 : vector<1x384xf32> to vector<8x384xf32>
    %5 = arith.addf %2, %4 : vector<8x384xf32>
    %c0_5 = arith.constant 0 : index
    %c0_6 = arith.constant 0 : index
    %6 = vector.load %arg4[%c0_5, %c0_6] : memref<8x384xf32, #tpu.memory_space<vmem>>, vector<8x384xf32>
    %7 = arith.addf %5, %6 : vector<8x384xf32>
    %c0_7 = arith.constant 0 : index
    %c0_8 = arith.constant 0 : index
    %8 = vector.load %arg5[%c0_7, %c0_8] : memref<8x384xf32, #tpu.memory_space<vmem>>, vector<8x384xf32>
    tpu.vector_store %arg5[%c0_7, %c0_8], %7 {strides = array<i32>} : memref<8x384xf32, #tpu.memory_space<vmem>>, vector<8x384xf32>,
    return
  }
  func.func @transform_0(%arg0: i32) -> (i32, i32) {
    %c0_i32 = arith.constant 0 : i32
    %c0_i32_0 = arith.constant 0 : i32
    return %arg0, %c0_i32 : i32, i32
  }
  func.func @transform_1(%arg0: i32) -> (i32, i32) {
    %c0_i32 = arith.constant 0 : i32
    %c0_i32_0 = arith.constant 0 : i32
    %c0_i32_1 = arith.constant 0 : i32
    return %c0_i32, %c0_i32_0 : i32, i32
  }
  func.func @transform_2(%arg0: i32) -> (i32, i32) {
    %c0_i32 = arith.constant 0 : i32
    %c0_i32_0 = arith.constant 0 : i32
    %c0_i32_1 = arith.constant 0 : i32
    return %c0_i32, %c0_i32_0 : i32, i32
  }
  func.func @transform_3(%arg0: i32) -> (i32, i32) {
    %c0_i32 = arith.constant 0 : i32
    %c0_i32_0 = arith.constant 0 : i32
    return %arg0, %c0_i32 : i32, i32
  }
  func.func @transform_4(%arg0: i32) -> (i32, i32) {
    %c0_i32 = arith.constant 0 : i32
    %c0_i32_0 = arith.constant 0 : i32
    return %arg0, %c0_i32 : i32, i32
  }
}

module attributes {stable_mosaic.version = 11 : i64} {
  func.func @_attn_kernel(%arg0: i32, %arg1: i32, %arg2: memref<1x8x384xbf16, #tpu.memory_space<vmem>>, %arg3: memref<1x8x384xbf16, #tpu.memory_space<vmem>>, %arg4: memref<1x8x384xbf16, #tpu.memory_space<vmem>>, %arg5: memref<1x8x384xbf16, #tpu.memory_space<vmem>>) attributes {dimension_semantics = [#tpu.dimension_semantics<parallel>, #tpu.dimension_semantics<parallel>], iteration_bounds = array<i64: 2, 1>, scalar_prefetch = 0 : i64, scratch_operands = 0 : i64, tpu.core_type = #tpu.core_type<tc>, window_params = [{transform_indices = @transform_0, window_bounds = array<i64: 1, 8, 384>}, {transform_indices = @transform_1, window_bounds = array<i64: 1, 8, 384>}, {transform_indices = @transform_2, window_bounds = array<i64: 1, 8, 384>}, {transform_indices = @transform_3, window_bounds = array<i64: 1, 8, 384>}]} {
    %c0 = arith.constant 0 : index
    %c0_0 = arith.constant 0 : index
    %c0_1 = arith.constant 0 : index
    %0 = vector.load %arg2[%c0, %c0_0, %c0_1] : memref<1x8x384xbf16, #tpu.memory_space<vmem>>, vector<1x8x384xbf16>
    %1 = vector.shape_cast %0 : vector<1x8x384xbf16> to vector<8x384xbf16>
    %c0_2 = arith.constant 0 : index
    %c0_3 = arith.constant 0 : index
    %c0_4 = arith.constant 0 : index
    %2 = vector.load %arg3[%c0_2, %c0_3, %c0_4] : memref<1x8x384xbf16, #tpu.memory_space<vmem>>, vector<1x8x384xbf16>
    %3 = vector.shape_cast %2 : vector<1x8x384xbf16> to vector<8x384xbf16>
    %c0_5 = arith.constant 0 : index
    %c0_6 = arith.constant 0 : index
    %c0_7 = arith.constant 0 : index
    %4 = vector.load %arg4[%c0_5, %c0_6, %c0_7] : memref<1x8x384xbf16, #tpu.memory_space<vmem>>, vector<1x8x384xbf16>
    %5 = vector.shape_cast %4 : vector<1x8x384xbf16> to vector<8x384xbf16>
    %6 = tpu.iota {dimensions = array<i32: 1>} : vector<8x8xi32>
    %c6_i32 = arith.constant 6 : i32
    %7 = vector.broadcast %c6_i32 : i32 to vector<8x8xi32>
    %8 = arith.cmpi slt, %6, %7 : vector<8x8xi32>
    %9 = vector.extract_strided_slice %1 {offsets = [0, 0], sizes = [8, 64], strides = [1, 1]} : vector<8x384xbf16> to vector<8x64xbf16>
    %10 = vector.extract_strided_slice %3 {offsets = [0, 0], sizes = [8, 64], strides = [1, 1]} : vector<8x384xbf16> to vector<8x64xbf16>
    %11 = vector.extract_strided_slice %5 {offsets = [0, 0], sizes = [8, 64], strides = [1, 1]} : vector<8x384xbf16> to vector<8x64xbf16>
    %cst = arith.constant dense<0.000000e+00> : vector<8x8xf32>
    %12 = tpu.matmul %9, %10, %cst {dimension_numbers = #tpu.dot_dimension_numbers<[1], [1], [0], [0], [0, 0, 1, 0], [], []>} : vector<8x64xbf16>, vector<8x64xbf16>, vector<8x8xf32> -> vector<8x8xf32>
    %cst_8 = arith.constant 1.250000e-01 : f32
    %13 = vector.broadcast %cst_8 : f32 to vector<8x8xf32>
    %14 = arith.mulf %12, %13 : vector<8x8xf32>
    %cst_9 = arith.constant -1.000000e+30 : f32
    %15 = vector.broadcast %cst_9 : f32 to vector<8x8xf32>
    %16 = arith.select %8, %14, %15 : vector<8x8xi1>, vector<8x8xf32>
    %cst_10 = arith.constant dense<0xFF800000> : vector<8xf32>
    %17 = vector.multi_reduction <maximumf>, %16, %cst_10 [1] : vector<8x8xf32> to vector<8xf32>
    %18 = vector.shape_cast %17 : vector<8xf32> to vector<8x1xf32>
    %19 = vector.broadcast %18 : vector<8x1xf32> to vector<8x8xf32>
    %20 = arith.subf %16, %19 : vector<8x8xf32>
    %21 = math.exp %20 : vector<8x8xf32>
    %cst_11 = arith.constant dense<0.000000e+00> : vector<8xf32>
    %22 = vector.multi_reduction <add>, %21, %cst_11 [1] : vector<8x8xf32> to vector<8xf32>
    %23 = vector.shape_cast %22 : vector<8xf32> to vector<8x1xf32>
    %24 = tpu.reciprocal %23 {approx = true} : vector<8x1xf32> -> vector<8x1xf32>
    %25 = vector.broadcast %24 : vector<8x1xf32> to vector<8x8xf32>
    %26 = arith.mulf %21, %25 : vector<8x8xf32>
    %27 = arith.truncf %26 : vector<8x8xf32> to vector<8x8xbf16>
    %cst_12 = arith.constant dense<0.000000e+00> : vector<8x64xf32>
    %28 = tpu.matmul %27, %11, %cst_12 {dimension_numbers = #tpu.dot_dimension_numbers<[1], [0], [0], [1], [0, 0, 1, 1], [], []>} : vector<8x8xbf16>, vector<8x64xbf16>, vector<8x64xf32> -> vector<8x64xf32>
    %29 = vector.extract_strided_slice %1 {offsets = [0, 64], sizes = [8, 64], strides = [1, 1]} : vector<8x384xbf16> to vector<8x64xbf16>
    %30 = vector.extract_strided_slice %3 {offsets = [0, 64], sizes = [8, 64], strides = [1, 1]} : vector<8x384xbf16> to vector<8x64xbf16>
    %31 = vector.extract_strided_slice %5 {offsets = [0, 64], sizes = [8, 64], strides = [1, 1]} : vector<8x384xbf16> to vector<8x64xbf16>
    %cst_13 = arith.constant dense<0.000000e+00> : vector<8x8xf32>
    %32 = tpu.matmul %29, %30, %cst_13 {dimension_numbers = #tpu.dot_dimension_numbers<[1], [1], [0], [0], [0, 0, 1, 0], [], []>} : vector<8x64xbf16>, vector<8x64xbf16>, vector<8x8xf32> -> vector<8x8xf32>
    %cst_14 = arith.constant 1.250000e-01 : f32
    %33 = vector.broadcast %cst_14 : f32 to vector<8x8xf32>
    %34 = arith.mulf %32, %33 : vector<8x8xf32>
    %cst_15 = arith.constant -1.000000e+30 : f32
    %35 = vector.broadcast %cst_15 : f32 to vector<8x8xf32>
    %36 = arith.select %8, %34, %35 : vector<8x8xi1>, vector<8x8xf32>
    %cst_16 = arith.constant dense<0xFF800000> : vector<8xf32>
    %37 = vector.multi_reduction <maximumf>, %36, %cst_16 [1] : vector<8x8xf32> to vector<8xf32>
    %38 = vector.shape_cast %37 : vector<8xf32> to vector<8x1xf32>
    %39 = vector.broadcast %38 : vector<8x1xf32> to vector<8x8xf32>
    %40 = arith.subf %36, %39 : vector<8x8xf32>
    %41 = math.exp %40 : vector<8x8xf32>
    %cst_17 = arith.constant dense<0.000000e+00> : vector<8xf32>
    %42 = vector.multi_reduction <add>, %41, %cst_17 [1] : vector<8x8xf32> to vector<8xf32>
    %43 = vector.shape_cast %42 : vector<8xf32> to vector<8x1xf32>
    %44 = tpu.reciprocal %43 {approx = true} : vector<8x1xf32> -> vector<8x1xf32>
    %45 = vector.broadcast %44 : vector<8x1xf32> to vector<8x8xf32>
    %46 = arith.mulf %41, %45 : vector<8x8xf32>
    %47 = arith.truncf %46 : vector<8x8xf32> to vector<8x8xbf16>
    %cst_18 = arith.constant dense<0.000000e+00> : vector<8x64xf32>
    %48 = tpu.matmul %47, %31, %cst_18 {dimension_numbers = #tpu.dot_dimension_numbers<[1], [0], [0], [1], [0, 0, 1, 1], [], []>} : vector<8x8xbf16>, vector<8x64xbf16>, vector<8x64xf32> -> vector<8x64xf32>
    %49 = tpu.concatenate %28, %48 in 1 : vector<8x64xf32>, vector<8x64xf32> -> vector<8x128xf32>
    %50 = arith.truncf %49 : vector<8x128xf32> to vector<8x128xbf16>
    %c0_19 = arith.constant 0 : index
    %c0_20 = arith.constant 0 : index
    %c0_21 = arith.constant 0 : index
    %51 = vector.load %arg5[%c0_19, %c0_20, %c0_21] : memref<1x8x384xbf16, #tpu.memory_space<vmem>>, vector<1x8x128xbf16>
    %52 = vector.shape_cast %51 : vector<1x8x128xbf16> to vector<8x128xbf16>
    %53 = vector.shape_cast %50 : vector<8x128xbf16> to vector<1x8x128xbf16>
    tpu.vector_store %arg5[%c0_19, %c0_20, %c0_21], %53 {strides = array<i32>} : memref<1x8x384xbf16, #tpu.memory_space<vmem>>, vector<1x8x128xbf16>,
    %54 = vector.extract_strided_slice %1 {offsets = [0, 128], sizes = [8, 64], strides = [1, 1]} : vector<8x384xbf16> to vector<8x64xbf16>
    %55 = vector.extract_strided_slice %3 {offsets = [0, 128], sizes = [8, 64], strides = [1, 1]} : vector<8x384xbf16> to vector<8x64xbf16>
    %56 = vector.extract_strided_slice %5 {offsets = [0, 128], sizes = [8, 64], strides = [1, 1]} : vector<8x384xbf16> to vector<8x64xbf16>
    %cst_22 = arith.constant dense<0.000000e+00> : vector<8x8xf32>
    %57 = tpu.matmul %54, %55, %cst_22 {dimension_numbers = #tpu.dot_dimension_numbers<[1], [1], [0], [0], [0, 0, 1, 0], [], []>} : vector<8x64xbf16>, vector<8x64xbf16>, vector<8x8xf32> -> vector<8x8xf32>
    %cst_23 = arith.constant 1.250000e-01 : f32
    %58 = vector.broadcast %cst_23 : f32 to vector<8x8xf32>
    %59 = arith.mulf %57, %58 : vector<8x8xf32>
    %cst_24 = arith.constant -1.000000e+30 : f32
    %60 = vector.broadcast %cst_24 : f32 to vector<8x8xf32>
    %61 = arith.select %8, %59, %60 : vector<8x8xi1>, vector<8x8xf32>
    %cst_25 = arith.constant dense<0xFF800000> : vector<8xf32>
    %62 = vector.multi_reduction <maximumf>, %61, %cst_25 [1] : vector<8x8xf32> to vector<8xf32>
    %63 = vector.shape_cast %62 : vector<8xf32> to vector<8x1xf32>
    %64 = vector.broadcast %63 : vector<8x1xf32> to vector<8x8xf32>
    %65 = arith.subf %61, %64 : vector<8x8xf32>
    %66 = math.exp %65 : vector<8x8xf32>
    %cst_26 = arith.constant dense<0.000000e+00> : vector<8xf32>
    %67 = vector.multi_reduction <add>, %66, %cst_26 [1] : vector<8x8xf32> to vector<8xf32>
    %68 = vector.shape_cast %67 : vector<8xf32> to vector<8x1xf32>
    %69 = tpu.reciprocal %68 {approx = true} : vector<8x1xf32> -> vector<8x1xf32>
    %70 = vector.broadcast %69 : vector<8x1xf32> to vector<8x8xf32>
    %71 = arith.mulf %66, %70 : vector<8x8xf32>
    %72 = arith.truncf %71 : vector<8x8xf32> to vector<8x8xbf16>
    %cst_27 = arith.constant dense<0.000000e+00> : vector<8x64xf32>
    %73 = tpu.matmul %72, %56, %cst_27 {dimension_numbers = #tpu.dot_dimension_numbers<[1], [0], [0], [1], [0, 0, 1, 1], [], []>} : vector<8x8xbf16>, vector<8x64xbf16>, vector<8x64xf32> -> vector<8x64xf32>
    %74 = vector.extract_strided_slice %1 {offsets = [0, 192], sizes = [8, 64], strides = [1, 1]} : vector<8x384xbf16> to vector<8x64xbf16>
    %75 = vector.extract_strided_slice %3 {offsets = [0, 192], sizes = [8, 64], strides = [1, 1]} : vector<8x384xbf16> to vector<8x64xbf16>
    %76 = vector.extract_strided_slice %5 {offsets = [0, 192], sizes = [8, 64], strides = [1, 1]} : vector<8x384xbf16> to vector<8x64xbf16>
    %cst_28 = arith.constant dense<0.000000e+00> : vector<8x8xf32>
    %77 = tpu.matmul %74, %75, %cst_28 {dimension_numbers = #tpu.dot_dimension_numbers<[1], [1], [0], [0], [0, 0, 1, 0], [], []>} : vector<8x64xbf16>, vector<8x64xbf16>, vector<8x8xf32> -> vector<8x8xf32>
    %cst_29 = arith.constant 1.250000e-01 : f32
    %78 = vector.broadcast %cst_29 : f32 to vector<8x8xf32>
    %79 = arith.mulf %77, %78 : vector<8x8xf32>
    %cst_30 = arith.constant -1.000000e+30 : f32
    %80 = vector.broadcast %cst_30 : f32 to vector<8x8xf32>
    %81 = arith.select %8, %79, %80 : vector<8x8xi1>, vector<8x8xf32>
    %cst_31 = arith.constant dense<0xFF800000> : vector<8xf32>
    %82 = vector.multi_reduction <maximumf>, %81, %cst_31 [1] : vector<8x8xf32> to vector<8xf32>
    %83 = vector.shape_cast %82 : vector<8xf32> to vector<8x1xf32>
    %84 = vector.broadcast %83 : vector<8x1xf32> to vector<8x8xf32>
    %85 = arith.subf %81, %84 : vector<8x8xf32>
    %86 = math.exp %85 : vector<8x8xf32>
    %cst_32 = arith.constant dense<0.000000e+00> : vector<8xf32>
    %87 = vector.multi_reduction <add>, %86, %cst_32 [1] : vector<8x8xf32> to vector<8xf32>
    %88 = vector.shape_cast %87 : vector<8xf32> to vector<8x1xf32>
    %89 = tpu.reciprocal %88 {approx = true} : vector<8x1xf32> -> vector<8x1xf32>
    %90 = vector.broadcast %89 : vector<8x1xf32> to vector<8x8xf32>
    %91 = arith.mulf %86, %90 : vector<8x8xf32>
    %92 = arith.truncf %91 : vector<8x8xf32> to vector<8x8xbf16>
    %cst_33 = arith.constant dense<0.000000e+00> : vector<8x64xf32>
    %93 = tpu.matmul %92, %76, %cst_33 {dimension_numbers = #tpu.dot_dimension_numbers<[1], [0], [0], [1], [0, 0, 1, 1], [], []>} : vector<8x8xbf16>, vector<8x64xbf16>, vector<8x64xf32> -> vector<8x64xf32>
    %94 = tpu.concatenate %73, %93 in 1 : vector<8x64xf32>, vector<8x64xf32> -> vector<8x128xf32>
    %95 = arith.truncf %94 : vector<8x128xf32> to vector<8x128xbf16>
    %c0_34 = arith.constant 0 : index
    %c0_35 = arith.constant 0 : index
    %c128 = arith.constant 128 : index
    %96 = vector.load %arg5[%c0_34, %c0_35, %c128] : memref<1x8x384xbf16, #tpu.memory_space<vmem>>, vector<1x8x128xbf16>
    %97 = vector.shape_cast %96 : vector<1x8x128xbf16> to vector<8x128xbf16>
    %98 = vector.shape_cast %95 : vector<8x128xbf16> to vector<1x8x128xbf16>
    tpu.vector_store %arg5[%c0_34, %c0_35, %c128], %98 {strides = array<i32>} : memref<1x8x384xbf16, #tpu.memory_space<vmem>>, vector<1x8x128xbf16>,
    %99 = vector.extract_strided_slice %1 {offsets = [0, 256], sizes = [8, 64], strides = [1, 1]} : vector<8x384xbf16> to vector<8x64xbf16>
    %100 = vector.extract_strided_slice %3 {offsets = [0, 256], sizes = [8, 64], strides = [1, 1]} : vector<8x384xbf16> to vector<8x64xbf16>
    %101 = vector.extract_strided_slice %5 {offsets = [0, 256], sizes = [8, 64], strides = [1, 1]} : vector<8x384xbf16> to vector<8x64xbf16>
    %cst_36 = arith.constant dense<0.000000e+00> : vector<8x8xf32>
    %102 = tpu.matmul %99, %100, %cst_36 {dimension_numbers = #tpu.dot_dimension_numbers<[1], [1], [0], [0], [0, 0, 1, 0], [], []>} : vector<8x64xbf16>, vector<8x64xbf16>, vector<8x8xf32> -> vector<8x8xf32>
    %cst_37 = arith.constant 1.250000e-01 : f32
    %103 = vector.broadcast %cst_37 : f32 to vector<8x8xf32>
    %104 = arith.mulf %102, %103 : vector<8x8xf32>
    %cst_38 = arith.constant -1.000000e+30 : f32
    %105 = vector.broadcast %cst_38 : f32 to vector<8x8xf32>
    %106 = arith.select %8, %104, %105 : vector<8x8xi1>, vector<8x8xf32>
    %cst_39 = arith.constant dense<0xFF800000> : vector<8xf32>
    %107 = vector.multi_reduction <maximumf>, %106, %cst_39 [1] : vector<8x8xf32> to vector<8xf32>
    %108 = vector.shape_cast %107 : vector<8xf32> to vector<8x1xf32>
    %109 = vector.broadcast %108 : vector<8x1xf32> to vector<8x8xf32>
    %110 = arith.subf %106, %109 : vector<8x8xf32>
    %111 = math.exp %110 : vector<8x8xf32>
    %cst_40 = arith.constant dense<0.000000e+00> : vector<8xf32>
    %112 = vector.multi_reduction <add>, %111, %cst_40 [1] : vector<8x8xf32> to vector<8xf32>
    %113 = vector.shape_cast %112 : vector<8xf32> to vector<8x1xf32>
    %114 = tpu.reciprocal %113 {approx = true} : vector<8x1xf32> -> vector<8x1xf32>
    %115 = vector.broadcast %114 : vector<8x1xf32> to vector<8x8xf32>
    %116 = arith.mulf %111, %115 : vector<8x8xf32>
    %117 = arith.truncf %116 : vector<8x8xf32> to vector<8x8xbf16>
    %cst_41 = arith.constant dense<0.000000e+00> : vector<8x64xf32>
    %118 = tpu.matmul %117, %101, %cst_41 {dimension_numbers = #tpu.dot_dimension_numbers<[1], [0], [0], [1], [0, 0, 1, 1], [], []>} : vector<8x8xbf16>, vector<8x64xbf16>, vector<8x64xf32> -> vector<8x64xf32>
    %119 = vector.extract_strided_slice %1 {offsets = [0, 320], sizes = [8, 64], strides = [1, 1]} : vector<8x384xbf16> to vector<8x64xbf16>
    %120 = vector.extract_strided_slice %3 {offsets = [0, 320], sizes = [8, 64], strides = [1, 1]} : vector<8x384xbf16> to vector<8x64xbf16>
    %121 = vector.extract_strided_slice %5 {offsets = [0, 320], sizes = [8, 64], strides = [1, 1]} : vector<8x384xbf16> to vector<8x64xbf16>
    %cst_42 = arith.constant dense<0.000000e+00> : vector<8x8xf32>
    %122 = tpu.matmul %119, %120, %cst_42 {dimension_numbers = #tpu.dot_dimension_numbers<[1], [1], [0], [0], [0, 0, 1, 0], [], []>} : vector<8x64xbf16>, vector<8x64xbf16>, vector<8x8xf32> -> vector<8x8xf32>
    %cst_43 = arith.constant 1.250000e-01 : f32
    %123 = vector.broadcast %cst_43 : f32 to vector<8x8xf32>
    %124 = arith.mulf %122, %123 : vector<8x8xf32>
    %cst_44 = arith.constant -1.000000e+30 : f32
    %125 = vector.broadcast %cst_44 : f32 to vector<8x8xf32>
    %126 = arith.select %8, %124, %125 : vector<8x8xi1>, vector<8x8xf32>
    %cst_45 = arith.constant dense<0xFF800000> : vector<8xf32>
    %127 = vector.multi_reduction <maximumf>, %126, %cst_45 [1] : vector<8x8xf32> to vector<8xf32>
    %128 = vector.shape_cast %127 : vector<8xf32> to vector<8x1xf32>
    %129 = vector.broadcast %128 : vector<8x1xf32> to vector<8x8xf32>
    %130 = arith.subf %126, %129 : vector<8x8xf32>
    %131 = math.exp %130 : vector<8x8xf32>
    %cst_46 = arith.constant dense<0.000000e+00> : vector<8xf32>
    %132 = vector.multi_reduction <add>, %131, %cst_46 [1] : vector<8x8xf32> to vector<8xf32>
    %133 = vector.shape_cast %132 : vector<8xf32> to vector<8x1xf32>
    %134 = tpu.reciprocal %133 {approx = true} : vector<8x1xf32> -> vector<8x1xf32>
    %135 = vector.broadcast %134 : vector<8x1xf32> to vector<8x8xf32>
    %136 = arith.mulf %131, %135 : vector<8x8xf32>
    %137 = arith.truncf %136 : vector<8x8xf32> to vector<8x8xbf16>
    %cst_47 = arith.constant dense<0.000000e+00> : vector<8x64xf32>
    %138 = tpu.matmul %137, %121, %cst_47 {dimension_numbers = #tpu.dot_dimension_numbers<[1], [0], [0], [1], [0, 0, 1, 1], [], []>} : vector<8x8xbf16>, vector<8x64xbf16>, vector<8x64xf32> -> vector<8x64xf32>
    %139 = tpu.concatenate %118, %138 in 1 : vector<8x64xf32>, vector<8x64xf32> -> vector<8x128xf32>
    %140 = arith.truncf %139 : vector<8x128xf32> to vector<8x128xbf16>
    %c0_48 = arith.constant 0 : index
    %c0_49 = arith.constant 0 : index
    %c256 = arith.constant 256 : index
    %141 = vector.load %arg5[%c0_48, %c0_49, %c256] : memref<1x8x384xbf16, #tpu.memory_space<vmem>>, vector<1x8x128xbf16>
    %142 = vector.shape_cast %141 : vector<1x8x128xbf16> to vector<8x128xbf16>
    %143 = vector.shape_cast %140 : vector<8x128xbf16> to vector<1x8x128xbf16>
    tpu.vector_store %arg5[%c0_48, %c0_49, %c256], %143 {strides = array<i32>} : memref<1x8x384xbf16, #tpu.memory_space<vmem>>, vector<1x8x128xbf16>,
    return
  }
  func.func @transform_0(%arg0: i32, %arg1: i32) -> (i32, i32, i32) {
    %c0_i32 = arith.constant 0 : i32
    %c0_i32_0 = arith.constant 0 : i32
    return %arg0, %c0_i32, %arg1 : i32, i32, i32
  }
  func.func @transform_1(%arg0: i32, %arg1: i32) -> (i32, i32, i32) {
    %c1_i32 = arith.constant 1 : i32
    %0 = arith.addi %c1_i32, %arg1 : i32
    %c0_i32 = arith.constant 0 : i32
    %c0_i32_0 = arith.constant 0 : i32
    return %arg0, %c0_i32, %0 : i32, i32, i32
  }
  func.func @transform_2(%arg0: i32, %arg1: i32) -> (i32, i32, i32) {
    %c2_i32 = arith.constant 2 : i32
    %0 = arith.addi %c2_i32, %arg1 : i32
    %c0_i32 = arith.constant 0 : i32
    %c0_i32_0 = arith.constant 0 : i32
    return %arg0, %c0_i32, %0 : i32, i32, i32
  }
  func.func @transform_3(%arg0: i32, %arg1: i32) -> (i32, i32, i32) {
    %c0_i32 = arith.constant 0 : i32
    %c0_i32_0 = arith.constant 0 : i32
    return %arg0, %c0_i32, %arg1 : i32, i32, i32
  }
}

module attributes {stable_mosaic.version = 11 : i64} {
  func.func @_mm_kernel(%arg0: i32, %arg1: memref<8x1536xbf16, #tpu.memory_space<vmem>>, %arg2: memref<1536x384xbf16, #tpu.memory_space<vmem>>, %arg3: memref<1x384xf32, #tpu.memory_space<vmem>>, %arg4: memref<8x384xf32, #tpu.memory_space<vmem>>, %arg5: memref<8x384xf32, #tpu.memory_space<vmem>>) attributes {dimension_semantics = [#tpu.dimension_semantics<parallel>], iteration_bounds = array<i64: 2>, scalar_prefetch = 0 : i64, scratch_operands = 0 : i64, tpu.core_type = #tpu.core_type<tc>, window_params = [{transform_indices = @transform_0, window_bounds = array<i64: 8, 1536>}, {pipeline_mode = #tpu.pipeline_mode<synchronous>, transform_indices = @transform_1, window_bounds = array<i64: 1536, 384>}, {pipeline_mode = #tpu.pipeline_mode<synchronous>, transform_indices = @transform_2, window_bounds = array<i64: 1, 384>}, {transform_indices = @transform_3, window_bounds = array<i64: 8, 384>}, {transform_indices = @transform_4, window_bounds = array<i64: 8, 384>}]} {
    %c0 = arith.constant 0 : index
    %c0_0 = arith.constant 0 : index
    %0 = vector.load %arg1[%c0, %c0_0] : memref<8x1536xbf16, #tpu.memory_space<vmem>>, vector<8x1536xbf16>
    %c0_1 = arith.constant 0 : index
    %c0_2 = arith.constant 0 : index
    %1 = vector.load %arg2[%c0_1, %c0_2] : memref<1536x384xbf16, #tpu.memory_space<vmem>>, vector<1536x384xbf16>
    %cst = arith.constant dense<0.000000e+00> : vector<8x384xf32>
    %2 = tpu.matmul %0, %1, %cst {dimension_numbers = #tpu.dot_dimension_numbers<[1], [0], [0], [1], [0, 0, 1, 1], [], []>} : vector<8x1536xbf16>, vector<1536x384xbf16>, vector<8x384xf32> -> vector<8x384xf32>
    %c0_3 = arith.constant 0 : index
    %c0_4 = arith.constant 0 : index
    %3 = vector.load %arg3[%c0_3, %c0_4] : memref<1x384xf32, #tpu.memory_space<vmem>>, vector<1x384xf32>
    %4 = vector.broadcast %3 : vector<1x384xf32> to vector<8x384xf32>
    %5 = arith.addf %2, %4 : vector<8x384xf32>
    %c0_5 = arith.constant 0 : index
    %c0_6 = arith.constant 0 : index
    %6 = vector.load %arg4[%c0_5, %c0_6] : memref<8x384xf32, #tpu.memory_space<vmem>>, vector<8x384xf32>
    %7 = arith.addf %5, %6 : vector<8x384xf32>
    %c0_7 = arith.constant 0 : index
    %c0_8 = arith.constant 0 : index
    %8 = vector.load %arg5[%c0_7, %c0_8] : memref<8x384xf32, #tpu.memory_space<vmem>>, vector<8x384xf32>
    tpu.vector_store %arg5[%c0_7, %c0_8], %7 {strides = array<i32>} : memref<8x384xf32, #tpu.memory_space<vmem>>, vector<8x384xf32>,
    return
  }
  func.func @transform_0(%arg0: i32) -> (i32, i32) {
    %c0_i32 = arith.constant 0 : i32
    %c0_i32_0 = arith.constant 0 : i32
    return %arg0, %c0_i32 : i32, i32
  }
  func.func @transform_1(%arg0: i32) -> (i32, i32) {
    %c0_i32 = arith.constant 0 : i32
    %c0_i32_0 = arith.constant 0 : i32
    %c0_i32_1 = arith.constant 0 : i32
    return %c0_i32, %c0_i32_0 : i32, i32
  }
  func.func @transform_2(%arg0: i32) -> (i32, i32) {
    %c0_i32 = arith.constant 0 : i32
    %c0_i32_0 = arith.constant 0 : i32
    %c0_i32_1 = arith.constant 0 : i32
    return %c0_i32, %c0_i32_0 : i32, i32
  }
  func.func @transform_3(%arg0: i32) -> (i32, i32) {
    %c0_i32 = arith.constant 0 : i32
    %c0_i32_0 = arith.constant 0 : i32
    return %arg0, %c0_i32 : i32, i32
  }
  func.func @transform_4(%arg0: i32) -> (i32, i32) {
    %c0_i32 = arith.constant 0 : i32
    %c0_i32_0 = arith.constant 0 : i32
    return %arg0, %c0_i32 : i32, i32
  }
}

module attributes {stable_mosaic.version = 11 : i64} {
  func.func @_mm_kernel(%arg0: i32, %arg1: memref<8x384xf32, #tpu.memory_space<vmem>>, %arg2: memref<384x1536xbf16, #tpu.memory_space<vmem>>, %arg3: memref<1x1536xf32, #tpu.memory_space<vmem>>, %arg4: memref<1x384xf32, #tpu.memory_space<vmem>>, %arg5: memref<1x384xf32, #tpu.memory_space<vmem>>, %arg6: memref<8x1536xbf16, #tpu.memory_space<vmem>>) attributes {dimension_semantics = [#tpu.dimension_semantics<parallel>], iteration_bounds = array<i64: 2>, scalar_prefetch = 0 : i64, scratch_operands = 0 : i64, tpu.core_type = #tpu.core_type<tc>, window_params = [{transform_indices = @transform_0, window_bounds = array<i64: 8, 384>}, {pipeline_mode = #tpu.pipeline_mode<synchronous>, transform_indices = @transform_1, window_bounds = array<i64: 384, 1536>}, {pipeline_mode = #tpu.pipeline_mode<synchronous>, transform_indices = @transform_2, window_bounds = array<i64: 1, 1536>}, {pipeline_mode = #tpu.pipeline_mode<synchronous>, transform_indices = @transform_3, window_bounds = array<i64: 1, 384>}, {pipeline_mode = #tpu.pipeline_mode<synchronous>, transform_indices = @transform_4, window_bounds = array<i64: 1, 384>}, {transform_indices = @transform_5, window_bounds = array<i64: 8, 1536>}]} {
    %c0 = arith.constant 0 : index
    %c0_0 = arith.constant 0 : index
    %0 = vector.load %arg1[%c0, %c0_0] : memref<8x384xf32, #tpu.memory_space<vmem>>, vector<8x384xf32>
    %cst = arith.constant dense<0.000000e+00> : vector<8xf32>
    %1 = vector.multi_reduction <add>, %0, %cst [1] : vector<8x384xf32> to vector<8xf32>
    %2 = vector.shape_cast %1 : vector<8xf32> to vector<8x1xf32>
    %cst_1 = arith.constant 3.840000e+02 : f32
    %3 = vector.broadcast %cst_1 : f32 to vector<8x1xf32>
    %4 = arith.divf %2, %3 : vector<8x1xf32>
    %5 = vector.broadcast %4 : vector<8x1xf32> to vector<8x384xf32>
    %6 = arith.subf %0, %5 : vector<8x384xf32>
    %7 = arith.mulf %6, %6 : vector<8x384xf32>
    %cst_2 = arith.constant dense<0.000000e+00> : vector<8xf32>
    %8 = vector.multi_reduction <add>, %7, %cst_2 [1] : vector<8x384xf32> to vector<8xf32>
    %9 = vector.shape_cast %8 : vector<8xf32> to vector<8x1xf32>
    %cst_3 = arith.constant 3.840000e+02 : f32
    %10 = vector.broadcast %cst_3 : f32 to vector<8x1xf32>
    %11 = arith.divf %9, %10 : vector<8x1xf32>
    %cst_4 = arith.constant 9.99999997E-7 : f32
    %12 = vector.broadcast %cst_4 : f32 to vector<8x1xf32>
    %13 = arith.addf %11, %12 : vector<8x1xf32>
    %14 = math.rsqrt %13 : vector<8x1xf32>
    %15 = vector.broadcast %14 : vector<8x1xf32> to vector<8x384xf32>
    %16 = arith.mulf %6, %15 : vector<8x384xf32>
    %c0_5 = arith.constant 0 : index
    %c0_6 = arith.constant 0 : index
    %17 = vector.load %arg4[%c0_5, %c0_6] : memref<1x384xf32, #tpu.memory_space<vmem>>, vector<1x384xf32>
    %18 = vector.broadcast %17 : vector<1x384xf32> to vector<8x384xf32>
    %19 = arith.mulf %16, %18 : vector<8x384xf32>
    %c0_7 = arith.constant 0 : index
    %c0_8 = arith.constant 0 : index
    %20 = vector.load %arg5[%c0_7, %c0_8] : memref<1x384xf32, #tpu.memory_space<vmem>>, vector<1x384xf32>
    %21 = vector.broadcast %20 : vector<1x384xf32> to vector<8x384xf32>
    %22 = arith.addf %19, %21 : vector<8x384xf32>
    %23 = arith.truncf %22 : vector<8x384xf32> to vector<8x384xbf16>
    %c0_9 = arith.constant 0 : index
    %c0_10 = arith.constant 0 : index
    %24 = vector.load %arg2[%c0_9, %c0_10] : memref<384x1536xbf16, #tpu.memory_space<vmem>>, vector<384x1536xbf16>
    %cst_11 = arith.constant dense<0.000000e+00> : vector<8x1536xf32>
    %25 = tpu.matmul %23, %24, %cst_11 {dimension_numbers = #tpu.dot_dimension_numbers<[1], [0], [0], [1], [0, 0, 1, 1], [], []>} : vector<8x384xbf16>, vector<384x1536xbf16>, vector<8x1536xf32> -> vector<8x1536xf32>
    %c0_12 = arith.constant 0 : index
    %c0_13 = arith.constant 0 : index
    %26 = vector.load %arg3[%c0_12, %c0_13] : memref<1x1536xf32, #tpu.memory_space<vmem>>, vector<1x1536xf32>
    %27 = vector.broadcast %26 : vector<1x1536xf32> to vector<8x1536xf32>
    %28 = arith.addf %25, %27 : vector<8x1536xf32>
    %29 = arith.truncf %28 : vector<8x1536xf32> to vector<8x1536xbf16>
    %cst_14 = arith.constant 5.000000e-01 : bf16
    %30 = vector.broadcast %cst_14 : bf16 to vector<8x1536xbf16>
    %31 = arith.mulf %30, %29 : vector<8x1536xbf16>
    %cst_15 = arith.constant 4.467770e-02 : bf16
    %32 = vector.broadcast %cst_15 : bf16 to vector<8x1536xbf16>
    %33 = arith.mulf %32, %29 : vector<8x1536xbf16>
    %34 = arith.mulf %33, %29 : vector<8x1536xbf16>
    %35 = arith.mulf %34, %29 : vector<8x1536xbf16>
    %36 = arith.addf %29, %35 : vector<8x1536xbf16>
    %cst_16 = arith.constant 7.968750e-01 : bf16
    %37 = vector.broadcast %cst_16 : bf16 to vector<8x1536xbf16>
    %38 = arith.mulf %37, %36 : vector<8x1536xbf16>
    %39 = math.tanh %38 : vector<8x1536xbf16>
    %cst_17 = arith.constant 1.000000e+00 : bf16
    %40 = vector.broadcast %cst_17 : bf16 to vector<8x1536xbf16>
    %41 = arith.addf %40, %39 : vector<8x1536xbf16>
    %42 = arith.mulf %31, %41 : vector<8x1536xbf16>
    %c0_18 = arith.constant 0 : index
    %c0_19 = arith.constant 0 : index
    %43 = vector.load %arg6[%c0_18, %c0_19] : memref<8x1536xbf16, #tpu.memory_space<vmem>>, vector<8x1536xbf16>
    tpu.vector_store %arg6[%c0_18, %c0_19], %42 {strides = array<i32>} : memref<8x1536xbf16, #tpu.memory_space<vmem>>, vector<8x1536xbf16>,
    return
  }
  func.func @transform_0(%arg0: i32) -> (i32, i32) {
    %c0_i32 = arith.constant 0 : i32
    %c0_i32_0 = arith.constant 0 : i32
    return %arg0, %c0_i32 : i32, i32
  }
  func.func @transform_1(%arg0: i32) -> (i32, i32) {
    %c0_i32 = arith.constant 0 : i32
    %c0_i32_0 = arith.constant 0 : i32
    %c0_i32_1 = arith.constant 0 : i32
    return %c0_i32, %c0_i32_0 : i32, i32
  }
  func.func @transform_2(%arg0: i32) -> (i32, i32) {
    %c0_i32 = arith.constant 0 : i32
    %c0_i32_0 = arith.constant 0 : i32
    %c0_i32_1 = arith.constant 0 : i32
    return %c0_i32, %c0_i32_0 : i32, i32
  }
  func.func @transform_3(%arg0: i32) -> (i32, i32) {
    %c0_i32 = arith.constant 0 : i32
    %c0_i32_0 = arith.constant 0 : i32
    %c0_i32_1 = arith.constant 0 : i32
    return %c0_i32, %c0_i32_0 : i32, i32
  }
  func.func @transform_4(%arg0: i32) -> (i32, i32) {
    %c0_i32 = arith.constant 0 : i32
    %c0_i32_0 = arith.constant 0 : i32
    %c0_i32_1 = arith.constant 0 : i32
    return %c0_i32, %c0_i32_0 : i32, i32
  }
  func.func @transform_5(%arg0: i32) -> (i32, i32) {
    %c0_i32 = arith.constant 0 : i32
    %c0_i32_0 = arith.constant 0 : i32
    return %arg0, %c0_i32 : i32, i32
  }
}

module attributes {stable_mosaic.version = 11 : i64} {
  func.func @_ln_bn_kernel(%arg0: i32, %arg1: memref<1x2x384xf32, #tpu.memory_space<vmem>>, %arg2: memref<1x384xf32, #tpu.memory_space<vmem>>, %arg3: memref<1x384xf32, #tpu.memory_space<vmem>>, %arg4: memref<1x1x384xf32, #tpu.memory_space<vmem>>, %arg5: memref<1x1x384xf32, #tpu.memory_space<vmem>>, %arg6: memref<1x1x384xf32, #tpu.memory_space<vmem>>, %arg7: memref<1x1x384xf32, #tpu.memory_space<vmem>>, %arg8: memref<1x2x384xf32, #tpu.memory_space<vmem>>) attributes {dimension_semantics = [#tpu.dimension_semantics<parallel>], iteration_bounds = array<i64: 2>, scalar_prefetch = 0 : i64, scratch_operands = 0 : i64, tpu.core_type = #tpu.core_type<tc>, window_params = [{transform_indices = @transform_0, window_bounds = array<i64: 1, 2, 384>}, {pipeline_mode = #tpu.pipeline_mode<synchronous>, transform_indices = @transform_1, window_bounds = array<i64: 1, 384>}, {pipeline_mode = #tpu.pipeline_mode<synchronous>, transform_indices = @transform_2, window_bounds = array<i64: 1, 384>}, {transform_indices = @transform_3, window_bounds = array<i64: 1, 1, 384>}, {transform_indices = @transform_4, window_bounds = array<i64: 1, 1, 384>}, {transform_indices = @transform_5, window_bounds = array<i64: 1, 1, 384>}, {transform_indices = @transform_6, window_bounds = array<i64: 1, 1, 384>}, {transform_indices = @transform_7, window_bounds = array<i64: 1, 2, 384>}]} {
    %c0 = arith.constant 0 : index
    %c0_0 = arith.constant 0 : index
    %c0_1 = arith.constant 0 : index
    %0 = vector.load %arg1[%c0, %c0_0, %c0_1] : memref<1x2x384xf32, #tpu.memory_space<vmem>>, vector<1x2x384xf32>
    %1 = vector.shape_cast %0 : vector<1x2x384xf32> to vector<2x384xf32>
    %cst = arith.constant dense<0.000000e+00> : vector<2xf32>
    %2 = vector.multi_reduction <add>, %1, %cst [1] : vector<2x384xf32> to vector<2xf32>
    %3 = vector.shape_cast %2 : vector<2xf32> to vector<2x1xf32>
    %cst_2 = arith.constant 3.840000e+02 : f32
    %4 = vector.broadcast %cst_2 : f32 to vector<2x1xf32>
    %5 = arith.divf %3, %4 : vector<2x1xf32>
    %6 = vector.broadcast %5 : vector<2x1xf32> to vector<2x384xf32>
    %7 = arith.subf %1, %6 : vector<2x384xf32>
    %8 = arith.mulf %7, %7 : vector<2x384xf32>
    %cst_3 = arith.constant dense<0.000000e+00> : vector<2xf32>
    %9 = vector.multi_reduction <add>, %8, %cst_3 [1] : vector<2x384xf32> to vector<2xf32>
    %10 = vector.shape_cast %9 : vector<2xf32> to vector<2x1xf32>
    %cst_4 = arith.constant 3.840000e+02 : f32
    %11 = vector.broadcast %cst_4 : f32 to vector<2x1xf32>
    %12 = arith.divf %10, %11 : vector<2x1xf32>
    %cst_5 = arith.constant 9.99999997E-7 : f32
    %13 = vector.broadcast %cst_5 : f32 to vector<2x1xf32>
    %14 = arith.addf %12, %13 : vector<2x1xf32>
    %15 = math.rsqrt %14 : vector<2x1xf32>
    %16 = vector.broadcast %15 : vector<2x1xf32> to vector<2x384xf32>
    %17 = arith.mulf %7, %16 : vector<2x384xf32>
    %c0_6 = arith.constant 0 : index
    %c0_7 = arith.constant 0 : index
    %18 = vector.load %arg2[%c0_6, %c0_7] : memref<1x384xf32, #tpu.memory_space<vmem>>, vector<1x384xf32>
    %19 = vector.broadcast %18 : vector<1x384xf32> to vector<2x384xf32>
    %20 = arith.mulf %17, %19 : vector<2x384xf32>
    %c0_8 = arith.constant 0 : index
    %c0_9 = arith.constant 0 : index
    %21 = vector.load %arg3[%c0_8, %c0_9] : memref<1x384xf32, #tpu.memory_space<vmem>>, vector<1x384xf32>
    %22 = vector.broadcast %21 : vector<1x384xf32> to vector<2x384xf32>
    %23 = arith.addf %20, %22 : vector<2x384xf32>
    %c0_10 = arith.constant 0 : index
    %c0_11 = arith.constant 0 : index
    %c0_12 = arith.constant 0 : index
    %24 = vector.load %arg7[%c0_10, %c0_11, %c0_12] : memref<1x1x384xf32, #tpu.memory_space<vmem>>, vector<1x1x384xf32>
    %25 = vector.shape_cast %24 : vector<1x1x384xf32> to vector<1x384xf32>
    %cst_13 = arith.constant 9.99999974E-6 : f32
    %26 = vector.broadcast %cst_13 : f32 to vector<1x384xf32>
    %27 = arith.addf %25, %26 : vector<1x384xf32>
    %28 = math.rsqrt %27 : vector<1x384xf32>
    %c0_14 = arith.constant 0 : index
    %c0_15 = arith.constant 0 : index
    %c0_16 = arith.constant 0 : index
    %29 = vector.load %arg6[%c0_14, %c0_15, %c0_16] : memref<1x1x384xf32, #tpu.memory_space<vmem>>, vector<1x1x384xf32>
    %30 = vector.shape_cast %29 : vector<1x1x384xf32> to vector<1x384xf32>
    %31 = vector.broadcast %30 : vector<1x384xf32> to vector<2x384xf32>
    %32 = arith.subf %23, %31 : vector<2x384xf32>
    %33 = vector.broadcast %28 : vector<1x384xf32> to vector<2x384xf32>
    %34 = arith.mulf %32, %33 : vector<2x384xf32>
    %c0_17 = arith.constant 0 : index
    %c0_18 = arith.constant 0 : index
    %c0_19 = arith.constant 0 : index
    %35 = vector.load %arg4[%c0_17, %c0_18, %c0_19] : memref<1x1x384xf32, #tpu.memory_space<vmem>>, vector<1x1x384xf32>
    %36 = vector.shape_cast %35 : vector<1x1x384xf32> to vector<1x384xf32>
    %37 = vector.broadcast %36 : vector<1x384xf32> to vector<2x384xf32>
    %38 = arith.mulf %34, %37 : vector<2x384xf32>
    %c0_20 = arith.constant 0 : index
    %c0_21 = arith.constant 0 : index
    %c0_22 = arith.constant 0 : index
    %39 = vector.load %arg5[%c0_20, %c0_21, %c0_22] : memref<1x1x384xf32, #tpu.memory_space<vmem>>, vector<1x1x384xf32>
    %40 = vector.shape_cast %39 : vector<1x1x384xf32> to vector<1x384xf32>
    %41 = vector.broadcast %40 : vector<1x384xf32> to vector<2x384xf32>
    %42 = arith.addf %38, %41 : vector<2x384xf32>
    %c0_23 = arith.constant 0 : index
    %c0_24 = arith.constant 0 : index
    %c0_25 = arith.constant 0 : index
    %43 = vector.load %arg8[%c0_23, %c0_24, %c0_25] : memref<1x2x384xf32, #tpu.memory_space<vmem>>, vector<1x2x384xf32>
    %44 = vector.shape_cast %43 : vector<1x2x384xf32> to vector<2x384xf32>
    %45 = vector.shape_cast %42 : vector<2x384xf32> to vector<1x2x384xf32>
    tpu.vector_store %arg8[%c0_23, %c0_24, %c0_25], %45 {strides = array<i32>} : memref<1x2x384xf32, #tpu.memory_space<vmem>>, vector<1x2x384xf32>,
    return
  }
  func.func @transform_0(%arg0: i32) -> (i32, i32, i32) {
    %c0_i32 = arith.constant 0 : i32
    %c0_i32_0 = arith.constant 0 : i32
    %c0_i32_1 = arith.constant 0 : i32
    return %arg0, %c0_i32, %c0_i32_0 : i32, i32, i32
  }
  func.func @transform_1(%arg0: i32) -> (i32, i32) {
    %c0_i32 = arith.constant 0 : i32
    %c0_i32_0 = arith.constant 0 : i32
    %c0_i32_1 = arith.constant 0 : i32
    return %c0_i32, %c0_i32_0 : i32, i32
  }
  func.func @transform_2(%arg0: i32) -> (i32, i32) {
    %c0_i32 = arith.constant 0 : i32
    %c0_i32_0 = arith.constant 0 : i32
    %c0_i32_1 = arith.constant 0 : i32
    return %c0_i32, %c0_i32_0 : i32, i32
  }
  func.func @transform_3(%arg0: i32) -> (i32, i32, i32) {
    %c0_i32 = arith.constant 0 : i32
    %c0_i32_0 = arith.constant 0 : i32
    %c0_i32_1 = arith.constant 0 : i32
    return %arg0, %c0_i32, %c0_i32_0 : i32, i32, i32
  }
  func.func @transform_4(%arg0: i32) -> (i32, i32, i32) {
    %c0_i32 = arith.constant 0 : i32
    %c0_i32_0 = arith.constant 0 : i32
    %c0_i32_1 = arith.constant 0 : i32
    return %arg0, %c0_i32, %c0_i32_0 : i32, i32, i32
  }
  func.func @transform_5(%arg0: i32) -> (i32, i32, i32) {
    %c0_i32 = arith.constant 0 : i32
    %c0_i32_0 = arith.constant 0 : i32
    %c0_i32_1 = arith.constant 0 : i32
    return %arg0, %c0_i32, %c0_i32_0 : i32, i32, i32
  }
  func.func @transform_6(%arg0: i32) -> (i32, i32, i32) {
    %c0_i32 = arith.constant 0 : i32
    %c0_i32_0 = arith.constant 0 : i32
    %c0_i32_1 = arith.constant 0 : i32
    return %arg0, %c0_i32, %c0_i32_0 : i32, i32, i32
  }
  func.func @transform_7(%arg0: i32) -> (i32, i32, i32) {
    %c0_i32 = arith.constant 0 : i32
    %c0_i32_0 = arith.constant 0 : i32
    %c0_i32_1 = arith.constant 0 : i32
    return %arg0, %c0_i32, %c0_i32_0 : i32, i32, i32
  }
}

</mosaic_0001>

<llo_original>
// kernel: build_transformer_forward.12
$region0: #{build_transformer_forward.12}
  #allocation0 [shape = 'u32[]', space=smem, size = 0x4, offset = 0x4, fixed_abs, tag = 'smem constant byte address 0x4 - core index']
  #allocation1 [shape = 'u32[144,128]{1,0:T(1,128)}', space=vmem, size = 0x12000, scoped, tag = 'internal scratch']
  %s0 = inlined_call_operand.vmem [shape: bf16[8,768], index: 0, kind: input, shape index: {}]
  %s1 = inlined_call_operand.hbm [shape: bf16[768,384], index: 1, kind: input, shape index: {}]
  %s2 = inlined_call_operand.vmem [shape: f32[1,384], index: 2, kind: input, shape index: {}]
  %s3 = inlined_call_operand.vmem [shape: f32[8,384], index: 3, kind: output, shape index: {}]
  %s4 = sld [smem:[#allocation0]]
  $region26: #{build_transformer_forward.12} parent=0
    _
  %s6 = ssub.s32 1, %s4
  %s7 = scalar_select 0, %s6, %s4
  $region1: #{build_transformer_forward.12} parent=0
    #allocation2 [shape = 'u8[589824]{0}', space=vmem, size = 0x90000, scoped, tag = 'input window, operand 1, single buffered']
    #allocation3 [shape = 's32[1]{0}', space=sflag, size = 0x4, scoped, tag = 'scoped memory for build_transformer_forward.12']
    %8 = vsyncpa [#allocation3], 0
    // Predicated region
    $region2: #{build_transformer_forward.12} parent=1 // pred_check
      _
    $region3: #{build_transformer_forward.12} parent=1 // pred_check_branch
      %10 = sbr.rel (0) target = $region5
    $region4: #{build_transformer_forward.12} parent=1 // pred_region
      _
    $region5: #{build_transformer_forward.12} parent=1 // pred_fallthru
      _
    // Predicated region
    $region6: #{build_transformer_forward.12} parent=1 // pred_check
      _
    $region7: #{build_transformer_forward.12} parent=1 // pred_check_branch
      %12 = sbr.rel (0) target = $region9
    $region8: #{build_transformer_forward.12} parent=1 // pred_region
      %s14 = ssub.s32 18432, 18432
      %15 = vsyncadd [#allocation3], %s14
      %s16 = sshll.u32 [#allocation2], 4
      %s17 = int_to_ptr.vmem [resolvable:$true] %s16
      %22 = dma.hbm_to_vmem [thread:$0]  %s1, 18432, %s17, [#allocation3], 192, 192, 12
    $region9: #{build_transformer_forward.12} parent=1 // pred_fallthru
      _
    // Predicated region
    $region10: #{build_transformer_forward.12} parent=1 // pred_check
      _
    $region11: #{build_transformer_forward.12} parent=1 // pred_check_branch
      %24 = sbr.rel (0) target = $region13
    $region12: #{build_transformer_forward.12} parent=1 // pred_region
      _
    $region13: #{build_transformer_forward.12} parent=1 // pred_fallthru
      _
    // Predicated region
    $region14: #{build_transformer_forward.12} parent=1 // pred_check
      _
    $region15: #{build_transformer_forward.12} parent=1 // pred_check_branch
      %26 = sbr.rel (0) target = $region17
    $region16: #{build_transformer_forward.12} parent=1 // pred_region
      %27 = dma.done [#allocation3], 18432
    $region17: #{build_transformer_forward.12} parent=1 // pred_fallthru
      _
    %v29 = vld [vmem:[%s0] sm:$0xff]
    %v30 = vld [vmem:[%s0 + $0x8] sm:$0xff]
    %v31 = vld [vmem:[%s0 + $0x10] sm:$0xff]
    %v32 = vld [vmem:[#allocation2] sm:$0xff]
    %v33 = vld [vmem:[#allocation2 + $0x8] sm:$0xf]
    %v34 = vld [vmem:[#allocation2 + $0xc] sm:$0xff]
    %v35 = vld [vmem:[#allocation2 + $0x14] sm:$0xf]
    %v36 = vld [vmem:[#allocation2 + $0x18] sm:$0xff]
    %v37 = vld [vmem:[#allocation2 + $0x20] sm:$0xf]
    %v38 = vld [vmem:[#allocation2 + $0x24] sm:$0xff]
    %v39 = vld [vmem:[#allocation2 + $0x2c] sm:$0xf]
    %v40 = vld [vmem:[#allocation2 + $0x30] sm:$0xff]
    %v41 = vld [vmem:[#allocation2 + $0x38] sm:$0xf]
    %v42 = vld [vmem:[#allocation2 + $0x3c] sm:$0xff]
    %v43 = vld [vmem:[#allocation2 + $0x44] sm:$0xf]
    %v44 = vld [vmem:[#allocation2 + $0x48] sm:$0xff]
    %v45 = vld [vmem:[#allocation2 + $0x50] sm:$0xf]
    %v46 = vld [vmem:[#allocation2 + $0x54] sm:$0xff]
    %v47 = vld [vmem:[#allocation2 + $0x5c] sm:$0xf]
    %v48 = vld [vmem:[#allocation2 + $0x60] sm:$0xff]
    %v49 = vld [vmem:[#allocation2 + $0x68] sm:$0xf]
    %v50 = vld [vmem:[#allocation2 + $0x6c] sm:$0xff]
    %v51 = vld [vmem:[#allocation2 + $0x74] sm:$0xf]
    %v52 = vld [vmem:[#allocation2 + $0x78] sm:$0xff]
    %v53 = vld [vmem:[#allocation2 + $0x80] sm:$0xf]
    %v54 = vld [vmem:[#allocation2 + $0x84] sm:$0xff]
    %v55 = vld [vmem:[#allocation2 + $0x8c] sm:$0xf]
    %v56 = vld [vmem:[#allocation2 + $0x90] sm:$0xff]
    %v57 = vld [vmem:[#allocation2 + $0x98] sm:$0xf]
    %v58 = vld [vmem:[#allocation2 + $0x9c] sm:$0xff]
    %v59 = vld [vmem:[#allocation2 + $0xa4] sm:$0xf]
    %v60 = vld [vmem:[#allocation2 + $0xa8] sm:$0xff]
    %v61 = vld [vmem:[#allocation2 + $0xb0] sm:$0xf]
    %v62 = vld [vmem:[#allocation2 + $0xb4] sm:$0xff]
    %v63 = vld [vmem:[#allocation2 + $0xbc] sm:$0xf]
    %v64 = vld [vmem:[#allocation2 + $0xc0] sm:$0xff]
    %v65 = vld [vmem:[#allocation2 + $0xc8] sm:$0xf]
    %v66 = vld [vmem:[#allocation2 + $0xcc] sm:$0xff]
    %v67 = vld [vmem:[#allocation2 + $0xd4] sm:$0xf]
    %v68 = vld [vmem:[#allocation2 + $0xd8] sm:$0xff]
    %v69 = vld [vmem:[#allocation2 + $0xe0] sm:$0xf]
    %v70 = vld [vmem:[#allocation2 + $0xe4] sm:$0xff]
    %v71 = vld [vmem:[#allocation2 + $0xec] sm:$0xf]
    %v72 = vld [vmem:[#allocation2 + $0xf0] sm:$0xff]
    %v73 = vld [vmem:[#allocation2 + $0xf8] sm:$0xf]
    %v74 = vld [vmem:[#allocation2 + $0xfc] sm:$0xff]
    %v75 = vld [vmem:[#allocation2 + $0x104] sm:$0xf]
    %v76 = vld [vmem:[#allocation2 + $0x108] sm:$0xff]
    %v77 = vld [vmem:[#allocation2 + $0x110] sm:$0xf]
    %v78 = vld [vmem:[#allocation2 + $0x114] sm:$0xff]
    %v79 = vld [vmem:[#allocation2 + $0x11c] sm:$0xf]
    %v80 = vld [vmem:[#allocation2 + $0x120] sm:$0xff]
    %v81 = vld [vmem:[#allocation2 + $0x128] sm:$0xf]
    %v82 = vld [vmem:[#allocation2 + $0x12c] sm:$0xff]
    %v83 = vld [vmem:[#allocation2 + $0x134] sm:$0xf]
    %v84 = vld [vmem:[#allocation2 + $0x138] sm:$0xff]
    %v85 = vld [vmem:[#allocation2 + $0x140] sm:$0xf]
    %v86 = vld [vmem:[#allocation2 + $0x144] sm:$0xff]
    %v87 = vld [vmem:[#allocation2 + $0x14c] sm:$0xf]
    %v88 = vld [vmem:[#allocation2 + $0x150] sm:$0xff]
    %v89 = vld [vmem:[#allocation2 + $0x158] sm:$0xf]
    %v90 = vld [vmem:[#allocation2 + $0x15c] sm:$0xff]
    %v91 = vld [vmem:[#allocation2 + $0x164] sm:$0xf]
    %v92 = vld [vmem:[#allocation2 + $0x168] sm:$0xff]
    %v93 = vld [vmem:[#allocation2 + $0x170] sm:$0xf]
    %v94 = vld [vmem:[#allocation2 + $0x174] sm:$0xff]
    %v95 = vld [vmem:[#allocation2 + $0x17c] sm:$0xf]
    %v96 = vld [vmem:[#allocation2 + $0x180] sm:$0xff]
    %v97 = vld [vmem:[#allocation2 + $0x188] sm:$0xf]
    %v98 = vld [vmem:[#allocation2 + $0x18c] sm:$0xff]
    %v99 = vld [vmem:[#allocation2 + $0x194] sm:$0xf]
    %v100 = vld [vmem:[#allocation2 + $0x198] sm:$0xff]
    %v101 = vld [vmem:[#allocation2 + $0x1a0] sm:$0xf]
    %v102 = vld [vmem:[#allocation2 + $0x1a4] sm:$0xff]
    %v103 = vld [vmem:[#allocation2 + $0x1ac] sm:$0xf]
    %v104 = vld [vmem:[#allocation2 + $0x1b0] sm:$0xff]
    %v105 = vld [vmem:[#allocation2 + $0x1b8] sm:$0xf]
    %v106 = vld [vmem:[#allocation2 + $0x1bc] sm:$0xff]
    %v107 = vld [vmem:[#allocation2 + $0x1c4] sm:$0xf]
    %v108 = vld [vmem:[#allocation2 + $0x1c8] sm:$0xff]
    %v109 = vld [vmem:[#allocation2 + $0x1d0] sm:$0xf]
    %v110 = vld [vmem:[#allocation2 + $0x1d4] sm:$0xff]
    %v111 = vld [vmem:[#allocation2 + $0x1dc] sm:$0xf]
    %v112 = vld [vmem:[#allocation2 + $0x1e0] sm:$0xff]
    %v113 = vld [vmem:[#allocation2 + $0x1e8] sm:$0xf]
    %v114 = vld [vmem:[#allocation2 + $0x1ec] sm:$0xff]
    %v115 = vld [vmem:[#allocation2 + $0x1f4] sm:$0xf]
    %v116 = vld [vmem:[#allocation2 + $0x1f8] sm:$0xff]
    %v117 = vld [vmem:[#allocation2 + $0x200] sm:$0xf]
    %v118 = vld [vmem:[#allocation2 + $0x204] sm:$0xff]
    %v119 = vld [vmem:[#allocation2 + $0x20c] sm:$0xf]
    %v120 = vld [vmem:[#allocation2 + $0x210] sm:$0xff]
    %v121 = vld [vmem:[#allocation2 + $0x218] sm:$0xf]
    %v122 = vld [vmem:[#allocation2 + $0x21c] sm:$0xff]
    %v123 = vld [vmem:[#allocation2 + $0x224] sm:$0xf]
    %v124 = vld [vmem:[#allocation2 + $0x228] sm:$0xff]
    %v125 = vld [vmem:[#allocation2 + $0x230] sm:$0xf]
    %v126 = vld [vmem:[#allocation2 + $0x234] sm:$0xff]
    %v127 = vld [vmem:[#allocation2 + $0x23c] sm:$0xf]
    %v128 = vld [vmem:[#allocation2 + $0x240] sm:$0xff]
    %v129 = vld [vmem:[#allocation2 + $0x248] sm:$0xf]
    %v130 = vld [vmem:[#allocation2 + $0x24c] sm:$0xff]
    %v131 = vld [vmem:[#allocation2 + $0x254] sm:$0xf]
    %v132 = vld [vmem:[#allocation2 + $0x258] sm:$0xff]
    %v133 = vld [vmem:[#allocation2 + $0x260] sm:$0xf]
    %v134 = vld [vmem:[#allocation2 + $0x264] sm:$0xff]
    %v135 = vld [vmem:[#allocation2 + $0x26c] sm:$0xf]
    %v136 = vld [vmem:[#allocation2 + $0x270] sm:$0xff]
    %v137 = vld [vmem:[#allocation2 + $0x278] sm:$0xf]
    %v138 = vld [vmem:[#allocation2 + $0x27c] sm:$0xff]
    %v139 = vld [vmem:[#allocation2 + $0x284] sm:$0xf]
    %v140 = vld [vmem:[#allocation2 + $0x288] sm:$0xff]
    %v141 = vld [vmem:[#allocation2 + $0x290] sm:$0xf]
    %v142 = vld [vmem:[#allocation2 + $0x294] sm:$0xff]
    %v143 = vld [vmem:[#allocation2 + $0x29c] sm:$0xf]
    %v144 = vld [vmem:[#allocation2 + $0x2a0] sm:$0xff]
    %v145 = vld [vmem:[#allocation2 + $0x2a8] sm:$0xf]
    %v146 = vld [vmem:[#allocation2 + $0x2ac] sm:$0xff]
    %v147 = vld [vmem:[#allocation2 + $0x2b4] sm:$0xf]
    %v148 = vld [vmem:[#allocation2 + $0x2b8] sm:$0xff]
    %v149 = vld [vmem:[#allocation2 + $0x2c0] sm:$0xf]
    %v150 = vld [vmem:[#allocation2 + $0x2c4] sm:$0xff]
    %v151 = vld [vmem:[#allocation2 + $0x2cc] sm:$0xf]
    %v152 = vld [vmem:[#allocation2 + $0x2d0] sm:$0xff]
    %v153 = vld [vmem:[#allocation2 + $0x2d8] sm:$0xf]
    %v154 = vld [vmem:[#allocation2 + $0x2dc] sm:$0xff]
    %v155 = vld [vmem:[#allocation2 + $0x2e4] sm:$0xf]
    %v156 = vld [vmem:[#allocation2 + $0x2e8] sm:$0xff]
    %v157 = vld [vmem:[#allocation2 + $0x2f0] sm:$0xf]
    %v158 = vld [vmem:[#allocation2 + $0x2f4] sm:$0xff]
    %v159 = vld [vmem:[#allocation2 + $0x2fc] sm:$0xf]
    %v160 = vld [vmem:[#allocation2 + $0x300] sm:$0xff]
    %v161 = vld [vmem:[#allocation2 + $0x308] sm:$0xf]
    %v162 = vld [vmem:[#allocation2 + $0x30c] sm:$0xff]
    %v163 = vld [vmem:[#allocation2 + $0x314] sm:$0xf]
    %v164 = vld [vmem:[#allocation2 + $0x318] sm:$0xff]
    %v165 = vld [vmem:[#allocation2 + $0x320] sm:$0xf]
    %v166 = vld [vmem:[#allocation2 + $0x324] sm:$0xff]
    %v167 = vld [vmem:[#allocation2 + $0x32c] sm:$0xf]
    %v168 = vld [vmem:[#allocation2 + $0x330] sm:$0xff]
    %v169 = vld [vmem:[#allocation2 + $0x338] sm:$0xf]
    %v170 = vld [vmem:[#allocation2 + $0x33c] sm:$0xff]
    %v171 = vld [vmem:[#allocation2 + $0x344] sm:$0xf]
    %v172 = vld [vmem:[#allocation2 + $0x348] sm:$0xff]
    %v173 = vld [vmem:[#allocation2 + $0x350] sm:$0xf]
    %v174 = vld [vmem:[#allocation2 + $0x354] sm:$0xff]
    %v175 = vld [vmem:[#allocation2 + $0x35c] sm:$0xf]
    %v176 = vld [vmem:[#allocation2 + $0x360] sm:$0xff]
    %v177 = vld [vmem:[#allocation2 + $0x368] sm:$0xf]
    %v178 = vld [vmem:[#allocation2 + $0x36c] sm:$0xff]
    %v179 = vld [vmem:[#allocation2 + $0x374] sm:$0xf]
    %v180 = vld [vmem:[#allocation2 + $0x378] sm:$0xff]
    %v181 = vld [vmem:[#allocation2 + $0x380] sm:$0xf]
    %v182 = vld [vmem:[#allocation2 + $0x384] sm:$0xff]
    %v183 = vld [vmem:[#allocation2 + $0x38c] sm:$0xf]
    %v184 = vld [vmem:[#allocation2 + $0x390] sm:$0xff]
    %v185 = vld [vmem:[#allocation2 + $0x398] sm:$0xf]
    %v186 = vld [vmem:[#allocation2 + $0x39c] sm:$0xff]
    %v187 = vld [vmem:[#allocation2 + $0x3a4] sm:$0xf]
    %v188 = vld [vmem:[#allocation2 + $0x3a8] sm:$0xff]
    %v189 = vld [vmem:[#allocation2 + $0x3b0] sm:$0xf]
    %v190 = vld [vmem:[#allocation2 + $0x3b4] sm:$0xff]
    %v191 = vld [vmem:[#allocation2 + $0x3bc] sm:$0xf]
    %v192 = vld [vmem:[#allocation2 + $0x3c0] sm:$0xff]
    %v193 = vld [vmem:[#allocation2 + $0x3c8] sm:$0xf]
    %v194 = vld [vmem:[#allocation2 + $0x3cc] sm:$0xff]
    %v195 = vld [vmem:[#allocation2 + $0x3d4] sm:$0xf]
    %v196 = vld [vmem:[#allocation2 + $0x3d8] sm:$0xff]
    %v197 = vld [vmem:[#allocation2 + $0x3e0] sm:$0xf]
    %v198 = vld [vmem:[#allocation2 + $0x3e4] sm:$0xff]
    %v199 = vld [vmem:[#allocation2 + $0x3ec] sm:$0xf]
    %v200 = vld [vmem:[#allocation2 + $0x3f0] sm:$0xff]
    %v201 = vld [vmem:[#allocation2 + $0x3f8] sm:$0xf]
    %v202 = vld [vmem:[#allocation2 + $0x3fc] sm:$0xff]
    %v203 = vld [vmem:[#allocation2 + $0x404] sm:$0xf]
    %v204 = vld [vmem:[#allocation2 + $0x408] sm:$0xff]
    %v205 = vld [vmem:[#allocation2 + $0x410] sm:$0xf]
    %v206 = vld [vmem:[#allocation2 + $0x414] sm:$0xff]
    %v207 = vld [vmem:[#allocation2 + $0x41c] sm:$0xf]
    %v208 = vld [vmem:[#allocation2 + $0x420] sm:$0xff]
    %v209 = vld [vmem:[#allocation2 + $0x428] sm:$0xf]
    %v210 = vld [vmem:[#allocation2 + $0x42c] sm:$0xff]
    %v211 = vld [vmem:[#allocation2 + $0x434] sm:$0xf]
    %v212 = vld [vmem:[#allocation2 + $0x438] sm:$0xff]
    %v213 = vld [vmem:[#allocation2 + $0x440] sm:$0xf]
    %v214 = vld [vmem:[#allocation2 + $0x444] sm:$0xff]
    %v215 = vld [vmem:[#allocation2 + $0x44c] sm:$0xf]
    %v216 = vld [vmem:[#allocation2 + $0x450] sm:$0xff]
    %v217 = vld [vmem:[#allocation2 + $0x458] sm:$0xf]
    %v218 = vld [vmem:[#allocation2 + $0x45c] sm:$0xff]
    %v219 = vld [vmem:[#allocation2 + $0x464] sm:$0xf]
    %v220 = vld [vmem:[#allocation2 + $0x468] sm:$0xff]
    %v221 = vld [vmem:[#allocation2 + $0x470] sm:$0xf]
    %v222 = vld [vmem:[#allocation2 + $0x474] sm:$0xff]
    %v223 = vld [vmem:[#allocation2 + $0x47c] sm:$0xf]
    %v224 = vld [vmem:[%s2] sm:$0x7]
    %v226 = vlaneseq
    %v227 = vshrl.u32 %v226, 7
    %v228 = vsub.s32 0, %v227
    %v229 = vrot.slane %v224, %v228
    %v230 = vlaneseq
    %v231 = vshrl.u32 %v230, 7
    %v232 = vsub.s32 1, %v231
    %v233 = vrot.slane %v224, %v232
    %v234 = vlaneseq
    %v235 = vshrl.u32 %v234, 7
    %v236 = vsub.s32 2, %v235
    %v237 = vrot.slane %v224, %v236
    %v244 = vunpack.c.l.b16 %v29
    %v245 = vunpack.c.h.b16 %v29
    %v246 = vunpack.c.l.b16 %v30
    %v247 = vunpack.c.h.b16 %v30
    %v248 = vunpack.c.l.b16 %v31
    %v249 = vunpack.c.h.b16 %v31
    %v250 = vpack.c.b16 %v244, %v244
    %v251 = vpack.c.b16 %v245, %v245
    %v252 = vpack.c.b16 %v246, %v246
    %v253 = vpack.c.b16 %v247, %v247
    %v254 = vpack.c.b16 %v248, %v248
    %v255 = vpack.c.b16 %v249, %v249
    %v454 = vunpack.c.l.b16 %v32
    %v455 = vunpack.c.h.b16 %v32
    %v456 = vunpack.c.l.b16 %v33
    %v457 = vunpack.c.l.b16 %v34
    %v458 = vunpack.c.h.b16 %v34
    %v459 = vunpack.c.l.b16 %v35
    %v460 = vunpack.c.l.b16 %v36
    %v461 = vunpack.c.h.b16 %v36
    %v462 = vunpack.c.l.b16 %v37
    %v463 = vunpack.c.l.b16 %v38
    %v464 = vunpack.c.h.b16 %v38
    %v465 = vunpack.c.l.b16 %v39
    %v466 = vunpack.c.l.b16 %v40
    %v467 = vunpack.c.h.b16 %v40
    %v468 = vunpack.c.l.b16 %v41
    %v469 = vunpack.c.l.b16 %v42
    %v470 = vunpack.c.h.b16 %v42
    %v471 = vunpack.c.l.b16 %v43
    %v472 = vunpack.c.l.b16 %v44
    %v473 = vunpack.c.h.b16 %v44
    %v474 = vunpack.c.l.b16 %v45
    %v475 = vunpack.c.l.b16 %v46
    %v476 = vunpack.c.h.b16 %v46
    %v477 = vunpack.c.l.b16 %v47
    %v478 = vunpack.c.l.b16 %v48
    %v479 = vunpack.c.h.b16 %v48
    %v480 = vunpack.c.l.b16 %v49
    %v481 = vunpack.c.l.b16 %v50
    %v482 = vunpack.c.h.b16 %v50
    %v483 = vunpack.c.l.b16 %v51
    %v484 = vunpack.c.l.b16 %v52
    %v485 = vunpack.c.h.b16 %v52
    %v486 = vunpack.c.l.b16 %v53
    %v487 = vunpack.c.l.b16 %v54
    %v488 = vunpack.c.h.b16 %v54
    %v489 = vunpack.c.l.b16 %v55
    %v490 = vunpack.c.l.b16 %v56
    %v491 = vunpack.c.h.b16 %v56
    %v492 = vunpack.c.l.b16 %v57
    %v493 = vunpack.c.l.b16 %v58
    %v494 = vunpack.c.h.b16 %v58
    %v495 = vunpack.c.l.b16 %v59
    %v496 = vunpack.c.l.b16 %v60
    %v497 = vunpack.c.h.b16 %v60
    %v498 = vunpack.c.l.b16 %v61
    %v499 = vunpack.c.l.b16 %v62
    %v500 = vunpack.c.h.b16 %v62
    %v501 = vunpack.c.l.b16 %v63
    %v502 = vunpack.c.l.b16 %v64
    %v503 = vunpack.c.h.b16 %v64
    %v504 = vunpack.c.l.b16 %v65
    %v505 = vunpack.c.l.b16 %v66
    %v506 = vunpack.c.h.b16 %v66
    %v507 = vunpack.c.l.b16 %v67
    %v508 = vunpack.c.l.b16 %v68
    %v509 = vunpack.c.h.b16 %v68
    %v510 = vunpack.c.l.b16 %v69
    %v511 = vunpack.c.l.b16 %v70
    %v512 = vunpack.c.h.b16 %v70
    %v513 = vunpack.c.l.b16 %v71
    %v514 = vunpack.c.l.b16 %v72
    %v515 = vunpack.c.h.b16 %v72
    %v516 = vunpack.c.l.b16 %v73
    %v517 = vunpack.c.l.b16 %v74
    %v518 = vunpack.c.h.b16 %v74
    %v519 = vunpack.c.l.b16 %v75
    %v520 = vunpack.c.l.b16 %v76
    %v521 = vunpack.c.h.b16 %v76
    %v522 = vunpack.c.l.b16 %v77
    %v523 = vunpack.c.l.b16 %v78
    %v524 = vunpack.c.h.b16 %v78
    %v525 = vunpack.c.l.b16 %v79
    %v526 = vunpack.c.l.b16 %v80
    %v527 = vunpack.c.h.b16 %v80
    %v528 = vunpack.c.l.b16 %v81
    %v529 = vunpack.c.l.b16 %v82
    %v530 = vunpack.c.h.b16 %v82
    %v531 = vunpack.c.l.b16 %v83
    %v532 = vunpack.c.l.b16 %v84
    %v533 = vunpack.c.h.b16 %v84
    %v534 = vunpack.c.l.b16 %v85
    %v535 = vunpack.c.l.b16 %v86
    %v536 = vunpack.c.h.b16 %v86
    %v537 = vunpack.c.l.b16 %v87
    %v538 = vunpack.c.l.b16 %v88
    %v539 = vunpack.c.h.b16 %v88
    %v540 = vunpack.c.l.b16 %v89
    %v541 = vunpack.c.l.b16 %v90
    %v542 = vunpack.c.h.b16 %v90
    %v543 = vunpack.c.l.b16 %v91
    %v544 = vunpack.c.l.b16 %v92
    %v545 = vunpack.c.h.b16 %v92
    %v546 = vunpack.c.l.b16 %v93
    %v547 = vunpack.c.l.b16 %v94
    %v548 = vunpack.c.h.b16 %v94
    %v549 = vunpack.c.l.b16 %v95
    %v550 = vunpack.c.l.b16 %v96
    %v551 = vunpack.c.h.b16 %v96
    %v552 = vunpack.c.l.b16 %v97
    %v553 = vunpack.c.l.b16 %v98
    %v554 = vunpack.c.h.b16 %v98
    %v555 = vunpack.c.l.b16 %v99
    %v556 = vunpack.c.l.b16 %v100
    %v557 = vunpack.c.h.b16 %v100
    %v558 = vunpack.c.l.b16 %v101
    %v559 = vunpack.c.l.b16 %v102
    %v560 = vunpack.c.h.b16 %v102
    %v561 = vunpack.c.l.b16 %v103
    %v562 = vunpack.c.l.b16 %v104
    %v563 = vunpack.c.h.b16 %v104
    %v564 = vunpack.c.l.b16 %v105
    %v565 = vunpack.c.l.b16 %v106
    %v566 = vunpack.c.h.b16 %v106
    %v567 = vunpack.c.l.b16 %v107
    %v568 = vunpack.c.l.b16 %v108
    %v569 = vunpack.c.h.b16 %v108
    %v570 = vunpack.c.l.b16 %v109
    %v571 = vunpack.c.l.b16 %v110
    %v572 = vunpack.c.h.b16 %v110
    %v573 = vunpack.c.l.b16 %v111
    %v574 = vunpack.c.l.b16 %v112
    %v575 = vunpack.c.h.b16 %v112
    %v576 = vunpack.c.l.b16 %v113
    %v577 = vunpack.c.l.b16 %v114
    %v578 = vunpack.c.h.b16 %v114
    %v579 = vunpack.c.l.b16 %v115
    %v580 = vunpack.c.l.b16 %v116
    %v581 = vunpack.c.h.b16 %v116
    %v582 = vunpack.c.l.b16 %v117
    %v583 = vunpack.c.l.b16 %v118
    %v584 = vunpack.c.h.b16 %v118
    %v585 = vunpack.c.l.b16 %v119
    %v586 = vunpack.c.l.b16 %v120
    %v587 = vunpack.c.h.b16 %v120
    %v588 = vunpack.c.l.b16 %v121
    %v589 = vunpack.c.l.b16 %v122
    %v590 = vunpack.c.h.b16 %v122
    %v591 = vunpack.c.l.b16 %v123
    %v592 = vunpack.c.l.b16 %v124
    %v593 = vunpack.c.h.b16 %v124
    %v594 = vunpack.c.l.b16 %v125
    %v595 = vunpack.c.l.b16 %v126
    %v596 = vunpack.c.h.b16 %v126
    %v597 = vunpack.c.l.b16 %v127
    %v598 = vunpack.c.l.b16 %v128
    %v599 = vunpack.c.h.b16 %v128
    %v600 = vunpack.c.l.b16 %v129
    %v601 = vunpack.c.l.b16 %v130
    %v602 = vunpack.c.h.b16 %v130
    %v603 = vunpack.c.l.b16 %v131
    %v604 = vunpack.c.l.b16 %v132
    %v605 = vunpack.c.h.b16 %v132
    %v606 = vunpack.c.l.b16 %v133
    %v607 = vunpack.c.l.b16 %v134
    %v608 = vunpack.c.h.b16 %v134
    %v609 = vunpack.c.l.b16 %v135
    %v610 = vunpack.c.l.b16 %v136
    %v611 = vunpack.c.h.b16 %v136
    %v612 = vunpack.c.l.b16 %v137
    %v613 = vunpack.c.l.b16 %v138
    %v614 = vunpack.c.h.b16 %v138
    %v615 = vunpack.c.l.b16 %v139
    %v616 = vunpack.c.l.b16 %v140
    %v617 = vunpack.c.h.b16 %v140
    %v618 = vunpack.c.l.b16 %v141
    %v619 = vunpack.c.l.b16 %v142
    %v620 = vunpack.c.h.b16 %v142
    %v621 = vunpack.c.l.b16 %v143
    %v622 = vunpack.c.l.b16 %v144
    %v623 = vunpack.c.h.b16 %v144
    %v624 = vunpack.c.l.b16 %v145
    %v625 = vunpack.c.l.b16 %v146
    %v626 = vunpack.c.h.b16 %v146
    %v627 = vunpack.c.l.b16 %v147
    %v628 = vunpack.c.l.b16 %v148
    %v629 = vunpack.c.h.b16 %v148
    %v630 = vunpack.c.l.b16 %v149
    %v631 = vunpack.c.l.b16 %v150
    %v632 = vunpack.c.h.b16 %v150
    %v633 = vunpack.c.l.b16 %v151
    %v634 = vunpack.c.l.b16 %v152
    %v635 = vunpack.c.h.b16 %v152
    %v636 = vunpack.c.l.b16 %v153
    %v637 = vunpack.c.l.b16 %v154
    %v638 = vunpack.c.h.b16 %v154
    %v639 = vunpack.c.l.b16 %v155
    %v640 = vunpack.c.l.b16 %v156
    %v641 = vunpack.c.h.b16 %v156
    %v642 = vunpack.c.l.b16 %v157
    %v643 = vunpack.c.l.b16 %v158
    %v644 = vunpack.c.h.b16 %v158
    %v645 = vunpack.c.l.b16 %v159
    %v646 = vunpack.c.l.b16 %v160
    %v647 = vunpack.c.h.b16 %v160
    %v648 = vunpack.c.l.b16 %v161
    %v649 = vunpack.c.l.b16 %v162
    %v650 = vunpack.c.h.b16 %v162
    %v651 = vunpack.c.l.b16 %v163
    %v652 = vunpack.c.l.b16 %v164
    %v653 = vunpack.c.h.b16 %v164
    %v654 = vunpack.c.l.b16 %v165
    %v655 = vunpack.c.l.b16 %v166
    %v656 = vunpack.c.h.b16 %v166
    %v657 = vunpack.c.l.b16 %v167
    %v658 = vunpack.c.l.b16 %v168
    %v659 = vunpack.c.h.b16 %v168
    %v660 = vunpack.c.l.b16 %v169
    %v661 = vunpack.c.l.b16 %v170
    %v662 = vunpack.c.h.b16 %v170
    %v663 = vunpack.c.l.b16 %v171
    %v664 = vunpack.c.l.b16 %v172
    %v665 = vunpack.c.h.b16 %v172
    %v666 = vunpack.c.l.b16 %v173
    %v667 = vunpack.c.l.b16 %v174
    %v668 = vunpack.c.h.b16 %v174
    %v669 = vunpack.c.l.b16 %v175
    %v670 = vunpack.c.l.b16 %v176
    %v671 = vunpack.c.h.b16 %v176
    %v672 = vunpack.c.l.b16 %v177
    %v673 = vunpack.c.l.b16 %v178
    %v674 = vunpack.c.h.b16 %v178
    %v675 = vunpack.c.l.b16 %v179
    %v676 = vunpack.c.l.b16 %v180
    %v677 = vunpack.c.h.b16 %v180
    %v678 = vunpack.c.l.b16 %v181
    %v679 = vunpack.c.l.b16 %v182
    %v680 = vunpack.c.h.b16 %v182
    %v681 = vunpack.c.l.b16 %v183
    %v682 = vunpack.c.l.b16 %v184
    %v683 = vunpack.c.h.b16 %v184
    %v684 = vunpack.c.l.b16 %v185
    %v685 = vunpack.c.l.b16 %v186
    %v686 = vunpack.c.h.b16 %v186
    %v687 = vunpack.c.l.b16 %v187
    %v688 = vunpack.c.l.b16 %v188
    %v689 = vunpack.c.h.b16 %v188
    %v690 = vunpack.c.l.b16 %v189
    %v691 = vunpack.c.l.b16 %v190
    %v692 = vunpack.c.h.b16 %v190
    %v693 = vunpack.c.l.b16 %v191
    %v694 = vunpack.c.l.b16 %v192
    %v695 = vunpack.c.h.b16 %v192
    %v696 = vunpack.c.l.b16 %v193
    %v697 = vunpack.c.l.b16 %v194
    %v698 = vunpack.c.h.b16 %v194
    %v699 = vunpack.c.l.b16 %v195
    %v700 = vunpack.c.l.b16 %v196
    %v701 = vunpack.c.h.b16 %v196
    %v702 = vunpack.c.l.b16 %v197
    %v703 = vunpack.c.l.b16 %v198
    %v704 = vunpack.c.h.b16 %v198
    %v705 = vunpack.c.l.b16 %v199
    %v706 = vunpack.c.l.b16 %v200
    %v707 = vunpack.c.h.b16 %v200
    %v708 = vunpack.c.l.b16 %v201
    %v709 = vunpack.c.l.b16 %v202
    %v710 = vunpack.c.h.b16 %v202
    %v711 = vunpack.c.l.b16 %v203
    %v712 = vunpack.c.l.b16 %v204
    %v713 = vunpack.c.h.b16 %v204
    %v714 = vunpack.c.l.b16 %v205
    %v715 = vunpack.c.l.b16 %v206
    %v716 = vunpack.c.h.b16 %v206
    %v717 = vunpack.c.l.b16 %v207
    %v718 = vunpack.c.l.b16 %v208
    %v719 = vunpack.c.h.b16 %v208
    %v720 = vunpack.c.l.b16 %v209
    %v721 = vunpack.c.l.b16 %v210
    %v722 = vunpack.c.h.b16 %v210
    %v723 = vunpack.c.l.b16 %v211
    %v724 = vunpack.c.l.b16 %v212
    %v725 = vunpack.c.h.b16 %v212
    %v726 = vunpack.c.l.b16 %v213
    %v727 = vunpack.c.l.b16 %v214
    %v728 = vunpack.c.h.b16 %v214
    %v729 = vunpack.c.l.b16 %v215
    %v730 = vunpack.c.l.b16 %v216
    %v731 = vunpack.c.h.b16 %v216
    %v732 = vunpack.c.l.b16 %v217
    %v733 = vunpack.c.l.b16 %v218
    %v734 = vunpack.c.h.b16 %v218
    %v735 = vunpack.c.l.b16 %v219
    %v736 = vunpack.c.l.b16 %v220
    %v737 = vunpack.c.h.b16 %v220
    %v738 = vunpack.c.l.b16 %v221
    %v739 = vunpack.c.l.b16 %v222
    %v740 = vunpack.c.h.b16 %v222
    %v741 = vunpack.c.l.b16 %v223
    %v742 = vpack.c.b16 %v457, %v454
    %v743 = vpack.c.b16 %v458, %v455
    %v744 = vpack.c.b16 %v459, %v456
    %v745 = vpack.c.b16 %v463, %v460
    %v746 = vpack.c.b16 %v464, %v461
    %v747 = vpack.c.b16 %v465, %v462
    %v748 = vpack.c.b16 %v469, %v466
    %v749 = vpack.c.b16 %v470, %v467
    %v750 = vpack.c.b16 %v471, %v468
    %v751 = vpack.c.b16 %v475, %v472
    %v752 = vpack.c.b16 %v476, %v473
    %v753 = vpack.c.b16 %v477, %v474
    %v754 = vpack.c.b16 %v481, %v478
    %v755 = vpack.c.b16 %v482, %v479
    %v756 = vpack.c.b16 %v483, %v480
    %v757 = vpack.c.b16 %v487, %v484
    %v758 = vpack.c.b16 %v488, %v485
    %v759 = vpack.c.b16 %v489, %v486
    %v760 = vpack.c.b16 %v493, %v490
    %v761 = vpack.c.b16 %v494, %v491
    %v762 = vpack.c.b16 %v495, %v492
    %v763 = vpack.c.b16 %v499, %v496
    %v764 = vpack.c.b16 %v500, %v497
    %v765 = vpack.c.b16 %v501, %v498
    %v766 = vpack.c.b16 %v505, %v502
    %v767 = vpack.c.b16 %v506, %v503
    %v768 = vpack.c.b16 %v507, %v504
    %v769 = vpack.c.b16 %v511, %v508
    %v770 = vpack.c.b16 %v512, %v509
    %v771 = vpack.c.b16 %v513, %v510
    %v772 = vpack.c.b16 %v517, %v514
    %v773 = vpack.c.b16 %v518, %v515
    %v774 = vpack.c.b16 %v519, %v516
    %v775 = vpack.c.b16 %v523, %v520
    %v776 = vpack.c.b16 %v524, %v521
    %v777 = vpack.c.b16 %v525, %v522
    %v778 = vpack.c.b16 %v529, %v526
    %v779 = vpack.c.b16 %v530, %v527
    %v780 = vpack.c.b16 %v531, %v528
    %v781 = vpack.c.b16 %v535, %v532
    %v782 = vpack.c.b16 %v536, %v533
    %v783 = vpack.c.b16 %v537, %v534
    %v784 = vpack.c.b16 %v541, %v538
    %v785 = vpack.c.b16 %v542, %v539
    %v786 = vpack.c.b16 %v543, %v540
    %v787 = vpack.c.b16 %v547, %v544
    %v788 = vpack.c.b16 %v548, %v545
    %v789 = vpack.c.b16 %v549, %v546
    %v790 = vpack.c.b16 %v553, %v550
    %v791 = vpack.c.b16 %v554, %v551
    %v792 = vpack.c.b16 %v555, %v552
    %v793 = vpack.c.b16 %v559, %v556
    %v794 = vpack.c.b16 %v560, %v557
    %v795 = vpack.c.b16 %v561, %v558
    %v796 = vpack.c.b16 %v565, %v562
    %v797 = vpack.c.b16 %v566, %v563
    %v798 = vpack.c.b16 %v567, %v564
    %v799 = vpack.c.b16 %v571, %v568
    %v800 = vpack.c.b16 %v572, %v569
    %v801 = vpack.c.b16 %v573, %v570
    %v802 = vpack.c.b16 %v577, %v574
    %v803 = vpack.c.b16 %v578, %v575
    %v804 = vpack.c.b16 %v579, %v576
    %v805 = vpack.c.b16 %v583, %v580
    %v806 = vpack.c.b16 %v584, %v581
    %v807 = vpack.c.b16 %v585, %v582
    %v808 = vpack.c.b16 %v589, %v586
    %v809 = vpack.c.b16 %v590, %v587
    %v810 = vpack.c.b16 %v591, %v588
    %v811 = vpack.c.b16 %v595, %v592
    %v812 = vpack.c.b16 %v596, %v593
    %v813 = vpack.c.b16 %v597, %v594
    %v814 = vpack.c.b16 %v601, %v598
    %v815 = vpack.c.b16 %v602, %v599
    %v816 = vpack.c.b16 %v603, %v600
    %v817 = vpack.c.b16 %v607, %v604
    %v818 = vpack.c.b16 %v608, %v605
    %v819 = vpack.c.b16 %v609, %v606
    %v820 = vpack.c.b16 %v613, %v610
    %v821 = vpack.c.b16 %v614, %v611
    %v822 = vpack.c.b16 %v615, %v612
    %v823 = vpack.c.b16 %v619, %v616
    %v824 = vpack.c.b16 %v620, %v617
    %v825 = vpack.c.b16 %v621, %v618
    %v826 = vpack.c.b16 %v625, %v622
    %v827 = vpack.c.b16 %v626, %v623
    %v828 = vpack.c.b16 %v627, %v624
    %v829 = vpack.c.b16 %v631, %v628
    %v830 = vpack.c.b16 %v632, %v629
    %v831 = vpack.c.b16 %v633, %v630
    %v832 = vpack.c.b16 %v637, %v634
    %v833 = vpack.c.b16 %v638, %v635
    %v834 = vpack.c.b16 %v639, %v636
    %v835 = vpack.c.b16 %v643, %v640
    %v836 = vpack.c.b16 %v644, %v641
    %v837 = vpack.c.b16 %v645, %v642
    %v838 = vpack.c.b16 %v649, %v646
    %v839 = vpack.c.b16 %v650, %v647
    %v840 = vpack.c.b16 %v651, %v648
    %v841 = vpack.c.b16 %v655, %v652
    %v842 = vpack.c.b16 %v656, %v653
    %v843 = vpack.c.b16 %v657, %v654
    %v844 = vpack.c.b16 %v661, %v658
    %v845 = vpack.c.b16 %v662, %v659
    %v846 = vpack.c.b16 %v663, %v660
    %v847 = vpack.c.b16 %v667, %v664
    %v848 = vpack.c.b16 %v668, %v665
    %v849 = vpack.c.b16 %v669, %v666
    %v850 = vpack.c.b16 %v673, %v670
    %v851 = vpack.c.b16 %v674, %v671
    %v852 = vpack.c.b16 %v675, %v672
    %v853 = vpack.c.b16 %v679, %v676
    %v854 = vpack.c.b16 %v680, %v677
    %v855 = vpack.c.b16 %v681, %v678
    %v856 = vpack.c.b16 %v685, %v682
    %v857 = vpack.c.b16 %v686, %v683
    %v858 = vpack.c.b16 %v687, %v684
    %v859 = vpack.c.b16 %v691, %v688
    %v860 = vpack.c.b16 %v692, %v689
    %v861 = vpack.c.b16 %v693, %v690
    %v862 = vpack.c.b16 %v697, %v694
    %v863 = vpack.c.b16 %v698, %v695
    %v864 = vpack.c.b16 %v699, %v696
    %v865 = vpack.c.b16 %v703, %v700
    %v866 = vpack.c.b16 %v704, %v701
    %v867 = vpack.c.b16 %v705, %v702
    %v868 = vpack.c.b16 %v709, %v706
    %v869 = vpack.c.b16 %v710, %v707
    %v870 = vpack.c.b16 %v711, %v708
    %v871 = vpack.c.b16 %v715, %v712
    %v872 = vpack.c.b16 %v716, %v713
    %v873 = vpack.c.b16 %v717, %v714
    %v874 = vpack.c.b16 %v721, %v718
    %v875 = vpack.c.b16 %v722, %v719
    %v876 = vpack.c.b16 %v723, %v720
    %v877 = vpack.c.b16 %v727, %v724
    %v878 = vpack.c.b16 %v728, %v725
    %v879 = vpack.c.b16 %v729, %v726
    %v880 = vpack.c.b16 %v733, %v730
    %v881 = vpack.c.b16 %v734, %v731
    %v882 = vpack.c.b16 %v735, %v732
    %v883 = vpack.c.b16 %v739, %v736
    %v884 = vpack.c.b16 %v740, %v737
    %v885 = vpack.c.b16 %v741, %v738
    %1030 = vmatprep.subr.bf16.mxu0 %v743
    %1031 = vmatpush1.bf16.msra.mxu0 %v742
    %1032 = vmatprep.subr.bf16.mxu0 %v746
    %1033 = vmatpush1.bf16.msra.mxu0 %v745
    %1034 = vmatprep.subr.bf16.mxu0 %v749
    %1035 = vmatpush1.bf16.msra.mxu0 %v748
    %1036 = vmatprep.subr.bf16.mxu0 %v752
    %1037 = vmatpush1.bf16.msra.mxu0 %v751
    %1038 = vmatprep.subr.bf16.mxu0 %v755
    %1039 = vmatpush1.bf16.msra.mxu0 %v754
    %1040 = vmatprep.subr.bf16.mxu0 %v758
    %1041 = vmatpush1.bf16.msra.mxu0 %v757
    %1042 = vmatprep.subr.bf16.mxu0 %v761
    %1043 = vmatpush1.bf16.msra.mxu0 %v760
    %1044 = vmatprep.subr.bf16.mxu0 %v764
    %1045 = vmatpush1.bf16.msra.mxu0 %v763
    %1046 = vmatprep.subr.bf16.mxu0 %v767
    %1047 = vmatpush1.bf16.msra.mxu0 %v766
    %1048 = vmatprep.subr.bf16.mxu0 %v770
    %1049 = vmatpush1.bf16.msra.mxu0 %v769
    %1050 = vmatprep.subr.bf16.mxu0 %v773
    %1051 = vmatpush1.bf16.msra.mxu0 %v772
    %1052 = vmatprep.subr.bf16.mxu0 %v776
    %1053 = vmatpush1.bf16.msra.mxu0 %v775
    %1054 = vmatprep.subr.bf16.mxu0 %v779
    %1055 = vmatpush1.bf16.msra.mxu0 %v778
    %1056 = vmatprep.subr.bf16.mxu0 %v782
    %1057 = vmatpush1.bf16.msra.mxu0 %v781
    %1058 = vmatprep.subr.bf16.mxu0 %v785
    %1059 = vmatpush1.bf16.msra.mxu0 %v784
    %1060 = vmatprep.subr.bf16.mxu0 %v788
    %1061 = vmatpush1.bf16.msra.mxu0 %v787
    %1062 = vmatprep.mubr.bf16.mxu0 %v251
    %1063 = vmatmul.mubr.bf16.gmra.mrb[0].mxu0 %v250
    %v1064 = vpop.f32.mrb[0].mxu0
    %v1065 = vadd.f32 %v229, %v1064
    %v1066 = vpop.f32.mrb[0].mxu0
    %v1067 = vadd.f32 %v233, %v1066
    %v1068 = vpop.f32.mrb[0].mxu0
    %v1069 = vpop.f32.mrb[0].mxu0
    %1070 = vdwg.mxu0
    %1071 = vmatprep.subr.bf16.mxu0 %v791
    %1072 = vmatpush1.bf16.msra.mxu0 %v790
    %1073 = vmatprep.subr.bf16.mxu0 %v794
    %1074 = vmatpush1.bf16.msra.mxu0 %v793
    %1075 = vmatprep.subr.bf16.mxu0 %v797
    %1076 = vmatpush1.bf16.msra.mxu0 %v796
    %1077 = vmatprep.subr.bf16.mxu0 %v800
    %1078 = vmatpush1.bf16.msra.mxu0 %v799
    %1079 = vmatprep.subr.bf16.mxu0 %v803
    %1080 = vmatpush1.bf16.msra.mxu0 %v802
    %1081 = vmatprep.subr.bf16.mxu0 %v806
    %1082 = vmatpush1.bf16.msra.mxu0 %v805
    %1083 = vmatprep.subr.bf16.mxu0 %v809
    %1084 = vmatpush1.bf16.msra.mxu0 %v808
    %1085 = vmatprep.subr.bf16.mxu0 %v812
    %1086 = vmatpush1.bf16.msra.mxu0 %v811
    %1087 = vmatprep.subr.bf16.mxu0 %v815
    %1088 = vmatpush1.bf16.msra.mxu0 %v814
    %1089 = vmatprep.subr.bf16.mxu0 %v818
    %1090 = vmatpush1.bf16.msra.mxu0 %v817
    %1091 = vmatprep.subr.bf16.mxu0 %v821
    %1092 = vmatpush1.bf16.msra.mxu0 %v820
    %1093 = vmatprep.subr.bf16.mxu0 %v824
    %1094 = vmatpush1.bf16.msra.mxu0 %v823
    %1095 = vmatprep.subr.bf16.mxu0 %v827
    %1096 = vmatpush1.bf16.msra.mxu0 %v826
    %1097 = vmatprep.subr.bf16.mxu0 %v830
    %1098 = vmatpush1.bf16.msra.mxu0 %v829
    %1099 = vmatprep.subr.bf16.mxu0 %v833
    %1100 = vmatpush1.bf16.msra.mxu0 %v832
    %1101 = vmatprep.subr.bf16.mxu0 %v836
    %1102 = vmatpush1.bf16.msra.mxu0 %v835
    %1103 = vmatprep.mubr.bf16.mxu0 %v253
    %1104 = vmatmul.mubr.bf16.gmra.mrb[0].mxu0 %v252
    %v1105 = vpop.f32.mrb[0].mxu0
    %v1106 = vadd.f32 %v1065, %v1105
    %v1107 = vpop.f32.mrb[0].mxu0
    %v1108 = vadd.f32 %v1067, %v1107
    %v1109 = vpop.f32.mrb[0].mxu0
    %v1110 = vpop.f32.mrb[0].mxu0
    %1111 = vdwg.mxu0
    %1112 = vmatprep.subr.bf16.mxu0 %v839
    %1113 = vmatpush1.bf16.msra.mxu0 %v838
    %1114 = vmatprep.subr.bf16.mxu0 %v842
    %1115 = vmatpush1.bf16.msra.mxu0 %v841
    %1116 = vmatprep.subr.bf16.mxu0 %v845
    %1117 = vmatpush1.bf16.msra.mxu0 %v844
    %1118 = vmatprep.subr.bf16.mxu0 %v848
    %1119 = vmatpush1.bf16.msra.mxu0 %v847
    %1120 = vmatprep.subr.bf16.mxu0 %v851
    %1121 = vmatpush1.bf16.msra.mxu0 %v850
    %1122 = vmatprep.subr.bf16.mxu0 %v854
    %1123 = vmatpush1.bf16.msra.mxu0 %v853
    %1124 = vmatprep.subr.bf16.mxu0 %v857
    %1125 = vmatpush1.bf16.msra.mxu0 %v856
    %1126 = vmatprep.subr.bf16.mxu0 %v860
    %1127 = vmatpush1.bf16.msra.mxu0 %v859
    %1128 = vmatprep.subr.bf16.mxu0 %v863
    %1129 = vmatpush1.bf16.msra.mxu0 %v862
    %1130 = vmatprep.subr.bf16.mxu0 %v866
    %1131 = vmatpush1.bf16.msra.mxu0 %v865
    %1132 = vmatprep.subr.bf16.mxu0 %v869
    %1133 = vmatpush1.bf16.msra.mxu0 %v868
    %1134 = vmatprep.subr.bf16.mxu0 %v872
    %1135 = vmatpush1.bf16.msra.mxu0 %v871
    %1136 = vmatprep.subr.bf16.mxu0 %v875
    %1137 = vmatpush1.bf16.msra.mxu0 %v874
    %1138 = vmatprep.subr.bf16.mxu0 %v878
    %1139 = vmatpush1.bf16.msra.mxu0 %v877
    %1140 = vmatprep.subr.bf16.mxu0 %v881
    %1141 = vmatpush1.bf16.msra.mxu0 %v880
    %1142 = vmatprep.subr.bf16.mxu0 %v884
    %1143 = vmatpush1.bf16.msra.mxu0 %v883
    %1144 = vmatprep.mubr.bf16.mxu0 %v255
    %1145 = vmatmul.mubr.bf16.gmra.mrb[0].mxu0 %v254
    %v1146 = vpop.f32.mrb[0].mxu0
    %v1147 = vadd.f32 %v1106, %v1146
    %v1148 = vpop.f32.mrb[0].mxu0
    %v1149 = vadd.f32 %v1108, %v1148
    %v1150 = vpop.f32.mrb[0].mxu0
    %v1151 = vpop.f32.mrb[0].mxu0
    %1152 = vdwg.mxu0
    %1153 = vmatprep.subr.bf16.mxu0 0
    %1154 = vmatpush1.bf16.msra.mxu0 %v744
    %1155 = vmatprep.subr.bf16.mxu0 0
    %1156 = vmatpush1.bf16.msra.mxu0 %v747
    %1157 = vmatprep.subr.bf16.mxu0 0
    %1158 = vmatpush1.bf16.msra.mxu0 %v750
    %1159 = vmatprep.subr.bf16.mxu0 0
    %1160 = vmatpush1.bf16.msra.mxu0 %v753
    %1161 = vmatprep.subr.bf16.mxu0 0
    %1162 = vmatpush1.bf16.msra.mxu0 %v756
    %1163 = vmatprep.subr.bf16.mxu0 0
    %1164 = vmatpush1.bf16.msra.mxu0 %v759
    %1165 = vmatprep.subr.bf16.mxu0 0
    %1166 = vmatpush1.bf16.msra.mxu0 %v762
    %1167 = vmatprep.subr.bf16.mxu0 0
    %1168 = vmatpush1.bf16.msra.mxu0 %v765
    %1169 = vmatprep.subr.bf16.mxu0 0
    %1170 = vmatpush1.bf16.msra.mxu0 %v768
    %1171 = vmatprep.subr.bf16.mxu0 0
    %1172 = vmatpush1.bf16.msra.mxu0 %v771
    %1173 = vmatprep.subr.bf16.mxu0 0
    %1174 = vmatpush1.bf16.msra.mxu0 %v774
    %1175 = vmatprep.subr.bf16.mxu0 0
    %1176 = vmatpush1.bf16.msra.mxu0 %v777
    %1177 = vmatprep.subr.bf16.mxu0 0
    %1178 = vmatpush1.bf16.msra.mxu0 %v780
    %1179 = vmatprep.subr.bf16.mxu0 0
    %1180 = vmatpush1.bf16.msra.mxu0 %v783
    %1181 = vmatprep.subr.bf16.mxu0 0
    %1182 = vmatpush1.bf16.msra.mxu0 %v786
    %1183 = vmatprep.subr.bf16.mxu0 0
    %1184 = vmatpush1.bf16.msra.mxu0 %v789
    %1185 = vmatprep.mubr.bf16.mxu0 %v251
    %1186 = vmatmul.mubr.bf16.gmra.mrb[0].mxu0 %v250
    %v1187 = vpop.f32.mrb[0].mxu0
    %v1188 = vadd.f32 %v237, %v1187
    %v1189 = vpop.f32.mrb[0].mxu0
    %v1190 = vpop.f32.mrb[0].mxu0
    %v1191 = vpop.f32.mrb[0].mxu0
    %1192 = vdwg.mxu0
    %1193 = vmatprep.subr.bf16.mxu0 0
    %1194 = vmatpush1.bf16.msra.mxu0 %v792
    %1195 = vmatprep.subr.bf16.mxu0 0
    %1196 = vmatpush1.bf16.msra.mxu0 %v795
    %1197 = vmatprep.subr.bf16.mxu0 0
    %1198 = vmatpush1.bf16.msra.mxu0 %v798
    %1199 = vmatprep.subr.bf16.mxu0 0
    %1200 = vmatpush1.bf16.msra.mxu0 %v801
    %1201 = vmatprep.subr.bf16.mxu0 0
    %1202 = vmatpush1.bf16.msra.mxu0 %v804
    %1203 = vmatprep.subr.bf16.mxu0 0
    %1204 = vmatpush1.bf16.msra.mxu0 %v807
    %1205 = vmatprep.subr.bf16.mxu0 0
    %1206 = vmatpush1.bf16.msra.mxu0 %v810
    %1207 = vmatprep.subr.bf16.mxu0 0
    %1208 = vmatpush1.bf16.msra.mxu0 %v813
    %1209 = vmatprep.subr.bf16.mxu0 0
    %1210 = vmatpush1.bf16.msra.mxu0 %v816
    %1211 = vmatprep.subr.bf16.mxu0 0
    %1212 = vmatpush1.bf16.msra.mxu0 %v819
    %1213 = vmatprep.subr.bf16.mxu0 0
    %1214 = vmatpush1.bf16.msra.mxu0 %v822
    %1215 = vmatprep.subr.bf16.mxu0 0
    %1216 = vmatpush1.bf16.msra.mxu0 %v825
    %1217 = vmatprep.subr.bf16.mxu0 0
    %1218 = vmatpush1.bf16.msra.mxu0 %v828
    %1219 = vmatprep.subr.bf16.mxu0 0
    %1220 = vmatpush1.bf16.msra.mxu0 %v831
    %1221 = vmatprep.subr.bf16.mxu0 0
    %1222 = vmatpush1.bf16.msra.mxu0 %v834
    %1223 = vmatprep.subr.bf16.mxu0 0
    %1224 = vmatpush1.bf16.msra.mxu0 %v837
    %1225 = vmatprep.mubr.bf16.mxu0 %v253
    %1226 = vmatmul.mubr.bf16.gmra.mrb[0].mxu0 %v252
    %v1227 = vpop.f32.mrb[0].mxu0
    %v1228 = vadd.f32 %v1188, %v1227
    %v1229 = vpop.f32.mrb[0].mxu0
    %v1230 = vpop.f32.mrb[0].mxu0
    %v1231 = vpop.f32.mrb[0].mxu0
    %1232 = vdwg.mxu0
    %1233 = vmatprep.subr.bf16.mxu0 0
    %1234 = vmatpush1.bf16.msra.mxu0 %v840
    %1235 = vmatprep.subr.bf16.mxu0 0
    %1236 = vmatpush1.bf16.msra.mxu0 %v843
    %1237 = vmatprep.subr.bf16.mxu0 0
    %1238 = vmatpush1.bf16.msra.mxu0 %v846
    %1239 = vmatprep.subr.bf16.mxu0 0
    %1240 = vmatpush1.bf16.msra.mxu0 %v849
    %1241 = vmatprep.subr.bf16.mxu0 0
    %1242 = vmatpush1.bf16.msra.mxu0 %v852
    %1243 = vmatprep.subr.bf16.mxu0 0
    %1244 = vmatpush1.bf16.msra.mxu0 %v855
    %1245 = vmatprep.subr.bf16.mxu0 0
    %1246 = vmatpush1.bf16.msra.mxu0 %v858
    %1247 = vmatprep.subr.bf16.mxu0 0
    %1248 = vmatpush1.bf16.msra.mxu0 %v861
    %1249 = vmatprep.subr.bf16.mxu0 0
    %1250 = vmatpush1.bf16.msra.mxu0 %v864
    %1251 = vmatprep.subr.bf16.mxu0 0
    %1252 = vmatpush1.bf16.msra.mxu0 %v867
    %1253 = vmatprep.subr.bf16.mxu0 0
    %1254 = vmatpush1.bf16.msra.mxu0 %v870
    %1255 = vmatprep.subr.bf16.mxu0 0
    %1256 = vmatpush1.bf16.msra.mxu0 %v873
    %1257 = vmatprep.subr.bf16.mxu0 0
    %1258 = vmatpush1.bf16.msra.mxu0 %v876
    %1259 = vmatprep.subr.bf16.mxu0 0
    %1260 = vmatpush1.bf16.msra.mxu0 %v879
    %1261 = vmatprep.subr.bf16.mxu0 0
    %1262 = vmatpush1.bf16.msra.mxu0 %v882
    %1263 = vmatprep.subr.bf16.mxu0 0
    %1264 = vmatpush1.bf16.msra.mxu0 %v885
    %1265 = vmatprep.mubr.bf16.mxu0 %v255
    %1266 = vmatmul.mubr.bf16.gmra.mrb[0].mxu0 %v254
    %v1267 = vpop.f32.mrb[0].mxu0
    %v1268 = vadd.f32 %v1228, %v1267
    %v1269 = vpop.f32.mrb[0].mxu0
    %v1270 = vpop.f32.mrb[0].mxu0
    %v1271 = vpop.f32.mrb[0].mxu0
    %1272 = vdwg.mxu0
    %1273 = vst [vmem:[%s3] sm:$0xff] %v1147
    %1274 = vst [vmem:[%s3 + $0x8] sm:$0xff] %v1149
    %1275 = vst [vmem:[%s3 + $0x10] sm:$0xff] %v1268
    // Predicated region
    $region18: #{build_transformer_forward.12} parent=1 // pred_check
      _
    $region19: #{build_transformer_forward.12} parent=1 // pred_check_branch
      %1277 = sbr.rel (0) target = $region21
    $region20: #{build_transformer_forward.12} parent=1 // pred_region
      _
    $region21: #{build_transformer_forward.12} parent=1 // pred_fallthru
      _
    // Predicated region
    $region22: #{build_transformer_forward.12} parent=1 // pred_check
      _
    $region23: #{build_transformer_forward.12} parent=1 // pred_check_branch
      %1279 = sbr.rel (0) target = $region25
    $region24: #{build_transformer_forward.12} parent=1 // pred_region
      _
    $region25: #{build_transformer_forward.12} parent=1 // pred_fallthru
      _
    %1280 = vsyncpa [#allocation3], 1

// kernel: build_transformer_forward.15
$region0: #{build_transformer_forward.15}
  #allocation0 [shape = 'u32[]', space=smem, size = 0x4, offset = 0x4, fixed_abs, tag = 'smem constant byte address 0x4 - core index']
  #allocation1 [shape = 'u32[144,128]{1,0:T(1,128)}', space=vmem, size = 0x12000, scoped, tag = 'internal scratch']
  %s0 = inlined_call_operand.vmem [shape: bf16[16,384], index: 0, kind: input, shape index: {}]
  %s1 = inlined_call_operand.vmem [shape: bf16[384,384], index: 1, kind: input, shape index: {}]
  %s2 = inlined_call_operand.vmem [shape: f32[1,384], index: 2, kind: input, shape index: {}]
  %s3 = inlined_call_operand.vmem [shape: f32[16,384], index: 3, kind: input, shape index: {}]
  %s4 = inlined_call_operand.vmem [shape: f32[16,384], index: 4, kind: output, shape index: {}]
  %s5 = sld [smem:[#allocation0]]
  $region49: #{build_transformer_forward.15} parent=0
    _
  %s7 = ssub.s32 1, %s5
  %s8 = scalar_select 0, %s7, %s5
  loop: start=0, step=1, limit=4
  $region2: #{build_transformer_forward.15} parent=0 // loop_pre_header
    _
  $region3: #{build_transformer_forward.15} parent=0 // loop_header
    %s10 = sphi 0, %s14
    %p11 = scmp.ge.s32.totalorder %s10, 4
    %s20 = sphi 0, %s22
    %s23 = sphi 0, %s20
    %s24 = sphi 0, %s23
    %s40 = sphi 0, %s24
    %s44 = sphi 0, %s44
    %s46 = sphi 0, %s44
    %s47 = sphi 0, %s46
    %s61 = sphi 0, %s47
    %s65 = sphi 0, %s65
    %s67 = sphi 0, %s65
    %s68 = sphi 0, %s67
    %s82 = sphi 0, %s68
    %s88 = sphi 0, %s90
    %s91 = sphi 0, %s88
    %s92 = sphi 0, %s91
    %s108 = sphi 0, %s92
    %s114 = sphi 0, %s116
    %s117 = sphi 0, %s114
    %s118 = sphi 0, %s117
    %s134 = sphi 0, %s118
  $region4: #{build_transformer_forward.15} parent=0 // loop_header_branch
    %13 = sbr.rel (%p11) target = $region8
  $region5: #{build_transformer_forward.15} parent=0 // loop_body
    %s15 = ssub.s32 %s10, 1
    %s16 = ssub.s32 %s10, 2
    %s17 = sadd.s32 %s10, 1
    %s18 = ssub.s32 %s10, %s17
    %p19 = scmp.eq.s32.totalorder %s18, 0
    %s21 = sadd.s32 %s20, 1
    %s22 = scalar_select %p19, %s20, %s21
    %p25 = pneg %p19
    %p26 = scmp.eq.s32.totalorder %s10, 1
    %p27 = por %p25, %p26
    %p28 = scmp.ne.s32.totalorder %s20, %s23
    %p29 = scmp.eq.s32.totalorder %s10, 0
    %p30 = por %p28, %p29
    %p31 = scmp.ne.s32.totalorder %s20, %s23
    %p32 = scmp.eq.s32.totalorder %s15, 1
    %p33 = por %p31, %p32
    %p34 = scmp.ne.s32.totalorder %s23, %s24
    %p35 = scmp.eq.s32.totalorder %s15, 0
    %p36 = por %p34, %p35
    %p37 = scmp.ne.s32.totalorder %s23, %s24
    %p38 = scmp.eq.s32.totalorder %s16, 1
    %p39 = por %p37, %p38
    %p41 = scmp.ne.s32.totalorder %s24, %s40
    %p42 = scmp.eq.s32.totalorder %s16, 0
    %p43 = por %p41, %p42
    %s45 = sadd.s32 %s44, 1
    %p48 = scmp.eq.s32.totalorder %s10, 1
    %p49 = scmp.ne.s32.totalorder %s44, %s46
    %p50 = scmp.eq.s32.totalorder %s10, 0
    %p51 = por %p49, %p50
    %p52 = scmp.ne.s32.totalorder %s44, %s46
    %p53 = scmp.eq.s32.totalorder %s15, 1
    %p54 = por %p52, %p53
    %p55 = scmp.ne.s32.totalorder %s46, %s47
    %p56 = scmp.eq.s32.totalorder %s15, 0
    %p57 = por %p55, %p56
    %p58 = scmp.ne.s32.totalorder %s46, %s47
    %p59 = scmp.eq.s32.totalorder %s16, 1
    %p60 = por %p58, %p59
    %p62 = scmp.ne.s32.totalorder %s47, %s61
    %p63 = scmp.eq.s32.totalorder %s16, 0
    %p64 = por %p62, %p63
    %s66 = sadd.s32 %s65, 1
    %p69 = scmp.eq.s32.totalorder %s10, 1
    %p70 = scmp.ne.s32.totalorder %s65, %s67
    %p71 = scmp.eq.s32.totalorder %s10, 0
    %p72 = por %p70, %p71
    %p73 = scmp.ne.s32.totalorder %s65, %s67
    %p74 = scmp.eq.s32.totalorder %s15, 1
    %p75 = por %p73, %p74
    %p76 = scmp.ne.s32.totalorder %s67, %s68
    %p77 = scmp.eq.s32.totalorder %s15, 0
    %p78 = por %p76, %p77
    %p79 = scmp.ne.s32.totalorder %s67, %s68
    %p80 = scmp.eq.s32.totalorder %s16, 1
    %p81 = por %p79, %p80
    %p83 = scmp.ne.s32.totalorder %s68, %s82
    %p84 = scmp.eq.s32.totalorder %s16, 0
    %p85 = por %p83, %p84
    %s86 = ssub.s32 %s10, %s17
    %p87 = scmp.eq.s32.totalorder %s86, 0
    %s89 = sadd.s32 %s88, 1
    %s90 = scalar_select %p87, %s88, %s89
    %p93 = pneg %p87
    %p94 = scmp.eq.s32.totalorder %s10, 1
    %p95 = por %p93, %p94
    %p96 = scmp.ne.s32.totalorder %s88, %s91
    %p97 = scmp.eq.s32.totalorder %s10, 0
    %p98 = por %p96, %p97
    %p99 = scmp.ne.s32.totalorder %s88, %s91
    %p100 = scmp.eq.s32.totalorder %s15, 1
    %p101 = por %p99, %p100
    %p102 = scmp.ne.s32.totalorder %s91, %s92
    %p103 = scmp.eq.s32.totalorder %s15, 0
    %p104 = por %p102, %p103
    %p105 = scmp.ne.s32.totalorder %s91, %s92
    %p106 = scmp.eq.s32.totalorder %s16, 1
    %p107 = por %p105, %p106
    %p109 = scmp.ne.s32.totalorder %s92, %s108
    %p110 = scmp.eq.s32.totalorder %s16, 0
    %p111 = por %p109, %p110
    %s112 = ssub.s32 %s10, %s17
    %p113 = scmp.eq.s32.totalorder %s112, 0
    %s115 = sadd.s32 %s114, 1
    %s116 = scalar_select %p113, %s114, %s115
    %p119 = pneg %p113
    %p120 = scmp.eq.s32.totalorder %s10, 1
    %p121 = por %p119, %p120
    %p122 = scmp.ne.s32.totalorder %s114, %s117
    %p123 = scmp.eq.s32.totalorder %s10, 0
    %p124 = por %p122, %p123
    %p125 = scmp.ne.s32.totalorder %s114, %s117
    %p126 = scmp.eq.s32.totalorder %s15, 1
    %p127 = por %p125, %p126
    %p128 = scmp.ne.s32.totalorder %s117, %s118
    %p129 = scmp.eq.s32.totalorder %s15, 0
    %p130 = por %p128, %p129
    %p131 = scmp.ne.s32.totalorder %s117, %s118
    %p132 = scmp.eq.s32.totalorder %s16, 1
    %p133 = por %p131, %p132
    %p135 = scmp.ne.s32.totalorder %s118, %s134
    %p136 = scmp.eq.s32.totalorder %s16, 0
    %p137 = por %p135, %p136
    %p138 = scmp.le.s32.totalorder 1, %s10
    %p139 = scmp.lt.s32.totalorder %s10, 3
    %p140 = pnand %p138, %p139
    %p141 = pneg %p140
    // Predicated region
    $region9: #{build_transformer_forward.15} parent=5 // pred_check
      _
    $region10: #{build_transformer_forward.15} parent=5 // pred_check_branch
      %143 = sbr.rel (%p140) target = $region12
    $region11: #{build_transformer_forward.15} parent=5 // pred_region
      %s144 = ssub.s32 %s10, 1
      // Predicated region
      $region13: #{build_transformer_forward.15} parent=11 // pred_check
        %p145 = pneg %p57
      $region14: #{build_transformer_forward.15} parent=11 // pred_check_branch
        %147 = sbr.rel (%p145) target = $region16
      $region15: #{build_transformer_forward.15} parent=11 // pred_region
        _
      $region16: #{build_transformer_forward.15} parent=11 // pred_fallthru
        _
      // Predicated region
      $region17: #{build_transformer_forward.15} parent=11 // pred_check
        %p148 = pneg %p78
      $region18: #{build_transformer_forward.15} parent=11 // pred_check_branch
        %150 = sbr.rel (%p148) target = $region20
      $region19: #{build_transformer_forward.15} parent=11 // pred_region
        _
      $region20: #{build_transformer_forward.15} parent=11 // pred_fallthru
        _
    $region12: #{build_transformer_forward.15} parent=5 // pred_fallthru
      _
    %p151 = scmp.lt.s32.totalorder %s10, 2
    // Predicated region
    $region21: #{build_transformer_forward.15} parent=5 // pred_check
      %p152 = pneg %p151
    $region22: #{build_transformer_forward.15} parent=5 // pred_check_branch
      %154 = sbr.rel (%p152) target = $region24
    $region23: #{build_transformer_forward.15} parent=5 // pred_region
      // Predicated region
      $region25: #{build_transformer_forward.15} parent=23 // pred_check
        %p155 = pneg %p30
      $region26: #{build_transformer_forward.15} parent=23 // pred_check_branch
        %157 = sbr.rel (%p155) target = $region28
      $region27: #{build_transformer_forward.15} parent=23 // pred_region
        %p158 = scmp.lt.s32.totalorder %s10, 1
        %s159 = scalar_select %p158, %s10, 1
        %s160 = smul.addr %s159, 3
        %s161 = smul.addr %s160, 4
        %s162 = scalar_lea.vmem %s0, %s161
      $region28: #{build_transformer_forward.15} parent=23 // pred_fallthru
        _
      // Predicated region
      $region29: #{build_transformer_forward.15} parent=23 // pred_check
        %p163 = pneg %p98
      $region30: #{build_transformer_forward.15} parent=23 // pred_check_branch
        %165 = sbr.rel (%p163) target = $region32
      $region31: #{build_transformer_forward.15} parent=23 // pred_region
        %p166 = scmp.lt.s32.totalorder %s10, 1
        %s167 = scalar_select %p166, %s10, 1
        %s168 = smul.addr %s167, 3
        %s169 = smul.addr %s168, 8
        %s170 = scalar_lea.vmem %s3, %s169
      $region32: #{build_transformer_forward.15} parent=23 // pred_fallthru
        _
    $region24: #{build_transformer_forward.15} parent=5 // pred_fallthru
      _
    %p171 = scmp.le.s32.totalorder 1, %s10
    %p172 = scmp.lt.s32.totalorder %s10, 3
    %p173 = pnand %p171, %p172
    %p174 = pneg %p173
    // Predicated region
    $region33: #{build_transformer_forward.15} parent=5 // pred_check
      _
    $region34: #{build_transformer_forward.15} parent=5 // pred_check_branch
      %176 = sbr.rel (%p173) target = $region36
    $region35: #{build_transformer_forward.15} parent=5 // pred_region
      %s177 = ssub.s32 %s10, 1
      %p178 = scmp.lt.s32.totalorder %s15, 1
      %s179 = scalar_select %p178, %s15, 1
      %s180 = smul.addr %s179, 3
      %s181 = smul.addr %s180, 4
      %s182 = scalar_lea.vmem %s0, %s181
      %p183 = pneg %p36
      %p184 = pneg %p33
      %p185 = pneg %p57
      %p186 = pneg %p54
      %p187 = pneg %p78
      %p188 = pneg %p75
      %p189 = scmp.lt.s32.totalorder %s15, 1
      %s190 = scalar_select %p189, %s15, 1
      %s191 = smul.addr %s190, 3
      %s192 = smul.addr %s191, 8
      %s193 = scalar_lea.vmem %s3, %s192
      %p194 = pneg %p104
      %p195 = pneg %p101
      %p196 = pneg %p130
      %p197 = pneg %p127
      %p198 = scmp.lt.s32.totalorder %s15, 1
      %s199 = scalar_select %p198, %s15, 1
      %s200 = smul.addr %s199, 3
      %s201 = smul.addr %s200, 8
      %s202 = scalar_lea.vmem %s4, %s201
      %p203 = scmp.lt.s32.totalorder %s15, 1
      %s204 = scalar_select %p203, %s15, 1
      %s205 = smul.addr %s204, 3
      %s206 = smul.addr %s205, 4
      %s207 = scalar_lea.vmem %s0, %s206
      %p208 = scmp.lt.s32.totalorder %s15, 1
      %s209 = scalar_select %p208, %s15, 1
      %s210 = smul.addr %s209, 3
      %s211 = smul.addr %s210, 8
      %s212 = scalar_lea.vmem %s3, %s211
      %p213 = scmp.lt.s32.totalorder %s15, 1
      %s214 = scalar_select %p213, %s15, 1
      %s215 = smul.addr %s214, 3
      %s216 = smul.addr %s215, 8
      %s217 = scalar_lea.vmem %s4, %s216
      %v219 = vld [vmem:[%s207] sm:$0xff]
      %v220 = vld [vmem:[%s207 + $0x8] sm:$0xf]
      %v221 = vld [vmem:[%s1] sm:$0xff]
      %v222 = vld [vmem:[%s1 + $0x8] sm:$0xf]
      %v223 = vld [vmem:[%s1 + $0xc] sm:$0xff]
      %v224 = vld [vmem:[%s1 + $0x14] sm:$0xf]
      %v225 = vld [vmem:[%s1 + $0x18] sm:$0xff]
      %v226 = vld [vmem:[%s1 + $0x20] sm:$0xf]
      %v227 = vld [vmem:[%s1 + $0x24] sm:$0xff]
      %v228 = vld [vmem:[%s1 + $0x2c] sm:$0xf]
      %v229 = vld [vmem:[%s1 + $0x30] sm:$0xff]
      %v230 = vld [vmem:[%s1 + $0x38] sm:$0xf]
      %v231 = vld [vmem:[%s1 + $0x3c] sm:$0xff]
      %v232 = vld [vmem:[%s1 + $0x44] sm:$0xf]
      %v233 = vld [vmem:[%s1 + $0x48] sm:$0xff]
      %v234 = vld [vmem:[%s1 + $0x50] sm:$0xf]
      %v235 = vld [vmem:[%s1 + $0x54] sm:$0xff]
      %v236 = vld [vmem:[%s1 + $0x5c] sm:$0xf]
      %v237 = vld [vmem:[%s1 + $0x60] sm:$0xff]
      %v238 = vld [vmem:[%s1 + $0x68] sm:$0xf]
      %v239 = vld [vmem:[%s1 + $0x6c] sm:$0xff]
      %v240 = vld [vmem:[%s1 + $0x74] sm:$0xf]
      %v241 = vld [vmem:[%s1 + $0x78] sm:$0xff]
      %v242 = vld [vmem:[%s1 + $0x80] sm:$0xf]
      %v243 = vld [vmem:[%s1 + $0x84] sm:$0xff]
      %v244 = vld [vmem:[%s1 + $0x8c] sm:$0xf]
      %v245 = vld [vmem:[%s1 + $0x90] sm:$0xff]
      %v246 = vld [vmem:[%s1 + $0x98] sm:$0xf]
      %v247 = vld [vmem:[%s1 + $0x9c] sm:$0xff]
      %v248 = vld [vmem:[%s1 + $0xa4] sm:$0xf]
      %v249 = vld [vmem:[%s1 + $0xa8] sm:$0xff]
      %v250 = vld [vmem:[%s1 + $0xb0] sm:$0xf]
      %v251 = vld [vmem:[%s1 + $0xb4] sm:$0xff]
      %v252 = vld [vmem:[%s1 + $0xbc] sm:$0xf]
      %v253 = vld [vmem:[%s1 + $0xc0] sm:$0xff]
      %v254 = vld [vmem:[%s1 + $0xc8] sm:$0xf]
      %v255 = vld [vmem:[%s1 + $0xcc] sm:$0xff]
      %v256 = vld [vmem:[%s1 + $0xd4] sm:$0xf]
      %v257 = vld [vmem:[%s1 + $0xd8] sm:$0xff]
      %v258 = vld [vmem:[%s1 + $0xe0] sm:$0xf]
      %v259 = vld [vmem:[%s1 + $0xe4] sm:$0xff]
      %v260 = vld [vmem:[%s1 + $0xec] sm:$0xf]
      %v261 = vld [vmem:[%s1 + $0xf0] sm:$0xff]
      %v262 = vld [vmem:[%s1 + $0xf8] sm:$0xf]
      %v263 = vld [vmem:[%s1 + $0xfc] sm:$0xff]
      %v264 = vld [vmem:[%s1 + $0x104] sm:$0xf]
      %v265 = vld [vmem:[%s1 + $0x108] sm:$0xff]
      %v266 = vld [vmem:[%s1 + $0x110] sm:$0xf]
      %v267 = vld [vmem:[%s1 + $0x114] sm:$0xff]
      %v268 = vld [vmem:[%s1 + $0x11c] sm:$0xf]
      %v269 = vld [vmem:[%s1 + $0x120] sm:$0xff]
      %v270 = vld [vmem:[%s1 + $0x128] sm:$0xf]
      %v271 = vld [vmem:[%s1 + $0x12c] sm:$0xff]
      %v272 = vld [vmem:[%s1 + $0x134] sm:$0xf]
      %v273 = vld [vmem:[%s1 + $0x138] sm:$0xff]
      %v274 = vld [vmem:[%s1 + $0x140] sm:$0xf]
      %v275 = vld [vmem:[%s1 + $0x144] sm:$0xff]
      %v276 = vld [vmem:[%s1 + $0x14c] sm:$0xf]
      %v277 = vld [vmem:[%s1 + $0x150] sm:$0xff]
      %v278 = vld [vmem:[%s1 + $0x158] sm:$0xf]
      %v279 = vld [vmem:[%s1 + $0x15c] sm:$0xff]
      %v280 = vld [vmem:[%s1 + $0x164] sm:$0xf]
      %v281 = vld [vmem:[%s1 + $0x168] sm:$0xff]
      %v282 = vld [vmem:[%s1 + $0x170] sm:$0xf]
      %v283 = vld [vmem:[%s1 + $0x174] sm:$0xff]
      %v284 = vld [vmem:[%s1 + $0x17c] sm:$0xf]
      %v285 = vld [vmem:[%s1 + $0x180] sm:$0xff]
      %v286 = vld [vmem:[%s1 + $0x188] sm:$0xf]
      %v287 = vld [vmem:[%s1 + $0x18c] sm:$0xff]
      %v288 = vld [vmem:[%s1 + $0x194] sm:$0xf]
      %v289 = vld [vmem:[%s1 + $0x198] sm:$0xff]
      %v290 = vld [vmem:[%s1 + $0x1a0] sm:$0xf]
      %v291 = vld [vmem:[%s1 + $0x1a4] sm:$0xff]
      %v292 = vld [vmem:[%s1 + $0x1ac] sm:$0xf]
      %v293 = vld [vmem:[%s1 + $0x1b0] sm:$0xff]
      %v294 = vld [vmem:[%s1 + $0x1b8] sm:$0xf]
      %v295 = vld [vmem:[%s1 + $0x1bc] sm:$0xff]
      %v296 = vld [vmem:[%s1 + $0x1c4] sm:$0xf]
      %v297 = vld [vmem:[%s1 + $0x1c8] sm:$0xff]
      %v298 = vld [vmem:[%s1 + $0x1d0] sm:$0xf]
      %v299 = vld [vmem:[%s1 + $0x1d4] sm:$0xff]
      %v300 = vld [vmem:[%s1 + $0x1dc] sm:$0xf]
      %v301 = vld [vmem:[%s1 + $0x1e0] sm:$0xff]
      %v302 = vld [vmem:[%s1 + $0x1e8] sm:$0xf]
      %v303 = vld [vmem:[%s1 + $0x1ec] sm:$0xff]
      %v304 = vld [vmem:[%s1 + $0x1f4] sm:$0xf]
      %v305 = vld [vmem:[%s1 + $0x1f8] sm:$0xff]
      %v306 = vld [vmem:[%s1 + $0x200] sm:$0xf]
      %v307 = vld [vmem:[%s1 + $0x204] sm:$0xff]
      %v308 = vld [vmem:[%s1 + $0x20c] sm:$0xf]
      %v309 = vld [vmem:[%s1 + $0x210] sm:$0xff]
      %v310 = vld [vmem:[%s1 + $0x218] sm:$0xf]
      %v311 = vld [vmem:[%s1 + $0x21c] sm:$0xff]
      %v312 = vld [vmem:[%s1 + $0x224] sm:$0xf]
      %v313 = vld [vmem:[%s1 + $0x228] sm:$0xff]
      %v314 = vld [vmem:[%s1 + $0x230] sm:$0xf]
      %v315 = vld [vmem:[%s1 + $0x234] sm:$0xff]
      %v316 = vld [vmem:[%s1 + $0x23c] sm:$0xf]
      %v317 = vld [vmem:[%s2] sm:$0x7]
      %v319 = vlaneseq
      %v320 = vshrl.u32 %v319, 7
      %v321 = vsub.s32 0, %v320
      %v322 = vrot.slane %v317, %v321
      %v323 = vlaneseq
      %v324 = vshrl.u32 %v323, 7
      %v325 = vsub.s32 1, %v324
      %v326 = vrot.slane %v317, %v325
      %v327 = vlaneseq
      %v328 = vshrl.u32 %v327, 7
      %v329 = vsub.s32 2, %v328
      %v330 = vrot.slane %v317, %v329
      %v336 = vunpack.c.l.b16 %v219
      %v337 = vunpack.c.h.b16 %v219
      %v338 = vunpack.c.l.b16 %v220
      %v339 = vpack.c.b16 %v336, %v336
      %v340 = vpack.c.b16 %v337, %v337
      %v341 = vpack.c.b16 %v338, %v338
      %v441 = vunpack.c.l.b16 %v221
      %v442 = vunpack.c.h.b16 %v221
      %v443 = vunpack.c.l.b16 %v222
      %v444 = vunpack.c.l.b16 %v223
      %v445 = vunpack.c.h.b16 %v223
      %v446 = vunpack.c.l.b16 %v224
      %v447 = vunpack.c.l.b16 %v225
      %v448 = vunpack.c.h.b16 %v225
      %v449 = vunpack.c.l.b16 %v226
      %v450 = vunpack.c.l.b16 %v227
      %v451 = vunpack.c.h.b16 %v227
      %v452 = vunpack.c.l.b16 %v228
      %v453 = vunpack.c.l.b16 %v229
      %v454 = vunpack.c.h.b16 %v229
      %v455 = vunpack.c.l.b16 %v230
      %v456 = vunpack.c.l.b16 %v231
      %v457 = vunpack.c.h.b16 %v231
      %v458 = vunpack.c.l.b16 %v232
      %v459 = vunpack.c.l.b16 %v233
      %v460 = vunpack.c.h.b16 %v233
      %v461 = vunpack.c.l.b16 %v234
      %v462 = vunpack.c.l.b16 %v235
      %v463 = vunpack.c.h.b16 %v235
      %v464 = vunpack.c.l.b16 %v236
      %v465 = vunpack.c.l.b16 %v237
      %v466 = vunpack.c.h.b16 %v237
      %v467 = vunpack.c.l.b16 %v238
      %v468 = vunpack.c.l.b16 %v239
      %v469 = vunpack.c.h.b16 %v239
      %v470 = vunpack.c.l.b16 %v240
      %v471 = vunpack.c.l.b16 %v241
      %v472 = vunpack.c.h.b16 %v241
      %v473 = vunpack.c.l.b16 %v242
      %v474 = vunpack.c.l.b16 %v243
      %v475 = vunpack.c.h.b16 %v243
      %v476 = vunpack.c.l.b16 %v244
      %v477 = vunpack.c.l.b16 %v245
      %v478 = vunpack.c.h.b16 %v245
      %v479 = vunpack.c.l.b16 %v246
      %v480 = vunpack.c.l.b16 %v247
      %v481 = vunpack.c.h.b16 %v247
      %v482 = vunpack.c.l.b16 %v248
      %v483 = vunpack.c.l.b16 %v249
      %v484 = vunpack.c.h.b16 %v249
      %v485 = vunpack.c.l.b16 %v250
      %v486 = vunpack.c.l.b16 %v251
      %v487 = vunpack.c.h.b16 %v251
      %v488 = vunpack.c.l.b16 %v252
      %v489 = vunpack.c.l.b16 %v253
      %v490 = vunpack.c.h.b16 %v253
      %v491 = vunpack.c.l.b16 %v254
      %v492 = vunpack.c.l.b16 %v255
      %v493 = vunpack.c.h.b16 %v255
      %v494 = vunpack.c.l.b16 %v256
      %v495 = vunpack.c.l.b16 %v257
      %v496 = vunpack.c.h.b16 %v257
      %v497 = vunpack.c.l.b16 %v258
      %v498 = vunpack.c.l.b16 %v259
      %v499 = vunpack.c.h.b16 %v259
      %v500 = vunpack.c.l.b16 %v260
      %v501 = vunpack.c.l.b16 %v261
      %v502 = vunpack.c.h.b16 %v261
      %v503 = vunpack.c.l.b16 %v262
      %v504 = vunpack.c.l.b16 %v263
      %v505 = vunpack.c.h.b16 %v263
      %v506 = vunpack.c.l.b16 %v264
      %v507 = vunpack.c.l.b16 %v265
      %v508 = vunpack.c.h.b16 %v265
      %v509 = vunpack.c.l.b16 %v266
      %v510 = vunpack.c.l.b16 %v267
      %v511 = vunpack.c.h.b16 %v267
      %v512 = vunpack.c.l.b16 %v268
      %v513 = vunpack.c.l.b16 %v269
      %v514 = vunpack.c.h.b16 %v269
      %v515 = vunpack.c.l.b16 %v270
      %v516 = vunpack.c.l.b16 %v271
      %v517 = vunpack.c.h.b16 %v271
      %v518 = vunpack.c.l.b16 %v272
      %v519 = vunpack.c.l.b16 %v273
      %v520 = vunpack.c.h.b16 %v273
      %v521 = vunpack.c.l.b16 %v274
      %v522 = vunpack.c.l.b16 %v275
      %v523 = vunpack.c.h.b16 %v275
      %v524 = vunpack.c.l.b16 %v276
      %v525 = vunpack.c.l.b16 %v277
      %v526 = vunpack.c.h.b16 %v277
      %v527 = vunpack.c.l.b16 %v278
      %v528 = vunpack.c.l.b16 %v279
      %v529 = vunpack.c.h.b16 %v279
      %v530 = vunpack.c.l.b16 %v280
      %v531 = vunpack.c.l.b16 %v281
      %v532 = vunpack.c.h.b16 %v281
      %v533 = vunpack.c.l.b16 %v282
      %v534 = vunpack.c.l.b16 %v283
      %v535 = vunpack.c.h.b16 %v283
      %v536 = vunpack.c.l.b16 %v284
      %v537 = vunpack.c.l.b16 %v285
      %v538 = vunpack.c.h.b16 %v285
      %v539 = vunpack.c.l.b16 %v286
      %v540 = vunpack.c.l.b16 %v287
      %v541 = vunpack.c.h.b16 %v287
      %v542 = vunpack.c.l.b16 %v288
      %v543 = vunpack.c.l.b16 %v289
      %v544 = vunpack.c.h.b16 %v289
      %v545 = vunpack.c.l.b16 %v290
      %v546 = vunpack.c.l.b16 %v291
      %v547 = vunpack.c.h.b16 %v291
      %v548 = vunpack.c.l.b16 %v292
      %v549 = vunpack.c.l.b16 %v293
      %v550 = vunpack.c.h.b16 %v293
      %v551 = vunpack.c.l.b16 %v294
      %v552 = vunpack.c.l.b16 %v295
      %v553 = vunpack.c.h.b16 %v295
      %v554 = vunpack.c.l.b16 %v296
      %v555 = vunpack.c.l.b16 %v297
      %v556 = vunpack.c.h.b16 %v297
      %v557 = vunpack.c.l.b16 %v298
      %v558 = vunpack.c.l.b16 %v299
      %v559 = vunpack.c.h.b16 %v299
      %v560 = vunpack.c.l.b16 %v300
      %v561 = vunpack.c.l.b16 %v301
      %v562 = vunpack.c.h.b16 %v301
      %v563 = vunpack.c.l.b16 %v302
      %v564 = vunpack.c.l.b16 %v303
      %v565 = vunpack.c.h.b16 %v303
      %v566 = vunpack.c.l.b16 %v304
      %v567 = vunpack.c.l.b16 %v305
      %v568 = vunpack.c.h.b16 %v305
      %v569 = vunpack.c.l.b16 %v306
      %v570 = vunpack.c.l.b16 %v307
      %v571 = vunpack.c.h.b16 %v307
      %v572 = vunpack.c.l.b16 %v308
      %v573 = vunpack.c.l.b16 %v309
      %v574 = vunpack.c.h.b16 %v309
      %v575 = vunpack.c.l.b16 %v310
      %v576 = vunpack.c.l.b16 %v311
      %v577 = vunpack.c.h.b16 %v311
      %v578 = vunpack.c.l.b16 %v312
      %v579 = vunpack.c.l.b16 %v313
      %v580 = vunpack.c.h.b16 %v313
      %v581 = vunpack.c.l.b16 %v314
      %v582 = vunpack.c.l.b16 %v315
      %v583 = vunpack.c.h.b16 %v315
      %v584 = vunpack.c.l.b16 %v316
      %v585 = vpack.c.b16 %v444, %v441
      %v586 = vpack.c.b16 %v445, %v442
      %v587 = vpack.c.b16 %v446, %v443
      %v588 = vpack.c.b16 %v450, %v447
      %v589 = vpack.c.b16 %v451, %v448
      %v590 = vpack.c.b16 %v452, %v449
      %v591 = vpack.c.b16 %v456, %v453
      %v592 = vpack.c.b16 %v457, %v454
      %v593 = vpack.c.b16 %v458, %v455
      %v594 = vpack.c.b16 %v462, %v459
      %v595 = vpack.c.b16 %v463, %v460
      %v596 = vpack.c.b16 %v464, %v461
      %v597 = vpack.c.b16 %v468, %v465
      %v598 = vpack.c.b16 %v469, %v466
      %v599 = vpack.c.b16 %v470, %v467
      %v600 = vpack.c.b16 %v474, %v471
      %v601 = vpack.c.b16 %v475, %v472
      %v602 = vpack.c.b16 %v476, %v473
      %v603 = vpack.c.b16 %v480, %v477
      %v604 = vpack.c.b16 %v481, %v478
      %v605 = vpack.c.b16 %v482, %v479
      %v606 = vpack.c.b16 %v486, %v483
      %v607 = vpack.c.b16 %v487, %v484
      %v608 = vpack.c.b16 %v488, %v485
      %v609 = vpack.c.b16 %v492, %v489
      %v610 = vpack.c.b16 %v493, %v490
      %v611 = vpack.c.b16 %v494, %v491
      %v612 = vpack.c.b16 %v498, %v495
      %v613 = vpack.c.b16 %v499, %v496
      %v614 = vpack.c.b16 %v500, %v497
      %v615 = vpack.c.b16 %v504, %v501
      %v616 = vpack.c.b16 %v505, %v502
      %v617 = vpack.c.b16 %v506, %v503
      %v618 = vpack.c.b16 %v510, %v507
      %v619 = vpack.c.b16 %v511, %v508
      %v620 = vpack.c.b16 %v512, %v509
      %v621 = vpack.c.b16 %v516, %v513
      %v622 = vpack.c.b16 %v517, %v514
      %v623 = vpack.c.b16 %v518, %v515
      %v624 = vpack.c.b16 %v522, %v519
      %v625 = vpack.c.b16 %v523, %v520
      %v626 = vpack.c.b16 %v524, %v521
      %v627 = vpack.c.b16 %v528, %v525
      %v628 = vpack.c.b16 %v529, %v526
      %v629 = vpack.c.b16 %v530, %v527
      %v630 = vpack.c.b16 %v534, %v531
      %v631 = vpack.c.b16 %v535, %v532
      %v632 = vpack.c.b16 %v536, %v533
      %v633 = vpack.c.b16 %v540, %v537
      %v634 = vpack.c.b16 %v541, %v538
      %v635 = vpack.c.b16 %v542, %v539
      %v636 = vpack.c.b16 %v546, %v543
      %v637 = vpack.c.b16 %v547, %v544
      %v638 = vpack.c.b16 %v548, %v545
      %v639 = vpack.c.b16 %v552, %v549
      %v640 = vpack.c.b16 %v553, %v550
      %v641 = vpack.c.b16 %v554, %v551
      %v642 = vpack.c.b16 %v558, %v555
      %v643 = vpack.c.b16 %v559, %v556
      %v644 = vpack.c.b16 %v560, %v557
      %v645 = vpack.c.b16 %v564, %v561
      %v646 = vpack.c.b16 %v565, %v562
      %v647 = vpack.c.b16 %v566, %v563
      %v648 = vpack.c.b16 %v570, %v567
      %v649 = vpack.c.b16 %v571, %v568
      %v650 = vpack.c.b16 %v572, %v569
      %v651 = vpack.c.b16 %v576, %v573
      %v652 = vpack.c.b16 %v577, %v574
      %v653 = vpack.c.b16 %v578, %v575
      %v654 = vpack.c.b16 %v582, %v579
      %v655 = vpack.c.b16 %v583, %v580
      %v656 = vpack.c.b16 %v584, %v581
      %729 = vmatprep.subr.bf16.mxu0 %v586
      %730 = vmatpush1.bf16.msra.mxu0 %v585
      %731 = vmatprep.subr.bf16.mxu0 %v589
      %732 = vmatpush1.bf16.msra.mxu0 %v588
      %733 = vmatprep.subr.bf16.mxu0 %v592
      %734 = vmatpush1.bf16.msra.mxu0 %v591
      %735 = vmatprep.subr.bf16.mxu0 %v595
      %736 = vmatpush1.bf16.msra.mxu0 %v594
      %737 = vmatprep.subr.bf16.mxu0 %v598
      %738 = vmatpush1.bf16.msra.mxu0 %v597
      %739 = vmatprep.subr.bf16.mxu0 %v601
      %740 = vmatpush1.bf16.msra.mxu0 %v600
      %741 = vmatprep.subr.bf16.mxu0 %v604
      %742 = vmatpush1.bf16.msra.mxu0 %v603
      %743 = vmatprep.subr.bf16.mxu0 %v607
      %744 = vmatpush1.bf16.msra.mxu0 %v606
      %745 = vmatprep.subr.bf16.mxu0 %v610
      %746 = vmatpush1.bf16.msra.mxu0 %v609
      %747 = vmatprep.subr.bf16.mxu0 %v613
      %748 = vmatpush1.bf16.msra.mxu0 %v612
      %749 = vmatprep.subr.bf16.mxu0 %v616
      %750 = vmatpush1.bf16.msra.mxu0 %v615
      %751 = vmatprep.subr.bf16.mxu0 %v619
      %752 = vmatpush1.bf16.msra.mxu0 %v618
      %753 = vmatprep.subr.bf16.mxu0 %v622
      %754 = vmatpush1.bf16.msra.mxu0 %v621
      %755 = vmatprep.subr.bf16.mxu0 %v625
      %756 = vmatpush1.bf16.msra.mxu0 %v624
      %757 = vmatprep.subr.bf16.mxu0 %v628
      %758 = vmatpush1.bf16.msra.mxu0 %v627
      %759 = vmatprep.subr.bf16.mxu0 %v631
      %760 = vmatpush1.bf16.msra.mxu0 %v630
      %761 = vmatprep.mubr.bf16.mxu0 %v340
      %762 = vmatmul.mubr.bf16.gmra.mrb[0].mxu0 %v339
      %v763 = vpop.f32.mrb[0].mxu0
      %v764 = vadd.f32 %v322, %v763
      %v765 = vpop.f32.mrb[0].mxu0
      %v766 = vadd.f32 %v326, %v765
      %v767 = vpop.f32.mrb[0].mxu0
      %v768 = vpop.f32.mrb[0].mxu0
      %769 = vdwg.mxu0
      %770 = vmatprep.subr.bf16.mxu0 %v634
      %771 = vmatpush1.bf16.msra.mxu0 %v633
      %772 = vmatprep.subr.bf16.mxu0 %v637
      %773 = vmatpush1.bf16.msra.mxu0 %v636
      %774 = vmatprep.subr.bf16.mxu0 %v640
      %775 = vmatpush1.bf16.msra.mxu0 %v639
      %776 = vmatprep.subr.bf16.mxu0 %v643
      %777 = vmatpush1.bf16.msra.mxu0 %v642
      %778 = vmatprep.subr.bf16.mxu0 %v646
      %779 = vmatpush1.bf16.msra.mxu0 %v645
      %780 = vmatprep.subr.bf16.mxu0 %v649
      %781 = vmatpush1.bf16.msra.mxu0 %v648
      %782 = vmatprep.subr.bf16.mxu0 %v652
      %783 = vmatpush1.bf16.msra.mxu0 %v651
      %784 = vmatprep.subr.bf16.mxu0 %v655
      %785 = vmatpush1.bf16.msra.mxu0 %v654
      %786 = vmatprep.subr.bf16.mxu0 0
      %787 = vmatpush1.bf16.msra.mxu0 0
      %788 = vmatprep.subr.bf16.mxu0 0
      %789 = vmatpush1.bf16.msra.mxu0 0
      %790 = vmatprep.subr.bf16.mxu0 0
      %791 = vmatpush1.bf16.msra.mxu0 0
      %792 = vmatprep.subr.bf16.mxu0 0
      %793 = vmatpush1.bf16.msra.mxu0 0
      %794 = vmatprep.subr.bf16.mxu0 0
      %795 = vmatpush1.bf16.msra.mxu0 0
      %796 = vmatprep.subr.bf16.mxu0 0
      %797 = vmatpush1.bf16.msra.mxu0 0
      %798 = vmatprep.subr.bf16.mxu0 0
      %799 = vmatpush1.bf16.msra.mxu0 0
      %800 = vmatprep.subr.bf16.mxu0 0
      %801 = vmatpush1.bf16.msra.mxu0 0
      %802 = vmatprep.mubr.bf16.mxu0 0
      %803 = vmatmul.mubr.bf16.gmra.mrb[0].mxu0 %v341
      %v804 = vpop.f32.mrb[0].mxu0
      %v805 = vadd.f32 %v764, %v804
      %v806 = vpop.f32.mrb[0].mxu0
      %v807 = vadd.f32 %v766, %v806
      %v808 = vpop.f32.mrb[0].mxu0
      %v809 = vpop.f32.mrb[0].mxu0
      %810 = vdwg.mxu0
      %811 = vmatprep.subr.bf16.mxu0 0
      %812 = vmatpush1.bf16.msra.mxu0 %v587
      %813 = vmatprep.subr.bf16.mxu0 0
      %814 = vmatpush1.bf16.msra.mxu0 %v590
      %815 = vmatprep.subr.bf16.mxu0 0
      %816 = vmatpush1.bf16.msra.mxu0 %v593
      %817 = vmatprep.subr.bf16.mxu0 0
      %818 = vmatpush1.bf16.msra.mxu0 %v596
      %819 = vmatprep.subr.bf16.mxu0 0
      %820 = vmatpush1.bf16.msra.mxu0 %v599
      %821 = vmatprep.subr.bf16.mxu0 0
      %822 = vmatpush1.bf16.msra.mxu0 %v602
      %823 = vmatprep.subr.bf16.mxu0 0
      %824 = vmatpush1.bf16.msra.mxu0 %v605
      %825 = vmatprep.subr.bf16.mxu0 0
      %826 = vmatpush1.bf16.msra.mxu0 %v608
      %827 = vmatprep.subr.bf16.mxu0 0
      %828 = vmatpush1.bf16.msra.mxu0 %v611
      %829 = vmatprep.subr.bf16.mxu0 0
      %830 = vmatpush1.bf16.msra.mxu0 %v614
      %831 = vmatprep.subr.bf16.mxu0 0
      %832 = vmatpush1.bf16.msra.mxu0 %v617
      %833 = vmatprep.subr.bf16.mxu0 0
      %834 = vmatpush1.bf16.msra.mxu0 %v620
      %835 = vmatprep.subr.bf16.mxu0 0
      %836 = vmatpush1.bf16.msra.mxu0 %v623
      %837 = vmatprep.subr.bf16.mxu0 0
      %838 = vmatpush1.bf16.msra.mxu0 %v626
      %839 = vmatprep.subr.bf16.mxu0 0
      %840 = vmatpush1.bf16.msra.mxu0 %v629
      %841 = vmatprep.subr.bf16.mxu0 0
      %842 = vmatpush1.bf16.msra.mxu0 %v632
      %843 = vmatprep.mubr.bf16.mxu0 %v340
      %844 = vmatmul.mubr.bf16.gmra.mrb[0].mxu0 %v339
      %v845 = vpop.f32.mrb[0].mxu0
      %v846 = vadd.f32 %v330, %v845
      %v847 = vpop.f32.mrb[0].mxu0
      %v848 = vpop.f32.mrb[0].mxu0
      %v849 = vpop.f32.mrb[0].mxu0
      %850 = vdwg.mxu0
      %851 = vmatprep.subr.bf16.mxu0 0
      %852 = vmatpush1.bf16.msra.mxu0 %v635
      %853 = vmatprep.subr.bf16.mxu0 0
      %854 = vmatpush1.bf16.msra.mxu0 %v638
      %855 = vmatprep.subr.bf16.mxu0 0
      %856 = vmatpush1.bf16.msra.mxu0 %v641
      %857 = vmatprep.subr.bf16.mxu0 0
      %858 = vmatpush1.bf16.msra.mxu0 %v644
      %859 = vmatprep.subr.bf16.mxu0 0
      %860 = vmatpush1.bf16.msra.mxu0 %v647
      %861 = vmatprep.subr.bf16.mxu0 0
      %862 = vmatpush1.bf16.msra.mxu0 %v650
      %863 = vmatprep.subr.bf16.mxu0 0
      %864 = vmatpush1.bf16.msra.mxu0 %v653
      %865 = vmatprep.subr.bf16.mxu0 0
      %866 = vmatpush1.bf16.msra.mxu0 %v656
      %867 = vmatprep.subr.bf16.mxu0 0
      %868 = vmatpush1.bf16.msra.mxu0 0
      %869 = vmatprep.subr.bf16.mxu0 0
      %870 = vmatpush1.bf16.msra.mxu0 0
      %871 = vmatprep.subr.bf16.mxu0 0
      %872 = vmatpush1.bf16.msra.mxu0 0
      %873 = vmatprep.subr.bf16.mxu0 0
      %874 = vmatpush1.bf16.msra.mxu0 0
      %875 = vmatprep.subr.bf16.mxu0 0
      %876 = vmatpush1.bf16.msra.mxu0 0
      %877 = vmatprep.subr.bf16.mxu0 0
      %878 = vmatpush1.bf16.msra.mxu0 0
      %879 = vmatprep.subr.bf16.mxu0 0
      %880 = vmatpush1.bf16.msra.mxu0 0
      %881 = vmatprep.subr.bf16.mxu0 0
      %882 = vmatpush1.bf16.msra.mxu0 0
      %883 = vmatprep.mubr.bf16.mxu0 0
      %884 = vmatmul.mubr.bf16.gmra.mrb[0].mxu0 %v341
      %v885 = vpop.f32.mrb[0].mxu0
      %v886 = vadd.f32 %v846, %v885
      %v887 = vpop.f32.mrb[0].mxu0
      %v888 = vpop.f32.mrb[0].mxu0
      %v889 = vpop.f32.mrb[0].mxu0
      %890 = vdwg.mxu0
      %v891 = vld [vmem:[%s212] sm:$0xff]
      %v892 = vld [vmem:[%s212 + $0x8] sm:$0xff]
      %v893 = vld [vmem:[%s212 + $0x10] sm:$0xff]
      %v894 = vadd.f32 %v805, %v891
      %v895 = vadd.f32 %v807, %v892
      %v896 = vadd.f32 %v886, %v893
      %897 = vst [vmem:[%s217] sm:$0xff] %v894
      %898 = vst [vmem:[%s217 + $0x8] sm:$0xff] %v895
      %899 = vst [vmem:[%s217 + $0x10] sm:$0xff] %v896
      %p900 = scmp.lt.s32.totalorder %s15, 1
      %s901 = scalar_select %p900, %s15, 1
      %s902 = smul.addr %s901, 3
      %s903 = smul.addr %s902, 8
      %s904 = scalar_lea.vmem %s4, %s903
      // Predicated region
      $region37: #{build_transformer_forward.15} parent=35 // pred_check
        %p905 = pneg %p127
      $region38: #{build_transformer_forward.15} parent=35 // pred_check_branch
        %907 = sbr.rel (%p905) target = $region40
      $region39: #{build_transformer_forward.15} parent=35 // pred_region
        _
      $region40: #{build_transformer_forward.15} parent=35 // pred_fallthru
        _
    $region36: #{build_transformer_forward.15} parent=5 // pred_fallthru
      _
    %p908 = scmp.le.s32.totalorder 2, %s10
    // Predicated region
    $region41: #{build_transformer_forward.15} parent=5 // pred_check
      %p909 = pneg %p908
    $region42: #{build_transformer_forward.15} parent=5 // pred_check_branch
      %911 = sbr.rel (%p909) target = $region44
    $region43: #{build_transformer_forward.15} parent=5 // pred_region
      %s912 = ssub.s32 %s10, 2
      // Predicated region
      $region45: #{build_transformer_forward.15} parent=43 // pred_check
        %p913 = pneg %p133
      $region46: #{build_transformer_forward.15} parent=43 // pred_check_branch
        %915 = sbr.rel (%p913) target = $region48
      $region47: #{build_transformer_forward.15} parent=43 // pred_region
        %p916 = scmp.lt.s32.totalorder %s16, 1
        %s917 = scalar_select %p916, %s16, 1
        %s918 = smul.addr %s917, 3
        %s919 = smul.addr %s918, 8
        %s920 = scalar_lea.vmem %s4, %s919
      $region48: #{build_transformer_forward.15} parent=43 // pred_fallthru
        _
    $region44: #{build_transformer_forward.15} parent=5 // pred_fallthru
      _
  $region6: #{build_transformer_forward.15} parent=0 // loop_footer
    %s14 = sadd.s32 1, %s10
  $region7: #{build_transformer_forward.15} parent=0 // loop_footer_branch
    %9 = sbr.rel target = $region3
  $region8: #{build_transformer_forward.15} parent=0 // loop_exit
    _

// kernel: build_transformer_forward.14
$region0: #{build_transformer_forward.14}
  #allocation0 [shape = 'u32[]', space=smem, size = 0x4, offset = 0x4, fixed_abs, tag = 'smem constant byte address 0x4 - core index']
  #allocation1 [shape = 'u32[144,128]{1,0:T(1,128)}', space=vmem, size = 0x12000, scoped, tag = 'internal scratch']
  %s0 = inlined_call_operand.vmem [shape: bf16[2,8,1152], index: 0, kind: input, shape index: {}, may-alias: {0,1,2}]
  %s1 = inlined_call_operand.vmem [shape: bf16[2,8,1152], index: 1, kind: input, shape index: {}, may-alias: {0,1,2}]
  %s2 = inlined_call_operand.vmem [shape: bf16[2,8,1152], index: 2, kind: input, shape index: {}, may-alias: {0,1,2}]
  %s3 = inlined_call_operand.vmem [shape: bf16[2,8,384], index: 3, kind: output, shape index: {}]
  %s4 = sld [smem:[#allocation0]]
  $region45: #{build_transformer_forward.14} parent=0
    _
  %s6 = ssub.s32 1, %s4
  %s7 = scalar_select 0, %s6, %s4
  loop: start=0, step=1, limit=4
  $region2: #{build_transformer_forward.14} parent=0 // loop_pre_header
    _
  $region3: #{build_transformer_forward.14} parent=0 // loop_header
    %s9 = sphi 0, %s13
    %p10 = scmp.ge.s32.totalorder %s9, 4
    %s16 = sphi 0, %s28
    %s17 = sphi 0, %s24
    %s18 = sphi 0, %s16
    %s19 = sphi 0, %s17
    %s20 = sphi 0, %s18
    %s21 = sphi 0, %s19
    %s33 = sphi 0, %s35
    %s36 = sphi 0, %s33
    %s37 = sphi 0, %s36
    %s53 = sphi 0, %s37
    %s63 = sphi 0, %s65
    %s66 = sphi 0, %s63
    %s67 = sphi 0, %s66
    %s83 = sphi 0, %s67
    %s93 = sphi 0, %s95
    %s96 = sphi 0, %s93
    %s97 = sphi 0, %s96
    %s113 = sphi 0, %s97
    %s121 = sphi 0, %s123
    %s124 = sphi 0, %s121
    %s125 = sphi 0, %s124
    %s141 = sphi 0, %s125
  $region4: #{build_transformer_forward.14} parent=0 // loop_header_branch
    %12 = sbr.rel (%p10) target = $region8
  $region5: #{build_transformer_forward.14} parent=0 // loop_body
    %s14 = ssub.s32 %s9, 1
    %s15 = ssub.s32 %s9, 2
    %s22 = sadd.s32 1, %s17
    %p23 = scmp.ge.s32.totalorder %s22, 1
    %s24 = scalar_select %p23, 0, %s22
    %s25 = sadd.s32 1, %s16
    %s26 = scalar_select %p23, %s25, %s16
    %p27 = scmp.ge.s32.totalorder %s26, 2
    %s28 = scalar_select %p27, 0, %s26
    %s29 = ssub.s32 %s16, %s28
    %s30 = ssub.s32 %s17, %s24
    %s31 = sor.u32 %s29, %s30
    %p32 = scmp.eq.s32.totalorder %s31, 0
    %s34 = sadd.s32 %s33, 1
    %s35 = scalar_select %p32, %s33, %s34
    %p38 = pneg %p32
    %p39 = scmp.eq.s32.totalorder %s9, 1
    %p40 = por %p38, %p39
    %p41 = scmp.ne.s32.totalorder %s33, %s36
    %p42 = scmp.eq.s32.totalorder %s9, 0
    %p43 = por %p41, %p42
    %p44 = scmp.ne.s32.totalorder %s33, %s36
    %p45 = scmp.eq.s32.totalorder %s14, 1
    %p46 = por %p44, %p45
    %p47 = scmp.ne.s32.totalorder %s36, %s37
    %p48 = scmp.eq.s32.totalorder %s14, 0
    %p49 = por %p47, %p48
    %p50 = scmp.ne.s32.totalorder %s36, %s37
    %p51 = scmp.eq.s32.totalorder %s15, 1
    %p52 = por %p50, %p51
    %p54 = scmp.ne.s32.totalorder %s37, %s53
    %p55 = scmp.eq.s32.totalorder %s15, 0
    %p56 = por %p54, %p55
    %s57 = sadd.s32 %s17, 1
    %s58 = sadd.s32 %s24, 1
    %s59 = ssub.s32 %s16, %s28
    %s60 = ssub.s32 %s57, %s58
    %s61 = sor.u32 %s59, %s60
    %p62 = scmp.eq.s32.totalorder %s61, 0
    %s64 = sadd.s32 %s63, 1
    %s65 = scalar_select %p62, %s63, %s64
    %p68 = pneg %p62
    %p69 = scmp.eq.s32.totalorder %s9, 1
    %p70 = por %p68, %p69
    %p71 = scmp.ne.s32.totalorder %s63, %s66
    %p72 = scmp.eq.s32.totalorder %s9, 0
    %p73 = por %p71, %p72
    %p74 = scmp.ne.s32.totalorder %s63, %s66
    %p75 = scmp.eq.s32.totalorder %s14, 1
    %p76 = por %p74, %p75
    %p77 = scmp.ne.s32.totalorder %s66, %s67
    %p78 = scmp.eq.s32.totalorder %s14, 0
    %p79 = por %p77, %p78
    %p80 = scmp.ne.s32.totalorder %s66, %s67
    %p81 = scmp.eq.s32.totalorder %s15, 1
    %p82 = por %p80, %p81
    %p84 = scmp.ne.s32.totalorder %s67, %s83
    %p85 = scmp.eq.s32.totalorder %s15, 0
    %p86 = por %p84, %p85
    %s87 = sadd.s32 %s17, 2
    %s88 = sadd.s32 %s24, 2
    %s89 = ssub.s32 %s16, %s28
    %s90 = ssub.s32 %s87, %s88
    %s91 = sor.u32 %s89, %s90
    %p92 = scmp.eq.s32.totalorder %s91, 0
    %s94 = sadd.s32 %s93, 1
    %s95 = scalar_select %p92, %s93, %s94
    %p98 = pneg %p92
    %p99 = scmp.eq.s32.totalorder %s9, 1
    %p100 = por %p98, %p99
    %p101 = scmp.ne.s32.totalorder %s93, %s96
    %p102 = scmp.eq.s32.totalorder %s9, 0
    %p103 = por %p101, %p102
    %p104 = scmp.ne.s32.totalorder %s93, %s96
    %p105 = scmp.eq.s32.totalorder %s14, 1
    %p106 = por %p104, %p105
    %p107 = scmp.ne.s32.totalorder %s96, %s97
    %p108 = scmp.eq.s32.totalorder %s14, 0
    %p109 = por %p107, %p108
    %p110 = scmp.ne.s32.totalorder %s96, %s97
    %p111 = scmp.eq.s32.totalorder %s15, 1
    %p112 = por %p110, %p111
    %p114 = scmp.ne.s32.totalorder %s97, %s113
    %p115 = scmp.eq.s32.totalorder %s15, 0
    %p116 = por %p114, %p115
    %s117 = ssub.s32 %s16, %s28
    %s118 = ssub.s32 %s17, %s24
    %s119 = sor.u32 %s117, %s118
    %p120 = scmp.eq.s32.totalorder %s119, 0
    %s122 = sadd.s32 %s121, 1
    %s123 = scalar_select %p120, %s121, %s122
    %p126 = pneg %p120
    %p127 = scmp.eq.s32.totalorder %s9, 1
    %p128 = por %p126, %p127
    %p129 = scmp.ne.s32.totalorder %s121, %s124
    %p130 = scmp.eq.s32.totalorder %s9, 0
    %p131 = por %p129, %p130
    %p132 = scmp.ne.s32.totalorder %s121, %s124
    %p133 = scmp.eq.s32.totalorder %s14, 1
    %p134 = por %p132, %p133
    %p135 = scmp.ne.s32.totalorder %s124, %s125
    %p136 = scmp.eq.s32.totalorder %s14, 0
    %p137 = por %p135, %p136
    %p138 = scmp.ne.s32.totalorder %s124, %s125
    %p139 = scmp.eq.s32.totalorder %s15, 1
    %p140 = por %p138, %p139
    %p142 = scmp.ne.s32.totalorder %s125, %s141
    %p143 = scmp.eq.s32.totalorder %s15, 0
    %p144 = por %p142, %p143
    %p145 = scmp.le.s32.totalorder 1, %s9
    %p146 = scmp.lt.s32.totalorder %s9, 3
    %p147 = pnand %p145, %p146
    %p148 = pneg %p147
    // Predicated region
    $region9: #{build_transformer_forward.14} parent=5 // pred_check
      _
    $region10: #{build_transformer_forward.14} parent=5 // pred_check_branch
      %150 = sbr.rel (%p147) target = $region12
    $region11: #{build_transformer_forward.14} parent=5 // pred_region
      %s151 = ssub.s32 %s9, 1
    $region12: #{build_transformer_forward.14} parent=5 // pred_fallthru
      _
    %p152 = scmp.lt.s32.totalorder %s9, 2
    // Predicated region
    $region13: #{build_transformer_forward.14} parent=5 // pred_check
      %p153 = pneg %p152
    $region14: #{build_transformer_forward.14} parent=5 // pred_check_branch
      %155 = sbr.rel (%p153) target = $region16
    $region15: #{build_transformer_forward.14} parent=5 // pred_region
      // Predicated region
      $region17: #{build_transformer_forward.14} parent=15 // pred_check
        %p156 = pneg %p43
      $region18: #{build_transformer_forward.14} parent=15 // pred_check_branch
        %158 = sbr.rel (%p156) target = $region20
      $region19: #{build_transformer_forward.14} parent=15 // pred_region
        %s159 = smul.u32 3, %s17
        %p160 = scmp.lt.s32.totalorder %s16, 1
        %s161 = scalar_select %p160, %s16, 1
        %p162 = scmp.lt.s32.totalorder %s159, 8
        %s163 = scalar_select %p162, %s159, 8
        %s164 = smul.addr %s161, 9
        %s165 = sadd.s32 %s163, %s164
        %s166 = smul.addr %s165, 4
        %s167 = scalar_lea.vmem %s0, %s166
        %s168 = smul.u32 3, %s17
      $region20: #{build_transformer_forward.14} parent=15 // pred_fallthru
        _
      // Predicated region
      $region21: #{build_transformer_forward.14} parent=15 // pred_check
        %p169 = pneg %p73
      $region22: #{build_transformer_forward.14} parent=15 // pred_check_branch
        %171 = sbr.rel (%p169) target = $region24
      $region23: #{build_transformer_forward.14} parent=15 // pred_region
        %s172 = sadd.s32 %s17, 1
        %s173 = smul.u32 3, %s172
        %p174 = scmp.lt.s32.totalorder %s16, 1
        %s175 = scalar_select %p174, %s16, 1
        %p176 = scmp.lt.s32.totalorder %s173, 8
        %s177 = scalar_select %p176, %s173, 8
        %s178 = smul.addr %s175, 9
        %s179 = sadd.s32 %s177, %s178
        %s180 = smul.addr %s179, 4
        %s181 = scalar_lea.vmem %s1, %s180
        %s182 = sadd.s32 %s17, 1
        %s183 = smul.u32 3, %s182
      $region24: #{build_transformer_forward.14} parent=15 // pred_fallthru
        _
      // Predicated region
      $region25: #{build_transformer_forward.14} parent=15 // pred_check
        %p184 = pneg %p103
      $region26: #{build_transformer_forward.14} parent=15 // pred_check_branch
        %186 = sbr.rel (%p184) target = $region28
      $region27: #{build_transformer_forward.14} parent=15 // pred_region
        %s187 = sadd.s32 %s17, 2
        %s188 = smul.u32 3, %s187
        %p189 = scmp.lt.s32.totalorder %s16, 1
        %s190 = scalar_select %p189, %s16, 1
        %p191 = scmp.lt.s32.totalorder %s188, 8
        %s192 = scalar_select %p191, %s188, 8
        %s193 = smul.addr %s190, 9
        %s194 = sadd.s32 %s192, %s193
        %s195 = smul.addr %s194, 4
        %s196 = scalar_lea.vmem %s2, %s195
        %s197 = sadd.s32 %s17, 2
        %s198 = smul.u32 3, %s197
      $region28: #{build_transformer_forward.14} parent=15 // pred_fallthru
        _
    $region16: #{build_transformer_forward.14} parent=5 // pred_fallthru
      _
    %p199 = scmp.le.s32.totalorder 1, %s9
    %p200 = scmp.lt.s32.totalorder %s9, 3
    %p201 = pnand %p199, %p200
    %p202 = pneg %p201
    // Predicated region
    $region29: #{build_transformer_forward.14} parent=5 // pred_check
      _
    $region30: #{build_transformer_forward.14} parent=5 // pred_check_branch
      %204 = sbr.rel (%p201) target = $region32
    $region31: #{build_transformer_forward.14} parent=5 // pred_region
      %s205 = ssub.s32 %s9, 1
      %s206 = smul.u32 3, %s19
      %p207 = scmp.lt.s32.totalorder %s18, 1
      %s208 = scalar_select %p207, %s18, 1
      %p209 = scmp.lt.s32.totalorder %s206, 8
      %s210 = scalar_select %p209, %s206, 8
      %s211 = smul.addr %s208, 9
      %s212 = sadd.s32 %s210, %s211
      %s213 = smul.addr %s212, 4
      %s214 = scalar_lea.vmem %s0, %s213
      %p215 = pneg %p49
      %p216 = pneg %p46
      %s217 = sadd.s32 %s19, 1
      %s218 = smul.u32 3, %s217
      %p219 = scmp.lt.s32.totalorder %s18, 1
      %s220 = scalar_select %p219, %s18, 1
      %p221 = scmp.lt.s32.totalorder %s218, 8
      %s222 = scalar_select %p221, %s218, 8
      %s223 = smul.addr %s220, 9
      %s224 = sadd.s32 %s222, %s223
      %s225 = smul.addr %s224, 4
      %s226 = scalar_lea.vmem %s1, %s225
      %p227 = pneg %p79
      %p228 = pneg %p76
      %s229 = sadd.s32 %s19, 2
      %s230 = smul.u32 3, %s229
      %p231 = scmp.lt.s32.totalorder %s18, 1
      %s232 = scalar_select %p231, %s18, 1
      %p233 = scmp.lt.s32.totalorder %s230, 8
      %s234 = scalar_select %p233, %s230, 8
      %s235 = smul.addr %s232, 9
      %s236 = sadd.s32 %s234, %s235
      %s237 = smul.addr %s236, 4
      %s238 = scalar_lea.vmem %s2, %s237
      %p239 = pneg %p109
      %p240 = pneg %p106
      %p241 = pneg %p137
      %p242 = pneg %p134
      %s243 = smul.u32 3, %s19
      %p244 = scmp.lt.s32.totalorder %s18, 1
      %s245 = scalar_select %p244, %s18, 1
      %p246 = scmp.lt.s32.totalorder %s243, 2
      %s247 = scalar_select %p246, %s243, 2
      %s248 = smul.addr %s245, 3
      %s249 = sadd.s32 %s247, %s248
      %s250 = smul.addr %s249, 4
      %s251 = scalar_lea.vmem %s3, %s250
      %s252 = smul.u32 3, %s19
      %p253 = scmp.lt.s32.totalorder %s18, 1
      %s254 = scalar_select %p253, %s18, 1
      %p255 = scmp.lt.s32.totalorder %s252, 8
      %s256 = scalar_select %p255, %s252, 8
      %s257 = smul.addr %s254, 9
      %s258 = sadd.s32 %s256, %s257
      %s259 = smul.addr %s258, 4
      %s260 = scalar_lea.vmem %s0, %s259
      %s261 = smul.u32 3, %s19
      %s262 = sadd.s32 %s19, 1
      %s263 = smul.u32 3, %s262
      %p264 = scmp.lt.s32.totalorder %s18, 1
      %s265 = scalar_select %p264, %s18, 1
      %p266 = scmp.lt.s32.totalorder %s263, 8
      %s267 = scalar_select %p266, %s263, 8
      %s268 = smul.addr %s265, 9
      %s269 = sadd.s32 %s267, %s268
      %s270 = smul.addr %s269, 4
      %s271 = scalar_lea.vmem %s1, %s270
      %s272 = sadd.s32 %s19, 1
      %s273 = smul.u32 3, %s272
      %s274 = sadd.s32 %s19, 2
      %s275 = smul.u32 3, %s274
      %p276 = scmp.lt.s32.totalorder %s18, 1
      %s277 = scalar_select %p276, %s18, 1
      %p278 = scmp.lt.s32.totalorder %s275, 8
      %s279 = scalar_select %p278, %s275, 8
      %s280 = smul.addr %s277, 9
      %s281 = sadd.s32 %s279, %s280
      %s282 = smul.addr %s281, 4
      %s283 = scalar_lea.vmem %s2, %s282
      %s284 = sadd.s32 %s19, 2
      %s285 = smul.u32 3, %s284
      %s286 = smul.u32 3, %s19
      %p287 = scmp.lt.s32.totalorder %s18, 1
      %s288 = scalar_select %p287, %s18, 1
      %p289 = scmp.lt.s32.totalorder %s286, 2
      %s290 = scalar_select %p289, %s286, 2
      %s291 = smul.addr %s288, 3
      %s292 = sadd.s32 %s290, %s291
      %s293 = smul.addr %s292, 4
      %s294 = scalar_lea.vmem %s3, %s293
      %s295 = smul.u32 3, %s19
      %v297 = vld [vmem:[%s260] sm:$0xff]
      %v298 = vld [vmem:[%s260 + $0x8] sm:$0xf]
      %v299 = vld [vmem:[%s271] sm:$0xff]
      %v300 = vld [vmem:[%s271 + $0x8] sm:$0xf]
      %v301 = vld [vmem:[%s283] sm:$0xff]
      %v302 = vld [vmem:[%s283 + $0x8] sm:$0xf]
      %v303 = vlaneseq
      %v304 = vand.u32 %v303, 127
      %vm305 = vcmp.lt.s32.totalorder %v304, 6
      %vm306 = vcmask 523264
      %v308 = vsel %vm306, %v297, 0
      %v311 = vsel %vm306, %v299, 0
      %313 = vmatprep.subr.bf16.mxu0 0
      %314 = vmatpush1.bf16.xpose.msra.mxu0 %v311
      %315 = vmatprep.subr.bf16.mxu0 0
      %316 = vmatpush1.bf16.xpose.msra.mxu0 0
      %317 = vmatprep.subr.bf16.mxu0 0
      %318 = vmatpush1.bf16.xpose.msra.mxu0 0
      %319 = vmatprep.subr.bf16.mxu0 0
      %320 = vmatpush1.bf16.xpose.msra.mxu0 0
      %321 = vmatprep.subr.bf16.mxu0 0
      %322 = vmatpush1.bf16.xpose.msra.mxu0 0
      %323 = vmatprep.subr.bf16.mxu0 0
      %324 = vmatpush1.bf16.xpose.msra.mxu0 0
      %325 = vmatprep.subr.bf16.mxu0 0
      %326 = vmatpush1.bf16.xpose.msra.mxu0 0
      %327 = vmatprep.subr.bf16.mxu0 0
      %328 = vmatpush1.bf16.xpose.msra.mxu0 0
      %329 = vmatprep.subr.bf16.mxu0 0
      %330 = vmatpush1.bf16.xpose.msra.mxu0 0
      %331 = vmatprep.subr.bf16.mxu0 0
      %332 = vmatpush1.bf16.xpose.msra.mxu0 0
      %333 = vmatprep.subr.bf16.mxu0 0
      %334 = vmatpush1.bf16.xpose.msra.mxu0 0
      %335 = vmatprep.subr.bf16.mxu0 0
      %336 = vmatpush1.bf16.xpose.msra.mxu0 0
      %337 = vmatprep.subr.bf16.mxu0 0
      %338 = vmatpush1.bf16.xpose.msra.mxu0 0
      %339 = vmatprep.subr.bf16.mxu0 0
      %340 = vmatpush1.bf16.xpose.msra.mxu0 0
      %341 = vmatprep.subr.bf16.mxu0 0
      %342 = vmatpush1.bf16.xpose.msra.mxu0 0
      %343 = vmatprep.subr.bf16.mxu0 0
      %344 = vmatpush1.bf16.xpose.msra.mxu0 0
      %345 = vmatprep.mubr.bf16.mxu0 0
      %346 = vmatmul.mubr.bf16.gmra.mrb[0].mxu0 %v308
      %v347 = vpop.f32.mrb[0].mxu0
      %v348 = vadd.f32 0.0, %v347
      %v349 = vpop.f32.mrb[0].mxu0
      %v350 = vpop.f32.mrb[0].mxu0
      %v351 = vpop.f32.mrb[0].mxu0
      %352 = vdwg.mxu0
      %v353 = vmul.f32 %v348, 0.125
      %v354 = vsel %vm305, %v353, -1e+30
      %vm355 = vcmask 64512
      %v356 = vsel %vm355, %v354, -inf
      %357 = vmax.xlane.f32.xlu0 %v356
      %v358 = vpop.xlane.xlu0 %357
      %v359 = vsub.f32 %v354, %v358
      %v360 = vmul.f32 %v359, 1.442695
      %v361 = vpow.pop %v360
      %v362 = vsel %vm355, %v361, 0.0
      %363 = vadd.xlane.f32.xlu0 %v362
      %v364 = vpop.xlane.xlu0 %363
      %v365 = vrcp.pop %v364
      %v366 = vmul.f32 %v361, %v365
      %v367 = vpack.c.bf16 %v366, %v366
      %v369 = vsel %vm355, %v367, 0
      %vm371 = vcmask 1043456
      %v373 = vsel %vm371, %v301, 0
      %375 = vmatprep.subr.bf16.mxu0 0
      %376 = vmatpush1.bf16.msra.mxu0 %v373
      %377 = vmatprep.subr.bf16.mxu0 0
      %378 = vmatpush1.bf16.msra.mxu0 0
      %379 = vmatprep.subr.bf16.mxu0 0
      %380 = vmatpush1.bf16.msra.mxu0 0
      %381 = vmatprep.subr.bf16.mxu0 0
      %382 = vmatpush1.bf16.msra.mxu0 0
      %383 = vmatprep.subr.bf16.mxu0 0
      %384 = vmatpush1.bf16.msra.mxu0 0
      %385 = vmatprep.subr.bf16.mxu0 0
      %386 = vmatpush1.bf16.msra.mxu0 0
      %387 = vmatprep.subr.bf16.mxu0 0
      %388 = vmatpush1.bf16.msra.mxu0 0
      %389 = vmatprep.subr.bf16.mxu0 0
      %390 = vmatpush1.bf16.msra.mxu0 0
      %391 = vmatprep.subr.bf16.mxu0 0
      %392 = vmatpush1.bf16.msra.mxu0 0
      %393 = vmatprep.subr.bf16.mxu0 0
      %394 = vmatpush1.bf16.msra.mxu0 0
      %395 = vmatprep.subr.bf16.mxu0 0
      %396 = vmatpush1.bf16.msra.mxu0 0
      %397 = vmatprep.subr.bf16.mxu0 0
      %398 = vmatpush1.bf16.msra.mxu0 0
      %399 = vmatprep.subr.bf16.mxu0 0
      %400 = vmatpush1.bf16.msra.mxu0 0
      %401 = vmatprep.subr.bf16.mxu0 0
      %402 = vmatpush1.bf16.msra.mxu0 0
      %403 = vmatprep.subr.bf16.mxu0 0
      %404 = vmatpush1.bf16.msra.mxu0 0
      %405 = vmatprep.subr.bf16.mxu0 0
      %406 = vmatpush1.bf16.msra.mxu0 0
      %407 = vmatprep.mubr.bf16.mxu0 0
      %408 = vmatmul.mubr.bf16.gmra.mrb[0].mxu0 %v369
      %v409 = vpop.f32.mrb[0].mxu0
      %v410 = vadd.f32 0.0, %v409
      %v411 = vpop.f32.mrb[0].mxu0
      %v412 = vpop.f32.mrb[0].mxu0
      %v413 = vpop.f32.mrb[0].mxu0
      %414 = vdwg.mxu0
      %v416 = vunpack.c.l.b16 %v297
      %v417 = vpack.c.b16 %v416, %v416
      %418 = vrot.lane.b32.xlu0 %v417, 64
      %v419 = vpop.permute.xlu0 %418
      %v421 = vunpack.c.l.b16 %v299
      %v422 = vpack.c.b16 %v421, %v421
      %423 = vrot.lane.b32.xlu0 %v422, 64
      %v424 = vpop.permute.xlu0 %423
      %v426 = vsel %vm306, %v419, 0
      %v429 = vsel %vm306, %v424, 0
      %431 = vmatprep.subr.bf16.mxu0 0
      %432 = vmatpush1.bf16.xpose.msra.mxu0 %v429
      %433 = vmatprep.subr.bf16.mxu0 0
      %434 = vmatpush1.bf16.xpose.msra.mxu0 0
      %435 = vmatprep.subr.bf16.mxu0 0
      %436 = vmatpush1.bf16.xpose.msra.mxu0 0
      %437 = vmatprep.subr.bf16.mxu0 0
      %438 = vmatpush1.bf16.xpose.msra.mxu0 0
      %439 = vmatprep.subr.bf16.mxu0 0
      %440 = vmatpush1.bf16.xpose.msra.mxu0 0
      %441 = vmatprep.subr.bf16.mxu0 0
      %442 = vmatpush1.bf16.xpose.msra.mxu0 0
      %443 = vmatprep.subr.bf16.mxu0 0
      %444 = vmatpush1.bf16.xpose.msra.mxu0 0
      %445 = vmatprep.subr.bf16.mxu0 0
      %446 = vmatpush1.bf16.xpose.msra.mxu0 0
      %447 = vmatprep.subr.bf16.mxu0 0
      %448 = vmatpush1.bf16.xpose.msra.mxu0 0
      %449 = vmatprep.subr.bf16.mxu0 0
      %450 = vmatpush1.bf16.xpose.msra.mxu0 0
      %451 = vmatprep.subr.bf16.mxu0 0
      %452 = vmatpush1.bf16.xpose.msra.mxu0 0
      %453 = vmatprep.subr.bf16.mxu0 0
      %454 = vmatpush1.bf16.xpose.msra.mxu0 0
      %455 = vmatprep.subr.bf16.mxu0 0
      %456 = vmatpush1.bf16.xpose.msra.mxu0 0
      %457 = vmatprep.subr.bf16.mxu0 0
      %458 = vmatpush1.bf16.xpose.msra.mxu0 0
      %459 = vmatprep.subr.bf16.mxu0 0
      %460 = vmatpush1.bf16.xpose.msra.mxu0 0
      %461 = vmatprep.subr.bf16.mxu0 0
      %462 = vmatpush1.bf16.xpose.msra.mxu0 0
      %463 = vmatprep.mubr.bf16.mxu0 0
      %464 = vmatmul.mubr.bf16.gmra.mrb[0].mxu0 %v426
      %v465 = vpop.f32.mrb[0].mxu0
      %v466 = vadd.f32 0.0, %v465
      %v467 = vpop.f32.mrb[0].mxu0
      %v468 = vpop.f32.mrb[0].mxu0
      %v469 = vpop.f32.mrb[0].mxu0
      %470 = vdwg.mxu0
      %v471 = vmul.f32 %v466, 0.125
      %v472 = vsel %vm305, %v471, -1e+30
      %v473 = vsel %vm355, %v472, -inf
      %474 = vmax.xlane.f32.xlu0 %v473
      %v475 = vpop.xlane.xlu0 %474
      %v476 = vsub.f32 %v472, %v475
      %v477 = vmul.f32 %v476, 1.442695
      %v478 = vpow.pop %v477
      %v479 = vsel %vm355, %v478, 0.0
      %480 = vadd.xlane.f32.xlu0 %v479
      %v481 = vpop.xlane.xlu0 %480
      %v482 = vrcp.pop %v481
      %v483 = vmul.f32 %v478, %v482
      %v484 = vpack.c.bf16 %v483, %v483
      %v486 = vunpack.c.l.b16 %v301
      %v487 = vpack.c.b16 %v486, %v486
      %488 = vrot.lane.b32.xlu0 %v487, 64
      %v489 = vpop.permute.xlu0 %488
      %v491 = vsel %vm355, %v484, 0
      %v494 = vsel %vm371, %v489, 0
      %496 = vmatprep.subr.bf16.mxu0 0
      %497 = vmatpush1.bf16.msra.mxu0 %v494
      %498 = vmatprep.subr.bf16.mxu0 0
      %499 = vmatpush1.bf16.msra.mxu0 0
      %500 = vmatprep.subr.bf16.mxu0 0
      %501 = vmatpush1.bf16.msra.mxu0 0
      %502 = vmatprep.subr.bf16.mxu0 0
      %503 = vmatpush1.bf16.msra.mxu0 0
      %504 = vmatprep.subr.bf16.mxu0 0
      %505 = vmatpush1.bf16.msra.mxu0 0
      %506 = vmatprep.subr.bf16.mxu0 0
      %507 = vmatpush1.bf16.msra.mxu0 0
      %508 = vmatprep.subr.bf16.mxu0 0
      %509 = vmatpush1.bf16.msra.mxu0 0
      %510 = vmatprep.subr.bf16.mxu0 0
      %511 = vmatpush1.bf16.msra.mxu0 0
      %512 = vmatprep.subr.bf16.mxu0 0
      %513 = vmatpush1.bf16.msra.mxu0 0
      %514 = vmatprep.subr.bf16.mxu0 0
      %515 = vmatpush1.bf16.msra.mxu0 0
      %516 = vmatprep.subr.bf16.mxu0 0
      %517 = vmatpush1.bf16.msra.mxu0 0
      %518 = vmatprep.subr.bf16.mxu0 0
      %519 = vmatpush1.bf16.msra.mxu0 0
      %520 = vmatprep.subr.bf16.mxu0 0
      %521 = vmatpush1.bf16.msra.mxu0 0
      %522 = vmatprep.subr.bf16.mxu0 0
      %523 = vmatpush1.bf16.msra.mxu0 0
      %524 = vmatprep.subr.bf16.mxu0 0
      %525 = vmatpush1.bf16.msra.mxu0 0
      %526 = vmatprep.subr.bf16.mxu0 0
      %527 = vmatpush1.bf16.msra.mxu0 0
      %528 = vmatprep.mubr.bf16.mxu0 0
      %529 = vmatmul.mubr.bf16.gmra.mrb[0].mxu0 %v491
      %v530 = vpop.f32.mrb[0].mxu0
      %v531 = vadd.f32 0.0, %v530
      %v532 = vpop.f32.mrb[0].mxu0
      %v533 = vpop.f32.mrb[0].mxu0
      %v534 = vpop.f32.mrb[0].mxu0
      %535 = vdwg.mxu0
      %537 = vrot.lane.b32.xlu0 %v531, 64
      %v538 = vpop.permute.xlu0 %537
      %v540 = vsel %vm306, %v410, %v538
      %v541 = vpack.c.bf16 %v540, %v540
      %542 = vst [vmem:[%s294] sm:$0xf] %v541
      %v543 = vunpack.c.h.b16 %v297
      %v544 = vpack.c.b16 %v543, %v543
      %v545 = vunpack.c.h.b16 %v299
      %v546 = vpack.c.b16 %v545, %v545
      %v548 = vsel %vm306, %v544, 0
      %v551 = vsel %vm306, %v546, 0
      %553 = vmatprep.subr.bf16.mxu0 0
      %554 = vmatpush1.bf16.xpose.msra.mxu0 %v551
      %555 = vmatprep.subr.bf16.mxu0 0
      %556 = vmatpush1.bf16.xpose.msra.mxu0 0
      %557 = vmatprep.subr.bf16.mxu0 0
      %558 = vmatpush1.bf16.xpose.msra.mxu0 0
      %559 = vmatprep.subr.bf16.mxu0 0
      %560 = vmatpush1.bf16.xpose.msra.mxu0 0
      %561 = vmatprep.subr.bf16.mxu0 0
      %562 = vmatpush1.bf16.xpose.msra.mxu0 0
      %563 = vmatprep.subr.bf16.mxu0 0
      %564 = vmatpush1.bf16.xpose.msra.mxu0 0
      %565 = vmatprep.subr.bf16.mxu0 0
      %566 = vmatpush1.bf16.xpose.msra.mxu0 0
      %567 = vmatprep.subr.bf16.mxu0 0
      %568 = vmatpush1.bf16.xpose.msra.mxu0 0
      %569 = vmatprep.subr.bf16.mxu0 0
      %570 = vmatpush1.bf16.xpose.msra.mxu0 0
      %571 = vmatprep.subr.bf16.mxu0 0
      %572 = vmatpush1.bf16.xpose.msra.mxu0 0
      %573 = vmatprep.subr.bf16.mxu0 0
      %574 = vmatpush1.bf16.xpose.msra.mxu0 0
      %575 = vmatprep.subr.bf16.mxu0 0
      %576 = vmatpush1.bf16.xpose.msra.mxu0 0
      %577 = vmatprep.subr.bf16.mxu0 0
      %578 = vmatpush1.bf16.xpose.msra.mxu0 0
      %579 = vmatprep.subr.bf16.mxu0 0
      %580 = vmatpush1.bf16.xpose.msra.mxu0 0
      %581 = vmatprep.subr.bf16.mxu0 0
      %582 = vmatpush1.bf16.xpose.msra.mxu0 0
      %583 = vmatprep.subr.bf16.mxu0 0
      %584 = vmatpush1.bf16.xpose.msra.mxu0 0
      %585 = vmatprep.mubr.bf16.mxu0 0
      %586 = vmatmul.mubr.bf16.gmra.mrb[0].mxu0 %v548
      %v587 = vpop.f32.mrb[0].mxu0
      %v588 = vadd.f32 0.0, %v587
      %v589 = vpop.f32.mrb[0].mxu0
      %v590 = vpop.f32.mrb[0].mxu0
      %v591 = vpop.f32.mrb[0].mxu0
      %592 = vdwg.mxu0
      %v593 = vmul.f32 %v588, 0.125
      %v594 = vsel %vm305, %v593, -1e+30
      %v595 = vsel %vm355, %v594, -inf
      %596 = vmax.xlane.f32.xlu0 %v595
      %v597 = vpop.xlane.xlu0 %596
      %v598 = vsub.f32 %v594, %v597
      %v599 = vmul.f32 %v598, 1.442695
      %v600 = vpow.pop %v599
      %v601 = vsel %vm355, %v600, 0.0
      %602 = vadd.xlane.f32.xlu0 %v601
      %v603 = vpop.xlane.xlu0 %602
      %v604 = vrcp.pop %v603
      %v605 = vmul.f32 %v600, %v604
      %v606 = vpack.c.bf16 %v605, %v605
      %v607 = vunpack.c.h.b16 %v301
      %v608 = vpack.c.b16 %v607, %v607
      %v610 = vsel %vm355, %v606, 0
      %v613 = vsel %vm371, %v608, 0
      %615 = vmatprep.subr.bf16.mxu0 0
      %616 = vmatpush1.bf16.msra.mxu0 %v613
      %617 = vmatprep.subr.bf16.mxu0 0
      %618 = vmatpush1.bf16.msra.mxu0 0
      %619 = vmatprep.subr.bf16.mxu0 0
      %620 = vmatpush1.bf16.msra.mxu0 0
      %621 = vmatprep.subr.bf16.mxu0 0
      %622 = vmatpush1.bf16.msra.mxu0 0
      %623 = vmatprep.subr.bf16.mxu0 0
      %624 = vmatpush1.bf16.msra.mxu0 0
      %625 = vmatprep.subr.bf16.mxu0 0
      %626 = vmatpush1.bf16.msra.mxu0 0
      %627 = vmatprep.subr.bf16.mxu0 0
      %628 = vmatpush1.bf16.msra.mxu0 0
      %629 = vmatprep.subr.bf16.mxu0 0
      %630 = vmatpush1.bf16.msra.mxu0 0
      %631 = vmatprep.subr.bf16.mxu0 0
      %632 = vmatpush1.bf16.msra.mxu0 0
      %633 = vmatprep.subr.bf16.mxu0 0
      %634 = vmatpush1.bf16.msra.mxu0 0
      %635 = vmatprep.subr.bf16.mxu0 0
      %636 = vmatpush1.bf16.msra.mxu0 0
      %637 = vmatprep.subr.bf16.mxu0 0
      %638 = vmatpush1.bf16.msra.mxu0 0
      %639 = vmatprep.subr.bf16.mxu0 0
      %640 = vmatpush1.bf16.msra.mxu0 0
      %641 = vmatprep.subr.bf16.mxu0 0
      %642 = vmatpush1.bf16.msra.mxu0 0
      %643 = vmatprep.subr.bf16.mxu0 0
      %644 = vmatpush1.bf16.msra.mxu0 0
      %645 = vmatprep.subr.bf16.mxu0 0
      %646 = vmatpush1.bf16.msra.mxu0 0
      %647 = vmatprep.mubr.bf16.mxu0 0
      %648 = vmatmul.mubr.bf16.gmra.mrb[0].mxu0 %v610
      %v649 = vpop.f32.mrb[0].mxu0
      %v650 = vadd.f32 0.0, %v649
      %v651 = vpop.f32.mrb[0].mxu0
      %v652 = vpop.f32.mrb[0].mxu0
      %v653 = vpop.f32.mrb[0].mxu0
      %654 = vdwg.mxu0
      %655 = vrot.lane.b32.xlu0 %v544, 64
      %v656 = vpop.permute.xlu0 %655
      %657 = vrot.lane.b32.xlu0 %v546, 64
      %v658 = vpop.permute.xlu0 %657
      %v660 = vsel %vm306, %v656, 0
      %v663 = vsel %vm306, %v658, 0
      %665 = vmatprep.subr.bf16.mxu0 0
      %666 = vmatpush1.bf16.xpose.msra.mxu0 %v663
      %667 = vmatprep.subr.bf16.mxu0 0
      %668 = vmatpush1.bf16.xpose.msra.mxu0 0
      %669 = vmatprep.subr.bf16.mxu0 0
      %670 = vmatpush1.bf16.xpose.msra.mxu0 0
      %671 = vmatprep.subr.bf16.mxu0 0
      %672 = vmatpush1.bf16.xpose.msra.mxu0 0
      %673 = vmatprep.subr.bf16.mxu0 0
      %674 = vmatpush1.bf16.xpose.msra.mxu0 0
      %675 = vmatprep.subr.bf16.mxu0 0
      %676 = vmatpush1.bf16.xpose.msra.mxu0 0
      %677 = vmatprep.subr.bf16.mxu0 0
      %678 = vmatpush1.bf16.xpose.msra.mxu0 0
      %679 = vmatprep.subr.bf16.mxu0 0
      %680 = vmatpush1.bf16.xpose.msra.mxu0 0
      %681 = vmatprep.subr.bf16.mxu0 0
      %682 = vmatpush1.bf16.xpose.msra.mxu0 0
      %683 = vmatprep.subr.bf16.mxu0 0
      %684 = vmatpush1.bf16.xpose.msra.mxu0 0
      %685 = vmatprep.subr.bf16.mxu0 0
      %686 = vmatpush1.bf16.xpose.msra.mxu0 0
      %687 = vmatprep.subr.bf16.mxu0 0
      %688 = vmatpush1.bf16.xpose.msra.mxu0 0
      %689 = vmatprep.subr.bf16.mxu0 0
      %690 = vmatpush1.bf16.xpose.msra.mxu0 0
      %691 = vmatprep.subr.bf16.mxu0 0
      %692 = vmatpush1.bf16.xpose.msra.mxu0 0
      %693 = vmatprep.subr.bf16.mxu0 0
      %694 = vmatpush1.bf16.xpose.msra.mxu0 0
      %695 = vmatprep.subr.bf16.mxu0 0
      %696 = vmatpush1.bf16.xpose.msra.mxu0 0
      %697 = vmatprep.mubr.bf16.mxu0 0
      %698 = vmatmul.mubr.bf16.gmra.mrb[0].mxu0 %v660
      %v699 = vpop.f32.mrb[0].mxu0
      %v700 = vadd.f32 0.0, %v699
      %v701 = vpop.f32.mrb[0].mxu0
      %v702 = vpop.f32.mrb[0].mxu0
      %v703 = vpop.f32.mrb[0].mxu0
      %704 = vdwg.mxu0
      %v705 = vmul.f32 %v700, 0.125
      %v706 = vsel %vm305, %v705, -1e+30
      %v707 = vsel %vm355, %v706, -inf
      %708 = vmax.xlane.f32.xlu0 %v707
      %v709 = vpop.xlane.xlu0 %708
      %v710 = vsub.f32 %v706, %v709
      %v711 = vmul.f32 %v710, 1.442695
      %v712 = vpow.pop %v711
      %v713 = vsel %vm355, %v712, 0.0
      %714 = vadd.xlane.f32.xlu0 %v713
      %v715 = vpop.xlane.xlu0 %714
      %v716 = vrcp.pop %v715
      %v717 = vmul.f32 %v712, %v716
      %v718 = vpack.c.bf16 %v717, %v717
      %719 = vrot.lane.b32.xlu0 %v608, 64
      %v720 = vpop.permute.xlu0 %719
      %v722 = vsel %vm355, %v718, 0
      %v725 = vsel %vm371, %v720, 0
      %727 = vmatprep.subr.bf16.mxu0 0
      %728 = vmatpush1.bf16.msra.mxu0 %v725
      %729 = vmatprep.subr.bf16.mxu0 0
      %730 = vmatpush1.bf16.msra.mxu0 0
      %731 = vmatprep.subr.bf16.mxu0 0
      %732 = vmatpush1.bf16.msra.mxu0 0
      %733 = vmatprep.subr.bf16.mxu0 0
      %734 = vmatpush1.bf16.msra.mxu0 0
      %735 = vmatprep.subr.bf16.mxu0 0
      %736 = vmatpush1.bf16.msra.mxu0 0
      %737 = vmatprep.subr.bf16.mxu0 0
      %738 = vmatpush1.bf16.msra.mxu0 0
      %739 = vmatprep.subr.bf16.mxu0 0
      %740 = vmatpush1.bf16.msra.mxu0 0
      %741 = vmatprep.subr.bf16.mxu0 0
      %742 = vmatpush1.bf16.msra.mxu0 0
      %743 = vmatprep.subr.bf16.mxu0 0
      %744 = vmatpush1.bf16.msra.mxu0 0
      %745 = vmatprep.subr.bf16.mxu0 0
      %746 = vmatpush1.bf16.msra.mxu0 0
      %747 = vmatprep.subr.bf16.mxu0 0
      %748 = vmatpush1.bf16.msra.mxu0 0
      %749 = vmatprep.subr.bf16.mxu0 0
      %750 = vmatpush1.bf16.msra.mxu0 0
      %751 = vmatprep.subr.bf16.mxu0 0
      %752 = vmatpush1.bf16.msra.mxu0 0
      %753 = vmatprep.subr.bf16.mxu0 0
      %754 = vmatpush1.bf16.msra.mxu0 0
      %755 = vmatprep.subr.bf16.mxu0 0
      %756 = vmatpush1.bf16.msra.mxu0 0
      %757 = vmatprep.subr.bf16.mxu0 0
      %758 = vmatpush1.bf16.msra.mxu0 0
      %759 = vmatprep.mubr.bf16.mxu0 0
      %760 = vmatmul.mubr.bf16.gmra.mrb[0].mxu0 %v722
      %v761 = vpop.f32.mrb[0].mxu0
      %v762 = vadd.f32 0.0, %v761
      %v763 = vpop.f32.mrb[0].mxu0
      %v764 = vpop.f32.mrb[0].mxu0
      %v765 = vpop.f32.mrb[0].mxu0
      %766 = vdwg.mxu0
      %768 = vrot.lane.b32.xlu0 %v762, 64
      %v769 = vpop.permute.xlu0 %768
      %v771 = vsel %vm306, %v650, %v769
      %v772 = vpack.c.bf16 %v771, %v771
      %773 = vst [vmem:[%s294 + $0x4] sm:$0xf] %v772
      %v775 = vsel %vm306, %v298, 0
      %v778 = vsel %vm306, %v300, 0
      %780 = vmatprep.subr.bf16.mxu0 0
      %781 = vmatpush1.bf16.xpose.msra.mxu0 %v778
      %782 = vmatprep.subr.bf16.mxu0 0
      %783 = vmatpush1.bf16.xpose.msra.mxu0 0
      %784 = vmatprep.subr.bf16.mxu0 0
      %785 = vmatpush1.bf16.xpose.msra.mxu0 0
      %786 = vmatprep.subr.bf16.mxu0 0
      %787 = vmatpush1.bf16.xpose.msra.mxu0 0
      %788 = vmatprep.subr.bf16.mxu0 0
      %789 = vmatpush1.bf16.xpose.msra.mxu0 0
      %790 = vmatprep.subr.bf16.mxu0 0
      %791 = vmatpush1.bf16.xpose.msra.mxu0 0
      %792 = vmatprep.subr.bf16.mxu0 0
      %793 = vmatpush1.bf16.xpose.msra.mxu0 0
      %794 = vmatprep.subr.bf16.mxu0 0
      %795 = vmatpush1.bf16.xpose.msra.mxu0 0
      %796 = vmatprep.subr.bf16.mxu0 0
      %797 = vmatpush1.bf16.xpose.msra.mxu0 0
      %798 = vmatprep.subr.bf16.mxu0 0
      %799 = vmatpush1.bf16.xpose.msra.mxu0 0
      %800 = vmatprep.subr.bf16.mxu0 0
      %801 = vmatpush1.bf16.xpose.msra.mxu0 0
      %802 = vmatprep.subr.bf16.mxu0 0
      %803 = vmatpush1.bf16.xpose.msra.mxu0 0
      %804 = vmatprep.subr.bf16.mxu0 0
      %805 = vmatpush1.bf16.xpose.msra.mxu0 0
      %806 = vmatprep.subr.bf16.mxu0 0
      %807 = vmatpush1.bf16.xpose.msra.mxu0 0
      %808 = vmatprep.subr.bf16.mxu0 0
      %809 = vmatpush1.bf16.xpose.msra.mxu0 0
      %810 = vmatprep.subr.bf16.mxu0 0
      %811 = vmatpush1.bf16.xpose.msra.mxu0 0
      %812 = vmatprep.mubr.bf16.mxu0 0
      %813 = vmatmul.mubr.bf16.gmra.mrb[0].mxu0 %v775
      %v814 = vpop.f32.mrb[0].mxu0
      %v815 = vadd.f32 0.0, %v814
      %v816 = vpop.f32.mrb[0].mxu0
      %v817 = vpop.f32.mrb[0].mxu0
      %v818 = vpop.f32.mrb[0].mxu0
      %819 = vdwg.mxu0
      %v820 = vmul.f32 %v815, 0.125
      %v821 = vsel %vm305, %v820, -1e+30
      %v822 = vsel %vm355, %v821, -inf
      %823 = vmax.xlane.f32.xlu0 %v822
      %v824 = vpop.xlane.xlu0 %823
      %v825 = vsub.f32 %v821, %v824
      %v826 = vmul.f32 %v825, 1.442695
      %v827 = vpow.pop %v826
      %v828 = vsel %vm355, %v827, 0.0
      %829 = vadd.xlane.f32.xlu0 %v828
      %v830 = vpop.xlane.xlu0 %829
      %v831 = vrcp.pop %v830
      %v832 = vmul.f32 %v827, %v831
      %v833 = vpack.c.bf16 %v832, %v832
      %v835 = vsel %vm355, %v833, 0
      %v838 = vsel %vm371, %v302, 0
      %840 = vmatprep.subr.bf16.mxu0 0
      %841 = vmatpush1.bf16.msra.mxu0 %v838
      %842 = vmatprep.subr.bf16.mxu0 0
      %843 = vmatpush1.bf16.msra.mxu0 0
      %844 = vmatprep.subr.bf16.mxu0 0
      %845 = vmatpush1.bf16.msra.mxu0 0
      %846 = vmatprep.subr.bf16.mxu0 0
      %847 = vmatpush1.bf16.msra.mxu0 0
      %848 = vmatprep.subr.bf16.mxu0 0
      %849 = vmatpush1.bf16.msra.mxu0 0
      %850 = vmatprep.subr.bf16.mxu0 0
      %851 = vmatpush1.bf16.msra.mxu0 0
      %852 = vmatprep.subr.bf16.mxu0 0
      %853 = vmatpush1.bf16.msra.mxu0 0
      %854 = vmatprep.subr.bf16.mxu0 0
      %855 = vmatpush1.bf16.msra.mxu0 0
      %856 = vmatprep.subr.bf16.mxu0 0
      %857 = vmatpush1.bf16.msra.mxu0 0
      %858 = vmatprep.subr.bf16.mxu0 0
      %859 = vmatpush1.bf16.msra.mxu0 0
      %860 = vmatprep.subr.bf16.mxu0 0
      %861 = vmatpush1.bf16.msra.mxu0 0
      %862 = vmatprep.subr.bf16.mxu0 0
      %863 = vmatpush1.bf16.msra.mxu0 0
      %864 = vmatprep.subr.bf16.mxu0 0
      %865 = vmatpush1.bf16.msra.mxu0 0
      %866 = vmatprep.subr.bf16.mxu0 0
      %867 = vmatpush1.bf16.msra.mxu0 0
      %868 = vmatprep.subr.bf16.mxu0 0
      %869 = vmatpush1.bf16.msra.mxu0 0
      %870 = vmatprep.subr.bf16.mxu0 0
      %871 = vmatpush1.bf16.msra.mxu0 0
      %872 = vmatprep.mubr.bf16.mxu0 0
      %873 = vmatmul.mubr.bf16.gmra.mrb[0].mxu0 %v835
      %v874 = vpop.f32.mrb[0].mxu0
      %v875 = vadd.f32 0.0, %v874
      %v876 = vpop.f32.mrb[0].mxu0
      %v877 = vpop.f32.mrb[0].mxu0
      %v878 = vpop.f32.mrb[0].mxu0
      %879 = vdwg.mxu0
      %v881 = vunpack.c.l.b16 %v298
      %v882 = vpack.c.b16 %v881, %v881
      %883 = vrot.lane.b32.xlu0 %v882, 64
      %v884 = vpop.permute.xlu0 %883
      %v886 = vunpack.c.l.b16 %v300
      %v887 = vpack.c.b16 %v886, %v886
      %888 = vrot.lane.b32.xlu0 %v887, 64
      %v889 = vpop.permute.xlu0 %888
      %v891 = vsel %vm306, %v884, 0
      %v894 = vsel %vm306, %v889, 0
      %896 = vmatprep.subr.bf16.mxu0 0
      %897 = vmatpush1.bf16.xpose.msra.mxu0 %v894
      %898 = vmatprep.subr.bf16.mxu0 0
      %899 = vmatpush1.bf16.xpose.msra.mxu0 0
      %900 = vmatprep.subr.bf16.mxu0 0
      %901 = vmatpush1.bf16.xpose.msra.mxu0 0
      %902 = vmatprep.subr.bf16.mxu0 0
      %903 = vmatpush1.bf16.xpose.msra.mxu0 0
      %904 = vmatprep.subr.bf16.mxu0 0
      %905 = vmatpush1.bf16.xpose.msra.mxu0 0
      %906 = vmatprep.subr.bf16.mxu0 0
      %907 = vmatpush1.bf16.xpose.msra.mxu0 0
      %908 = vmatprep.subr.bf16.mxu0 0
      %909 = vmatpush1.bf16.xpose.msra.mxu0 0
      %910 = vmatprep.subr.bf16.mxu0 0
      %911 = vmatpush1.bf16.xpose.msra.mxu0 0
      %912 = vmatprep.subr.bf16.mxu0 0
      %913 = vmatpush1.bf16.xpose.msra.mxu0 0
      %914 = vmatprep.subr.bf16.mxu0 0
      %915 = vmatpush1.bf16.xpose.msra.mxu0 0
      %916 = vmatprep.subr.bf16.mxu0 0
      %917 = vmatpush1.bf16.xpose.msra.mxu0 0
      %918 = vmatprep.subr.bf16.mxu0 0
      %919 = vmatpush1.bf16.xpose.msra.mxu0 0
      %920 = vmatprep.subr.bf16.mxu0 0
      %921 = vmatpush1.bf16.xpose.msra.mxu0 0
      %922 = vmatprep.subr.bf16.mxu0 0
      %923 = vmatpush1.bf16.xpose.msra.mxu0 0
      %924 = vmatprep.subr.bf16.mxu0 0
      %925 = vmatpush1.bf16.xpose.msra.mxu0 0
      %926 = vmatprep.subr.bf16.mxu0 0
      %927 = vmatpush1.bf16.xpose.msra.mxu0 0
      %928 = vmatprep.mubr.bf16.mxu0 0
      %929 = vmatmul.mubr.bf16.gmra.mrb[0].mxu0 %v891
      %v930 = vpop.f32.mrb[0].mxu0
      %v931 = vadd.f32 0.0, %v930
      %v932 = vpop.f32.mrb[0].mxu0
      %v933 = vpop.f32.mrb[0].mxu0
      %v934 = vpop.f32.mrb[0].mxu0
      %935 = vdwg.mxu0
      %v936 = vmul.f32 %v931, 0.125
      %v937 = vsel %vm305, %v936, -1e+30
      %v938 = vsel %vm355, %v937, -inf
      %939 = vmax.xlane.f32.xlu0 %v938
      %v940 = vpop.xlane.xlu0 %939
      %v941 = vsub.f32 %v937, %v940
      %v942 = vmul.f32 %v941, 1.442695
      %v943 = vpow.pop %v942
      %v944 = vsel %vm355, %v943, 0.0
      %945 = vadd.xlane.f32.xlu0 %v944
      %v946 = vpop.xlane.xlu0 %945
      %v947 = vrcp.pop %v946
      %v948 = vmul.f32 %v943, %v947
      %v949 = vpack.c.bf16 %v948, %v948
      %v951 = vunpack.c.l.b16 %v302
      %v952 = vpack.c.b16 %v951, %v951
      %953 = vrot.lane.b32.xlu0 %v952, 64
      %v954 = vpop.permute.xlu0 %953
      %v956 = vsel %vm355, %v949, 0
      %v959 = vsel %vm371, %v954, 0
      %961 = vmatprep.subr.bf16.mxu0 0
      %962 = vmatpush1.bf16.msra.mxu0 %v959
      %963 = vmatprep.subr.bf16.mxu0 0
      %964 = vmatpush1.bf16.msra.mxu0 0
      %965 = vmatprep.subr.bf16.mxu0 0
      %966 = vmatpush1.bf16.msra.mxu0 0
      %967 = vmatprep.subr.bf16.mxu0 0
      %968 = vmatpush1.bf16.msra.mxu0 0
      %969 = vmatprep.subr.bf16.mxu0 0
      %970 = vmatpush1.bf16.msra.mxu0 0
      %971 = vmatprep.subr.bf16.mxu0 0
      %972 = vmatpush1.bf16.msra.mxu0 0
      %973 = vmatprep.subr.bf16.mxu0 0
      %974 = vmatpush1.bf16.msra.mxu0 0
      %975 = vmatprep.subr.bf16.mxu0 0
      %976 = vmatpush1.bf16.msra.mxu0 0
      %977 = vmatprep.subr.bf16.mxu0 0
      %978 = vmatpush1.bf16.msra.mxu0 0
      %979 = vmatprep.subr.bf16.mxu0 0
      %980 = vmatpush1.bf16.msra.mxu0 0
      %981 = vmatprep.subr.bf16.mxu0 0
      %982 = vmatpush1.bf16.msra.mxu0 0
      %983 = vmatprep.subr.bf16.mxu0 0
      %984 = vmatpush1.bf16.msra.mxu0 0
      %985 = vmatprep.subr.bf16.mxu0 0
      %986 = vmatpush1.bf16.msra.mxu0 0
      %987 = vmatprep.subr.bf16.mxu0 0
      %988 = vmatpush1.bf16.msra.mxu0 0
      %989 = vmatprep.subr.bf16.mxu0 0
      %990 = vmatpush1.bf16.msra.mxu0 0
      %991 = vmatprep.subr.bf16.mxu0 0
      %992 = vmatpush1.bf16.msra.mxu0 0
      %993 = vmatprep.mubr.bf16.mxu0 0
      %994 = vmatmul.mubr.bf16.gmra.mrb[0].mxu0 %v956
      %v995 = vpop.f32.mrb[0].mxu0
      %v996 = vadd.f32 0.0, %v995
      %v997 = vpop.f32.mrb[0].mxu0
      %v998 = vpop.f32.mrb[0].mxu0
      %v999 = vpop.f32.mrb[0].mxu0
      %1000 = vdwg.mxu0
      %1002 = vrot.lane.b32.xlu0 %v996, 64
      %v1003 = vpop.permute.xlu0 %1002
      %v1005 = vsel %vm306, %v875, %v1003
      %v1006 = vpack.c.bf16 %v1005, %v1005
      %1007 = vst [vmem:[%s294 + $0x8] sm:$0xf] %v1006
      %s1008 = smul.u32 3, %s19
      %p1009 = scmp.lt.s32.totalorder %s18, 1
      %s1010 = scalar_select %p1009, %s18, 1
      %p1011 = scmp.lt.s32.totalorder %s1008, 2
      %s1012 = scalar_select %p1011, %s1008, 2
      %s1013 = smul.addr %s1010, 3
      %s1014 = sadd.s32 %s1012, %s1013
      %s1015 = smul.addr %s1014, 4
      %s1016 = scalar_lea.vmem %s3, %s1015
      // Predicated region
      $region33: #{build_transformer_forward.14} parent=31 // pred_check
        %p1017 = pneg %p134
      $region34: #{build_transformer_forward.14} parent=31 // pred_check_branch
        %1019 = sbr.rel (%p1017) target = $region36
      $region35: #{build_transformer_forward.14} parent=31 // pred_region
        %s1020 = smul.u32 3, %s19
      $region36: #{build_transformer_forward.14} parent=31 // pred_fallthru
        _
    $region32: #{build_transformer_forward.14} parent=5 // pred_fallthru
      _
    %p1021 = scmp.le.s32.totalorder 2, %s9
    // Predicated region
    $region37: #{build_transformer_forward.14} parent=5 // pred_check
      %p1022 = pneg %p1021
    $region38: #{build_transformer_forward.14} parent=5 // pred_check_branch
      %1024 = sbr.rel (%p1022) target = $region40
    $region39: #{build_transformer_forward.14} parent=5 // pred_region
      %s1025 = ssub.s32 %s9, 2
      // Predicated region
      $region41: #{build_transformer_forward.14} parent=39 // pred_check
        %p1026 = pneg %p140
      $region42: #{build_transformer_forward.14} parent=39 // pred_check_branch
        %1028 = sbr.rel (%p1026) target = $region44
      $region43: #{build_transformer_forward.14} parent=39 // pred_region
        %s1029 = smul.u32 3, %s21
        %p1030 = scmp.lt.s32.totalorder %s20, 1
        %s1031 = scalar_select %p1030, %s20, 1
        %p1032 = scmp.lt.s32.totalorder %s1029, 2
        %s1033 = scalar_select %p1032, %s1029, 2
        %s1034 = smul.addr %s1031, 3
        %s1035 = sadd.s32 %s1033, %s1034
        %s1036 = smul.addr %s1035, 4
        %s1037 = scalar_lea.vmem %s3, %s1036
      $region44: #{build_transformer_forward.14} parent=39 // pred_fallthru
        _
    $region40: #{build_transformer_forward.14} parent=5 // pred_fallthru
      _
  $region6: #{build_transformer_forward.14} parent=0 // loop_footer
    %s13 = sadd.s32 1, %s9
  $region7: #{build_transformer_forward.14} parent=0 // loop_footer_branch
    %8 = sbr.rel target = $region3
  $region8: #{build_transformer_forward.14} parent=0 // loop_exit
    _

// kernel: build_transformer_forward.13
$region0: #{build_transformer_forward.13}
  #allocation0 [shape = 'u32[]', space=smem, size = 0x4, offset = 0x4, fixed_abs, tag = 'smem constant byte address 0x4 - core index']
  #allocation1 [shape = 'u32[144,128]{1,0:T(1,128)}', space=vmem, size = 0x12000, scoped, tag = 'internal scratch']
  %s0 = inlined_call_operand.vmem [shape: f32[16,384], index: 0, kind: input, shape index: {}]
  %s1 = inlined_call_operand.vmem [shape: bf16[384,1152], index: 1, kind: input, shape index: {}]
  %s2 = inlined_call_operand.vmem [shape: f32[1,1152], index: 2, kind: input, shape index: {}]
  %s3 = inlined_call_operand.vmem [shape: f32[1,384], index: 3, kind: input, shape index: {}]
  %s4 = inlined_call_operand.vmem [shape: f32[1,384], index: 4, kind: input, shape index: {}]
  %s5 = inlined_call_operand.vmem [shape: bf16[16,1152], index: 5, kind: output, shape index: {}]
  %s6 = sld [smem:[#allocation0]]
  $region53: #{build_transformer_forward.13} parent=0
    _
  %s8 = ssub.s32 1, %s6
  %s9 = scalar_select 0, %s8, %s6
  loop: start=0, step=1, limit=4
  $region2: #{build_transformer_forward.13} parent=0 // loop_pre_header
    _
  $region3: #{build_transformer_forward.13} parent=0 // loop_header
    %s11 = sphi 0, %s15
    %p12 = scmp.ge.s32.totalorder %s11, 4
    %s21 = sphi 0, %s23
    %s24 = sphi 0, %s21
    %s25 = sphi 0, %s24
    %s41 = sphi 0, %s25
    %s45 = sphi 0, %s45
    %s47 = sphi 0, %s45
    %s48 = sphi 0, %s47
    %s62 = sphi 0, %s48
    %s66 = sphi 0, %s66
    %s68 = sphi 0, %s66
    %s69 = sphi 0, %s68
    %s83 = sphi 0, %s69
    %s87 = sphi 0, %s87
    %s89 = sphi 0, %s87
    %s90 = sphi 0, %s89
    %s104 = sphi 0, %s90
    %s108 = sphi 0, %s108
    %s110 = sphi 0, %s108
    %s111 = sphi 0, %s110
    %s125 = sphi 0, %s111
    %s131 = sphi 0, %s133
    %s134 = sphi 0, %s131
    %s135 = sphi 0, %s134
    %s151 = sphi 0, %s135
  $region4: #{build_transformer_forward.13} parent=0 // loop_header_branch
    %14 = sbr.rel (%p12) target = $region8
  $region5: #{build_transformer_forward.13} parent=0 // loop_body
    %s16 = ssub.s32 %s11, 1
    %s17 = ssub.s32 %s11, 2
    %s18 = sadd.s32 %s11, 1
    %s19 = ssub.s32 %s11, %s18
    %p20 = scmp.eq.s32.totalorder %s19, 0
    %s22 = sadd.s32 %s21, 1
    %s23 = scalar_select %p20, %s21, %s22
    %p26 = pneg %p20
    %p27 = scmp.eq.s32.totalorder %s11, 1
    %p28 = por %p26, %p27
    %p29 = scmp.ne.s32.totalorder %s21, %s24
    %p30 = scmp.eq.s32.totalorder %s11, 0
    %p31 = por %p29, %p30
    %p32 = scmp.ne.s32.totalorder %s21, %s24
    %p33 = scmp.eq.s32.totalorder %s16, 1
    %p34 = por %p32, %p33
    %p35 = scmp.ne.s32.totalorder %s24, %s25
    %p36 = scmp.eq.s32.totalorder %s16, 0
    %p37 = por %p35, %p36
    %p38 = scmp.ne.s32.totalorder %s24, %s25
    %p39 = scmp.eq.s32.totalorder %s17, 1
    %p40 = por %p38, %p39
    %p42 = scmp.ne.s32.totalorder %s25, %s41
    %p43 = scmp.eq.s32.totalorder %s17, 0
    %p44 = por %p42, %p43
    %s46 = sadd.s32 %s45, 1
    %p49 = scmp.eq.s32.totalorder %s11, 1
    %p50 = scmp.ne.s32.totalorder %s45, %s47
    %p51 = scmp.eq.s32.totalorder %s11, 0
    %p52 = por %p50, %p51
    %p53 = scmp.ne.s32.totalorder %s45, %s47
    %p54 = scmp.eq.s32.totalorder %s16, 1
    %p55 = por %p53, %p54
    %p56 = scmp.ne.s32.totalorder %s47, %s48
    %p57 = scmp.eq.s32.totalorder %s16, 0
    %p58 = por %p56, %p57
    %p59 = scmp.ne.s32.totalorder %s47, %s48
    %p60 = scmp.eq.s32.totalorder %s17, 1
    %p61 = por %p59, %p60
    %p63 = scmp.ne.s32.totalorder %s48, %s62
    %p64 = scmp.eq.s32.totalorder %s17, 0
    %p65 = por %p63, %p64
    %s67 = sadd.s32 %s66, 1
    %p70 = scmp.eq.s32.totalorder %s11, 1
    %p71 = scmp.ne.s32.totalorder %s66, %s68
    %p72 = scmp.eq.s32.totalorder %s11, 0
    %p73 = por %p71, %p72
    %p74 = scmp.ne.s32.totalorder %s66, %s68
    %p75 = scmp.eq.s32.totalorder %s16, 1
    %p76 = por %p74, %p75
    %p77 = scmp.ne.s32.totalorder %s68, %s69
    %p78 = scmp.eq.s32.totalorder %s16, 0
    %p79 = por %p77, %p78
    %p80 = scmp.ne.s32.totalorder %s68, %s69
    %p81 = scmp.eq.s32.totalorder %s17, 1
    %p82 = por %p80, %p81
    %p84 = scmp.ne.s32.totalorder %s69, %s83
    %p85 = scmp.eq.s32.totalorder %s17, 0
    %p86 = por %p84, %p85
    %s88 = sadd.s32 %s87, 1
    %p91 = scmp.eq.s32.totalorder %s11, 1
    %p92 = scmp.ne.s32.totalorder %s87, %s89
    %p93 = scmp.eq.s32.totalorder %s11, 0
    %p94 = por %p92, %p93
    %p95 = scmp.ne.s32.totalorder %s87, %s89
    %p96 = scmp.eq.s32.totalorder %s16, 1
    %p97 = por %p95, %p96
    %p98 = scmp.ne.s32.totalorder %s89, %s90
    %p99 = scmp.eq.s32.totalorder %s16, 0
    %p100 = por %p98, %p99
    %p101 = scmp.ne.s32.totalorder %s89, %s90
    %p102 = scmp.eq.s32.totalorder %s17, 1
    %p103 = por %p101, %p102
    %p105 = scmp.ne.s32.totalorder %s90, %s104
    %p106 = scmp.eq.s32.totalorder %s17, 0
    %p107 = por %p105, %p106
    %s109 = sadd.s32 %s108, 1
    %p112 = scmp.eq.s32.totalorder %s11, 1
    %p113 = scmp.ne.s32.totalorder %s108, %s110
    %p114 = scmp.eq.s32.totalorder %s11, 0
    %p115 = por %p113, %p114
    %p116 = scmp.ne.s32.totalorder %s108, %s110
    %p117 = scmp.eq.s32.totalorder %s16, 1
    %p118 = por %p116, %p117
    %p119 = scmp.ne.s32.totalorder %s110, %s111
    %p120 = scmp.eq.s32.totalorder %s16, 0
    %p121 = por %p119, %p120
    %p122 = scmp.ne.s32.totalorder %s110, %s111
    %p123 = scmp.eq.s32.totalorder %s17, 1
    %p124 = por %p122, %p123
    %p126 = scmp.ne.s32.totalorder %s111, %s125
    %p127 = scmp.eq.s32.totalorder %s17, 0
    %p128 = por %p126, %p127
    %s129 = ssub.s32 %s11, %s18
    %p130 = scmp.eq.s32.totalorder %s129, 0
    %s132 = sadd.s32 %s131, 1
    %s133 = scalar_select %p130, %s131, %s132
    %p136 = pneg %p130
    %p137 = scmp.eq.s32.totalorder %s11, 1
    %p138 = por %p136, %p137
    %p139 = scmp.ne.s32.totalorder %s131, %s134
    %p140 = scmp.eq.s32.totalorder %s11, 0
    %p141 = por %p139, %p140
    %p142 = scmp.ne.s32.totalorder %s131, %s134
    %p143 = scmp.eq.s32.totalorder %s16, 1
    %p144 = por %p142, %p143
    %p145 = scmp.ne.s32.totalorder %s134, %s135
    %p146 = scmp.eq.s32.totalorder %s16, 0
    %p147 = por %p145, %p146
    %p148 = scmp.ne.s32.totalorder %s134, %s135
    %p149 = scmp.eq.s32.totalorder %s17, 1
    %p150 = por %p148, %p149
    %p152 = scmp.ne.s32.totalorder %s135, %s151
    %p153 = scmp.eq.s32.totalorder %s17, 0
    %p154 = por %p152, %p153
    %p155 = scmp.le.s32.totalorder 1, %s11
    %p156 = scmp.lt.s32.totalorder %s11, 3
    %p157 = pnand %p155, %p156
    %p158 = pneg %p157
    // Predicated region
    $region9: #{build_transformer_forward.13} parent=5 // pred_check
      _
    $region10: #{build_transformer_forward.13} parent=5 // pred_check_branch
      %160 = sbr.rel (%p157) target = $region12
    $region11: #{build_transformer_forward.13} parent=5 // pred_region
      %s161 = ssub.s32 %s11, 1
      // Predicated region
      $region13: #{build_transformer_forward.13} parent=11 // pred_check
        %p162 = pneg %p58
      $region14: #{build_transformer_forward.13} parent=11 // pred_check_branch
        %164 = sbr.rel (%p162) target = $region16
      $region15: #{build_transformer_forward.13} parent=11 // pred_region
        _
      $region16: #{build_transformer_forward.13} parent=11 // pred_fallthru
        _
      // Predicated region
      $region17: #{build_transformer_forward.13} parent=11 // pred_check
        %p165 = pneg %p79
      $region18: #{build_transformer_forward.13} parent=11 // pred_check_branch
        %167 = sbr.rel (%p165) target = $region20
      $region19: #{build_transformer_forward.13} parent=11 // pred_region
        _
      $region20: #{build_transformer_forward.13} parent=11 // pred_fallthru
        _
      // Predicated region
      $region21: #{build_transformer_forward.13} parent=11 // pred_check
        %p168 = pneg %p100
      $region22: #{build_transformer_forward.13} parent=11 // pred_check_branch
        %170 = sbr.rel (%p168) target = $region24
      $region23: #{build_transformer_forward.13} parent=11 // pred_region
        _
      $region24: #{build_transformer_forward.13} parent=11 // pred_fallthru
        _
      // Predicated region
      $region25: #{build_transformer_forward.13} parent=11 // pred_check
        %p171 = pneg %p121
      $region26: #{build_transformer_forward.13} parent=11 // pred_check_branch
        %173 = sbr.rel (%p171) target = $region28
      $region27: #{build_transformer_forward.13} parent=11 // pred_region
        _
      $region28: #{build_transformer_forward.13} parent=11 // pred_fallthru
        _
    $region12: #{build_transformer_forward.13} parent=5 // pred_fallthru
      _
    %p174 = scmp.lt.s32.totalorder %s11, 2
    // Predicated region
    $region29: #{build_transformer_forward.13} parent=5 // pred_check
      %p175 = pneg %p174
    $region30: #{build_transformer_forward.13} parent=5 // pred_check_branch
      %177 = sbr.rel (%p175) target = $region32
    $region31: #{build_transformer_forward.13} parent=5 // pred_region
      // Predicated region
      $region33: #{build_transformer_forward.13} parent=31 // pred_check
        %p178 = pneg %p31
      $region34: #{build_transformer_forward.13} parent=31 // pred_check_branch
        %180 = sbr.rel (%p178) target = $region36
      $region35: #{build_transformer_forward.13} parent=31 // pred_region
        %p181 = scmp.lt.s32.totalorder %s11, 1
        %s182 = scalar_select %p181, %s11, 1
        %s183 = smul.addr %s182, 3
        %s184 = smul.addr %s183, 8
        %s185 = scalar_lea.vmem %s0, %s184
      $region36: #{build_transformer_forward.13} parent=31 // pred_fallthru
        _
    $region32: #{build_transformer_forward.13} parent=5 // pred_fallthru
      _
    %p186 = scmp.le.s32.totalorder 1, %s11
    %p187 = scmp.lt.s32.totalorder %s11, 3
    %p188 = pnand %p186, %p187
    %p189 = pneg %p188
    // Predicated region
    $region37: #{build_transformer_forward.13} parent=5 // pred_check
      _
    $region38: #{build_transformer_forward.13} parent=5 // pred_check_branch
      %191 = sbr.rel (%p188) target = $region40
    $region39: #{build_transformer_forward.13} parent=5 // pred_region
      %s192 = ssub.s32 %s11, 1
      %p193 = scmp.lt.s32.totalorder %s16, 1
      %s194 = scalar_select %p193, %s16, 1
      %s195 = smul.addr %s194, 3
      %s196 = smul.addr %s195, 8
      %s197 = scalar_lea.vmem %s0, %s196
      %p198 = pneg %p37
      %p199 = pneg %p34
      %p200 = pneg %p58
      %p201 = pneg %p55
      %p202 = pneg %p79
      %p203 = pneg %p76
      %p204 = pneg %p100
      %p205 = pneg %p97
      %p206 = pneg %p121
      %p207 = pneg %p118
      %p208 = pneg %p147
      %p209 = pneg %p144
      %p210 = scmp.lt.s32.totalorder %s16, 1
      %s211 = scalar_select %p210, %s16, 1
      %s212 = smul.addr %s211, 9
      %s213 = smul.addr %s212, 4
      %s214 = scalar_lea.vmem %s5, %s213
      %p215 = scmp.lt.s32.totalorder %s16, 1
      %s216 = scalar_select %p215, %s16, 1
      %s217 = smul.addr %s216, 3
      %s218 = smul.addr %s217, 8
      %s219 = scalar_lea.vmem %s0, %s218
      %p220 = scmp.lt.s32.totalorder %s16, 1
      %s221 = scalar_select %p220, %s16, 1
      %s222 = smul.addr %s221, 9
      %s223 = smul.addr %s222, 4
      %s224 = scalar_lea.vmem %s5, %s223
      %v226 = vld [vmem:[%s219] sm:$0xff]
      %v227 = vld [vmem:[%s219 + $0x8] sm:$0xff]
      %v228 = vld [vmem:[%s219 + $0x10] sm:$0xff]
      %v229 = vadd.f32 %v226, %v227
      %v230 = vadd.f32 %v229, %v228
      %231 = vadd.xlane.f32.xlu0 %v230
      %v232 = vpop.xlane.xlu0 %231
      %v233 = vrcp.pop 384.0
      %v234 = vmul.f32 %v232, %v233
      %v235 = vsub.f32 %v226, %v234
      %v236 = vsub.f32 %v227, %v234
      %v237 = vsub.f32 %v228, %v234
      %v238 = vmul.f32 %v235, %v235
      %v239 = vmul.f32 %v236, %v236
      %v240 = vmul.f32 %v237, %v237
      %v241 = vadd.f32 %v238, %v239
      %v242 = vadd.f32 %v241, %v240
      %243 = vadd.xlane.f32.xlu0 %v242
      %v244 = vpop.xlane.xlu0 %243
      %v245 = vmul.f32 %v244, %v233
      %v246 = vadd.f32 %v245, 1e-06
      %v247 = vrsqrt.pop %v246
      %v248 = vmul.f32 %v235, %v247
      %v249 = vmul.f32 %v236, %v247
      %v250 = vmul.f32 %v237, %v247
      %v251 = vld [vmem:[%s3] sm:$0x7]
      %v253 = vlaneseq
      %v254 = vshrl.u32 %v253, 7
      %v255 = vsub.s32 0, %v254
      %v256 = vrot.slane %v251, %v255
      %v257 = vlaneseq
      %v258 = vshrl.u32 %v257, 7
      %v259 = vsub.s32 1, %v258
      %v260 = vrot.slane %v251, %v259
      %v261 = vlaneseq
      %v262 = vshrl.u32 %v261, 7
      %v263 = vsub.s32 2, %v262
      %v264 = vrot.slane %v251, %v263
      %v268 = vmul.f32 %v248, %v256
      %v269 = vmul.f32 %v249, %v260
      %v270 = vmul.f32 %v250, %v264
      %v271 = vld [vmem:[%s4] sm:$0x7]
      %v273 = vlaneseq
      %v274 = vshrl.u32 %v273, 7
      %v275 = vsub.s32 0, %v274
      %v276 = vrot.slane %v271, %v275
      %v277 = vlaneseq
      %v278 = vshrl.u32 %v277, 7
      %v279 = vsub.s32 1, %v278
      %v280 = vrot.slane %v271, %v279
      %v281 = vlaneseq
      %v282 = vshrl.u32 %v281, 7
      %v283 = vsub.s32 2, %v282
      %v284 = vrot.slane %v271, %v283
      %v288 = vadd.f32 %v268, %v276
      %v289 = vadd.f32 %v269, %v280
      %v290 = vadd.f32 %v270, %v284
      %v291 = vpack.c.bf16 %v288, %v288
      %v292 = vpack.c.bf16 %v289, %v289
      %v293 = vpack.c.bf16 %v290, %v290
      %v294 = vld [vmem:[%s1] sm:$0xff]
      %v295 = vld [vmem:[%s1 + $0x8] sm:$0xff]
      %v296 = vld [vmem:[%s1 + $0x10] sm:$0xff]
      %v297 = vld [vmem:[%s1 + $0x18] sm:$0xff]
      %v298 = vld [vmem:[%s1 + $0x20] sm:$0xf]
      %v299 = vld [vmem:[%s1 + $0x24] sm:$0xff]
      %v300 = vld [vmem:[%s1 + $0x2c] sm:$0xff]
      %v301 = vld [vmem:[%s1 + $0x34] sm:$0xff]
      %v302 = vld [vmem:[%s1 + $0x3c] sm:$0xff]
      %v303 = vld [vmem:[%s1 + $0x44] sm:$0xf]
      %v304 = vld [vmem:[%s1 + $0x48] sm:$0xff]
      %v305 = vld [vmem:[%s1 + $0x50] sm:$0xff]
      %v306 = vld [vmem:[%s1 + $0x58] sm:$0xff]
      %v307 = vld [vmem:[%s1 + $0x60] sm:$0xff]
      %v308 = vld [vmem:[%s1 + $0x68] sm:$0xf]
      %v309 = vld [vmem:[%s1 + $0x6c] sm:$0xff]
      %v310 = vld [vmem:[%s1 + $0x74] sm:$0xff]
      %v311 = vld [vmem:[%s1 + $0x7c] sm:$0xff]
      %v312 = vld [vmem:[%s1 + $0x84] sm:$0xff]
      %v313 = vld [vmem:[%s1 + $0x8c] sm:$0xf]
      %v314 = vld [vmem:[%s1 + $0x90] sm:$0xff]
      %v315 = vld [vmem:[%s1 + $0x98] sm:$0xff]
      %v316 = vld [vmem:[%s1 + $0xa0] sm:$0xff]
      %v317 = vld [vmem:[%s1 + $0xa8] sm:$0xff]
      %v318 = vld [vmem:[%s1 + $0xb0] sm:$0xf]
      %v319 = vld [vmem:[%s1 + $0xb4] sm:$0xff]
      %v320 = vld [vmem:[%s1 + $0xbc] sm:$0xff]
      %v321 = vld [vmem:[%s1 + $0xc4] sm:$0xff]
      %v322 = vld [vmem:[%s1 + $0xcc] sm:$0xff]
      %v323 = vld [vmem:[%s1 + $0xd4] sm:$0xf]
      %v324 = vld [vmem:[%s1 + $0xd8] sm:$0xff]
      %v325 = vld [vmem:[%s1 + $0xe0] sm:$0xff]
      %v326 = vld [vmem:[%s1 + $0xe8] sm:$0xff]
      %v327 = vld [vmem:[%s1 + $0xf0] sm:$0xff]
      %v328 = vld [vmem:[%s1 + $0xf8] sm:$0xf]
      %v329 = vld [vmem:[%s1 + $0xfc] sm:$0xff]
      %v330 = vld [vmem:[%s1 + $0x104] sm:$0xff]
      %v331 = vld [vmem:[%s1 + $0x10c] sm:$0xff]
      %v332 = vld [vmem:[%s1 + $0x114] sm:$0xff]
      %v333 = vld [vmem:[%s1 + $0x11c] sm:$0xf]
      %v334 = vld [vmem:[%s1 + $0x120] sm:$0xff]
      %v335 = vld [vmem:[%s1 + $0x128] sm:$0xff]
      %v336 = vld [vmem:[%s1 + $0x130] sm:$0xff]
      %v337 = vld [vmem:[%s1 + $0x138] sm:$0xff]
      %v338 = vld [vmem:[%s1 + $0x140] sm:$0xf]
      %v339 = vld [vmem:[%s1 + $0x144] sm:$0xff]
      %v340 = vld [vmem:[%s1 + $0x14c] sm:$0xff]
      %v341 = vld [vmem:[%s1 + $0x154] sm:$0xff]
      %v342 = vld [vmem:[%s1 + $0x15c] sm:$0xff]
      %v343 = vld [vmem:[%s1 + $0x164] sm:$0xf]
      %v344 = vld [vmem:[%s1 + $0x168] sm:$0xff]
      %v345 = vld [vmem:[%s1 + $0x170] sm:$0xff]
      %v346 = vld [vmem:[%s1 + $0x178] sm:$0xff]
      %v347 = vld [vmem:[%s1 + $0x180] sm:$0xff]
      %v348 = vld [vmem:[%s1 + $0x188] sm:$0xf]
      %v349 = vld [vmem:[%s1 + $0x18c] sm:$0xff]
      %v350 = vld [vmem:[%s1 + $0x194] sm:$0xff]
      %v351 = vld [vmem:[%s1 + $0x19c] sm:$0xff]
      %v352 = vld [vmem:[%s1 + $0x1a4] sm:$0xff]
      %v353 = vld [vmem:[%s1 + $0x1ac] sm:$0xf]
      %v354 = vld [vmem:[%s1 + $0x1b0] sm:$0xff]
      %v355 = vld [vmem:[%s1 + $0x1b8] sm:$0xff]
      %v356 = vld [vmem:[%s1 + $0x1c0] sm:$0xff]
      %v357 = vld [vmem:[%s1 + $0x1c8] sm:$0xff]
      %v358 = vld [vmem:[%s1 + $0x1d0] sm:$0xf]
      %v359 = vld [vmem:[%s1 + $0x1d4] sm:$0xff]
      %v360 = vld [vmem:[%s1 + $0x1dc] sm:$0xff]
      %v361 = vld [vmem:[%s1 + $0x1e4] sm:$0xff]
      %v362 = vld [vmem:[%s1 + $0x1ec] sm:$0xff]
      %v363 = vld [vmem:[%s1 + $0x1f4] sm:$0xf]
      %v364 = vld [vmem:[%s1 + $0x1f8] sm:$0xff]
      %v365 = vld [vmem:[%s1 + $0x200] sm:$0xff]
      %v366 = vld [vmem:[%s1 + $0x208] sm:$0xff]
      %v367 = vld [vmem:[%s1 + $0x210] sm:$0xff]
      %v368 = vld [vmem:[%s1 + $0x218] sm:$0xf]
      %v369 = vld [vmem:[%s1 + $0x21c] sm:$0xff]
      %v370 = vld [vmem:[%s1 + $0x224] sm:$0xff]
      %v371 = vld [vmem:[%s1 + $0x22c] sm:$0xff]
      %v372 = vld [vmem:[%s1 + $0x234] sm:$0xff]
      %v373 = vld [vmem:[%s1 + $0x23c] sm:$0xf]
      %v374 = vld [vmem:[%s1 + $0x240] sm:$0xff]
      %v375 = vld [vmem:[%s1 + $0x248] sm:$0xff]
      %v376 = vld [vmem:[%s1 + $0x250] sm:$0xff]
      %v377 = vld [vmem:[%s1 + $0x258] sm:$0xff]
      %v378 = vld [vmem:[%s1 + $0x260] sm:$0xf]
      %v379 = vld [vmem:[%s1 + $0x264] sm:$0xff]
      %v380 = vld [vmem:[%s1 + $0x26c] sm:$0xff]
      %v381 = vld [vmem:[%s1 + $0x274] sm:$0xff]
      %v382 = vld [vmem:[%s1 + $0x27c] sm:$0xff]
      %v383 = vld [vmem:[%s1 + $0x284] sm:$0xf]
      %v384 = vld [vmem:[%s1 + $0x288] sm:$0xff]
      %v385 = vld [vmem:[%s1 + $0x290] sm:$0xff]
      %v386 = vld [vmem:[%s1 + $0x298] sm:$0xff]
      %v387 = vld [vmem:[%s1 + $0x2a0] sm:$0xff]
      %v388 = vld [vmem:[%s1 + $0x2a8] sm:$0xf]
      %v389 = vld [vmem:[%s1 + $0x2ac] sm:$0xff]
      %v390 = vld [vmem:[%s1 + $0x2b4] sm:$0xff]
      %v391 = vld [vmem:[%s1 + $0x2bc] sm:$0xff]
      %v392 = vld [vmem:[%s1 + $0x2c4] sm:$0xff]
      %v393 = vld [vmem:[%s1 + $0x2cc] sm:$0xf]
      %v394 = vld [vmem:[%s1 + $0x2d0] sm:$0xff]
      %v395 = vld [vmem:[%s1 + $0x2d8] sm:$0xff]
      %v396 = vld [vmem:[%s1 + $0x2e0] sm:$0xff]
      %v397 = vld [vmem:[%s1 + $0x2e8] sm:$0xff]
      %v398 = vld [vmem:[%s1 + $0x2f0] sm:$0xf]
      %v399 = vld [vmem:[%s1 + $0x2f4] sm:$0xff]
      %v400 = vld [vmem:[%s1 + $0x2fc] sm:$0xff]
      %v401 = vld [vmem:[%s1 + $0x304] sm:$0xff]
      %v402 = vld [vmem:[%s1 + $0x30c] sm:$0xff]
      %v403 = vld [vmem:[%s1 + $0x314] sm:$0xf]
      %v404 = vld [vmem:[%s1 + $0x318] sm:$0xff]
      %v405 = vld [vmem:[%s1 + $0x320] sm:$0xff]
      %v406 = vld [vmem:[%s1 + $0x328] sm:$0xff]
      %v407 = vld [vmem:[%s1 + $0x330] sm:$0xff]
      %v408 = vld [vmem:[%s1 + $0x338] sm:$0xf]
      %v409 = vld [vmem:[%s1 + $0x33c] sm:$0xff]
      %v410 = vld [vmem:[%s1 + $0x344] sm:$0xff]
      %v411 = vld [vmem:[%s1 + $0x34c] sm:$0xff]
      %v412 = vld [vmem:[%s1 + $0x354] sm:$0xff]
      %v413 = vld [vmem:[%s1 + $0x35c] sm:$0xf]
      %v414 = vld [vmem:[%s1 + $0x360] sm:$0xff]
      %v415 = vld [vmem:[%s1 + $0x368] sm:$0xff]
      %v416 = vld [vmem:[%s1 + $0x370] sm:$0xff]
      %v417 = vld [vmem:[%s1 + $0x378] sm:$0xff]
      %v418 = vld [vmem:[%s1 + $0x380] sm:$0xf]
      %v419 = vld [vmem:[%s1 + $0x384] sm:$0xff]
      %v420 = vld [vmem:[%s1 + $0x38c] sm:$0xff]
      %v421 = vld [vmem:[%s1 + $0x394] sm:$0xff]
      %v422 = vld [vmem:[%s1 + $0x39c] sm:$0xff]
      %v423 = vld [vmem:[%s1 + $0x3a4] sm:$0xf]
      %v424 = vld [vmem:[%s1 + $0x3a8] sm:$0xff]
      %v425 = vld [vmem:[%s1 + $0x3b0] sm:$0xff]
      %v426 = vld [vmem:[%s1 + $0x3b8] sm:$0xff]
      %v427 = vld [vmem:[%s1 + $0x3c0] sm:$0xff]
      %v428 = vld [vmem:[%s1 + $0x3c8] sm:$0xf]
      %v429 = vld [vmem:[%s1 + $0x3cc] sm:$0xff]
      %v430 = vld [vmem:[%s1 + $0x3d4] sm:$0xff]
      %v431 = vld [vmem:[%s1 + $0x3dc] sm:$0xff]
      %v432 = vld [vmem:[%s1 + $0x3e4] sm:$0xff]
      %v433 = vld [vmem:[%s1 + $0x3ec] sm:$0xf]
      %v434 = vld [vmem:[%s1 + $0x3f0] sm:$0xff]
      %v435 = vld [vmem:[%s1 + $0x3f8] sm:$0xff]
      %v436 = vld [vmem:[%s1 + $0x400] sm:$0xff]
      %v437 = vld [vmem:[%s1 + $0x408] sm:$0xff]
      %v438 = vld [vmem:[%s1 + $0x410] sm:$0xf]
      %v439 = vld [vmem:[%s1 + $0x414] sm:$0xff]
      %v440 = vld [vmem:[%s1 + $0x41c] sm:$0xff]
      %v441 = vld [vmem:[%s1 + $0x424] sm:$0xff]
      %v442 = vld [vmem:[%s1 + $0x42c] sm:$0xff]
      %v443 = vld [vmem:[%s1 + $0x434] sm:$0xf]
      %v444 = vld [vmem:[%s1 + $0x438] sm:$0xff]
      %v445 = vld [vmem:[%s1 + $0x440] sm:$0xff]
      %v446 = vld [vmem:[%s1 + $0x448] sm:$0xff]
      %v447 = vld [vmem:[%s1 + $0x450] sm:$0xff]
      %v448 = vld [vmem:[%s1 + $0x458] sm:$0xf]
      %v449 = vld [vmem:[%s1 + $0x45c] sm:$0xff]
      %v450 = vld [vmem:[%s1 + $0x464] sm:$0xff]
      %v451 = vld [vmem:[%s1 + $0x46c] sm:$0xff]
      %v452 = vld [vmem:[%s1 + $0x474] sm:$0xff]
      %v453 = vld [vmem:[%s1 + $0x47c] sm:$0xf]
      %v454 = vld [vmem:[%s1 + $0x480] sm:$0xff]
      %v455 = vld [vmem:[%s1 + $0x488] sm:$0xff]
      %v456 = vld [vmem:[%s1 + $0x490] sm:$0xff]
      %v457 = vld [vmem:[%s1 + $0x498] sm:$0xff]
      %v458 = vld [vmem:[%s1 + $0x4a0] sm:$0xf]
      %v459 = vld [vmem:[%s1 + $0x4a4] sm:$0xff]
      %v460 = vld [vmem:[%s1 + $0x4ac] sm:$0xff]
      %v461 = vld [vmem:[%s1 + $0x4b4] sm:$0xff]
      %v462 = vld [vmem:[%s1 + $0x4bc] sm:$0xff]
      %v463 = vld [vmem:[%s1 + $0x4c4] sm:$0xf]
      %v464 = vld [vmem:[%s1 + $0x4c8] sm:$0xff]
      %v465 = vld [vmem:[%s1 + $0x4d0] sm:$0xff]
      %v466 = vld [vmem:[%s1 + $0x4d8] sm:$0xff]
      %v467 = vld [vmem:[%s1 + $0x4e0] sm:$0xff]
      %v468 = vld [vmem:[%s1 + $0x4e8] sm:$0xf]
      %v469 = vld [vmem:[%s1 + $0x4ec] sm:$0xff]
      %v470 = vld [vmem:[%s1 + $0x4f4] sm:$0xff]
      %v471 = vld [vmem:[%s1 + $0x4fc] sm:$0xff]
      %v472 = vld [vmem:[%s1 + $0x504] sm:$0xff]
      %v473 = vld [vmem:[%s1 + $0x50c] sm:$0xf]
      %v474 = vld [vmem:[%s1 + $0x510] sm:$0xff]
      %v475 = vld [vmem:[%s1 + $0x518] sm:$0xff]
      %v476 = vld [vmem:[%s1 + $0x520] sm:$0xff]
      %v477 = vld [vmem:[%s1 + $0x528] sm:$0xff]
      %v478 = vld [vmem:[%s1 + $0x530] sm:$0xf]
      %v479 = vld [vmem:[%s1 + $0x534] sm:$0xff]
      %v480 = vld [vmem:[%s1 + $0x53c] sm:$0xff]
      %v481 = vld [vmem:[%s1 + $0x544] sm:$0xff]
      %v482 = vld [vmem:[%s1 + $0x54c] sm:$0xff]
      %v483 = vld [vmem:[%s1 + $0x554] sm:$0xf]
      %v484 = vld [vmem:[%s1 + $0x558] sm:$0xff]
      %v485 = vld [vmem:[%s1 + $0x560] sm:$0xff]
      %v486 = vld [vmem:[%s1 + $0x568] sm:$0xff]
      %v487 = vld [vmem:[%s1 + $0x570] sm:$0xff]
      %v488 = vld [vmem:[%s1 + $0x578] sm:$0xf]
      %v489 = vld [vmem:[%s1 + $0x57c] sm:$0xff]
      %v490 = vld [vmem:[%s1 + $0x584] sm:$0xff]
      %v491 = vld [vmem:[%s1 + $0x58c] sm:$0xff]
      %v492 = vld [vmem:[%s1 + $0x594] sm:$0xff]
      %v493 = vld [vmem:[%s1 + $0x59c] sm:$0xf]
      %v494 = vld [vmem:[%s1 + $0x5a0] sm:$0xff]
      %v495 = vld [vmem:[%s1 + $0x5a8] sm:$0xff]
      %v496 = vld [vmem:[%s1 + $0x5b0] sm:$0xff]
      %v497 = vld [vmem:[%s1 + $0x5b8] sm:$0xff]
      %v498 = vld [vmem:[%s1 + $0x5c0] sm:$0xf]
      %v499 = vld [vmem:[%s1 + $0x5c4] sm:$0xff]
      %v500 = vld [vmem:[%s1 + $0x5cc] sm:$0xff]
      %v501 = vld [vmem:[%s1 + $0x5d4] sm:$0xff]
      %v502 = vld [vmem:[%s1 + $0x5dc] sm:$0xff]
      %v503 = vld [vmem:[%s1 + $0x5e4] sm:$0xf]
      %v504 = vld [vmem:[%s1 + $0x5e8] sm:$0xff]
      %v505 = vld [vmem:[%s1 + $0x5f0] sm:$0xff]
      %v506 = vld [vmem:[%s1 + $0x5f8] sm:$0xff]
      %v507 = vld [vmem:[%s1 + $0x600] sm:$0xff]
      %v508 = vld [vmem:[%s1 + $0x608] sm:$0xf]
      %v509 = vld [vmem:[%s1 + $0x60c] sm:$0xff]
      %v510 = vld [vmem:[%s1 + $0x614] sm:$0xff]
      %v511 = vld [vmem:[%s1 + $0x61c] sm:$0xff]
      %v512 = vld [vmem:[%s1 + $0x624] sm:$0xff]
      %v513 = vld [vmem:[%s1 + $0x62c] sm:$0xf]
      %v514 = vld [vmem:[%s1 + $0x630] sm:$0xff]
      %v515 = vld [vmem:[%s1 + $0x638] sm:$0xff]
      %v516 = vld [vmem:[%s1 + $0x640] sm:$0xff]
      %v517 = vld [vmem:[%s1 + $0x648] sm:$0xff]
      %v518 = vld [vmem:[%s1 + $0x650] sm:$0xf]
      %v519 = vld [vmem:[%s1 + $0x654] sm:$0xff]
      %v520 = vld [vmem:[%s1 + $0x65c] sm:$0xff]
      %v521 = vld [vmem:[%s1 + $0x664] sm:$0xff]
      %v522 = vld [vmem:[%s1 + $0x66c] sm:$0xff]
      %v523 = vld [vmem:[%s1 + $0x674] sm:$0xf]
      %v524 = vld [vmem:[%s1 + $0x678] sm:$0xff]
      %v525 = vld [vmem:[%s1 + $0x680] sm:$0xff]
      %v526 = vld [vmem:[%s1 + $0x688] sm:$0xff]
      %v527 = vld [vmem:[%s1 + $0x690] sm:$0xff]
      %v528 = vld [vmem:[%s1 + $0x698] sm:$0xf]
      %v529 = vld [vmem:[%s1 + $0x69c] sm:$0xff]
      %v530 = vld [vmem:[%s1 + $0x6a4] sm:$0xff]
      %v531 = vld [vmem:[%s1 + $0x6ac] sm:$0xff]
      %v532 = vld [vmem:[%s1 + $0x6b4] sm:$0xff]
      %v533 = vld [vmem:[%s1 + $0x6bc] sm:$0xf]
      %v534 = vld [vmem:[%s2] sm:$0xff]
      %v535 = vld [vmem:[%s2 + $0x8] sm:$0x1]
      %v538 = vlaneseq
      %v539 = vshrl.u32 %v538, 7
      %v540 = vsub.s32 0, %v539
      %v541 = vrot.slane %v534, %v540
      %v542 = vlaneseq
      %v543 = vshrl.u32 %v542, 7
      %v544 = vsub.s32 1, %v543
      %v545 = vrot.slane %v534, %v544
      %v546 = vlaneseq
      %v547 = vshrl.u32 %v546, 7
      %v548 = vsub.s32 2, %v547
      %v549 = vrot.slane %v534, %v548
      %v550 = vlaneseq
      %v551 = vshrl.u32 %v550, 7
      %v552 = vsub.s32 3, %v551
      %v553 = vrot.slane %v534, %v552
      %v554 = vlaneseq
      %v555 = vshrl.u32 %v554, 7
      %v556 = vsub.s32 4, %v555
      %v557 = vrot.slane %v534, %v556
      %v558 = vlaneseq
      %v559 = vshrl.u32 %v558, 7
      %v560 = vsub.s32 5, %v559
      %v561 = vrot.slane %v534, %v560
      %v562 = vlaneseq
      %v563 = vshrl.u32 %v562, 7
      %v564 = vsub.s32 6, %v563
      %v565 = vrot.slane %v534, %v564
      %v566 = vlaneseq
      %v567 = vshrl.u32 %v566, 7
      %v568 = vsub.s32 7, %v567
      %v569 = vrot.slane %v534, %v568
      %v570 = vlaneseq
      %v571 = vshrl.u32 %v570, 7
      %v572 = vsub.s32 0, %v571
      %v573 = vrot.slane %v535, %v572
      %v823 = vunpack.c.l.b16 %v294
      %v824 = vunpack.c.h.b16 %v294
      %v825 = vunpack.c.l.b16 %v295
      %v826 = vunpack.c.h.b16 %v295
      %v827 = vunpack.c.l.b16 %v296
      %v828 = vunpack.c.h.b16 %v296
      %v829 = vunpack.c.l.b16 %v297
      %v830 = vunpack.c.h.b16 %v297
      %v831 = vunpack.c.l.b16 %v298
      %v832 = vunpack.c.l.b16 %v299
      %v833 = vunpack.c.h.b16 %v299
      %v834 = vunpack.c.l.b16 %v300
      %v835 = vunpack.c.h.b16 %v300
      %v836 = vunpack.c.l.b16 %v301
      %v837 = vunpack.c.h.b16 %v301
      %v838 = vunpack.c.l.b16 %v302
      %v839 = vunpack.c.h.b16 %v302
      %v840 = vunpack.c.l.b16 %v303
      %v841 = vunpack.c.l.b16 %v304
      %v842 = vunpack.c.h.b16 %v304
      %v843 = vunpack.c.l.b16 %v305
      %v844 = vunpack.c.h.b16 %v305
      %v845 = vunpack.c.l.b16 %v306
      %v846 = vunpack.c.h.b16 %v306
      %v847 = vunpack.c.l.b16 %v307
      %v848 = vunpack.c.h.b16 %v307
      %v849 = vunpack.c.l.b16 %v308
      %v850 = vunpack.c.l.b16 %v309
      %v851 = vunpack.c.h.b16 %v309
      %v852 = vunpack.c.l.b16 %v310
      %v853 = vunpack.c.h.b16 %v310
      %v854 = vunpack.c.l.b16 %v311
      %v855 = vunpack.c.h.b16 %v311
      %v856 = vunpack.c.l.b16 %v312
      %v857 = vunpack.c.h.b16 %v312
      %v858 = vunpack.c.l.b16 %v313
      %v859 = vunpack.c.l.b16 %v314
      %v860 = vunpack.c.h.b16 %v314
      %v861 = vunpack.c.l.b16 %v315
      %v862 = vunpack.c.h.b16 %v315
      %v863 = vunpack.c.l.b16 %v316
      %v864 = vunpack.c.h.b16 %v316
      %v865 = vunpack.c.l.b16 %v317
      %v866 = vunpack.c.h.b16 %v317
      %v867 = vunpack.c.l.b16 %v318
      %v868 = vunpack.c.l.b16 %v319
      %v869 = vunpack.c.h.b16 %v319
      %v870 = vunpack.c.l.b16 %v320
      %v871 = vunpack.c.h.b16 %v320
      %v872 = vunpack.c.l.b16 %v321
      %v873 = vunpack.c.h.b16 %v321
      %v874 = vunpack.c.l.b16 %v322
      %v875 = vunpack.c.h.b16 %v322
      %v876 = vunpack.c.l.b16 %v323
      %v877 = vunpack.c.l.b16 %v324
      %v878 = vunpack.c.h.b16 %v324
      %v879 = vunpack.c.l.b16 %v325
      %v880 = vunpack.c.h.b16 %v325
      %v881 = vunpack.c.l.b16 %v326
      %v882 = vunpack.c.h.b16 %v326
      %v883 = vunpack.c.l.b16 %v327
      %v884 = vunpack.c.h.b16 %v327
      %v885 = vunpack.c.l.b16 %v328
      %v886 = vunpack.c.l.b16 %v329
      %v887 = vunpack.c.h.b16 %v329
      %v888 = vunpack.c.l.b16 %v330
      %v889 = vunpack.c.h.b16 %v330
      %v890 = vunpack.c.l.b16 %v331
      %v891 = vunpack.c.h.b16 %v331
      %v892 = vunpack.c.l.b16 %v332
      %v893 = vunpack.c.h.b16 %v332
      %v894 = vunpack.c.l.b16 %v333
      %v895 = vunpack.c.l.b16 %v334
      %v896 = vunpack.c.h.b16 %v334
      %v897 = vunpack.c.l.b16 %v335
      %v898 = vunpack.c.h.b16 %v335
      %v899 = vunpack.c.l.b16 %v336
      %v900 = vunpack.c.h.b16 %v336
      %v901 = vunpack.c.l.b16 %v337
      %v902 = vunpack.c.h.b16 %v337
      %v903 = vunpack.c.l.b16 %v338
      %v904 = vunpack.c.l.b16 %v339
      %v905 = vunpack.c.h.b16 %v339
      %v906 = vunpack.c.l.b16 %v340
      %v907 = vunpack.c.h.b16 %v340
      %v908 = vunpack.c.l.b16 %v341
      %v909 = vunpack.c.h.b16 %v341
      %v910 = vunpack.c.l.b16 %v342
      %v911 = vunpack.c.h.b16 %v342
      %v912 = vunpack.c.l.b16 %v343
      %v913 = vunpack.c.l.b16 %v344
      %v914 = vunpack.c.h.b16 %v344
      %v915 = vunpack.c.l.b16 %v345
      %v916 = vunpack.c.h.b16 %v345
      %v917 = vunpack.c.l.b16 %v346
      %v918 = vunpack.c.h.b16 %v346
      %v919 = vunpack.c.l.b16 %v347
      %v920 = vunpack.c.h.b16 %v347
      %v921 = vunpack.c.l.b16 %v348
      %v922 = vunpack.c.l.b16 %v349
      %v923 = vunpack.c.h.b16 %v349
      %v924 = vunpack.c.l.b16 %v350
      %v925 = vunpack.c.h.b16 %v350
      %v926 = vunpack.c.l.b16 %v351
      %v927 = vunpack.c.h.b16 %v351
      %v928 = vunpack.c.l.b16 %v352
      %v929 = vunpack.c.h.b16 %v352
      %v930 = vunpack.c.l.b16 %v353
      %v931 = vunpack.c.l.b16 %v354
      %v932 = vunpack.c.h.b16 %v354
      %v933 = vunpack.c.l.b16 %v355
      %v934 = vunpack.c.h.b16 %v355
      %v935 = vunpack.c.l.b16 %v356
      %v936 = vunpack.c.h.b16 %v356
      %v937 = vunpack.c.l.b16 %v357
      %v938 = vunpack.c.h.b16 %v357
      %v939 = vunpack.c.l.b16 %v358
      %v940 = vunpack.c.l.b16 %v359
      %v941 = vunpack.c.h.b16 %v359
      %v942 = vunpack.c.l.b16 %v360
      %v943 = vunpack.c.h.b16 %v360
      %v944 = vunpack.c.l.b16 %v361
      %v945 = vunpack.c.h.b16 %v361
      %v946 = vunpack.c.l.b16 %v362
      %v947 = vunpack.c.h.b16 %v362
      %v948 = vunpack.c.l.b16 %v363
      %v949 = vunpack.c.l.b16 %v364
      %v950 = vunpack.c.h.b16 %v364
      %v951 = vunpack.c.l.b16 %v365
      %v952 = vunpack.c.h.b16 %v365
      %v953 = vunpack.c.l.b16 %v366
      %v954 = vunpack.c.h.b16 %v366
      %v955 = vunpack.c.l.b16 %v367
      %v956 = vunpack.c.h.b16 %v367
      %v957 = vunpack.c.l.b16 %v368
      %v958 = vunpack.c.l.b16 %v369
      %v959 = vunpack.c.h.b16 %v369
      %v960 = vunpack.c.l.b16 %v370
      %v961 = vunpack.c.h.b16 %v370
      %v962 = vunpack.c.l.b16 %v371
      %v963 = vunpack.c.h.b16 %v371
      %v964 = vunpack.c.l.b16 %v372
      %v965 = vunpack.c.h.b16 %v372
      %v966 = vunpack.c.l.b16 %v373
      %v967 = vunpack.c.l.b16 %v374
      %v968 = vunpack.c.h.b16 %v374
      %v969 = vunpack.c.l.b16 %v375
      %v970 = vunpack.c.h.b16 %v375
      %v971 = vunpack.c.l.b16 %v376
      %v972 = vunpack.c.h.b16 %v376
      %v973 = vunpack.c.l.b16 %v377
      %v974 = vunpack.c.h.b16 %v377
      %v975 = vunpack.c.l.b16 %v378
      %v976 = vunpack.c.l.b16 %v379
      %v977 = vunpack.c.h.b16 %v379
      %v978 = vunpack.c.l.b16 %v380
      %v979 = vunpack.c.h.b16 %v380
      %v980 = vunpack.c.l.b16 %v381
      %v981 = vunpack.c.h.b16 %v381
      %v982 = vunpack.c.l.b16 %v382
      %v983 = vunpack.c.h.b16 %v382
      %v984 = vunpack.c.l.b16 %v383
      %v985 = vunpack.c.l.b16 %v384
      %v986 = vunpack.c.h.b16 %v384
      %v987 = vunpack.c.l.b16 %v385
      %v988 = vunpack.c.h.b16 %v385
      %v989 = vunpack.c.l.b16 %v386
      %v990 = vunpack.c.h.b16 %v386
      %v991 = vunpack.c.l.b16 %v387
      %v992 = vunpack.c.h.b16 %v387
      %v993 = vunpack.c.l.b16 %v388
      %v994 = vunpack.c.l.b16 %v389
      %v995 = vunpack.c.h.b16 %v389
      %v996 = vunpack.c.l.b16 %v390
      %v997 = vunpack.c.h.b16 %v390
      %v998 = vunpack.c.l.b16 %v391
      %v999 = vunpack.c.h.b16 %v391
      %v1000 = vunpack.c.l.b16 %v392
      %v1001 = vunpack.c.h.b16 %v392
      %v1002 = vunpack.c.l.b16 %v393
      %v1003 = vunpack.c.l.b16 %v394
      %v1004 = vunpack.c.h.b16 %v394
      %v1005 = vunpack.c.l.b16 %v395
      %v1006 = vunpack.c.h.b16 %v395
      %v1007 = vunpack.c.l.b16 %v396
      %v1008 = vunpack.c.h.b16 %v396
      %v1009 = vunpack.c.l.b16 %v397
      %v1010 = vunpack.c.h.b16 %v397
      %v1011 = vunpack.c.l.b16 %v398
      %v1012 = vunpack.c.l.b16 %v399
      %v1013 = vunpack.c.h.b16 %v399
      %v1014 = vunpack.c.l.b16 %v400
      %v1015 = vunpack.c.h.b16 %v400
      %v1016 = vunpack.c.l.b16 %v401
      %v1017 = vunpack.c.h.b16 %v401
      %v1018 = vunpack.c.l.b16 %v402
      %v1019 = vunpack.c.h.b16 %v402
      %v1020 = vunpack.c.l.b16 %v403
      %v1021 = vunpack.c.l.b16 %v404
      %v1022 = vunpack.c.h.b16 %v404
      %v1023 = vunpack.c.l.b16 %v405
      %v1024 = vunpack.c.h.b16 %v405
      %v1025 = vunpack.c.l.b16 %v406
      %v1026 = vunpack.c.h.b16 %v406
      %v1027 = vunpack.c.l.b16 %v407
      %v1028 = vunpack.c.h.b16 %v407
      %v1029 = vunpack.c.l.b16 %v408
      %v1030 = vunpack.c.l.b16 %v409
      %v1031 = vunpack.c.h.b16 %v409
      %v1032 = vunpack.c.l.b16 %v410
      %v1033 = vunpack.c.h.b16 %v410
      %v1034 = vunpack.c.l.b16 %v411
      %v1035 = vunpack.c.h.b16 %v411
      %v1036 = vunpack.c.l.b16 %v412
      %v1037 = vunpack.c.h.b16 %v412
      %v1038 = vunpack.c.l.b16 %v413
      %v1039 = vunpack.c.l.b16 %v414
      %v1040 = vunpack.c.h.b16 %v414
      %v1041 = vunpack.c.l.b16 %v415
      %v1042 = vunpack.c.h.b16 %v415
      %v1043 = vunpack.c.l.b16 %v416
      %v1044 = vunpack.c.h.b16 %v416
      %v1045 = vunpack.c.l.b16 %v417
      %v1046 = vunpack.c.h.b16 %v417
      %v1047 = vunpack.c.l.b16 %v418
      %v1048 = vunpack.c.l.b16 %v419
      %v1049 = vunpack.c.h.b16 %v419
      %v1050 = vunpack.c.l.b16 %v420
      %v1051 = vunpack.c.h.b16 %v420
      %v1052 = vunpack.c.l.b16 %v421
      %v1053 = vunpack.c.h.b16 %v421
      %v1054 = vunpack.c.l.b16 %v422
      %v1055 = vunpack.c.h.b16 %v422
      %v1056 = vunpack.c.l.b16 %v423
      %v1057 = vunpack.c.l.b16 %v424
      %v1058 = vunpack.c.h.b16 %v424
      %v1059 = vunpack.c.l.b16 %v425
      %v1060 = vunpack.c.h.b16 %v425
      %v1061 = vunpack.c.l.b16 %v426
      %v1062 = vunpack.c.h.b16 %v426
      %v1063 = vunpack.c.l.b16 %v427
      %v1064 = vunpack.c.h.b16 %v427
      %v1065 = vunpack.c.l.b16 %v428
      %v1066 = vunpack.c.l.b16 %v429
      %v1067 = vunpack.c.h.b16 %v429
      %v1068 = vunpack.c.l.b16 %v430
      %v1069 = vunpack.c.h.b16 %v430
      %v1070 = vunpack.c.l.b16 %v431
      %v1071 = vunpack.c.h.b16 %v431
      %v1072 = vunpack.c.l.b16 %v432
      %v1073 = vunpack.c.h.b16 %v432
      %v1074 = vunpack.c.l.b16 %v433
      %v1075 = vunpack.c.l.b16 %v434
      %v1076 = vunpack.c.h.b16 %v434
      %v1077 = vunpack.c.l.b16 %v435
      %v1078 = vunpack.c.h.b16 %v435
      %v1079 = vunpack.c.l.b16 %v436
      %v1080 = vunpack.c.h.b16 %v436
      %v1081 = vunpack.c.l.b16 %v437
      %v1082 = vunpack.c.h.b16 %v437
      %v1083 = vunpack.c.l.b16 %v438
      %v1084 = vunpack.c.l.b16 %v439
      %v1085 = vunpack.c.h.b16 %v439
      %v1086 = vunpack.c.l.b16 %v440
      %v1087 = vunpack.c.h.b16 %v440
      %v1088 = vunpack.c.l.b16 %v441
      %v1089 = vunpack.c.h.b16 %v441
      %v1090 = vunpack.c.l.b16 %v442
      %v1091 = vunpack.c.h.b16 %v442
      %v1092 = vunpack.c.l.b16 %v443
      %v1093 = vunpack.c.l.b16 %v444
      %v1094 = vunpack.c.h.b16 %v444
      %v1095 = vunpack.c.l.b16 %v445
      %v1096 = vunpack.c.h.b16 %v445
      %v1097 = vunpack.c.l.b16 %v446
      %v1098 = vunpack.c.h.b16 %v446
      %v1099 = vunpack.c.l.b16 %v447
      %v1100 = vunpack.c.h.b16 %v447
      %v1101 = vunpack.c.l.b16 %v448
      %v1102 = vunpack.c.l.b16 %v449
      %v1103 = vunpack.c.h.b16 %v449
      %v1104 = vunpack.c.l.b16 %v450
      %v1105 = vunpack.c.h.b16 %v450
      %v1106 = vunpack.c.l.b16 %v451
      %v1107 = vunpack.c.h.b16 %v451
      %v1108 = vunpack.c.l.b16 %v452
      %v1109 = vunpack.c.h.b16 %v452
      %v1110 = vunpack.c.l.b16 %v453
      %v1111 = vunpack.c.l.b16 %v454
      %v1112 = vunpack.c.h.b16 %v454
      %v1113 = vunpack.c.l.b16 %v455
      %v1114 = vunpack.c.h.b16 %v455
      %v1115 = vunpack.c.l.b16 %v456
      %v1116 = vunpack.c.h.b16 %v456
      %v1117 = vunpack.c.l.b16 %v457
      %v1118 = vunpack.c.h.b16 %v457
      %v1119 = vunpack.c.l.b16 %v458
      %v1120 = vunpack.c.l.b16 %v459
      %v1121 = vunpack.c.h.b16 %v459
      %v1122 = vunpack.c.l.b16 %v460
      %v1123 = vunpack.c.h.b16 %v460
      %v1124 = vunpack.c.l.b16 %v461
      %v1125 = vunpack.c.h.b16 %v461
      %v1126 = vunpack.c.l.b16 %v462
      %v1127 = vunpack.c.h.b16 %v462
      %v1128 = vunpack.c.l.b16 %v463
      %v1129 = vunpack.c.l.b16 %v464
      %v1130 = vunpack.c.h.b16 %v464
      %v1131 = vunpack.c.l.b16 %v465
      %v1132 = vunpack.c.h.b16 %v465
      %v1133 = vunpack.c.l.b16 %v466
      %v1134 = vunpack.c.h.b16 %v466
      %v1135 = vunpack.c.l.b16 %v467
      %v1136 = vunpack.c.h.b16 %v467
      %v1137 = vunpack.c.l.b16 %v468
      %v1138 = vunpack.c.l.b16 %v469
      %v1139 = vunpack.c.h.b16 %v469
      %v1140 = vunpack.c.l.b16 %v470
      %v1141 = vunpack.c.h.b16 %v470
      %v1142 = vunpack.c.l.b16 %v471
      %v1143 = vunpack.c.h.b16 %v471
      %v1144 = vunpack.c.l.b16 %v472
      %v1145 = vunpack.c.h.b16 %v472
      %v1146 = vunpack.c.l.b16 %v473
      %v1147 = vunpack.c.l.b16 %v474
      %v1148 = vunpack.c.h.b16 %v474
      %v1149 = vunpack.c.l.b16 %v475
      %v1150 = vunpack.c.h.b16 %v475
      %v1151 = vunpack.c.l.b16 %v476
      %v1152 = vunpack.c.h.b16 %v476
      %v1153 = vunpack.c.l.b16 %v477
      %v1154 = vunpack.c.h.b16 %v477
      %v1155 = vunpack.c.l.b16 %v478
      %v1156 = vunpack.c.l.b16 %v479
      %v1157 = vunpack.c.h.b16 %v479
      %v1158 = vunpack.c.l.b16 %v480
      %v1159 = vunpack.c.h.b16 %v480
      %v1160 = vunpack.c.l.b16 %v481
      %v1161 = vunpack.c.h.b16 %v481
      %v1162 = vunpack.c.l.b16 %v482
      %v1163 = vunpack.c.h.b16 %v482
      %v1164 = vunpack.c.l.b16 %v483
      %v1165 = vunpack.c.l.b16 %v484
      %v1166 = vunpack.c.h.b16 %v484
      %v1167 = vunpack.c.l.b16 %v485
      %v1168 = vunpack.c.h.b16 %v485
      %v1169 = vunpack.c.l.b16 %v486
      %v1170 = vunpack.c.h.b16 %v486
      %v1171 = vunpack.c.l.b16 %v487
      %v1172 = vunpack.c.h.b16 %v487
      %v1173 = vunpack.c.l.b16 %v488
      %v1174 = vunpack.c.l.b16 %v489
      %v1175 = vunpack.c.h.b16 %v489
      %v1176 = vunpack.c.l.b16 %v490
      %v1177 = vunpack.c.h.b16 %v490
      %v1178 = vunpack.c.l.b16 %v491
      %v1179 = vunpack.c.h.b16 %v491
      %v1180 = vunpack.c.l.b16 %v492
      %v1181 = vunpack.c.h.b16 %v492
      %v1182 = vunpack.c.l.b16 %v493
      %v1183 = vunpack.c.l.b16 %v494
      %v1184 = vunpack.c.h.b16 %v494
      %v1185 = vunpack.c.l.b16 %v495
      %v1186 = vunpack.c.h.b16 %v495
      %v1187 = vunpack.c.l.b16 %v496
      %v1188 = vunpack.c.h.b16 %v496
      %v1189 = vunpack.c.l.b16 %v497
      %v1190 = vunpack.c.h.b16 %v497
      %v1191 = vunpack.c.l.b16 %v498
      %v1192 = vunpack.c.l.b16 %v499
      %v1193 = vunpack.c.h.b16 %v499
      %v1194 = vunpack.c.l.b16 %v500
      %v1195 = vunpack.c.h.b16 %v500
      %v1196 = vunpack.c.l.b16 %v501
      %v1197 = vunpack.c.h.b16 %v501
      %v1198 = vunpack.c.l.b16 %v502
      %v1199 = vunpack.c.h.b16 %v502
      %v1200 = vunpack.c.l.b16 %v503
      %v1201 = vunpack.c.l.b16 %v504
      %v1202 = vunpack.c.h.b16 %v504
      %v1203 = vunpack.c.l.b16 %v505
      %v1204 = vunpack.c.h.b16 %v505
      %v1205 = vunpack.c.l.b16 %v506
      %v1206 = vunpack.c.h.b16 %v506
      %v1207 = vunpack.c.l.b16 %v507
      %v1208 = vunpack.c.h.b16 %v507
      %v1209 = vunpack.c.l.b16 %v508
      %v1210 = vunpack.c.l.b16 %v509
      %v1211 = vunpack.c.h.b16 %v509
      %v1212 = vunpack.c.l.b16 %v510
      %v1213 = vunpack.c.h.b16 %v510
      %v1214 = vunpack.c.l.b16 %v511
      %v1215 = vunpack.c.h.b16 %v511
      %v1216 = vunpack.c.l.b16 %v512
      %v1217 = vunpack.c.h.b16 %v512
      %v1218 = vunpack.c.l.b16 %v513
      %v1219 = vunpack.c.l.b16 %v514
      %v1220 = vunpack.c.h.b16 %v514
      %v1221 = vunpack.c.l.b16 %v515
      %v1222 = vunpack.c.h.b16 %v515
      %v1223 = vunpack.c.l.b16 %v516
      %v1224 = vunpack.c.h.b16 %v516
      %v1225 = vunpack.c.l.b16 %v517
      %v1226 = vunpack.c.h.b16 %v517
      %v1227 = vunpack.c.l.b16 %v518
      %v1228 = vunpack.c.l.b16 %v519
      %v1229 = vunpack.c.h.b16 %v519
      %v1230 = vunpack.c.l.b16 %v520
      %v1231 = vunpack.c.h.b16 %v520
      %v1232 = vunpack.c.l.b16 %v521
      %v1233 = vunpack.c.h.b16 %v521
      %v1234 = vunpack.c.l.b16 %v522
      %v1235 = vunpack.c.h.b16 %v522
      %v1236 = vunpack.c.l.b16 %v523
      %v1237 = vunpack.c.l.b16 %v524
      %v1238 = vunpack.c.h.b16 %v524
      %v1239 = vunpack.c.l.b16 %v525
      %v1240 = vunpack.c.h.b16 %v525
      %v1241 = vunpack.c.l.b16 %v526
      %v1242 = vunpack.c.h.b16 %v526
      %v1243 = vunpack.c.l.b16 %v527
      %v1244 = vunpack.c.h.b16 %v527
      %v1245 = vunpack.c.l.b16 %v528
      %v1246 = vunpack.c.l.b16 %v529
      %v1247 = vunpack.c.h.b16 %v529
      %v1248 = vunpack.c.l.b16 %v530
      %v1249 = vunpack.c.h.b16 %v530
      %v1250 = vunpack.c.l.b16 %v531
      %v1251 = vunpack.c.h.b16 %v531
      %v1252 = vunpack.c.l.b16 %v532
      %v1253 = vunpack.c.h.b16 %v532
      %v1254 = vunpack.c.l.b16 %v533
      %v1255 = vpack.c.b16 %v832, %v823
      %v1256 = vpack.c.b16 %v833, %v824
      %v1257 = vpack.c.b16 %v834, %v825
      %v1258 = vpack.c.b16 %v835, %v826
      %v1259 = vpack.c.b16 %v836, %v827
      %v1260 = vpack.c.b16 %v837, %v828
      %v1261 = vpack.c.b16 %v838, %v829
      %v1262 = vpack.c.b16 %v839, %v830
      %v1263 = vpack.c.b16 %v840, %v831
      %v1264 = vpack.c.b16 %v850, %v841
      %v1265 = vpack.c.b16 %v851, %v842
      %v1266 = vpack.c.b16 %v852, %v843
      %v1267 = vpack.c.b16 %v853, %v844
      %v1268 = vpack.c.b16 %v854, %v845
      %v1269 = vpack.c.b16 %v855, %v846
      %v1270 = vpack.c.b16 %v856, %v847
      %v1271 = vpack.c.b16 %v857, %v848
      %v1272 = vpack.c.b16 %v858, %v849
      %v1273 = vpack.c.b16 %v868, %v859
      %v1274 = vpack.c.b16 %v869, %v860
      %v1275 = vpack.c.b16 %v870, %v861
      %v1276 = vpack.c.b16 %v871, %v862
      %v1277 = vpack.c.b16 %v872, %v863
      %v1278 = vpack.c.b16 %v873, %v864
      %v1279 = vpack.c.b16 %v874, %v865
      %v1280 = vpack.c.b16 %v875, %v866
      %v1281 = vpack.c.b16 %v876, %v867
      %v1282 = vpack.c.b16 %v886, %v877
      %v1283 = vpack.c.b16 %v887, %v878
      %v1284 = vpack.c.b16 %v888, %v879
      %v1285 = vpack.c.b16 %v889, %v880
      %v1286 = vpack.c.b16 %v890, %v881
      %v1287 = vpack.c.b16 %v891, %v882
      %v1288 = vpack.c.b16 %v892, %v883
      %v1289 = vpack.c.b16 %v893, %v884
      %v1290 = vpack.c.b16 %v894, %v885
      %v1291 = vpack.c.b16 %v904, %v895
      %v1292 = vpack.c.b16 %v905, %v896
      %v1293 = vpack.c.b16 %v906, %v897
      %v1294 = vpack.c.b16 %v907, %v898
      %v1295 = vpack.c.b16 %v908, %v899
      %v1296 = vpack.c.b16 %v909, %v900
      %v1297 = vpack.c.b16 %v910, %v901
      %v1298 = vpack.c.b16 %v911, %v902
      %v1299 = vpack.c.b16 %v912, %v903
      %v1300 = vpack.c.b16 %v922, %v913
      %v1301 = vpack.c.b16 %v923, %v914
      %v1302 = vpack.c.b16 %v924, %v915
      %v1303 = vpack.c.b16 %v925, %v916
      %v1304 = vpack.c.b16 %v926, %v917
      %v1305 = vpack.c.b16 %v927, %v918
      %v1306 = vpack.c.b16 %v928, %v919
      %v1307 = vpack.c.b16 %v929, %v920
      %v1308 = vpack.c.b16 %v930, %v921
      %v1309 = vpack.c.b16 %v940, %v931
      %v1310 = vpack.c.b16 %v941, %v932
      %v1311 = vpack.c.b16 %v942, %v933
      %v1312 = vpack.c.b16 %v943, %v934
      %v1313 = vpack.c.b16 %v944, %v935
      %v1314 = vpack.c.b16 %v945, %v936
      %v1315 = vpack.c.b16 %v946, %v937
      %v1316 = vpack.c.b16 %v947, %v938
      %v1317 = vpack.c.b16 %v948, %v939
      %v1318 = vpack.c.b16 %v958, %v949
      %v1319 = vpack.c.b16 %v959, %v950
      %v1320 = vpack.c.b16 %v960, %v951
      %v1321 = vpack.c.b16 %v961, %v952
      %v1322 = vpack.c.b16 %v962, %v953
      %v1323 = vpack.c.b16 %v963, %v954
      %v1324 = vpack.c.b16 %v964, %v955
      %v1325 = vpack.c.b16 %v965, %v956
      %v1326 = vpack.c.b16 %v966, %v957
      %v1327 = vpack.c.b16 %v976, %v967
      %v1328 = vpack.c.b16 %v977, %v968
      %v1329 = vpack.c.b16 %v978, %v969
      %v1330 = vpack.c.b16 %v979, %v970
      %v1331 = vpack.c.b16 %v980, %v971
      %v1332 = vpack.c.b16 %v981, %v972
      %v1333 = vpack.c.b16 %v982, %v973
      %v1334 = vpack.c.b16 %v983, %v974
      %v1335 = vpack.c.b16 %v984, %v975
      %v1336 = vpack.c.b16 %v994, %v985
      %v1337 = vpack.c.b16 %v995, %v986
      %v1338 = vpack.c.b16 %v996, %v987
      %v1339 = vpack.c.b16 %v997, %v988
      %v1340 = vpack.c.b16 %v998, %v989
      %v1341 = vpack.c.b16 %v999, %v990
      %v1342 = vpack.c.b16 %v1000, %v991
      %v1343 = vpack.c.b16 %v1001, %v992
      %v1344 = vpack.c.b16 %v1002, %v993
      %v1345 = vpack.c.b16 %v1012, %v1003
      %v1346 = vpack.c.b16 %v1013, %v1004
      %v1347 = vpack.c.b16 %v1014, %v1005
      %v1348 = vpack.c.b16 %v1015, %v1006
      %v1349 = vpack.c.b16 %v1016, %v1007
      %v1350 = vpack.c.b16 %v1017, %v1008
      %v1351 = vpack.c.b16 %v1018, %v1009
      %v1352 = vpack.c.b16 %v1019, %v1010
      %v1353 = vpack.c.b16 %v1020, %v1011
      %v1354 = vpack.c.b16 %v1030, %v1021
      %v1355 = vpack.c.b16 %v1031, %v1022
      %v1356 = vpack.c.b16 %v1032, %v1023
      %v1357 = vpack.c.b16 %v1033, %v1024
      %v1358 = vpack.c.b16 %v1034, %v1025
      %v1359 = vpack.c.b16 %v1035, %v1026
      %v1360 = vpack.c.b16 %v1036, %v1027
      %v1361 = vpack.c.b16 %v1037, %v1028
      %v1362 = vpack.c.b16 %v1038, %v1029
      %v1363 = vpack.c.b16 %v1048, %v1039
      %v1364 = vpack.c.b16 %v1049, %v1040
      %v1365 = vpack.c.b16 %v1050, %v1041
      %v1366 = vpack.c.b16 %v1051, %v1042
      %v1367 = vpack.c.b16 %v1052, %v1043
      %v1368 = vpack.c.b16 %v1053, %v1044
      %v1369 = vpack.c.b16 %v1054, %v1045
      %v1370 = vpack.c.b16 %v1055, %v1046
      %v1371 = vpack.c.b16 %v1056, %v1047
      %v1372 = vpack.c.b16 %v1066, %v1057
      %v1373 = vpack.c.b16 %v1067, %v1058
      %v1374 = vpack.c.b16 %v1068, %v1059
      %v1375 = vpack.c.b16 %v1069, %v1060
      %v1376 = vpack.c.b16 %v1070, %v1061
      %v1377 = vpack.c.b16 %v1071, %v1062
      %v1378 = vpack.c.b16 %v1072, %v1063
      %v1379 = vpack.c.b16 %v1073, %v1064
      %v1380 = vpack.c.b16 %v1074, %v1065
      %v1381 = vpack.c.b16 %v1084, %v1075
      %v1382 = vpack.c.b16 %v1085, %v1076
      %v1383 = vpack.c.b16 %v1086, %v1077
      %v1384 = vpack.c.b16 %v1087, %v1078
      %v1385 = vpack.c.b16 %v1088, %v1079
      %v1386 = vpack.c.b16 %v1089, %v1080
      %v1387 = vpack.c.b16 %v1090, %v1081
      %v1388 = vpack.c.b16 %v1091, %v1082
      %v1389 = vpack.c.b16 %v1092, %v1083
      %v1390 = vpack.c.b16 %v1102, %v1093
      %v1391 = vpack.c.b16 %v1103, %v1094
      %v1392 = vpack.c.b16 %v1104, %v1095
      %v1393 = vpack.c.b16 %v1105, %v1096
      %v1394 = vpack.c.b16 %v1106, %v1097
      %v1395 = vpack.c.b16 %v1107, %v1098
      %v1396 = vpack.c.b16 %v1108, %v1099
      %v1397 = vpack.c.b16 %v1109, %v1100
      %v1398 = vpack.c.b16 %v1110, %v1101
      %v1399 = vpack.c.b16 %v1120, %v1111
      %v1400 = vpack.c.b16 %v1121, %v1112
      %v1401 = vpack.c.b16 %v1122, %v1113
      %v1402 = vpack.c.b16 %v1123, %v1114
      %v1403 = vpack.c.b16 %v1124, %v1115
      %v1404 = vpack.c.b16 %v1125, %v1116
      %v1405 = vpack.c.b16 %v1126, %v1117
      %v1406 = vpack.c.b16 %v1127, %v1118
      %v1407 = vpack.c.b16 %v1128, %v1119
      %v1408 = vpack.c.b16 %v1138, %v1129
      %v1409 = vpack.c.b16 %v1139, %v1130
      %v1410 = vpack.c.b16 %v1140, %v1131
      %v1411 = vpack.c.b16 %v1141, %v1132
      %v1412 = vpack.c.b16 %v1142, %v1133
      %v1413 = vpack.c.b16 %v1143, %v1134
      %v1414 = vpack.c.b16 %v1144, %v1135
      %v1415 = vpack.c.b16 %v1145, %v1136
      %v1416 = vpack.c.b16 %v1146, %v1137
      %v1417 = vpack.c.b16 %v1156, %v1147
      %v1418 = vpack.c.b16 %v1157, %v1148
      %v1419 = vpack.c.b16 %v1158, %v1149
      %v1420 = vpack.c.b16 %v1159, %v1150
      %v1421 = vpack.c.b16 %v1160, %v1151
      %v1422 = vpack.c.b16 %v1161, %v1152
      %v1423 = vpack.c.b16 %v1162, %v1153
      %v1424 = vpack.c.b16 %v1163, %v1154
      %v1425 = vpack.c.b16 %v1164, %v1155
      %v1426 = vpack.c.b16 %v1174, %v1165
      %v1427 = vpack.c.b16 %v1175, %v1166
      %v1428 = vpack.c.b16 %v1176, %v1167
      %v1429 = vpack.c.b16 %v1177, %v1168
      %v1430 = vpack.c.b16 %v1178, %v1169
      %v1431 = vpack.c.b16 %v1179, %v1170
      %v1432 = vpack.c.b16 %v1180, %v1171
      %v1433 = vpack.c.b16 %v1181, %v1172
      %v1434 = vpack.c.b16 %v1182, %v1173
      %v1435 = vpack.c.b16 %v1192, %v1183
      %v1436 = vpack.c.b16 %v1193, %v1184
      %v1437 = vpack.c.b16 %v1194, %v1185
      %v1438 = vpack.c.b16 %v1195, %v1186
      %v1439 = vpack.c.b16 %v1196, %v1187
      %v1440 = vpack.c.b16 %v1197, %v1188
      %v1441 = vpack.c.b16 %v1198, %v1189
      %v1442 = vpack.c.b16 %v1199, %v1190
      %v1443 = vpack.c.b16 %v1200, %v1191
      %v1444 = vpack.c.b16 %v1210, %v1201
      %v1445 = vpack.c.b16 %v1211, %v1202
      %v1446 = vpack.c.b16 %v1212, %v1203
      %v1447 = vpack.c.b16 %v1213, %v1204
      %v1448 = vpack.c.b16 %v1214, %v1205
      %v1449 = vpack.c.b16 %v1215, %v1206
      %v1450 = vpack.c.b16 %v1216, %v1207
      %v1451 = vpack.c.b16 %v1217, %v1208
      %v1452 = vpack.c.b16 %v1218, %v1209
      %v1453 = vpack.c.b16 %v1228, %v1219
      %v1454 = vpack.c.b16 %v1229, %v1220
      %v1455 = vpack.c.b16 %v1230, %v1221
      %v1456 = vpack.c.b16 %v1231, %v1222
      %v1457 = vpack.c.b16 %v1232, %v1223
      %v1458 = vpack.c.b16 %v1233, %v1224
      %v1459 = vpack.c.b16 %v1234, %v1225
      %v1460 = vpack.c.b16 %v1235, %v1226
      %v1461 = vpack.c.b16 %v1236, %v1227
      %v1462 = vpack.c.b16 %v1246, %v1237
      %v1463 = vpack.c.b16 %v1247, %v1238
      %v1464 = vpack.c.b16 %v1248, %v1239
      %v1465 = vpack.c.b16 %v1249, %v1240
      %v1466 = vpack.c.b16 %v1250, %v1241
      %v1467 = vpack.c.b16 %v1251, %v1242
      %v1468 = vpack.c.b16 %v1252, %v1243
      %v1469 = vpack.c.b16 %v1253, %v1244
      %v1470 = vpack.c.b16 %v1254, %v1245
      %1687 = vmatprep.subr.bf16.mxu0 %v1256
      %1688 = vmatpush1.bf16.msra.mxu0 %v1255
      %1689 = vmatprep.subr.bf16.mxu0 %v1265
      %1690 = vmatpush1.bf16.msra.mxu0 %v1264
      %1691 = vmatprep.subr.bf16.mxu0 %v1274
      %1692 = vmatpush1.bf16.msra.mxu0 %v1273
      %1693 = vmatprep.subr.bf16.mxu0 %v1283
      %1694 = vmatpush1.bf16.msra.mxu0 %v1282
      %1695 = vmatprep.subr.bf16.mxu0 %v1292
      %1696 = vmatpush1.bf16.msra.mxu0 %v1291
      %1697 = vmatprep.subr.bf16.mxu0 %v1301
      %1698 = vmatpush1.bf16.msra.mxu0 %v1300
      %1699 = vmatprep.subr.bf16.mxu0 %v1310
      %1700 = vmatpush1.bf16.msra.mxu0 %v1309
      %1701 = vmatprep.subr.bf16.mxu0 %v1319
      %1702 = vmatpush1.bf16.msra.mxu0 %v1318
      %1703 = vmatprep.subr.bf16.mxu0 %v1328
      %1704 = vmatpush1.bf16.msra.mxu0 %v1327
      %1705 = vmatprep.subr.bf16.mxu0 %v1337
      %1706 = vmatpush1.bf16.msra.mxu0 %v1336
      %1707 = vmatprep.subr.bf16.mxu0 %v1346
      %1708 = vmatpush1.bf16.msra.mxu0 %v1345
      %1709 = vmatprep.subr.bf16.mxu0 %v1355
      %1710 = vmatpush1.bf16.msra.mxu0 %v1354
      %1711 = vmatprep.subr.bf16.mxu0 %v1364
      %1712 = vmatpush1.bf16.msra.mxu0 %v1363
      %1713 = vmatprep.subr.bf16.mxu0 %v1373
      %1714 = vmatpush1.bf16.msra.mxu0 %v1372
      %1715 = vmatprep.subr.bf16.mxu0 %v1382
      %1716 = vmatpush1.bf16.msra.mxu0 %v1381
      %1717 = vmatprep.subr.bf16.mxu0 %v1391
      %1718 = vmatpush1.bf16.msra.mxu0 %v1390
      %1719 = vmatprep.mubr.bf16.mxu0 %v292
      %1720 = vmatmul.mubr.bf16.gmra.mrb[0].mxu0 %v291
      %v1721 = vpop.f32.mrb[0].mxu0
      %v1722 = vadd.f32 %v541, %v1721
      %v1723 = vpop.f32.mrb[0].mxu0
      %v1724 = vadd.f32 %v545, %v1723
      %v1725 = vpop.f32.mrb[0].mxu0
      %v1726 = vpop.f32.mrb[0].mxu0
      %1727 = vdwg.mxu0
      %1728 = vmatprep.subr.bf16.mxu0 %v1400
      %1729 = vmatpush1.bf16.msra.mxu0 %v1399
      %1730 = vmatprep.subr.bf16.mxu0 %v1409
      %1731 = vmatpush1.bf16.msra.mxu0 %v1408
      %1732 = vmatprep.subr.bf16.mxu0 %v1418
      %1733 = vmatpush1.bf16.msra.mxu0 %v1417
      %1734 = vmatprep.subr.bf16.mxu0 %v1427
      %1735 = vmatpush1.bf16.msra.mxu0 %v1426
      %1736 = vmatprep.subr.bf16.mxu0 %v1436
      %1737 = vmatpush1.bf16.msra.mxu0 %v1435
      %1738 = vmatprep.subr.bf16.mxu0 %v1445
      %1739 = vmatpush1.bf16.msra.mxu0 %v1444
      %1740 = vmatprep.subr.bf16.mxu0 %v1454
      %1741 = vmatpush1.bf16.msra.mxu0 %v1453
      %1742 = vmatprep.subr.bf16.mxu0 %v1463
      %1743 = vmatpush1.bf16.msra.mxu0 %v1462
      %1744 = vmatprep.subr.bf16.mxu0 0
      %1745 = vmatpush1.bf16.msra.mxu0 0
      %1746 = vmatprep.subr.bf16.mxu0 0
      %1747 = vmatpush1.bf16.msra.mxu0 0
      %1748 = vmatprep.subr.bf16.mxu0 0
      %1749 = vmatpush1.bf16.msra.mxu0 0
      %1750 = vmatprep.subr.bf16.mxu0 0
      %1751 = vmatpush1.bf16.msra.mxu0 0
      %1752 = vmatprep.subr.bf16.mxu0 0
      %1753 = vmatpush1.bf16.msra.mxu0 0
      %1754 = vmatprep.subr.bf16.mxu0 0
      %1755 = vmatpush1.bf16.msra.mxu0 0
      %1756 = vmatprep.subr.bf16.mxu0 0
      %1757 = vmatpush1.bf16.msra.mxu0 0
      %1758 = vmatprep.subr.bf16.mxu0 0
      %1759 = vmatpush1.bf16.msra.mxu0 0
      %1760 = vmatprep.mubr.bf16.mxu0 0
      %1761 = vmatmul.mubr.bf16.gmra.mrb[0].mxu0 %v293
      %v1762 = vpop.f32.mrb[0].mxu0
      %v1763 = vadd.f32 %v1722, %v1762
      %v1764 = vpop.f32.mrb[0].mxu0
      %v1765 = vadd.f32 %v1724, %v1764
      %v1766 = vpop.f32.mrb[0].mxu0
      %v1767 = vpop.f32.mrb[0].mxu0
      %1768 = vdwg.mxu0
      %1769 = vmatprep.subr.bf16.mxu0 %v1258
      %1770 = vmatpush1.bf16.msra.mxu0 %v1257
      %1771 = vmatprep.subr.bf16.mxu0 %v1267
      %1772 = vmatpush1.bf16.msra.mxu0 %v1266
      %1773 = vmatprep.subr.bf16.mxu0 %v1276
      %1774 = vmatpush1.bf16.msra.mxu0 %v1275
      %1775 = vmatprep.subr.bf16.mxu0 %v1285
      %1776 = vmatpush1.bf16.msra.mxu0 %v1284
      %1777 = vmatprep.subr.bf16.mxu0 %v1294
      %1778 = vmatpush1.bf16.msra.mxu0 %v1293
      %1779 = vmatprep.subr.bf16.mxu0 %v1303
      %1780 = vmatpush1.bf16.msra.mxu0 %v1302
      %1781 = vmatprep.subr.bf16.mxu0 %v1312
      %1782 = vmatpush1.bf16.msra.mxu0 %v1311
      %1783 = vmatprep.subr.bf16.mxu0 %v1321
      %1784 = vmatpush1.bf16.msra.mxu0 %v1320
      %1785 = vmatprep.subr.bf16.mxu0 %v1330
      %1786 = vmatpush1.bf16.msra.mxu0 %v1329
      %1787 = vmatprep.subr.bf16.mxu0 %v1339
      %1788 = vmatpush1.bf16.msra.mxu0 %v1338
      %1789 = vmatprep.subr.bf16.mxu0 %v1348
      %1790 = vmatpush1.bf16.msra.mxu0 %v1347
      %1791 = vmatprep.subr.bf16.mxu0 %v1357
      %1792 = vmatpush1.bf16.msra.mxu0 %v1356
      %1793 = vmatprep.subr.bf16.mxu0 %v1366
      %1794 = vmatpush1.bf16.msra.mxu0 %v1365
      %1795 = vmatprep.subr.bf16.mxu0 %v1375
      %1796 = vmatpush1.bf16.msra.mxu0 %v1374
      %1797 = vmatprep.subr.bf16.mxu0 %v1384
      %1798 = vmatpush1.bf16.msra.mxu0 %v1383
      %1799 = vmatprep.subr.bf16.mxu0 %v1393
      %1800 = vmatpush1.bf16.msra.mxu0 %v1392
      %1801 = vmatprep.mubr.bf16.mxu0 %v292
      %1802 = vmatmul.mubr.bf16.gmra.mrb[0].mxu0 %v291
      %v1803 = vpop.f32.mrb[0].mxu0
      %v1804 = vadd.f32 %v549, %v1803
      %v1805 = vpop.f32.mrb[0].mxu0
      %v1806 = vadd.f32 %v553, %v1805
      %v1807 = vpop.f32.mrb[0].mxu0
      %v1808 = vpop.f32.mrb[0].mxu0
      %1809 = vdwg.mxu0
      %1810 = vmatprep.subr.bf16.mxu0 %v1402
      %1811 = vmatpush1.bf16.msra.mxu0 %v1401
      %1812 = vmatprep.subr.bf16.mxu0 %v1411
      %1813 = vmatpush1.bf16.msra.mxu0 %v1410
      %1814 = vmatprep.subr.bf16.mxu0 %v1420
      %1815 = vmatpush1.bf16.msra.mxu0 %v1419
      %1816 = vmatprep.subr.bf16.mxu0 %v1429
      %1817 = vmatpush1.bf16.msra.mxu0 %v1428
      %1818 = vmatprep.subr.bf16.mxu0 %v1438
      %1819 = vmatpush1.bf16.msra.mxu0 %v1437
      %1820 = vmatprep.subr.bf16.mxu0 %v1447
      %1821 = vmatpush1.bf16.msra.mxu0 %v1446
      %1822 = vmatprep.subr.bf16.mxu0 %v1456
      %1823 = vmatpush1.bf16.msra.mxu0 %v1455
      %1824 = vmatprep.subr.bf16.mxu0 %v1465
      %1825 = vmatpush1.bf16.msra.mxu0 %v1464
      %1826 = vmatprep.subr.bf16.mxu0 0
      %1827 = vmatpush1.bf16.msra.mxu0 0
      %1828 = vmatprep.subr.bf16.mxu0 0
      %1829 = vmatpush1.bf16.msra.mxu0 0
      %1830 = vmatprep.subr.bf16.mxu0 0
      %1831 = vmatpush1.bf16.msra.mxu0 0
      %1832 = vmatprep.subr.bf16.mxu0 0
      %1833 = vmatpush1.bf16.msra.mxu0 0
      %1834 = vmatprep.subr.bf16.mxu0 0
      %1835 = vmatpush1.bf16.msra.mxu0 0
      %1836 = vmatprep.subr.bf16.mxu0 0
      %1837 = vmatpush1.bf16.msra.mxu0 0
      %1838 = vmatprep.subr.bf16.mxu0 0
      %1839 = vmatpush1.bf16.msra.mxu0 0
      %1840 = vmatprep.subr.bf16.mxu0 0
      %1841 = vmatpush1.bf16.msra.mxu0 0
      %1842 = vmatprep.mubr.bf16.mxu0 0
      %1843 = vmatmul.mubr.bf16.gmra.mrb[0].mxu0 %v293
      %v1844 = vpop.f32.mrb[0].mxu0
      %v1845 = vadd.f32 %v1804, %v1844
      %v1846 = vpop.f32.mrb[0].mxu0
      %v1847 = vadd.f32 %v1806, %v1846
      %v1848 = vpop.f32.mrb[0].mxu0
      %v1849 = vpop.f32.mrb[0].mxu0
      %1850 = vdwg.mxu0
      %1851 = vmatprep.subr.bf16.mxu0 %v1260
      %1852 = vmatpush1.bf16.msra.mxu0 %v1259
      %1853 = vmatprep.subr.bf16.mxu0 %v1269
      %1854 = vmatpush1.bf16.msra.mxu0 %v1268
      %1855 = vmatprep.subr.bf16.mxu0 %v1278
      %1856 = vmatpush1.bf16.msra.mxu0 %v1277
      %1857 = vmatprep.subr.bf16.mxu0 %v1287
      %1858 = vmatpush1.bf16.msra.mxu0 %v1286
      %1859 = vmatprep.subr.bf16.mxu0 %v1296
      %1860 = vmatpush1.bf16.msra.mxu0 %v1295
      %1861 = vmatprep.subr.bf16.mxu0 %v1305
      %1862 = vmatpush1.bf16.msra.mxu0 %v1304
      %1863 = vmatprep.subr.bf16.mxu0 %v1314
      %1864 = vmatpush1.bf16.msra.mxu0 %v1313
      %1865 = vmatprep.subr.bf16.mxu0 %v1323
      %1866 = vmatpush1.bf16.msra.mxu0 %v1322
      %1867 = vmatprep.subr.bf16.mxu0 %v1332
      %1868 = vmatpush1.bf16.msra.mxu0 %v1331
      %1869 = vmatprep.subr.bf16.mxu0 %v1341
      %1870 = vmatpush1.bf16.msra.mxu0 %v1340
      %1871 = vmatprep.subr.bf16.mxu0 %v1350
      %1872 = vmatpush1.bf16.msra.mxu0 %v1349
      %1873 = vmatprep.subr.bf16.mxu0 %v1359
      %1874 = vmatpush1.bf16.msra.mxu0 %v1358
      %1875 = vmatprep.subr.bf16.mxu0 %v1368
      %1876 = vmatpush1.bf16.msra.mxu0 %v1367
      %1877 = vmatprep.subr.bf16.mxu0 %v1377
      %1878 = vmatpush1.bf16.msra.mxu0 %v1376
      %1879 = vmatprep.subr.bf16.mxu0 %v1386
      %1880 = vmatpush1.bf16.msra.mxu0 %v1385
      %1881 = vmatprep.subr.bf16.mxu0 %v1395
      %1882 = vmatpush1.bf16.msra.mxu0 %v1394
      %1883 = vmatprep.mubr.bf16.mxu0 %v292
      %1884 = vmatmul.mubr.bf16.gmra.mrb[0].mxu0 %v291
      %v1885 = vpop.f32.mrb[0].mxu0
      %v1886 = vadd.f32 %v557, %v1885
      %v1887 = vpop.f32.mrb[0].mxu0
      %v1888 = vadd.f32 %v561, %v1887
      %v1889 = vpop.f32.mrb[0].mxu0
      %v1890 = vpop.f32.mrb[0].mxu0
      %1891 = vdwg.mxu0
      %1892 = vmatprep.subr.bf16.mxu0 %v1404
      %1893 = vmatpush1.bf16.msra.mxu0 %v1403
      %1894 = vmatprep.subr.bf16.mxu0 %v1413
      %1895 = vmatpush1.bf16.msra.mxu0 %v1412
      %1896 = vmatprep.subr.bf16.mxu0 %v1422
      %1897 = vmatpush1.bf16.msra.mxu0 %v1421
      %1898 = vmatprep.subr.bf16.mxu0 %v1431
      %1899 = vmatpush1.bf16.msra.mxu0 %v1430
      %1900 = vmatprep.subr.bf16.mxu0 %v1440
      %1901 = vmatpush1.bf16.msra.mxu0 %v1439
      %1902 = vmatprep.subr.bf16.mxu0 %v1449
      %1903 = vmatpush1.bf16.msra.mxu0 %v1448
      %1904 = vmatprep.subr.bf16.mxu0 %v1458
      %1905 = vmatpush1.bf16.msra.mxu0 %v1457
      %1906 = vmatprep.subr.bf16.mxu0 %v1467
      %1907 = vmatpush1.bf16.msra.mxu0 %v1466
      %1908 = vmatprep.subr.bf16.mxu0 0
      %1909 = vmatpush1.bf16.msra.mxu0 0
      %1910 = vmatprep.subr.bf16.mxu0 0
      %1911 = vmatpush1.bf16.msra.mxu0 0
      %1912 = vmatprep.subr.bf16.mxu0 0
      %1913 = vmatpush1.bf16.msra.mxu0 0
      %1914 = vmatprep.subr.bf16.mxu0 0
      %1915 = vmatpush1.bf16.msra.mxu0 0
      %1916 = vmatprep.subr.bf16.mxu0 0
      %1917 = vmatpush1.bf16.msra.mxu0 0
      %1918 = vmatprep.subr.bf16.mxu0 0
      %1919 = vmatpush1.bf16.msra.mxu0 0
      %1920 = vmatprep.subr.bf16.mxu0 0
      %1921 = vmatpush1.bf16.msra.mxu0 0
      %1922 = vmatprep.subr.bf16.mxu0 0
      %1923 = vmatpush1.bf16.msra.mxu0 0
      %1924 = vmatprep.mubr.bf16.mxu0 0
      %1925 = vmatmul.mubr.bf16.gmra.mrb[0].mxu0 %v293
      %v1926 = vpop.f32.mrb[0].mxu0
      %v1927 = vadd.f32 %v1886, %v1926
      %v1928 = vpop.f32.mrb[0].mxu0
      %v1929 = vadd.f32 %v1888, %v1928
      %v1930 = vpop.f32.mrb[0].mxu0
      %v1931 = vpop.f32.mrb[0].mxu0
      %1932 = vdwg.mxu0
      %1933 = vmatprep.subr.bf16.mxu0 %v1262
      %1934 = vmatpush1.bf16.msra.mxu0 %v1261
      %1935 = vmatprep.subr.bf16.mxu0 %v1271
      %1936 = vmatpush1.bf16.msra.mxu0 %v1270
      %1937 = vmatprep.subr.bf16.mxu0 %v1280
      %1938 = vmatpush1.bf16.msra.mxu0 %v1279
      %1939 = vmatprep.subr.bf16.mxu0 %v1289
      %1940 = vmatpush1.bf16.msra.mxu0 %v1288
      %1941 = vmatprep.subr.bf16.mxu0 %v1298
      %1942 = vmatpush1.bf16.msra.mxu0 %v1297
      %1943 = vmatprep.subr.bf16.mxu0 %v1307
      %1944 = vmatpush1.bf16.msra.mxu0 %v1306
      %1945 = vmatprep.subr.bf16.mxu0 %v1316
      %1946 = vmatpush1.bf16.msra.mxu0 %v1315
      %1947 = vmatprep.subr.bf16.mxu0 %v1325
      %1948 = vmatpush1.bf16.msra.mxu0 %v1324
      %1949 = vmatprep.subr.bf16.mxu0 %v1334
      %1950 = vmatpush1.bf16.msra.mxu0 %v1333
      %1951 = vmatprep.subr.bf16.mxu0 %v1343
      %1952 = vmatpush1.bf16.msra.mxu0 %v1342
      %1953 = vmatprep.subr.bf16.mxu0 %v1352
      %1954 = vmatpush1.bf16.msra.mxu0 %v1351
      %1955 = vmatprep.subr.bf16.mxu0 %v1361
      %1956 = vmatpush1.bf16.msra.mxu0 %v1360
      %1957 = vmatprep.subr.bf16.mxu0 %v1370
      %1958 = vmatpush1.bf16.msra.mxu0 %v1369
      %1959 = vmatprep.subr.bf16.mxu0 %v1379
      %1960 = vmatpush1.bf16.msra.mxu0 %v1378
      %1961 = vmatprep.subr.bf16.mxu0 %v1388
      %1962 = vmatpush1.bf16.msra.mxu0 %v1387
      %1963 = vmatprep.subr.bf16.mxu0 %v1397
      %1964 = vmatpush1.bf16.msra.mxu0 %v1396
      %1965 = vmatprep.mubr.bf16.mxu0 %v292
      %1966 = vmatmul.mubr.bf16.gmra.mrb[0].mxu0 %v291
      %v1967 = vpop.f32.mrb[0].mxu0
      %v1968 = vadd.f32 %v565, %v1967
      %v1969 = vpop.f32.mrb[0].mxu0
      %v1970 = vadd.f32 %v569, %v1969
      %v1971 = vpop.f32.mrb[0].mxu0
      %v1972 = vpop.f32.mrb[0].mxu0
      %1973 = vdwg.mxu0
      %1974 = vmatprep.subr.bf16.mxu0 %v1406
      %1975 = vmatpush1.bf16.msra.mxu0 %v1405
      %1976 = vmatprep.subr.bf16.mxu0 %v1415
      %1977 = vmatpush1.bf16.msra.mxu0 %v1414
      %1978 = vmatprep.subr.bf16.mxu0 %v1424
      %1979 = vmatpush1.bf16.msra.mxu0 %v1423
      %1980 = vmatprep.subr.bf16.mxu0 %v1433
      %1981 = vmatpush1.bf16.msra.mxu0 %v1432
      %1982 = vmatprep.subr.bf16.mxu0 %v1442
      %1983 = vmatpush1.bf16.msra.mxu0 %v1441
      %1984 = vmatprep.subr.bf16.mxu0 %v1451
      %1985 = vmatpush1.bf16.msra.mxu0 %v1450
      %1986 = vmatprep.subr.bf16.mxu0 %v1460
      %1987 = vmatpush1.bf16.msra.mxu0 %v1459
      %1988 = vmatprep.subr.bf16.mxu0 %v1469
      %1989 = vmatpush1.bf16.msra.mxu0 %v1468
      %1990 = vmatprep.subr.bf16.mxu0 0
      %1991 = vmatpush1.bf16.msra.mxu0 0
      %1992 = vmatprep.subr.bf16.mxu0 0
      %1993 = vmatpush1.bf16.msra.mxu0 0
      %1994 = vmatprep.subr.bf16.mxu0 0
      %1995 = vmatpush1.bf16.msra.mxu0 0
      %1996 = vmatprep.subr.bf16.mxu0 0
      %1997 = vmatpush1.bf16.msra.mxu0 0
      %1998 = vmatprep.subr.bf16.mxu0 0
      %1999 = vmatpush1.bf16.msra.mxu0 0
      %2000 = vmatprep.subr.bf16.mxu0 0
      %2001 = vmatpush1.bf16.msra.mxu0 0
      %2002 = vmatprep.subr.bf16.mxu0 0
      %2003 = vmatpush1.bf16.msra.mxu0 0
      %2004 = vmatprep.subr.bf16.mxu0 0
      %2005 = vmatpush1.bf16.msra.mxu0 0
      %2006 = vmatprep.mubr.bf16.mxu0 0
      %2007 = vmatmul.mubr.bf16.gmra.mrb[0].mxu0 %v293
      %v2008 = vpop.f32.mrb[0].mxu0
      %v2009 = vadd.f32 %v1968, %v2008
      %v2010 = vpop.f32.mrb[0].mxu0
      %v2011 = vadd.f32 %v1970, %v2010
      %v2012 = vpop.f32.mrb[0].mxu0
      %v2013 = vpop.f32.mrb[0].mxu0
      %2014 = vdwg.mxu0
      %2015 = vmatprep.subr.bf16.mxu0 0
      %2016 = vmatpush1.bf16.msra.mxu0 %v1263
      %2017 = vmatprep.subr.bf16.mxu0 0
      %2018 = vmatpush1.bf16.msra.mxu0 %v1272
      %2019 = vmatprep.subr.bf16.mxu0 0
      %2020 = vmatpush1.bf16.msra.mxu0 %v1281
      %2021 = vmatprep.subr.bf16.mxu0 0
      %2022 = vmatpush1.bf16.msra.mxu0 %v1290
      %2023 = vmatprep.subr.bf16.mxu0 0
      %2024 = vmatpush1.bf16.msra.mxu0 %v1299
      %2025 = vmatprep.subr.bf16.mxu0 0
      %2026 = vmatpush1.bf16.msra.mxu0 %v1308
      %2027 = vmatprep.subr.bf16.mxu0 0
      %2028 = vmatpush1.bf16.msra.mxu0 %v1317
      %2029 = vmatprep.subr.bf16.mxu0 0
      %2030 = vmatpush1.bf16.msra.mxu0 %v1326
      %2031 = vmatprep.subr.bf16.mxu0 0
      %2032 = vmatpush1.bf16.msra.mxu0 %v1335
      %2033 = vmatprep.subr.bf16.mxu0 0
      %2034 = vmatpush1.bf16.msra.mxu0 %v1344
      %2035 = vmatprep.subr.bf16.mxu0 0
      %2036 = vmatpush1.bf16.msra.mxu0 %v1353
      %2037 = vmatprep.subr.bf16.mxu0 0
      %2038 = vmatpush1.bf16.msra.mxu0 %v1362
      %2039 = vmatprep.subr.bf16.mxu0 0
      %2040 = vmatpush1.bf16.msra.mxu0 %v1371
      %2041 = vmatprep.subr.bf16.mxu0 0
      %2042 = vmatpush1.bf16.msra.mxu0 %v1380
      %2043 = vmatprep.subr.bf16.mxu0 0
      %2044 = vmatpush1.bf16.msra.mxu0 %v1389
      %2045 = vmatprep.subr.bf16.mxu0 0
      %2046 = vmatpush1.bf16.msra.mxu0 %v1398
      %2047 = vmatprep.mubr.bf16.mxu0 %v292
      %2048 = vmatmul.mubr.bf16.gmra.mrb[0].mxu0 %v291
      %v2049 = vpop.f32.mrb[0].mxu0
      %v2050 = vadd.f32 %v573, %v2049
      %v2051 = vpop.f32.mrb[0].mxu0
      %v2052 = vpop.f32.mrb[0].mxu0
      %v2053 = vpop.f32.mrb[0].mxu0
      %2054 = vdwg.mxu0
      %2055 = vmatprep.subr.bf16.mxu0 0
      %2056 = vmatpush1.bf16.msra.mxu0 %v1407
      %2057 = vmatprep.subr.bf16.mxu0 0
      %2058 = vmatpush1.bf16.msra.mxu0 %v1416
      %2059 = vmatprep.subr.bf16.mxu0 0
      %2060 = vmatpush1.bf16.msra.mxu0 %v1425
      %2061 = vmatprep.subr.bf16.mxu0 0
      %2062 = vmatpush1.bf16.msra.mxu0 %v1434
      %2063 = vmatprep.subr.bf16.mxu0 0
      %2064 = vmatpush1.bf16.msra.mxu0 %v1443
      %2065 = vmatprep.subr.bf16.mxu0 0
      %2066 = vmatpush1.bf16.msra.mxu0 %v1452
      %2067 = vmatprep.subr.bf16.mxu0 0
      %2068 = vmatpush1.bf16.msra.mxu0 %v1461
      %2069 = vmatprep.subr.bf16.mxu0 0
      %2070 = vmatpush1.bf16.msra.mxu0 %v1470
      %2071 = vmatprep.subr.bf16.mxu0 0
      %2072 = vmatpush1.bf16.msra.mxu0 0
      %2073 = vmatprep.subr.bf16.mxu0 0
      %2074 = vmatpush1.bf16.msra.mxu0 0
      %2075 = vmatprep.subr.bf16.mxu0 0
      %2076 = vmatpush1.bf16.msra.mxu0 0
      %2077 = vmatprep.subr.bf16.mxu0 0
      %2078 = vmatpush1.bf16.msra.mxu0 0
      %2079 = vmatprep.subr.bf16.mxu0 0
      %2080 = vmatpush1.bf16.msra.mxu0 0
      %2081 = vmatprep.subr.bf16.mxu0 0
      %2082 = vmatpush1.bf16.msra.mxu0 0
      %2083 = vmatprep.subr.bf16.mxu0 0
      %2084 = vmatpush1.bf16.msra.mxu0 0
      %2085 = vmatprep.subr.bf16.mxu0 0
      %2086 = vmatpush1.bf16.msra.mxu0 0
      %2087 = vmatprep.mubr.bf16.mxu0 0
      %2088 = vmatmul.mubr.bf16.gmra.mrb[0].mxu0 %v293
      %v2089 = vpop.f32.mrb[0].mxu0
      %v2090 = vadd.f32 %v2050, %v2089
      %v2091 = vpop.f32.mrb[0].mxu0
      %v2092 = vpop.f32.mrb[0].mxu0
      %v2093 = vpop.f32.mrb[0].mxu0
      %2094 = vdwg.mxu0
      %v2095 = vpack.c.bf16 %v1763, %v1763
      %v2096 = vpack.c.bf16 %v1765, %v1765
      %v2097 = vpack.c.bf16 %v1845, %v1845
      %v2098 = vpack.c.bf16 %v1847, %v1847
      %v2099 = vpack.c.bf16 %v1927, %v1927
      %v2100 = vpack.c.bf16 %v1929, %v1929
      %v2101 = vpack.c.bf16 %v2009, %v2009
      %v2102 = vpack.c.bf16 %v2011, %v2011
      %v2103 = vpack.c.bf16 %v2090, %v2090
      %v2113 = vunpack.c.l.b16 %v2095
      %v2114 = vunpack.c.l.b16 %v2096
      %v2115 = vunpack.c.l.b16 %v2097
      %v2116 = vunpack.c.l.b16 %v2098
      %v2117 = vunpack.c.l.b16 %v2099
      %v2118 = vunpack.c.l.b16 %v2100
      %v2119 = vunpack.c.l.b16 %v2101
      %v2120 = vunpack.c.l.b16 %v2102
      %v2121 = vunpack.c.l.b16 %v2103
      %v2122 = vpack.c.b16 %v2114, %v2113
      %v2123 = vpack.c.b16 %v2116, %v2115
      %v2124 = vpack.c.b16 %v2118, %v2117
      %v2125 = vpack.c.b16 %v2120, %v2119
      %v2126 = vpack.c.b16 %v2121, %v2121
      %2132 = vst [vmem:[%s224] sm:$0xff] %v2122
      %2133 = vst [vmem:[%s224 + $0x8] sm:$0xff] %v2123
      %2134 = vst [vmem:[%s224 + $0x10] sm:$0xff] %v2124
      %2135 = vst [vmem:[%s224 + $0x18] sm:$0xff] %v2125
      %2136 = vst [vmem:[%s224 + $0x20] sm:$0xf] %v2126
      %p2137 = scmp.lt.s32.totalorder %s16, 1
      %s2138 = scalar_select %p2137, %s16, 1
      %s2139 = smul.addr %s2138, 9
      %s2140 = smul.addr %s2139, 4
      %s2141 = scalar_lea.vmem %s5, %s2140
      // Predicated region
      $region41: #{build_transformer_forward.13} parent=39 // pred_check
        %p2142 = pneg %p144
      $region42: #{build_transformer_forward.13} parent=39 // pred_check_branch
        %2144 = sbr.rel (%p2142) target = $region44
      $region43: #{build_transformer_forward.13} parent=39 // pred_region
        _
      $region44: #{build_transformer_forward.13} parent=39 // pred_fallthru
        _
    $region40: #{build_transformer_forward.13} parent=5 // pred_fallthru
      _
    %p2145 = scmp.le.s32.totalorder 2, %s11
    // Predicated region
    $region45: #{build_transformer_forward.13} parent=5 // pred_check
      %p2146 = pneg %p2145
    $region46: #{build_transformer_forward.13} parent=5 // pred_check_branch
      %2148 = sbr.rel (%p2146) target = $region48
    $region47: #{build_transformer_forward.13} parent=5 // pred_region
      %s2149 = ssub.s32 %s11, 2
      // Predicated region
      $region49: #{build_transformer_forward.13} parent=47 // pred_check
        %p2150 = pneg %p150
      $region50: #{build_transformer_forward.13} parent=47 // pred_check_branch
        %2152 = sbr.rel (%p2150) target = $region52
      $region51: #{build_transformer_forward.13} parent=47 // pred_region
        %p2153 = scmp.lt.s32.totalorder %s17, 1
        %s2154 = scalar_select %p2153, %s17, 1
        %s2155 = smul.addr %s2154, 9
        %s2156 = smul.addr %s2155, 4
        %s2157 = scalar_lea.vmem %s5, %s2156
      $region52: #{build_transformer_forward.13} parent=47 // pred_fallthru
        _
    $region48: #{build_transformer_forward.13} parent=5 // pred_fallthru
      _
  $region6: #{build_transformer_forward.13} parent=0 // loop_footer
    %s15 = sadd.s32 1, %s11
  $region7: #{build_transformer_forward.13} parent=0 // loop_footer_branch
    %10 = sbr.rel target = $region3
  $region8: #{build_transformer_forward.13} parent=0 // loop_exit
    _

// kernel: build_transformer_forward.23
$region0: #{build_transformer_forward.23}
  #allocation0 [shape = 'u32[]', space=smem, size = 0x4, offset = 0x4, fixed_abs, tag = 'smem constant byte address 0x4 - core index']
  #allocation1 [shape = 'u32[144,128]{1,0:T(1,128)}', space=vmem, size = 0x12000, scoped, tag = 'internal scratch']
  %s0 = inlined_call_operand.vmem [shape: f32[2,2,384], index: 0, kind: input, shape index: {}]
  %s1 = inlined_call_operand.vmem [shape: f32[1,384], index: 1, kind: input, shape index: {}]
  %s2 = inlined_call_operand.vmem [shape: f32[1,384], index: 2, kind: input, shape index: {}]
  %s3 = inlined_call_operand.vmem [shape: f32[2,1,384], index: 3, kind: input, shape index: {}]
  %s4 = inlined_call_operand.vmem [shape: f32[2,1,384], index: 4, kind: input, shape index: {}]
  %s5 = inlined_call_operand.vmem [shape: f32[2,1,384], index: 5, kind: input, shape index: {}]
  %s6 = inlined_call_operand.vmem [shape: f32[2,1,384], index: 6, kind: input, shape index: {}]
  %s7 = inlined_call_operand.hbm [shape: f32[2,2,384], index: 7, kind: output, shape index: {}]
  %s8 = sld [smem:[#allocation0]]
  $region61: #{build_transformer_forward.23} parent=0
    _
  %s10 = ssub.s32 1, %s8
  %s11 = scalar_select 0, %s10, %s8
  $region1: #{build_transformer_forward.23} parent=0
    #allocation2 [shape = 'u8[6144]{0}', space=vmem, size = 0x1800, scoped, tag = 'output window, operand 0']
    #allocation3 [shape = 's32[2]{0}', space=sflag, size = 0x8, scoped, tag = 'scoped memory for build_transformer_forward.23']
    %12 = vsyncpa [#allocation3], 0
    %s13 = scalar_lea.sflag [#allocation3], 1
    %14 = vsyncpa %s13, 0
    loop: start=0, step=1, limit=4
    $region2: #{build_transformer_forward.23} parent=1 // loop_pre_header
      _
    $region3: #{build_transformer_forward.23} parent=1 // loop_header
      %s16 = sphi 0, %s20
      %p17 = scmp.ge.s32.totalorder %s16, 4
      %s26 = sphi 0, %s28
      %s29 = sphi 0, %s26
      %s30 = sphi 0, %s29
      %s46 = sphi 0, %s30
      %s50 = sphi 0, %s50
      %s52 = sphi 0, %s50
      %s53 = sphi 0, %s52
      %s67 = sphi 0, %s53
      %s71 = sphi 0, %s71
      %s73 = sphi 0, %s71
      %s74 = sphi 0, %s73
      %s88 = sphi 0, %s74
      %s94 = sphi 0, %s96
      %s97 = sphi 0, %s94
      %s98 = sphi 0, %s97
      %s114 = sphi 0, %s98
      %s120 = sphi 0, %s122
      %s123 = sphi 0, %s120
      %s124 = sphi 0, %s123
      %s140 = sphi 0, %s124
      %s146 = sphi 0, %s148
      %s149 = sphi 0, %s146
      %s150 = sphi 0, %s149
      %s166 = sphi 0, %s150
      %s172 = sphi 0, %s174
      %s175 = sphi 0, %s172
      %s176 = sphi 0, %s175
      %s192 = sphi 0, %s176
      %s198 = sphi 0, %s200
      %s201 = sphi 0, %s198
      %s202 = sphi 0, %s201
      %s218 = sphi 0, %s202
    $region4: #{build_transformer_forward.23} parent=1 // loop_header_branch
      %19 = sbr.rel (%p17) target = $region8
    $region5: #{build_transformer_forward.23} parent=1 // loop_body
      %s21 = ssub.s32 %s16, 1
      %s22 = ssub.s32 %s16, 2
      %s23 = sadd.s32 %s16, 1
      %s24 = ssub.s32 %s16, %s23
      %p25 = scmp.eq.s32.totalorder %s24, 0
      %s27 = sadd.s32 %s26, 1
      %s28 = scalar_select %p25, %s26, %s27
      %p31 = pneg %p25
      %p32 = scmp.eq.s32.totalorder %s16, 1
      %p33 = por %p31, %p32
      %p34 = scmp.ne.s32.totalorder %s26, %s29
      %p35 = scmp.eq.s32.totalorder %s16, 0
      %p36 = por %p34, %p35
      %p37 = scmp.ne.s32.totalorder %s26, %s29
      %p38 = scmp.eq.s32.totalorder %s21, 1
      %p39 = por %p37, %p38
      %p40 = scmp.ne.s32.totalorder %s29, %s30
      %p41 = scmp.eq.s32.totalorder %s21, 0
      %p42 = por %p40, %p41
      %p43 = scmp.ne.s32.totalorder %s29, %s30
      %p44 = scmp.eq.s32.totalorder %s22, 1
      %p45 = por %p43, %p44
      %p47 = scmp.ne.s32.totalorder %s30, %s46
      %p48 = scmp.eq.s32.totalorder %s22, 0
      %p49 = por %p47, %p48
      %s51 = sadd.s32 %s50, 1
      %p54 = scmp.eq.s32.totalorder %s16, 1
      %p55 = scmp.ne.s32.totalorder %s50, %s52
      %p56 = scmp.eq.s32.totalorder %s16, 0
      %p57 = por %p55, %p56
      %p58 = scmp.ne.s32.totalorder %s50, %s52
      %p59 = scmp.eq.s32.totalorder %s21, 1
      %p60 = por %p58, %p59
      %p61 = scmp.ne.s32.totalorder %s52, %s53
      %p62 = scmp.eq.s32.totalorder %s21, 0
      %p63 = por %p61, %p62
      %p64 = scmp.ne.s32.totalorder %s52, %s53
      %p65 = scmp.eq.s32.totalorder %s22, 1
      %p66 = por %p64, %p65
      %p68 = scmp.ne.s32.totalorder %s53, %s67
      %p69 = scmp.eq.s32.totalorder %s22, 0
      %p70 = por %p68, %p69
      %s72 = sadd.s32 %s71, 1
      %p75 = scmp.eq.s32.totalorder %s16, 1
      %p76 = scmp.ne.s32.totalorder %s71, %s73
      %p77 = scmp.eq.s32.totalorder %s16, 0
      %p78 = por %p76, %p77
      %p79 = scmp.ne.s32.totalorder %s71, %s73
      %p80 = scmp.eq.s32.totalorder %s21, 1
      %p81 = por %p79, %p80
      %p82 = scmp.ne.s32.totalorder %s73, %s74
      %p83 = scmp.eq.s32.totalorder %s21, 0
      %p84 = por %p82, %p83
      %p85 = scmp.ne.s32.totalorder %s73, %s74
      %p86 = scmp.eq.s32.totalorder %s22, 1
      %p87 = por %p85, %p86
      %p89 = scmp.ne.s32.totalorder %s74, %s88
      %p90 = scmp.eq.s32.totalorder %s22, 0
      %p91 = por %p89, %p90
      %s92 = ssub.s32 %s16, %s23
      %p93 = scmp.eq.s32.totalorder %s92, 0
      %s95 = sadd.s32 %s94, 1
      %s96 = scalar_select %p93, %s94, %s95
      %p99 = pneg %p93
      %p100 = scmp.eq.s32.totalorder %s16, 1
      %p101 = por %p99, %p100
      %p102 = scmp.ne.s32.totalorder %s94, %s97
      %p103 = scmp.eq.s32.totalorder %s16, 0
      %p104 = por %p102, %p103
      %p105 = scmp.ne.s32.totalorder %s94, %s97
      %p106 = scmp.eq.s32.totalorder %s21, 1
      %p107 = por %p105, %p106
      %p108 = scmp.ne.s32.totalorder %s97, %s98
      %p109 = scmp.eq.s32.totalorder %s21, 0
      %p110 = por %p108, %p109
      %p111 = scmp.ne.s32.totalorder %s97, %s98
      %p112 = scmp.eq.s32.totalorder %s22, 1
      %p113 = por %p111, %p112
      %p115 = scmp.ne.s32.totalorder %s98, %s114
      %p116 = scmp.eq.s32.totalorder %s22, 0
      %p117 = por %p115, %p116
      %s118 = ssub.s32 %s16, %s23
      %p119 = scmp.eq.s32.totalorder %s118, 0
      %s121 = sadd.s32 %s120, 1
      %s122 = scalar_select %p119, %s120, %s121
      %p125 = pneg %p119
      %p126 = scmp.eq.s32.totalorder %s16, 1
      %p127 = por %p125, %p126
      %p128 = scmp.ne.s32.totalorder %s120, %s123
      %p129 = scmp.eq.s32.totalorder %s16, 0
      %p130 = por %p128, %p129
      %p131 = scmp.ne.s32.totalorder %s120, %s123
      %p132 = scmp.eq.s32.totalorder %s21, 1
      %p133 = por %p131, %p132
      %p134 = scmp.ne.s32.totalorder %s123, %s124
      %p135 = scmp.eq.s32.totalorder %s21, 0
      %p136 = por %p134, %p135
      %p137 = scmp.ne.s32.totalorder %s123, %s124
      %p138 = scmp.eq.s32.totalorder %s22, 1
      %p139 = por %p137, %p138
      %p141 = scmp.ne.s32.totalorder %s124, %s140
      %p142 = scmp.eq.s32.totalorder %s22, 0
      %p143 = por %p141, %p142
      %s144 = ssub.s32 %s16, %s23
      %p145 = scmp.eq.s32.totalorder %s144, 0
      %s147 = sadd.s32 %s146, 1
      %s148 = scalar_select %p145, %s146, %s147
      %p151 = pneg %p145
      %p152 = scmp.eq.s32.totalorder %s16, 1
      %p153 = por %p151, %p152
      %p154 = scmp.ne.s32.totalorder %s146, %s149
      %p155 = scmp.eq.s32.totalorder %s16, 0
      %p156 = por %p154, %p155
      %p157 = scmp.ne.s32.totalorder %s146, %s149
      %p158 = scmp.eq.s32.totalorder %s21, 1
      %p159 = por %p157, %p158
      %p160 = scmp.ne.s32.totalorder %s149, %s150
      %p161 = scmp.eq.s32.totalorder %s21, 0
      %p162 = por %p160, %p161
      %p163 = scmp.ne.s32.totalorder %s149, %s150
      %p164 = scmp.eq.s32.totalorder %s22, 1
      %p165 = por %p163, %p164
      %p167 = scmp.ne.s32.totalorder %s150, %s166
      %p168 = scmp.eq.s32.totalorder %s22, 0
      %p169 = por %p167, %p168
      %s170 = ssub.s32 %s16, %s23
      %p171 = scmp.eq.s32.totalorder %s170, 0
      %s173 = sadd.s32 %s172, 1
      %s174 = scalar_select %p171, %s172, %s173
      %p177 = pneg %p171
      %p178 = scmp.eq.s32.totalorder %s16, 1
      %p179 = por %p177, %p178
      %p180 = scmp.ne.s32.totalorder %s172, %s175
      %p181 = scmp.eq.s32.totalorder %s16, 0
      %p182 = por %p180, %p181
      %p183 = scmp.ne.s32.totalorder %s172, %s175
      %p184 = scmp.eq.s32.totalorder %s21, 1
      %p185 = por %p183, %p184
      %p186 = scmp.ne.s32.totalorder %s175, %s176
      %p187 = scmp.eq.s32.totalorder %s21, 0
      %p188 = por %p186, %p187
      %p189 = scmp.ne.s32.totalorder %s175, %s176
      %p190 = scmp.eq.s32.totalorder %s22, 1
      %p191 = por %p189, %p190
      %p193 = scmp.ne.s32.totalorder %s176, %s192
      %p194 = scmp.eq.s32.totalorder %s22, 0
      %p195 = por %p193, %p194
      %s196 = ssub.s32 %s16, %s23
      %p197 = scmp.eq.s32.totalorder %s196, 0
      %s199 = sadd.s32 %s198, 1
      %s200 = scalar_select %p197, %s198, %s199
      %p203 = pneg %p197
      %p204 = scmp.eq.s32.totalorder %s16, 1
      %p205 = por %p203, %p204
      %p206 = scmp.ne.s32.totalorder %s198, %s201
      %p207 = scmp.eq.s32.totalorder %s16, 0
      %p208 = por %p206, %p207
      %p209 = scmp.ne.s32.totalorder %s198, %s201
      %p210 = scmp.eq.s32.totalorder %s21, 1
      %p211 = por %p209, %p210
      %p212 = scmp.ne.s32.totalorder %s201, %s202
      %p213 = scmp.eq.s32.totalorder %s21, 0
      %p214 = por %p212, %p213
      %p215 = scmp.ne.s32.totalorder %s201, %s202
      %p216 = scmp.eq.s32.totalorder %s22, 1
      %p217 = por %p215, %p216
      %p219 = scmp.ne.s32.totalorder %s202, %s218
      %p220 = scmp.eq.s32.totalorder %s22, 0
      %p221 = por %p219, %p220
      %p222 = scmp.le.s32.totalorder 1, %s16
      %p223 = scmp.lt.s32.totalorder %s16, 3
      %p224 = pnand %p222, %p223
      %p225 = pneg %p224
      // Predicated region
      $region9: #{build_transformer_forward.23} parent=5 // pred_check
        _
      $region10: #{build_transformer_forward.23} parent=5 // pred_check_branch
        %227 = sbr.rel (%p224) target = $region12
      $region11: #{build_transformer_forward.23} parent=5 // pred_region
        %s228 = ssub.s32 %s16, 1
        // Predicated region
        $region13: #{build_transformer_forward.23} parent=11 // pred_check
          %p229 = pneg %p63
        $region14: #{build_transformer_forward.23} parent=11 // pred_check_branch
          %231 = sbr.rel (%p229) target = $region16
        $region15: #{build_transformer_forward.23} parent=11 // pred_region
          _
        $region16: #{build_transformer_forward.23} parent=11 // pred_fallthru
          _
        // Predicated region
        $region17: #{build_transformer_forward.23} parent=11 // pred_check
          %p232 = pneg %p84
        $region18: #{build_transformer_forward.23} parent=11 // pred_check_branch
          %234 = sbr.rel (%p232) target = $region20
        $region19: #{build_transformer_forward.23} parent=11 // pred_region
          _
        $region20: #{build_transformer_forward.23} parent=11 // pred_fallthru
          _
      $region12: #{build_transformer_forward.23} parent=5 // pred_fallthru
        _
      %p235 = scmp.lt.s32.totalorder %s16, 2
      // Predicated region
      $region21: #{build_transformer_forward.23} parent=5 // pred_check
        %p236 = pneg %p235
      $region22: #{build_transformer_forward.23} parent=5 // pred_check_branch
        %238 = sbr.rel (%p236) target = $region24
      $region23: #{build_transformer_forward.23} parent=5 // pred_region
        // Predicated region
        $region25: #{build_transformer_forward.23} parent=23 // pred_check
          %p239 = pneg %p36
        $region26: #{build_transformer_forward.23} parent=23 // pred_check_branch
          %241 = sbr.rel (%p239) target = $region28
        $region27: #{build_transformer_forward.23} parent=23 // pred_region
          %p242 = scmp.lt.s32.totalorder %s16, 1
          %s243 = scalar_select %p242, %s16, 1
          %s244 = smul.addr %s243, 3
          %s245 = smul.addr %s244, 2
          %s246 = scalar_lea.vmem %s0, %s245
        $region28: #{build_transformer_forward.23} parent=23 // pred_fallthru
          _
        // Predicated region
        $region29: #{build_transformer_forward.23} parent=23 // pred_check
          %p247 = pneg %p104
        $region30: #{build_transformer_forward.23} parent=23 // pred_check_branch
          %249 = sbr.rel (%p247) target = $region32
        $region31: #{build_transformer_forward.23} parent=23 // pred_region
          %p250 = scmp.lt.s32.totalorder %s16, 1
          %s251 = scalar_select %p250, %s16, 1
          %s252 = smul.addr %s251, 3
          %s253 = scalar_lea.vmem %s3, %s252
        $region32: #{build_transformer_forward.23} parent=23 // pred_fallthru
          _
        // Predicated region
        $region33: #{build_transformer_forward.23} parent=23 // pred_check
          %p254 = pneg %p130
        $region34: #{build_transformer_forward.23} parent=23 // pred_check_branch
          %256 = sbr.rel (%p254) target = $region36
        $region35: #{build_transformer_forward.23} parent=23 // pred_region
          %p257 = scmp.lt.s32.totalorder %s16, 1
          %s258 = scalar_select %p257, %s16, 1
          %s259 = smul.addr %s258, 3
          %s260 = scalar_lea.vmem %s4, %s259
        $region36: #{build_transformer_forward.23} parent=23 // pred_fallthru
          _
        // Predicated region
        $region37: #{build_transformer_forward.23} parent=23 // pred_check
          %p261 = pneg %p156
        $region38: #{build_transformer_forward.23} parent=23 // pred_check_branch
          %263 = sbr.rel (%p261) target = $region40
        $region39: #{build_transformer_forward.23} parent=23 // pred_region
          %p264 = scmp.lt.s32.totalorder %s16, 1
          %s265 = scalar_select %p264, %s16, 1
          %s266 = smul.addr %s265, 3
          %s267 = scalar_lea.vmem %s5, %s266
        $region40: #{build_transformer_forward.23} parent=23 // pred_fallthru
          _
        // Predicated region
        $region41: #{build_transformer_forward.23} parent=23 // pred_check
          %p268 = pneg %p182
        $region42: #{build_transformer_forward.23} parent=23 // pred_check_branch
          %270 = sbr.rel (%p268) target = $region44
        $region43: #{build_transformer_forward.23} parent=23 // pred_region
          %p271 = scmp.lt.s32.totalorder %s16, 1
          %s272 = scalar_select %p271, %s16, 1
          %s273 = smul.addr %s272, 3
          %s274 = scalar_lea.vmem %s6, %s273
        $region44: #{build_transformer_forward.23} parent=23 // pred_fallthru
          _
      $region24: #{build_transformer_forward.23} parent=5 // pred_fallthru
        _
      %p275 = scmp.le.s32.totalorder 1, %s16
      %p276 = scmp.lt.s32.totalorder %s16, 3
      %p277 = pnand %p275, %p276
      %p278 = pneg %p277
      // Predicated region
      $region45: #{build_transformer_forward.23} parent=5 // pred_check
        _
      $region46: #{build_transformer_forward.23} parent=5 // pred_check_branch
        %280 = sbr.rel (%p277) target = $region48
      $region47: #{build_transformer_forward.23} parent=5 // pred_region
        %s281 = ssub.s32 %s16, 1
        %p282 = scmp.lt.s32.totalorder %s21, 1
        %s283 = scalar_select %p282, %s21, 1
        %s284 = smul.addr %s283, 3
        %s285 = smul.addr %s284, 2
        %s286 = scalar_lea.vmem %s0, %s285
        %p287 = pneg %p42
        %p288 = pneg %p39
        %p289 = pneg %p63
        %p290 = pneg %p60
        %p291 = pneg %p84
        %p292 = pneg %p81
        %p293 = scmp.lt.s32.totalorder %s21, 1
        %s294 = scalar_select %p293, %s21, 1
        %s295 = smul.addr %s294, 3
        %s296 = scalar_lea.vmem %s3, %s295
        %p297 = pneg %p110
        %p298 = pneg %p107
        %p299 = scmp.lt.s32.totalorder %s21, 1
        %s300 = scalar_select %p299, %s21, 1
        %s301 = smul.addr %s300, 3
        %s302 = scalar_lea.vmem %s4, %s301
        %p303 = pneg %p136
        %p304 = pneg %p133
        %p305 = scmp.lt.s32.totalorder %s21, 1
        %s306 = scalar_select %p305, %s21, 1
        %s307 = smul.addr %s306, 3
        %s308 = scalar_lea.vmem %s5, %s307
        %p309 = pneg %p162
        %p310 = pneg %p159
        %p311 = scmp.lt.s32.totalorder %s21, 1
        %s312 = scalar_select %p311, %s21, 1
        %s313 = smul.addr %s312, 3
        %s314 = scalar_lea.vmem %s6, %s313
        %p315 = pneg %p188
        %p316 = pneg %p185
        %p317 = pneg %p214
        %p318 = pneg %p211
        %s319 = sand.u32 %s201, 1
        %s320 = scalar_lea.sflag [#allocation3], %s319
        %s321 = sand.u32 %s201, 1
        %s322 = smul.addr %s321, 6
        %s323 = scalar_lea.vmem [#allocation2], %s322
        %p324 = scmp.lt.s32.totalorder %s21, 1
        %s325 = scalar_select %p324, %s21, 1
        %s326 = smul.addr %s325, 3
        %s327 = smul.addr %s326, 2
        %s328 = scalar_lea.vmem %s0, %s327
        %p329 = scmp.lt.s32.totalorder %s21, 1
        %s330 = scalar_select %p329, %s21, 1
        %s331 = smul.addr %s330, 3
        %s332 = scalar_lea.vmem %s3, %s331
        %p333 = scmp.lt.s32.totalorder %s21, 1
        %s334 = scalar_select %p333, %s21, 1
        %s335 = smul.addr %s334, 3
        %s336 = scalar_lea.vmem %s4, %s335
        %p337 = scmp.lt.s32.totalorder %s21, 1
        %s338 = scalar_select %p337, %s21, 1
        %s339 = smul.addr %s338, 3
        %s340 = scalar_lea.vmem %s5, %s339
        %p341 = scmp.lt.s32.totalorder %s21, 1
        %s342 = scalar_select %p341, %s21, 1
        %s343 = smul.addr %s342, 3
        %s344 = scalar_lea.vmem %s6, %s343
        %v345 = vld [vmem:[%s328] sm:$0x3f]
        %v347 = vcombine.high %v345, %v345
        %v349 = vunpack.c.l.s4 1983009808
        %v350 = vunpack.c.0.s8 %v349
        %v351 = vlaneseq
        %v352 = vshrl.u32 %v351, 7
        %v353 = vsub.s32 %v350, %v352
        %v354 = vrot.slane %v345, %v353
        %v356 = vunpack.c.l.s4 1983009808
        %v357 = vunpack.c.0.s8 %v356
        %v358 = vlaneseq
        %v359 = vshrl.u32 %v358, 7
        %v360 = vsub.s32 %v357, %v359
        %v361 = vrot.slane %v347, %v360
        %v362 = vcombine.high %v354, %v354
        %vm366 = vcmask 1041408
        %v367 = vsel %vm366, %v354, 0.0
        %v368 = vsel %vm366, %v362, 0.0
        %v369 = vadd.f32 %v367, %v368
        %v370 = vsel %vm366, %v361, 0.0
        %v371 = vadd.f32 %v369, %v370
        %372 = vadd.xlane.f32.xlu0 %v371
        %v373 = vpop.xlane.xlu0 %372
        %v374 = vrcp.pop 384.0
        %v375 = vmul.f32 %v373, %v374
        %v378 = vunpack.c.l.s4 269488144
        %v379 = vunpack.c.0.s8 %v378
        %v380 = vlaneseq
        %v381 = vshrl.u32 %v380, 7
        %v382 = vsub.s32 %v379, %v381
        %v383 = vrot.slane %v375, %v382
        %v385 = vsub.f32 %v345, %v383
        %v386 = vmul.f32 %v385, %v385
        %v388 = vcombine.high %v386, %v386
        %v390 = vunpack.c.l.s4 1983009808
        %v391 = vunpack.c.0.s8 %v390
        %v392 = vlaneseq
        %v393 = vshrl.u32 %v392, 7
        %v394 = vsub.s32 %v391, %v393
        %v395 = vrot.slane %v386, %v394
        %v397 = vunpack.c.l.s4 1983009808
        %v398 = vunpack.c.0.s8 %v397
        %v399 = vlaneseq
        %v400 = vshrl.u32 %v399, 7
        %v401 = vsub.s32 %v398, %v400
        %v402 = vrot.slane %v388, %v401
        %v403 = vcombine.high %v395, %v395
        %v407 = vsel %vm366, %v395, 0.0
        %v408 = vsel %vm366, %v403, 0.0
        %v409 = vadd.f32 %v407, %v408
        %v410 = vsel %vm366, %v402, 0.0
        %v411 = vadd.f32 %v409, %v410
        %412 = vadd.xlane.f32.xlu0 %v411
        %v413 = vpop.xlane.xlu0 %412
        %v414 = vmul.f32 %v413, %v374
        %v415 = vadd.f32 %v414, 1e-06
        %v416 = vrsqrt.pop %v415
        %v419 = vunpack.c.l.s4 269488144
        %v420 = vunpack.c.0.s8 %v419
        %v421 = vlaneseq
        %v422 = vshrl.u32 %v421, 7
        %v423 = vsub.s32 %v420, %v422
        %v424 = vrot.slane %v416, %v423
        %v426 = vmul.f32 %v385, %v424
        %v427 = vld [vmem:[%s1] sm:$0x7]
        %v429 = vlaneseq
        %v430 = vshrl.u32 %v429, 7
        %v431 = vsub.s32 0, %v430
        %v432 = vrot.slane %v427, %v431
        %v433 = vlaneseq
        %v434 = vshrl.u32 %v433, 7
        %v435 = vsub.s32 1, %v434
        %v436 = vrot.slane %v427, %v435
        %v437 = vlaneseq
        %v438 = vshrl.u32 %v437, 7
        %v439 = vsub.s32 2, %v438
        %v440 = vrot.slane %v427, %v439
        %v441 = vcombine.low %v432, %v436
        %v443 = vunpack.c.l.s4 1983009808
        %v444 = vunpack.c.0.s8 %v443
        %v445 = vlaneseq
        %v446 = vshrl.u32 %v445, 7
        %v447 = vsub.s32 %v444, %v446
        %v448 = vrot.slane %v441, %v447
        %v450 = vunpack.c.l.s4 1983009808
        %v451 = vunpack.c.0.s8 %v450
        %v452 = vlaneseq
        %v453 = vshrl.u32 %v452, 7
        %v454 = vsub.s32 %v451, %v453
        %v455 = vrot.slane %v440, %v454
        %v456 = vcombine.low %v448, %v455
        %v458 = vmul.f32 %v426, %v456
        %v459 = vld [vmem:[%s2] sm:$0x7]
        %v461 = vlaneseq
        %v462 = vshrl.u32 %v461, 7
        %v463 = vsub.s32 0, %v462
        %v464 = vrot.slane %v459, %v463
        %v465 = vlaneseq
        %v466 = vshrl.u32 %v465, 7
        %v467 = vsub.s32 1, %v466
        %v468 = vrot.slane %v459, %v467
        %v469 = vlaneseq
        %v470 = vshrl.u32 %v469, 7
        %v471 = vsub.s32 2, %v470
        %v472 = vrot.slane %v459, %v471
        %v473 = vcombine.low %v464, %v468
        %v475 = vunpack.c.l.s4 1983009808
        %v476 = vunpack.c.0.s8 %v475
        %v477 = vlaneseq
        %v478 = vshrl.u32 %v477, 7
        %v479 = vsub.s32 %v476, %v478
        %v480 = vrot.slane %v473, %v479
        %v482 = vunpack.c.l.s4 1983009808
        %v483 = vunpack.c.0.s8 %v482
        %v484 = vlaneseq
        %v485 = vshrl.u32 %v484, 7
        %v486 = vsub.s32 %v483, %v485
        %v487 = vrot.slane %v472, %v486
        %v488 = vcombine.low %v480, %v487
        %v490 = vadd.f32 %v458, %v488
        %v491 = vld [vmem:[%s344] sm:$0x7]
        %v492 = vadd.f32 %v491, 1e-05
        %v493 = vrsqrt.pop %v492
        %v494 = vld [vmem:[%s340] sm:$0x7]
        %v496 = vlaneseq
        %v497 = vshrl.u32 %v496, 7
        %v498 = vsub.s32 0, %v497
        %v499 = vrot.slane %v494, %v498
        %v500 = vlaneseq
        %v501 = vshrl.u32 %v500, 7
        %v502 = vsub.s32 1, %v501
        %v503 = vrot.slane %v494, %v502
        %v504 = vlaneseq
        %v505 = vshrl.u32 %v504, 7
        %v506 = vsub.s32 2, %v505
        %v507 = vrot.slane %v494, %v506
        %v508 = vcombine.low %v499, %v503
        %v510 = vunpack.c.l.s4 1983009808
        %v511 = vunpack.c.0.s8 %v510
        %v512 = vlaneseq
        %v513 = vshrl.u32 %v512, 7
        %v514 = vsub.s32 %v511, %v513
        %v515 = vrot.slane %v508, %v514
        %v517 = vunpack.c.l.s4 1983009808
        %v518 = vunpack.c.0.s8 %v517
        %v519 = vlaneseq
        %v520 = vshrl.u32 %v519, 7
        %v521 = vsub.s32 %v518, %v520
        %v522 = vrot.slane %v507, %v521
        %v523 = vcombine.low %v515, %v522
        %v525 = vsub.f32 %v490, %v523
        %v527 = vlaneseq
        %v528 = vshrl.u32 %v527, 7
        %v529 = vsub.s32 0, %v528
        %v530 = vrot.slane %v493, %v529
        %v531 = vlaneseq
        %v532 = vshrl.u32 %v531, 7
        %v533 = vsub.s32 1, %v532
        %v534 = vrot.slane %v493, %v533
        %v535 = vlaneseq
        %v536 = vshrl.u32 %v535, 7
        %v537 = vsub.s32 2, %v536
        %v538 = vrot.slane %v493, %v537
        %v539 = vcombine.low %v530, %v534
        %v541 = vunpack.c.l.s4 1983009808
        %v542 = vunpack.c.0.s8 %v541
        %v543 = vlaneseq
        %v544 = vshrl.u32 %v543, 7
        %v545 = vsub.s32 %v542, %v544
        %v546 = vrot.slane %v539, %v545
        %v548 = vunpack.c.l.s4 1983009808
        %v549 = vunpack.c.0.s8 %v548
        %v550 = vlaneseq
        %v551 = vshrl.u32 %v550, 7
        %v552 = vsub.s32 %v549, %v551
        %v553 = vrot.slane %v538, %v552
        %v554 = vcombine.low %v546, %v553
        %v556 = vmul.f32 %v525, %v554
        %v557 = vld [vmem:[%s332] sm:$0x7]
        %v559 = vlaneseq
        %v560 = vshrl.u32 %v559, 7
        %v561 = vsub.s32 0, %v560
        %v562 = vrot.slane %v557, %v561
        %v563 = vlaneseq
        %v564 = vshrl.u32 %v563, 7
        %v565 = vsub.s32 1, %v564
        %v566 = vrot.slane %v557, %v565
        %v567 = vlaneseq
        %v568 = vshrl.u32 %v567, 7
        %v569 = vsub.s32 2, %v568
        %v570 = vrot.slane %v557, %v569
        %v571 = vcombine.low %v562, %v566
        %v573 = vunpack.c.l.s4 1983009808
        %v574 = vunpack.c.0.s8 %v573
        %v575 = vlaneseq
        %v576 = vshrl.u32 %v575, 7
        %v577 = vsub.s32 %v574, %v576
        %v578 = vrot.slane %v571, %v577
        %v580 = vunpack.c.l.s4 1983009808
        %v581 = vunpack.c.0.s8 %v580
        %v582 = vlaneseq
        %v583 = vshrl.u32 %v582, 7
        %v584 = vsub.s32 %v581, %v583
        %v585 = vrot.slane %v570, %v584
        %v586 = vcombine.low %v578, %v585
        %v588 = vmul.f32 %v556, %v586
        %v589 = vld [vmem:[%s336] sm:$0x7]
        %v591 = vlaneseq
        %v592 = vshrl.u32 %v591, 7
        %v593 = vsub.s32 0, %v592
        %v594 = vrot.slane %v589, %v593
        %v595 = vlaneseq
        %v596 = vshrl.u32 %v595, 7
        %v597 = vsub.s32 1, %v596
        %v598 = vrot.slane %v589, %v597
        %v599 = vlaneseq
        %v600 = vshrl.u32 %v599, 7
        %v601 = vsub.s32 2, %v600
        %v602 = vrot.slane %v589, %v601
        %v603 = vcombine.low %v594, %v598
        %v605 = vunpack.c.l.s4 1983009808
        %v606 = vunpack.c.0.s8 %v605
        %v607 = vlaneseq
        %v608 = vshrl.u32 %v607, 7
        %v609 = vsub.s32 %v606, %v608
        %v610 = vrot.slane %v603, %v609
        %v612 = vunpack.c.l.s4 1983009808
        %v613 = vunpack.c.0.s8 %v612
        %v614 = vlaneseq
        %v615 = vshrl.u32 %v614, 7
        %v616 = vsub.s32 %v613, %v615
        %v617 = vrot.slane %v602, %v616
        %v618 = vcombine.low %v610, %v617
        %v620 = vadd.f32 %v588, %v618
        %621 = vst [vmem:[%s323] sm:$0x3f] %v620
        %s622 = sand.u32 %s201, 1
        %s623 = scalar_lea.sflag [#allocation3], %s622
        %s624 = sand.u32 %s201, 1
        %s625 = smul.addr %s624, 6
        %s626 = scalar_lea.vmem [#allocation2], %s625
        // Predicated region
        $region49: #{build_transformer_forward.23} parent=47 // pred_check
          %p627 = pneg %p211
        $region50: #{build_transformer_forward.23} parent=47 // pred_check_branch
          %629 = sbr.rel (%p627) target = $region52
        $region51: #{build_transformer_forward.23} parent=47 // pred_region
          %s631 = ssub.s32 96, 96
          %632 = vsyncadd %s623, %s631
          %s633 = smul.addr %s21, 3
          %s634 = smul.addr %s633, 32
          %s635 = scalar_lea.hbm %s7, %s634
          %s637 = sshll.u32 %s626, 4
          %s638 = int_to_ptr.vmem [resolvable:$true] %s637
          %640 = dma.vmem_to_hbm [thread:$0]  %s638, 96, %s635, %s623
        $region52: #{build_transformer_forward.23} parent=47 // pred_fallthru
          _
      $region48: #{build_transformer_forward.23} parent=5 // pred_fallthru
        _
      %p641 = scmp.le.s32.totalorder 2, %s16
      // Predicated region
      $region53: #{build_transformer_forward.23} parent=5 // pred_check
        %p642 = pneg %p641
      $region54: #{build_transformer_forward.23} parent=5 // pred_check_branch
        %644 = sbr.rel (%p642) target = $region56
      $region55: #{build_transformer_forward.23} parent=5 // pred_region
        %s645 = ssub.s32 %s16, 2
        // Predicated region
        $region57: #{build_transformer_forward.23} parent=55 // pred_check
          %p646 = pneg %p217
        $region58: #{build_transformer_forward.23} parent=55 // pred_check_branch
          %648 = sbr.rel (%p646) target = $region60
        $region59: #{build_transformer_forward.23} parent=55 // pred_region
          %s649 = sand.u32 %s202, 1
          %s650 = scalar_lea.sflag [#allocation3], %s649
          %s651 = sand.u32 %s202, 1
          %s652 = smul.addr %s651, 6
          %s653 = scalar_lea.vmem [#allocation2], %s652
          %654 = dma.done %s650, 96
        $region60: #{build_transformer_forward.23} parent=55 // pred_fallthru
          _
      $region56: #{build_transformer_forward.23} parent=5 // pred_fallthru
        _
    $region6: #{build_transformer_forward.23} parent=1 // loop_footer
      %s20 = sadd.s32 1, %s16
    $region7: #{build_transformer_forward.23} parent=1 // loop_footer_branch
      %15 = sbr.rel target = $region3
    $region8: #{build_transformer_forward.23} parent=1 // loop_exit
      _
    %655 = vsyncpa [#allocation3], 1
    %s656 = scalar_lea.sflag [#allocation3], 1
    %657 = vsyncpa %s656, 1

// kernel: build_transformer_forward.17
$region0: #{build_transformer_forward.17}
  #allocation0 [shape = 'u32[]', space=smem, size = 0x4, offset = 0x4, fixed_abs, tag = 'smem constant byte address 0x4 - core index']
  #allocation1 [shape = 'u32[144,128]{1,0:T(1,128)}', space=vmem, size = 0x12000, scoped, tag = 'internal scratch']
  %s0 = inlined_call_operand.vmem [shape: bf16[16,1536], index: 0, kind: input, shape index: {}]
  %s1 = inlined_call_operand.vmem [shape: bf16[1536,384], index: 1, kind: input, shape index: {}]
  %s2 = inlined_call_operand.vmem [shape: f32[1,384], index: 2, kind: input, shape index: {}]
  %s3 = inlined_call_operand.vmem [shape: f32[16,384], index: 3, kind: input, shape index: {}]
  %s4 = inlined_call_operand.vmem [shape: f32[16,384], index: 4, kind: output, shape index: {}]
  %s5 = sld [smem:[#allocation0]]
  $region49: #{build_transformer_forward.17} parent=0
    _
  %s7 = ssub.s32 1, %s5
  %s8 = scalar_select 0, %s7, %s5
  loop: start=0, step=1, limit=4
  $region2: #{build_transformer_forward.17} parent=0 // loop_pre_header
    _
  $region3: #{build_transformer_forward.17} parent=0 // loop_header
    %s10 = sphi 0, %s14
    %p11 = scmp.ge.s32.totalorder %s10, 4
    %s20 = sphi 0, %s22
    %s23 = sphi 0, %s20
    %s24 = sphi 0, %s23
    %s40 = sphi 0, %s24
    %s44 = sphi 0, %s44
    %s46 = sphi 0, %s44
    %s47 = sphi 0, %s46
    %s61 = sphi 0, %s47
    %s65 = sphi 0, %s65
    %s67 = sphi 0, %s65
    %s68 = sphi 0, %s67
    %s82 = sphi 0, %s68
    %s88 = sphi 0, %s90
    %s91 = sphi 0, %s88
    %s92 = sphi 0, %s91
    %s108 = sphi 0, %s92
    %s114 = sphi 0, %s116
    %s117 = sphi 0, %s114
    %s118 = sphi 0, %s117
    %s134 = sphi 0, %s118
  $region4: #{build_transformer_forward.17} parent=0 // loop_header_branch
    %13 = sbr.rel (%p11) target = $region8
  $region5: #{build_transformer_forward.17} parent=0 // loop_body
    %s15 = ssub.s32 %s10, 1
    %s16 = ssub.s32 %s10, 2
    %s17 = sadd.s32 %s10, 1
    %s18 = ssub.s32 %s10, %s17
    %p19 = scmp.eq.s32.totalorder %s18, 0
    %s21 = sadd.s32 %s20, 1
    %s22 = scalar_select %p19, %s20, %s21
    %p25 = pneg %p19
    %p26 = scmp.eq.s32.totalorder %s10, 1
    %p27 = por %p25, %p26
    %p28 = scmp.ne.s32.totalorder %s20, %s23
    %p29 = scmp.eq.s32.totalorder %s10, 0
    %p30 = por %p28, %p29
    %p31 = scmp.ne.s32.totalorder %s20, %s23
    %p32 = scmp.eq.s32.totalorder %s15, 1
    %p33 = por %p31, %p32
    %p34 = scmp.ne.s32.totalorder %s23, %s24
    %p35 = scmp.eq.s32.totalorder %s15, 0
    %p36 = por %p34, %p35
    %p37 = scmp.ne.s32.totalorder %s23, %s24
    %p38 = scmp.eq.s32.totalorder %s16, 1
    %p39 = por %p37, %p38
    %p41 = scmp.ne.s32.totalorder %s24, %s40
    %p42 = scmp.eq.s32.totalorder %s16, 0
    %p43 = por %p41, %p42
    %s45 = sadd.s32 %s44, 1
    %p48 = scmp.eq.s32.totalorder %s10, 1
    %p49 = scmp.ne.s32.totalorder %s44, %s46
    %p50 = scmp.eq.s32.totalorder %s10, 0
    %p51 = por %p49, %p50
    %p52 = scmp.ne.s32.totalorder %s44, %s46
    %p53 = scmp.eq.s32.totalorder %s15, 1
    %p54 = por %p52, %p53
    %p55 = scmp.ne.s32.totalorder %s46, %s47
    %p56 = scmp.eq.s32.totalorder %s15, 0
    %p57 = por %p55, %p56
    %p58 = scmp.ne.s32.totalorder %s46, %s47
    %p59 = scmp.eq.s32.totalorder %s16, 1
    %p60 = por %p58, %p59
    %p62 = scmp.ne.s32.totalorder %s47, %s61
    %p63 = scmp.eq.s32.totalorder %s16, 0
    %p64 = por %p62, %p63
    %s66 = sadd.s32 %s65, 1
    %p69 = scmp.eq.s32.totalorder %s10, 1
    %p70 = scmp.ne.s32.totalorder %s65, %s67
    %p71 = scmp.eq.s32.totalorder %s10, 0
    %p72 = por %p70, %p71
    %p73 = scmp.ne.s32.totalorder %s65, %s67
    %p74 = scmp.eq.s32.totalorder %s15, 1
    %p75 = por %p73, %p74
    %p76 = scmp.ne.s32.totalorder %s67, %s68
    %p77 = scmp.eq.s32.totalorder %s15, 0
    %p78 = por %p76, %p77
    %p79 = scmp.ne.s32.totalorder %s67, %s68
    %p80 = scmp.eq.s32.totalorder %s16, 1
    %p81 = por %p79, %p80
    %p83 = scmp.ne.s32.totalorder %s68, %s82
    %p84 = scmp.eq.s32.totalorder %s16, 0
    %p85 = por %p83, %p84
    %s86 = ssub.s32 %s10, %s17
    %p87 = scmp.eq.s32.totalorder %s86, 0
    %s89 = sadd.s32 %s88, 1
    %s90 = scalar_select %p87, %s88, %s89
    %p93 = pneg %p87
    %p94 = scmp.eq.s32.totalorder %s10, 1
    %p95 = por %p93, %p94
    %p96 = scmp.ne.s32.totalorder %s88, %s91
    %p97 = scmp.eq.s32.totalorder %s10, 0
    %p98 = por %p96, %p97
    %p99 = scmp.ne.s32.totalorder %s88, %s91
    %p100 = scmp.eq.s32.totalorder %s15, 1
    %p101 = por %p99, %p100
    %p102 = scmp.ne.s32.totalorder %s91, %s92
    %p103 = scmp.eq.s32.totalorder %s15, 0
    %p104 = por %p102, %p103
    %p105 = scmp.ne.s32.totalorder %s91, %s92
    %p106 = scmp.eq.s32.totalorder %s16, 1
    %p107 = por %p105, %p106
    %p109 = scmp.ne.s32.totalorder %s92, %s108
    %p110 = scmp.eq.s32.totalorder %s16, 0
    %p111 = por %p109, %p110
    %s112 = ssub.s32 %s10, %s17
    %p113 = scmp.eq.s32.totalorder %s112, 0
    %s115 = sadd.s32 %s114, 1
    %s116 = scalar_select %p113, %s114, %s115
    %p119 = pneg %p113
    %p120 = scmp.eq.s32.totalorder %s10, 1
    %p121 = por %p119, %p120
    %p122 = scmp.ne.s32.totalorder %s114, %s117
    %p123 = scmp.eq.s32.totalorder %s10, 0
    %p124 = por %p122, %p123
    %p125 = scmp.ne.s32.totalorder %s114, %s117
    %p126 = scmp.eq.s32.totalorder %s15, 1
    %p127 = por %p125, %p126
    %p128 = scmp.ne.s32.totalorder %s117, %s118
    %p129 = scmp.eq.s32.totalorder %s15, 0
    %p130 = por %p128, %p129
    %p131 = scmp.ne.s32.totalorder %s117, %s118
    %p132 = scmp.eq.s32.totalorder %s16, 1
    %p133 = por %p131, %p132
    %p135 = scmp.ne.s32.totalorder %s118, %s134
    %p136 = scmp.eq.s32.totalorder %s16, 0
    %p137 = por %p135, %p136
    %p138 = scmp.le.s32.totalorder 1, %s10
    %p139 = scmp.lt.s32.totalorder %s10, 3
    %p140 = pnand %p138, %p139
    %p141 = pneg %p140
    // Predicated region
    $region9: #{build_transformer_forward.17} parent=5 // pred_check
      _
    $region10: #{build_transformer_forward.17} parent=5 // pred_check_branch
      %143 = sbr.rel (%p140) target = $region12
    $region11: #{build_transformer_forward.17} parent=5 // pred_region
      %s144 = ssub.s32 %s10, 1
      // Predicated region
      $region13: #{build_transformer_forward.17} parent=11 // pred_check
        %p145 = pneg %p57
      $region14: #{build_transformer_forward.17} parent=11 // pred_check_branch
        %147 = sbr.rel (%p145) target = $region16
      $region15: #{build_transformer_forward.17} parent=11 // pred_region
        _
      $region16: #{build_transformer_forward.17} parent=11 // pred_fallthru
        _
      // Predicated region
      $region17: #{build_transformer_forward.17} parent=11 // pred_check
        %p148 = pneg %p78
      $region18: #{build_transformer_forward.17} parent=11 // pred_check_branch
        %150 = sbr.rel (%p148) target = $region20
      $region19: #{build_transformer_forward.17} parent=11 // pred_region
        _
      $region20: #{build_transformer_forward.17} parent=11 // pred_fallthru
        _
    $region12: #{build_transformer_forward.17} parent=5 // pred_fallthru
      _
    %p151 = scmp.lt.s32.totalorder %s10, 2
    // Predicated region
    $region21: #{build_transformer_forward.17} parent=5 // pred_check
      %p152 = pneg %p151
    $region22: #{build_transformer_forward.17} parent=5 // pred_check_branch
      %154 = sbr.rel (%p152) target = $region24
    $region23: #{build_transformer_forward.17} parent=5 // pred_region
      // Predicated region
      $region25: #{build_transformer_forward.17} parent=23 // pred_check
        %p155 = pneg %p30
      $region26: #{build_transformer_forward.17} parent=23 // pred_check_branch
        %157 = sbr.rel (%p155) target = $region28
      $region27: #{build_transformer_forward.17} parent=23 // pred_region
        %p158 = scmp.lt.s32.totalorder %s10, 1
        %s159 = scalar_select %p158, %s10, 1
        %s160 = smul.addr %s159, 12
        %s161 = smul.addr %s160, 4
        %s162 = scalar_lea.vmem %s0, %s161
      $region28: #{build_transformer_forward.17} parent=23 // pred_fallthru
        _
      // Predicated region
      $region29: #{build_transformer_forward.17} parent=23 // pred_check
        %p163 = pneg %p98
      $region30: #{build_transformer_forward.17} parent=23 // pred_check_branch
        %165 = sbr.rel (%p163) target = $region32
      $region31: #{build_transformer_forward.17} parent=23 // pred_region
        %p166 = scmp.lt.s32.totalorder %s10, 1
        %s167 = scalar_select %p166, %s10, 1
        %s168 = smul.addr %s167, 3
        %s169 = smul.addr %s168, 8
        %s170 = scalar_lea.vmem %s3, %s169
      $region32: #{build_transformer_forward.17} parent=23 // pred_fallthru
        _
    $region24: #{build_transformer_forward.17} parent=5 // pred_fallthru
      _
    %p171 = scmp.le.s32.totalorder 1, %s10
    %p172 = scmp.lt.s32.totalorder %s10, 3
    %p173 = pnand %p171, %p172
    %p174 = pneg %p173
    // Predicated region
    $region33: #{build_transformer_forward.17} parent=5 // pred_check
      _
    $region34: #{build_transformer_forward.17} parent=5 // pred_check_branch
      %176 = sbr.rel (%p173) target = $region36
    $region35: #{build_transformer_forward.17} parent=5 // pred_region
      %s177 = ssub.s32 %s10, 1
      %p178 = scmp.lt.s32.totalorder %s15, 1
      %s179 = scalar_select %p178, %s15, 1
      %s180 = smul.addr %s179, 12
      %s181 = smul.addr %s180, 4
      %s182 = scalar_lea.vmem %s0, %s181
      %p183 = pneg %p36
      %p184 = pneg %p33
      %p185 = pneg %p57
      %p186 = pneg %p54
      %p187 = pneg %p78
      %p188 = pneg %p75
      %p189 = scmp.lt.s32.totalorder %s15, 1
      %s190 = scalar_select %p189, %s15, 1
      %s191 = smul.addr %s190, 3
      %s192 = smul.addr %s191, 8
      %s193 = scalar_lea.vmem %s3, %s192
      %p194 = pneg %p104
      %p195 = pneg %p101
      %p196 = pneg %p130
      %p197 = pneg %p127
      %p198 = scmp.lt.s32.totalorder %s15, 1
      %s199 = scalar_select %p198, %s15, 1
      %s200 = smul.addr %s199, 3
      %s201 = smul.addr %s200, 8
      %s202 = scalar_lea.vmem %s4, %s201
      %p203 = scmp.lt.s32.totalorder %s15, 1
      %s204 = scalar_select %p203, %s15, 1
      %s205 = smul.addr %s204, 12
      %s206 = smul.addr %s205, 4
      %s207 = scalar_lea.vmem %s0, %s206
      %p208 = scmp.lt.s32.totalorder %s15, 1
      %s209 = scalar_select %p208, %s15, 1
      %s210 = smul.addr %s209, 3
      %s211 = smul.addr %s210, 8
      %s212 = scalar_lea.vmem %s3, %s211
      %p213 = scmp.lt.s32.totalorder %s15, 1
      %s214 = scalar_select %p213, %s15, 1
      %s215 = smul.addr %s214, 3
      %s216 = smul.addr %s215, 8
      %s217 = scalar_lea.vmem %s4, %s216
      %v219 = vld [vmem:[%s207] sm:$0xff]
      %v220 = vld [vmem:[%s207 + $0x8] sm:$0xff]
      %v221 = vld [vmem:[%s207 + $0x10] sm:$0xff]
      %v222 = vld [vmem:[%s207 + $0x18] sm:$0xff]
      %v223 = vld [vmem:[%s207 + $0x20] sm:$0xff]
      %v224 = vld [vmem:[%s207 + $0x28] sm:$0xff]
      %v225 = vld [vmem:[%s1] sm:$0xff]
      %v226 = vld [vmem:[%s1 + $0x8] sm:$0xf]
      %v227 = vld [vmem:[%s1 + $0xc] sm:$0xff]
      %v228 = vld [vmem:[%s1 + $0x14] sm:$0xf]
      %v229 = vld [vmem:[%s1 + $0x18] sm:$0xff]
      %v230 = vld [vmem:[%s1 + $0x20] sm:$0xf]
      %v231 = vld [vmem:[%s1 + $0x24] sm:$0xff]
      %v232 = vld [vmem:[%s1 + $0x2c] sm:$0xf]
      %v233 = vld [vmem:[%s1 + $0x30] sm:$0xff]
      %v234 = vld [vmem:[%s1 + $0x38] sm:$0xf]
      %v235 = vld [vmem:[%s1 + $0x3c] sm:$0xff]
      %v236 = vld [vmem:[%s1 + $0x44] sm:$0xf]
      %v237 = vld [vmem:[%s1 + $0x48] sm:$0xff]
      %v238 = vld [vmem:[%s1 + $0x50] sm:$0xf]
      %v239 = vld [vmem:[%s1 + $0x54] sm:$0xff]
      %v240 = vld [vmem:[%s1 + $0x5c] sm:$0xf]
      %v241 = vld [vmem:[%s1 + $0x60] sm:$0xff]
      %v242 = vld [vmem:[%s1 + $0x68] sm:$0xf]
      %v243 = vld [vmem:[%s1 + $0x6c] sm:$0xff]
      %v244 = vld [vmem:[%s1 + $0x74] sm:$0xf]
      %v245 = vld [vmem:[%s1 + $0x78] sm:$0xff]
      %v246 = vld [vmem:[%s1 + $0x80] sm:$0xf]
      %v247 = vld [vmem:[%s1 + $0x84] sm:$0xff]
      %v248 = vld [vmem:[%s1 + $0x8c] sm:$0xf]
      %v249 = vld [vmem:[%s1 + $0x90] sm:$0xff]
      %v250 = vld [vmem:[%s1 + $0x98] sm:$0xf]
      %v251 = vld [vmem:[%s1 + $0x9c] sm:$0xff]
      %v252 = vld [vmem:[%s1 + $0xa4] sm:$0xf]
      %v253 = vld [vmem:[%s1 + $0xa8] sm:$0xff]
      %v254 = vld [vmem:[%s1 + $0xb0] sm:$0xf]
      %v255 = vld [vmem:[%s1 + $0xb4] sm:$0xff]
      %v256 = vld [vmem:[%s1 + $0xbc] sm:$0xf]
      %v257 = vld [vmem:[%s1 + $0xc0] sm:$0xff]
      %v258 = vld [vmem:[%s1 + $0xc8] sm:$0xf]
      %v259 = vld [vmem:[%s1 + $0xcc] sm:$0xff]
      %v260 = vld [vmem:[%s1 + $0xd4] sm:$0xf]
      %v261 = vld [vmem:[%s1 + $0xd8] sm:$0xff]
      %v262 = vld [vmem:[%s1 + $0xe0] sm:$0xf]
      %v263 = vld [vmem:[%s1 + $0xe4] sm:$0xff]
      %v264 = vld [vmem:[%s1 + $0xec] sm:$0xf]
      %v265 = vld [vmem:[%s1 + $0xf0] sm:$0xff]
      %v266 = vld [vmem:[%s1 + $0xf8] sm:$0xf]
      %v267 = vld [vmem:[%s1 + $0xfc] sm:$0xff]
      %v268 = vld [vmem:[%s1 + $0x104] sm:$0xf]
      %v269 = vld [vmem:[%s1 + $0x108] sm:$0xff]
      %v270 = vld [vmem:[%s1 + $0x110] sm:$0xf]
      %v271 = vld [vmem:[%s1 + $0x114] sm:$0xff]
      %v272 = vld [vmem:[%s1 + $0x11c] sm:$0xf]
      %v273 = vld [vmem:[%s1 + $0x120] sm:$0xff]
      %v274 = vld [vmem:[%s1 + $0x128] sm:$0xf]
      %v275 = vld [vmem:[%s1 + $0x12c] sm:$0xff]
      %v276 = vld [vmem:[%s1 + $0x134] sm:$0xf]
      %v277 = vld [vmem:[%s1 + $0x138] sm:$0xff]
      %v278 = vld [vmem:[%s1 + $0x140] sm:$0xf]
      %v279 = vld [vmem:[%s1 + $0x144] sm:$0xff]
      %v280 = vld [vmem:[%s1 + $0x14c] sm:$0xf]
      %v281 = vld [vmem:[%s1 + $0x150] sm:$0xff]
      %v282 = vld [vmem:[%s1 + $0x158] sm:$0xf]
      %v283 = vld [vmem:[%s1 + $0x15c] sm:$0xff]
      %v284 = vld [vmem:[%s1 + $0x164] sm:$0xf]
      %v285 = vld [vmem:[%s1 + $0x168] sm:$0xff]
      %v286 = vld [vmem:[%s1 + $0x170] sm:$0xf]
      %v287 = vld [vmem:[%s1 + $0x174] sm:$0xff]
      %v288 = vld [vmem:[%s1 + $0x17c] sm:$0xf]
      %v289 = vld [vmem:[%s1 + $0x180] sm:$0xff]
      %v290 = vld [vmem:[%s1 + $0x188] sm:$0xf]
      %v291 = vld [vmem:[%s1 + $0x18c] sm:$0xff]
      %v292 = vld [vmem:[%s1 + $0x194] sm:$0xf]
      %v293 = vld [vmem:[%s1 + $0x198] sm:$0xff]
      %v294 = vld [vmem:[%s1 + $0x1a0] sm:$0xf]
      %v295 = vld [vmem:[%s1 + $0x1a4] sm:$0xff]
      %v296 = vld [vmem:[%s1 + $0x1ac] sm:$0xf]
      %v297 = vld [vmem:[%s1 + $0x1b0] sm:$0xff]
      %v298 = vld [vmem:[%s1 + $0x1b8] sm:$0xf]
      %v299 = vld [vmem:[%s1 + $0x1bc] sm:$0xff]
      %v300 = vld [vmem:[%s1 + $0x1c4] sm:$0xf]
      %v301 = vld [vmem:[%s1 + $0x1c8] sm:$0xff]
      %v302 = vld [vmem:[%s1 + $0x1d0] sm:$0xf]
      %v303 = vld [vmem:[%s1 + $0x1d4] sm:$0xff]
      %v304 = vld [vmem:[%s1 + $0x1dc] sm:$0xf]
      %v305 = vld [vmem:[%s1 + $0x1e0] sm:$0xff]
      %v306 = vld [vmem:[%s1 + $0x1e8] sm:$0xf]
      %v307 = vld [vmem:[%s1 + $0x1ec] sm:$0xff]
      %v308 = vld [vmem:[%s1 + $0x1f4] sm:$0xf]
      %v309 = vld [vmem:[%s1 + $0x1f8] sm:$0xff]
      %v310 = vld [vmem:[%s1 + $0x200] sm:$0xf]
      %v311 = vld [vmem:[%s1 + $0x204] sm:$0xff]
      %v312 = vld [vmem:[%s1 + $0x20c] sm:$0xf]
      %v313 = vld [vmem:[%s1 + $0x210] sm:$0xff]
      %v314 = vld [vmem:[%s1 + $0x218] sm:$0xf]
      %v315 = vld [vmem:[%s1 + $0x21c] sm:$0xff]
      %v316 = vld [vmem:[%s1 + $0x224] sm:$0xf]
      %v317 = vld [vmem:[%s1 + $0x228] sm:$0xff]
      %v318 = vld [vmem:[%s1 + $0x230] sm:$0xf]
      %v319 = vld [vmem:[%s1 + $0x234] sm:$0xff]
      %v320 = vld [vmem:[%s1 + $0x23c] sm:$0xf]
      %v321 = vld [vmem:[%s1 + $0x240] sm:$0xff]
      %v322 = vld [vmem:[%s1 + $0x248] sm:$0xf]
      %v323 = vld [vmem:[%s1 + $0x24c] sm:$0xff]
      %v324 = vld [vmem:[%s1 + $0x254] sm:$0xf]
      %v325 = vld [vmem:[%s1 + $0x258] sm:$0xff]
      %v326 = vld [vmem:[%s1 + $0x260] sm:$0xf]
      %v327 = vld [vmem:[%s1 + $0x264] sm:$0xff]
      %v328 = vld [vmem:[%s1 + $0x26c] sm:$0xf]
      %v329 = vld [vmem:[%s1 + $0x270] sm:$0xff]
      %v330 = vld [vmem:[%s1 + $0x278] sm:$0xf]
      %v331 = vld [vmem:[%s1 + $0x27c] sm:$0xff]
      %v332 = vld [vmem:[%s1 + $0x284] sm:$0xf]
      %v333 = vld [vmem:[%s1 + $0x288] sm:$0xff]
      %v334 = vld [vmem:[%s1 + $0x290] sm:$0xf]
      %v335 = vld [vmem:[%s1 + $0x294] sm:$0xff]
      %v336 = vld [vmem:[%s1 + $0x29c] sm:$0xf]
      %v337 = vld [vmem:[%s1 + $0x2a0] sm:$0xff]
      %v338 = vld [vmem:[%s1 + $0x2a8] sm:$0xf]
      %v339 = vld [vmem:[%s1 + $0x2ac] sm:$0xff]
      %v340 = vld [vmem:[%s1 + $0x2b4] sm:$0xf]
      %v341 = vld [vmem:[%s1 + $0x2b8] sm:$0xff]
      %v342 = vld [vmem:[%s1 + $0x2c0] sm:$0xf]
      %v343 = vld [vmem:[%s1 + $0x2c4] sm:$0xff]
      %v344 = vld [vmem:[%s1 + $0x2cc] sm:$0xf]
      %v345 = vld [vmem:[%s1 + $0x2d0] sm:$0xff]
      %v346 = vld [vmem:[%s1 + $0x2d8] sm:$0xf]
      %v347 = vld [vmem:[%s1 + $0x2dc] sm:$0xff]
      %v348 = vld [vmem:[%s1 + $0x2e4] sm:$0xf]
      %v349 = vld [vmem:[%s1 + $0x2e8] sm:$0xff]
      %v350 = vld [vmem:[%s1 + $0x2f0] sm:$0xf]
      %v351 = vld [vmem:[%s1 + $0x2f4] sm:$0xff]
      %v352 = vld [vmem:[%s1 + $0x2fc] sm:$0xf]
      %v353 = vld [vmem:[%s1 + $0x300] sm:$0xff]
      %v354 = vld [vmem:[%s1 + $0x308] sm:$0xf]
      %v355 = vld [vmem:[%s1 + $0x30c] sm:$0xff]
      %v356 = vld [vmem:[%s1 + $0x314] sm:$0xf]
      %v357 = vld [vmem:[%s1 + $0x318] sm:$0xff]
      %v358 = vld [vmem:[%s1 + $0x320] sm:$0xf]
      %v359 = vld [vmem:[%s1 + $0x324] sm:$0xff]
      %v360 = vld [vmem:[%s1 + $0x32c] sm:$0xf]
      %v361 = vld [vmem:[%s1 + $0x330] sm:$0xff]
      %v362 = vld [vmem:[%s1 + $0x338] sm:$0xf]
      %v363 = vld [vmem:[%s1 + $0x33c] sm:$0xff]
      %v364 = vld [vmem:[%s1 + $0x344] sm:$0xf]
      %v365 = vld [vmem:[%s1 + $0x348] sm:$0xff]
      %v366 = vld [vmem:[%s1 + $0x350] sm:$0xf]
      %v367 = vld [vmem:[%s1 + $0x354] sm:$0xff]
      %v368 = vld [vmem:[%s1 + $0x35c] sm:$0xf]
      %v369 = vld [vmem:[%s1 + $0x360] sm:$0xff]
      %v370 = vld [vmem:[%s1 + $0x368] sm:$0xf]
      %v371 = vld [vmem:[%s1 + $0x36c] sm:$0xff]
      %v372 = vld [vmem:[%s1 + $0x374] sm:$0xf]
      %v373 = vld [vmem:[%s1 + $0x378] sm:$0xff]
      %v374 = vld [vmem:[%s1 + $0x380] sm:$0xf]
      %v375 = vld [vmem:[%s1 + $0x384] sm:$0xff]
      %v376 = vld [vmem:[%s1 + $0x38c] sm:$0xf]
      %v377 = vld [vmem:[%s1 + $0x390] sm:$0xff]
      %v378 = vld [vmem:[%s1 + $0x398] sm:$0xf]
      %v379 = vld [vmem:[%s1 + $0x39c] sm:$0xff]
      %v380 = vld [vmem:[%s1 + $0x3a4] sm:$0xf]
      %v381 = vld [vmem:[%s1 + $0x3a8] sm:$0xff]
      %v382 = vld [vmem:[%s1 + $0x3b0] sm:$0xf]
      %v383 = vld [vmem:[%s1 + $0x3b4] sm:$0xff]
      %v384 = vld [vmem:[%s1 + $0x3bc] sm:$0xf]
      %v385 = vld [vmem:[%s1 + $0x3c0] sm:$0xff]
      %v386 = vld [vmem:[%s1 + $0x3c8] sm:$0xf]
      %v387 = vld [vmem:[%s1 + $0x3cc] sm:$0xff]
      %v388 = vld [vmem:[%s1 + $0x3d4] sm:$0xf]
      %v389 = vld [vmem:[%s1 + $0x3d8] sm:$0xff]
      %v390 = vld [vmem:[%s1 + $0x3e0] sm:$0xf]
      %v391 = vld [vmem:[%s1 + $0x3e4] sm:$0xff]
      %v392 = vld [vmem:[%s1 + $0x3ec] sm:$0xf]
      %v393 = vld [vmem:[%s1 + $0x3f0] sm:$0xff]
      %v394 = vld [vmem:[%s1 + $0x3f8] sm:$0xf]
      %v395 = vld [vmem:[%s1 + $0x3fc] sm:$0xff]
      %v396 = vld [vmem:[%s1 + $0x404] sm:$0xf]
      %v397 = vld [vmem:[%s1 + $0x408] sm:$0xff]
      %v398 = vld [vmem:[%s1 + $0x410] sm:$0xf]
      %v399 = vld [vmem:[%s1 + $0x414] sm:$0xff]
      %v400 = vld [vmem:[%s1 + $0x41c] sm:$0xf]
      %v401 = vld [vmem:[%s1 + $0x420] sm:$0xff]
      %v402 = vld [vmem:[%s1 + $0x428] sm:$0xf]
      %v403 = vld [vmem:[%s1 + $0x42c] sm:$0xff]
      %v404 = vld [vmem:[%s1 + $0x434] sm:$0xf]
      %v405 = vld [vmem:[%s1 + $0x438] sm:$0xff]
      %v406 = vld [vmem:[%s1 + $0x440] sm:$0xf]
      %v407 = vld [vmem:[%s1 + $0x444] sm:$0xff]
      %v408 = vld [vmem:[%s1 + $0x44c] sm:$0xf]
      %v409 = vld [vmem:[%s1 + $0x450] sm:$0xff]
      %v410 = vld [vmem:[%s1 + $0x458] sm:$0xf]
      %v411 = vld [vmem:[%s1 + $0x45c] sm:$0xff]
      %v412 = vld [vmem:[%s1 + $0x464] sm:$0xf]
      %v413 = vld [vmem:[%s1 + $0x468] sm:$0xff]
      %v414 = vld [vmem:[%s1 + $0x470] sm:$0xf]
      %v415 = vld [vmem:[%s1 + $0x474] sm:$0xff]
      %v416 = vld [vmem:[%s1 + $0x47c] sm:$0xf]
      %v417 = vld [vmem:[%s1 + $0x480] sm:$0xff]
      %v418 = vld [vmem:[%s1 + $0x488] sm:$0xf]
      %v419 = vld [vmem:[%s1 + $0x48c] sm:$0xff]
      %v420 = vld [vmem:[%s1 + $0x494] sm:$0xf]
      %v421 = vld [vmem:[%s1 + $0x498] sm:$0xff]
      %v422 = vld [vmem:[%s1 + $0x4a0] sm:$0xf]
      %v423 = vld [vmem:[%s1 + $0x4a4] sm:$0xff]
      %v424 = vld [vmem:[%s1 + $0x4ac] sm:$0xf]
      %v425 = vld [vmem:[%s1 + $0x4b0] sm:$0xff]
      %v426 = vld [vmem:[%s1 + $0x4b8] sm:$0xf]
      %v427 = vld [vmem:[%s1 + $0x4bc] sm:$0xff]
      %v428 = vld [vmem:[%s1 + $0x4c4] sm:$0xf]
      %v429 = vld [vmem:[%s1 + $0x4c8] sm:$0xff]
      %v430 = vld [vmem:[%s1 + $0x4d0] sm:$0xf]
      %v431 = vld [vmem:[%s1 + $0x4d4] sm:$0xff]
      %v432 = vld [vmem:[%s1 + $0x4dc] sm:$0xf]
      %v433 = vld [vmem:[%s1 + $0x4e0] sm:$0xff]
      %v434 = vld [vmem:[%s1 + $0x4e8] sm:$0xf]
      %v435 = vld [vmem:[%s1 + $0x4ec] sm:$0xff]
      %v436 = vld [vmem:[%s1 + $0x4f4] sm:$0xf]
      %v437 = vld [vmem:[%s1 + $0x4f8] sm:$0xff]
      %v438 = vld [vmem:[%s1 + $0x500] sm:$0xf]
      %v439 = vld [vmem:[%s1 + $0x504] sm:$0xff]
      %v440 = vld [vmem:[%s1 + $0x50c] sm:$0xf]
      %v441 = vld [vmem:[%s1 + $0x510] sm:$0xff]
      %v442 = vld [vmem:[%s1 + $0x518] sm:$0xf]
      %v443 = vld [vmem:[%s1 + $0x51c] sm:$0xff]
      %v444 = vld [vmem:[%s1 + $0x524] sm:$0xf]
      %v445 = vld [vmem:[%s1 + $0x528] sm:$0xff]
      %v446 = vld [vmem:[%s1 + $0x530] sm:$0xf]
      %v447 = vld [vmem:[%s1 + $0x534] sm:$0xff]
      %v448 = vld [vmem:[%s1 + $0x53c] sm:$0xf]
      %v449 = vld [vmem:[%s1 + $0x540] sm:$0xff]
      %v450 = vld [vmem:[%s1 + $0x548] sm:$0xf]
      %v451 = vld [vmem:[%s1 + $0x54c] sm:$0xff]
      %v452 = vld [vmem:[%s1 + $0x554] sm:$0xf]
      %v453 = vld [vmem:[%s1 + $0x558] sm:$0xff]
      %v454 = vld [vmem:[%s1 + $0x560] sm:$0xf]
      %v455 = vld [vmem:[%s1 + $0x564] sm:$0xff]
      %v456 = vld [vmem:[%s1 + $0x56c] sm:$0xf]
      %v457 = vld [vmem:[%s1 + $0x570] sm:$0xff]
      %v458 = vld [vmem:[%s1 + $0x578] sm:$0xf]
      %v459 = vld [vmem:[%s1 + $0x57c] sm:$0xff]
      %v460 = vld [vmem:[%s1 + $0x584] sm:$0xf]
      %v461 = vld [vmem:[%s1 + $0x588] sm:$0xff]
      %v462 = vld [vmem:[%s1 + $0x590] sm:$0xf]
      %v463 = vld [vmem:[%s1 + $0x594] sm:$0xff]
      %v464 = vld [vmem:[%s1 + $0x59c] sm:$0xf]
      %v465 = vld [vmem:[%s1 + $0x5a0] sm:$0xff]
      %v466 = vld [vmem:[%s1 + $0x5a8] sm:$0xf]
      %v467 = vld [vmem:[%s1 + $0x5ac] sm:$0xff]
      %v468 = vld [vmem:[%s1 + $0x5b4] sm:$0xf]
      %v469 = vld [vmem:[%s1 + $0x5b8] sm:$0xff]
      %v470 = vld [vmem:[%s1 + $0x5c0] sm:$0xf]
      %v471 = vld [vmem:[%s1 + $0x5c4] sm:$0xff]
      %v472 = vld [vmem:[%s1 + $0x5cc] sm:$0xf]
      %v473 = vld [vmem:[%s1 + $0x5d0] sm:$0xff]
      %v474 = vld [vmem:[%s1 + $0x5d8] sm:$0xf]
      %v475 = vld [vmem:[%s1 + $0x5dc] sm:$0xff]
      %v476 = vld [vmem:[%s1 + $0x5e4] sm:$0xf]
      %v477 = vld [vmem:[%s1 + $0x5e8] sm:$0xff]
      %v478 = vld [vmem:[%s1 + $0x5f0] sm:$0xf]
      %v479 = vld [vmem:[%s1 + $0x5f4] sm:$0xff]
      %v480 = vld [vmem:[%s1 + $0x5fc] sm:$0xf]
      %v481 = vld [vmem:[%s1 + $0x600] sm:$0xff]
      %v482 = vld [vmem:[%s1 + $0x608] sm:$0xf]
      %v483 = vld [vmem:[%s1 + $0x60c] sm:$0xff]
      %v484 = vld [vmem:[%s1 + $0x614] sm:$0xf]
      %v485 = vld [vmem:[%s1 + $0x618] sm:$0xff]
      %v486 = vld [vmem:[%s1 + $0x620] sm:$0xf]
      %v487 = vld [vmem:[%s1 + $0x624] sm:$0xff]
      %v488 = vld [vmem:[%s1 + $0x62c] sm:$0xf]
      %v489 = vld [vmem:[%s1 + $0x630] sm:$0xff]
      %v490 = vld [vmem:[%s1 + $0x638] sm:$0xf]
      %v491 = vld [vmem:[%s1 + $0x63c] sm:$0xff]
      %v492 = vld [vmem:[%s1 + $0x644] sm:$0xf]
      %v493 = vld [vmem:[%s1 + $0x648] sm:$0xff]
      %v494 = vld [vmem:[%s1 + $0x650] sm:$0xf]
      %v495 = vld [vmem:[%s1 + $0x654] sm:$0xff]
      %v496 = vld [vmem:[%s1 + $0x65c] sm:$0xf]
      %v497 = vld [vmem:[%s1 + $0x660] sm:$0xff]
      %v498 = vld [vmem:[%s1 + $0x668] sm:$0xf]
      %v499 = vld [vmem:[%s1 + $0x66c] sm:$0xff]
      %v500 = vld [vmem:[%s1 + $0x674] sm:$0xf]
      %v501 = vld [vmem:[%s1 + $0x678] sm:$0xff]
      %v502 = vld [vmem:[%s1 + $0x680] sm:$0xf]
      %v503 = vld [vmem:[%s1 + $0x684] sm:$0xff]
      %v504 = vld [vmem:[%s1 + $0x68c] sm:$0xf]
      %v505 = vld [vmem:[%s1 + $0x690] sm:$0xff]
      %v506 = vld [vmem:[%s1 + $0x698] sm:$0xf]
      %v507 = vld [vmem:[%s1 + $0x69c] sm:$0xff]
      %v508 = vld [vmem:[%s1 + $0x6a4] sm:$0xf]
      %v509 = vld [vmem:[%s1 + $0x6a8] sm:$0xff]
      %v510 = vld [vmem:[%s1 + $0x6b0] sm:$0xf]
      %v511 = vld [vmem:[%s1 + $0x6b4] sm:$0xff]
      %v512 = vld [vmem:[%s1 + $0x6bc] sm:$0xf]
      %v513 = vld [vmem:[%s1 + $0x6c0] sm:$0xff]
      %v514 = vld [vmem:[%s1 + $0x6c8] sm:$0xf]
      %v515 = vld [vmem:[%s1 + $0x6cc] sm:$0xff]
      %v516 = vld [vmem:[%s1 + $0x6d4] sm:$0xf]
      %v517 = vld [vmem:[%s1 + $0x6d8] sm:$0xff]
      %v518 = vld [vmem:[%s1 + $0x6e0] sm:$0xf]
      %v519 = vld [vmem:[%s1 + $0x6e4] sm:$0xff]
      %v520 = vld [vmem:[%s1 + $0x6ec] sm:$0xf]
      %v521 = vld [vmem:[%s1 + $0x6f0] sm:$0xff]
      %v522 = vld [vmem:[%s1 + $0x6f8] sm:$0xf]
      %v523 = vld [vmem:[%s1 + $0x6fc] sm:$0xff]
      %v524 = vld [vmem:[%s1 + $0x704] sm:$0xf]
      %v525 = vld [vmem:[%s1 + $0x708] sm:$0xff]
      %v526 = vld [vmem:[%s1 + $0x710] sm:$0xf]
      %v527 = vld [vmem:[%s1 + $0x714] sm:$0xff]
      %v528 = vld [vmem:[%s1 + $0x71c] sm:$0xf]
      %v529 = vld [vmem:[%s1 + $0x720] sm:$0xff]
      %v530 = vld [vmem:[%s1 + $0x728] sm:$0xf]
      %v531 = vld [vmem:[%s1 + $0x72c] sm:$0xff]
      %v532 = vld [vmem:[%s1 + $0x734] sm:$0xf]
      %v533 = vld [vmem:[%s1 + $0x738] sm:$0xff]
      %v534 = vld [vmem:[%s1 + $0x740] sm:$0xf]
      %v535 = vld [vmem:[%s1 + $0x744] sm:$0xff]
      %v536 = vld [vmem:[%s1 + $0x74c] sm:$0xf]
      %v537 = vld [vmem:[%s1 + $0x750] sm:$0xff]
      %v538 = vld [vmem:[%s1 + $0x758] sm:$0xf]
      %v539 = vld [vmem:[%s1 + $0x75c] sm:$0xff]
      %v540 = vld [vmem:[%s1 + $0x764] sm:$0xf]
      %v541 = vld [vmem:[%s1 + $0x768] sm:$0xff]
      %v542 = vld [vmem:[%s1 + $0x770] sm:$0xf]
      %v543 = vld [vmem:[%s1 + $0x774] sm:$0xff]
      %v544 = vld [vmem:[%s1 + $0x77c] sm:$0xf]
      %v545 = vld [vmem:[%s1 + $0x780] sm:$0xff]
      %v546 = vld [vmem:[%s1 + $0x788] sm:$0xf]
      %v547 = vld [vmem:[%s1 + $0x78c] sm:$0xff]
      %v548 = vld [vmem:[%s1 + $0x794] sm:$0xf]
      %v549 = vld [vmem:[%s1 + $0x798] sm:$0xff]
      %v550 = vld [vmem:[%s1 + $0x7a0] sm:$0xf]
      %v551 = vld [vmem:[%s1 + $0x7a4] sm:$0xff]
      %v552 = vld [vmem:[%s1 + $0x7ac] sm:$0xf]
      %v553 = vld [vmem:[%s1 + $0x7b0] sm:$0xff]
      %v554 = vld [vmem:[%s1 + $0x7b8] sm:$0xf]
      %v555 = vld [vmem:[%s1 + $0x7bc] sm:$0xff]
      %v556 = vld [vmem:[%s1 + $0x7c4] sm:$0xf]
      %v557 = vld [vmem:[%s1 + $0x7c8] sm:$0xff]
      %v558 = vld [vmem:[%s1 + $0x7d0] sm:$0xf]
      %v559 = vld [vmem:[%s1 + $0x7d4] sm:$0xff]
      %v560 = vld [vmem:[%s1 + $0x7dc] sm:$0xf]
      %v561 = vld [vmem:[%s1 + $0x7e0] sm:$0xff]
      %v562 = vld [vmem:[%s1 + $0x7e8] sm:$0xf]
      %v563 = vld [vmem:[%s1 + $0x7ec] sm:$0xff]
      %v564 = vld [vmem:[%s1 + $0x7f4] sm:$0xf]
      %v565 = vld [vmem:[%s1 + $0x7f8] sm:$0xff]
      %v566 = vld [vmem:[%s1 + $0x800] sm:$0xf]
      %v567 = vld [vmem:[%s1 + $0x804] sm:$0xff]
      %v568 = vld [vmem:[%s1 + $0x80c] sm:$0xf]
      %v569 = vld [vmem:[%s1 + $0x810] sm:$0xff]
      %v570 = vld [vmem:[%s1 + $0x818] sm:$0xf]
      %v571 = vld [vmem:[%s1 + $0x81c] sm:$0xff]
      %v572 = vld [vmem:[%s1 + $0x824] sm:$0xf]
      %v573 = vld [vmem:[%s1 + $0x828] sm:$0xff]
      %v574 = vld [vmem:[%s1 + $0x830] sm:$0xf]
      %v575 = vld [vmem:[%s1 + $0x834] sm:$0xff]
      %v576 = vld [vmem:[%s1 + $0x83c] sm:$0xf]
      %v577 = vld [vmem:[%s1 + $0x840] sm:$0xff]
      %v578 = vld [vmem:[%s1 + $0x848] sm:$0xf]
      %v579 = vld [vmem:[%s1 + $0x84c] sm:$0xff]
      %v580 = vld [vmem:[%s1 + $0x854] sm:$0xf]
      %v581 = vld [vmem:[%s1 + $0x858] sm:$0xff]
      %v582 = vld [vmem:[%s1 + $0x860] sm:$0xf]
      %v583 = vld [vmem:[%s1 + $0x864] sm:$0xff]
      %v584 = vld [vmem:[%s1 + $0x86c] sm:$0xf]
      %v585 = vld [vmem:[%s1 + $0x870] sm:$0xff]
      %v586 = vld [vmem:[%s1 + $0x878] sm:$0xf]
      %v587 = vld [vmem:[%s1 + $0x87c] sm:$0xff]
      %v588 = vld [vmem:[%s1 + $0x884] sm:$0xf]
      %v589 = vld [vmem:[%s1 + $0x888] sm:$0xff]
      %v590 = vld [vmem:[%s1 + $0x890] sm:$0xf]
      %v591 = vld [vmem:[%s1 + $0x894] sm:$0xff]
      %v592 = vld [vmem:[%s1 + $0x89c] sm:$0xf]
      %v593 = vld [vmem:[%s1 + $0x8a0] sm:$0xff]
      %v594 = vld [vmem:[%s1 + $0x8a8] sm:$0xf]
      %v595 = vld [vmem:[%s1 + $0x8ac] sm:$0xff]
      %v596 = vld [vmem:[%s1 + $0x8b4] sm:$0xf]
      %v597 = vld [vmem:[%s1 + $0x8b8] sm:$0xff]
      %v598 = vld [vmem:[%s1 + $0x8c0] sm:$0xf]
      %v599 = vld [vmem:[%s1 + $0x8c4] sm:$0xff]
      %v600 = vld [vmem:[%s1 + $0x8cc] sm:$0xf]
      %v601 = vld [vmem:[%s1 + $0x8d0] sm:$0xff]
      %v602 = vld [vmem:[%s1 + $0x8d8] sm:$0xf]
      %v603 = vld [vmem:[%s1 + $0x8dc] sm:$0xff]
      %v604 = vld [vmem:[%s1 + $0x8e4] sm:$0xf]
      %v605 = vld [vmem:[%s1 + $0x8e8] sm:$0xff]
      %v606 = vld [vmem:[%s1 + $0x8f0] sm:$0xf]
      %v607 = vld [vmem:[%s1 + $0x8f4] sm:$0xff]
      %v608 = vld [vmem:[%s1 + $0x8fc] sm:$0xf]
      %v609 = vld [vmem:[%s2] sm:$0x7]
      %v611 = vlaneseq
      %v612 = vshrl.u32 %v611, 7
      %v613 = vsub.s32 0, %v612
      %v614 = vrot.slane %v609, %v613
      %v615 = vlaneseq
      %v616 = vshrl.u32 %v615, 7
      %v617 = vsub.s32 1, %v616
      %v618 = vrot.slane %v609, %v617
      %v619 = vlaneseq
      %v620 = vshrl.u32 %v619, 7
      %v621 = vsub.s32 2, %v620
      %v622 = vrot.slane %v609, %v621
      %v632 = vunpack.c.l.b16 %v219
      %v633 = vunpack.c.h.b16 %v219
      %v634 = vunpack.c.l.b16 %v220
      %v635 = vunpack.c.h.b16 %v220
      %v636 = vunpack.c.l.b16 %v221
      %v637 = vunpack.c.h.b16 %v221
      %v638 = vunpack.c.l.b16 %v222
      %v639 = vunpack.c.h.b16 %v222
      %v640 = vunpack.c.l.b16 %v223
      %v641 = vunpack.c.h.b16 %v223
      %v642 = vunpack.c.l.b16 %v224
      %v643 = vunpack.c.h.b16 %v224
      %v644 = vpack.c.b16 %v632, %v632
      %v645 = vpack.c.b16 %v633, %v633
      %v646 = vpack.c.b16 %v634, %v634
      %v647 = vpack.c.b16 %v635, %v635
      %v648 = vpack.c.b16 %v636, %v636
      %v649 = vpack.c.b16 %v637, %v637
      %v650 = vpack.c.b16 %v638, %v638
      %v651 = vpack.c.b16 %v639, %v639
      %v652 = vpack.c.b16 %v640, %v640
      %v653 = vpack.c.b16 %v641, %v641
      %v654 = vpack.c.b16 %v642, %v642
      %v655 = vpack.c.b16 %v643, %v643
      %v1052 = vunpack.c.l.b16 %v225
      %v1053 = vunpack.c.h.b16 %v225
      %v1054 = vunpack.c.l.b16 %v226
      %v1055 = vunpack.c.l.b16 %v227
      %v1056 = vunpack.c.h.b16 %v227
      %v1057 = vunpack.c.l.b16 %v228
      %v1058 = vunpack.c.l.b16 %v229
      %v1059 = vunpack.c.h.b16 %v229
      %v1060 = vunpack.c.l.b16 %v230
      %v1061 = vunpack.c.l.b16 %v231
      %v1062 = vunpack.c.h.b16 %v231
      %v1063 = vunpack.c.l.b16 %v232
      %v1064 = vunpack.c.l.b16 %v233
      %v1065 = vunpack.c.h.b16 %v233
      %v1066 = vunpack.c.l.b16 %v234
      %v1067 = vunpack.c.l.b16 %v235
      %v1068 = vunpack.c.h.b16 %v235
      %v1069 = vunpack.c.l.b16 %v236
      %v1070 = vunpack.c.l.b16 %v237
      %v1071 = vunpack.c.h.b16 %v237
      %v1072 = vunpack.c.l.b16 %v238
      %v1073 = vunpack.c.l.b16 %v239
      %v1074 = vunpack.c.h.b16 %v239
      %v1075 = vunpack.c.l.b16 %v240
      %v1076 = vunpack.c.l.b16 %v241
      %v1077 = vunpack.c.h.b16 %v241
      %v1078 = vunpack.c.l.b16 %v242
      %v1079 = vunpack.c.l.b16 %v243
      %v1080 = vunpack.c.h.b16 %v243
      %v1081 = vunpack.c.l.b16 %v244
      %v1082 = vunpack.c.l.b16 %v245
      %v1083 = vunpack.c.h.b16 %v245
      %v1084 = vunpack.c.l.b16 %v246
      %v1085 = vunpack.c.l.b16 %v247
      %v1086 = vunpack.c.h.b16 %v247
      %v1087 = vunpack.c.l.b16 %v248
      %v1088 = vunpack.c.l.b16 %v249
      %v1089 = vunpack.c.h.b16 %v249
      %v1090 = vunpack.c.l.b16 %v250
      %v1091 = vunpack.c.l.b16 %v251
      %v1092 = vunpack.c.h.b16 %v251
      %v1093 = vunpack.c.l.b16 %v252
      %v1094 = vunpack.c.l.b16 %v253
      %v1095 = vunpack.c.h.b16 %v253
      %v1096 = vunpack.c.l.b16 %v254
      %v1097 = vunpack.c.l.b16 %v255
      %v1098 = vunpack.c.h.b16 %v255
      %v1099 = vunpack.c.l.b16 %v256
      %v1100 = vunpack.c.l.b16 %v257
      %v1101 = vunpack.c.h.b16 %v257
      %v1102 = vunpack.c.l.b16 %v258
      %v1103 = vunpack.c.l.b16 %v259
      %v1104 = vunpack.c.h.b16 %v259
      %v1105 = vunpack.c.l.b16 %v260
      %v1106 = vunpack.c.l.b16 %v261
      %v1107 = vunpack.c.h.b16 %v261
      %v1108 = vunpack.c.l.b16 %v262
      %v1109 = vunpack.c.l.b16 %v263
      %v1110 = vunpack.c.h.b16 %v263
      %v1111 = vunpack.c.l.b16 %v264
      %v1112 = vunpack.c.l.b16 %v265
      %v1113 = vunpack.c.h.b16 %v265
      %v1114 = vunpack.c.l.b16 %v266
      %v1115 = vunpack.c.l.b16 %v267
      %v1116 = vunpack.c.h.b16 %v267
      %v1117 = vunpack.c.l.b16 %v268
      %v1118 = vunpack.c.l.b16 %v269
      %v1119 = vunpack.c.h.b16 %v269
      %v1120 = vunpack.c.l.b16 %v270
      %v1121 = vunpack.c.l.b16 %v271
      %v1122 = vunpack.c.h.b16 %v271
      %v1123 = vunpack.c.l.b16 %v272
      %v1124 = vunpack.c.l.b16 %v273
      %v1125 = vunpack.c.h.b16 %v273
      %v1126 = vunpack.c.l.b16 %v274
      %v1127 = vunpack.c.l.b16 %v275
      %v1128 = vunpack.c.h.b16 %v275
      %v1129 = vunpack.c.l.b16 %v276
      %v1130 = vunpack.c.l.b16 %v277
      %v1131 = vunpack.c.h.b16 %v277
      %v1132 = vunpack.c.l.b16 %v278
      %v1133 = vunpack.c.l.b16 %v279
      %v1134 = vunpack.c.h.b16 %v279
      %v1135 = vunpack.c.l.b16 %v280
      %v1136 = vunpack.c.l.b16 %v281
      %v1137 = vunpack.c.h.b16 %v281
      %v1138 = vunpack.c.l.b16 %v282
      %v1139 = vunpack.c.l.b16 %v283
      %v1140 = vunpack.c.h.b16 %v283
      %v1141 = vunpack.c.l.b16 %v284
      %v1142 = vunpack.c.l.b16 %v285
      %v1143 = vunpack.c.h.b16 %v285
      %v1144 = vunpack.c.l.b16 %v286
      %v1145 = vunpack.c.l.b16 %v287
      %v1146 = vunpack.c.h.b16 %v287
      %v1147 = vunpack.c.l.b16 %v288
      %v1148 = vunpack.c.l.b16 %v289
      %v1149 = vunpack.c.h.b16 %v289
      %v1150 = vunpack.c.l.b16 %v290
      %v1151 = vunpack.c.l.b16 %v291
      %v1152 = vunpack.c.h.b16 %v291
      %v1153 = vunpack.c.l.b16 %v292
      %v1154 = vunpack.c.l.b16 %v293
      %v1155 = vunpack.c.h.b16 %v293
      %v1156 = vunpack.c.l.b16 %v294
      %v1157 = vunpack.c.l.b16 %v295
      %v1158 = vunpack.c.h.b16 %v295
      %v1159 = vunpack.c.l.b16 %v296
      %v1160 = vunpack.c.l.b16 %v297
      %v1161 = vunpack.c.h.b16 %v297
      %v1162 = vunpack.c.l.b16 %v298
      %v1163 = vunpack.c.l.b16 %v299
      %v1164 = vunpack.c.h.b16 %v299
      %v1165 = vunpack.c.l.b16 %v300
      %v1166 = vunpack.c.l.b16 %v301
      %v1167 = vunpack.c.h.b16 %v301
      %v1168 = vunpack.c.l.b16 %v302
      %v1169 = vunpack.c.l.b16 %v303
      %v1170 = vunpack.c.h.b16 %v303
      %v1171 = vunpack.c.l.b16 %v304
      %v1172 = vunpack.c.l.b16 %v305
      %v1173 = vunpack.c.h.b16 %v305
      %v1174 = vunpack.c.l.b16 %v306
      %v1175 = vunpack.c.l.b16 %v307
      %v1176 = vunpack.c.h.b16 %v307
      %v1177 = vunpack.c.l.b16 %v308
      %v1178 = vunpack.c.l.b16 %v309
      %v1179 = vunpack.c.h.b16 %v309
      %v1180 = vunpack.c.l.b16 %v310
      %v1181 = vunpack.c.l.b16 %v311
      %v1182 = vunpack.c.h.b16 %v311
      %v1183 = vunpack.c.l.b16 %v312
      %v1184 = vunpack.c.l.b16 %v313
      %v1185 = vunpack.c.h.b16 %v313
      %v1186 = vunpack.c.l.b16 %v314
      %v1187 = vunpack.c.l.b16 %v315
      %v1188 = vunpack.c.h.b16 %v315
      %v1189 = vunpack.c.l.b16 %v316
      %v1190 = vunpack.c.l.b16 %v317
      %v1191 = vunpack.c.h.b16 %v317
      %v1192 = vunpack.c.l.b16 %v318
      %v1193 = vunpack.c.l.b16 %v319
      %v1194 = vunpack.c.h.b16 %v319
      %v1195 = vunpack.c.l.b16 %v320
      %v1196 = vunpack.c.l.b16 %v321
      %v1197 = vunpack.c.h.b16 %v321
      %v1198 = vunpack.c.l.b16 %v322
      %v1199 = vunpack.c.l.b16 %v323
      %v1200 = vunpack.c.h.b16 %v323
      %v1201 = vunpack.c.l.b16 %v324
      %v1202 = vunpack.c.l.b16 %v325
      %v1203 = vunpack.c.h.b16 %v325
      %v1204 = vunpack.c.l.b16 %v326
      %v1205 = vunpack.c.l.b16 %v327
      %v1206 = vunpack.c.h.b16 %v327
      %v1207 = vunpack.c.l.b16 %v328
      %v1208 = vunpack.c.l.b16 %v329
      %v1209 = vunpack.c.h.b16 %v329
      %v1210 = vunpack.c.l.b16 %v330
      %v1211 = vunpack.c.l.b16 %v331
      %v1212 = vunpack.c.h.b16 %v331
      %v1213 = vunpack.c.l.b16 %v332
      %v1214 = vunpack.c.l.b16 %v333
      %v1215 = vunpack.c.h.b16 %v333
      %v1216 = vunpack.c.l.b16 %v334
      %v1217 = vunpack.c.l.b16 %v335
      %v1218 = vunpack.c.h.b16 %v335
      %v1219 = vunpack.c.l.b16 %v336
      %v1220 = vunpack.c.l.b16 %v337
      %v1221 = vunpack.c.h.b16 %v337
      %v1222 = vunpack.c.l.b16 %v338
      %v1223 = vunpack.c.l.b16 %v339
      %v1224 = vunpack.c.h.b16 %v339
      %v1225 = vunpack.c.l.b16 %v340
      %v1226 = vunpack.c.l.b16 %v341
      %v1227 = vunpack.c.h.b16 %v341
      %v1228 = vunpack.c.l.b16 %v342
      %v1229 = vunpack.c.l.b16 %v343
      %v1230 = vunpack.c.h.b16 %v343
      %v1231 = vunpack.c.l.b16 %v344
      %v1232 = vunpack.c.l.b16 %v345
      %v1233 = vunpack.c.h.b16 %v345
      %v1234 = vunpack.c.l.b16 %v346
      %v1235 = vunpack.c.l.b16 %v347
      %v1236 = vunpack.c.h.b16 %v347
      %v1237 = vunpack.c.l.b16 %v348
      %v1238 = vunpack.c.l.b16 %v349
      %v1239 = vunpack.c.h.b16 %v349
      %v1240 = vunpack.c.l.b16 %v350
      %v1241 = vunpack.c.l.b16 %v351
      %v1242 = vunpack.c.h.b16 %v351
      %v1243 = vunpack.c.l.b16 %v352
      %v1244 = vunpack.c.l.b16 %v353
      %v1245 = vunpack.c.h.b16 %v353
      %v1246 = vunpack.c.l.b16 %v354
      %v1247 = vunpack.c.l.b16 %v355
      %v1248 = vunpack.c.h.b16 %v355
      %v1249 = vunpack.c.l.b16 %v356
      %v1250 = vunpack.c.l.b16 %v357
      %v1251 = vunpack.c.h.b16 %v357
      %v1252 = vunpack.c.l.b16 %v358
      %v1253 = vunpack.c.l.b16 %v359
      %v1254 = vunpack.c.h.b16 %v359
      %v1255 = vunpack.c.l.b16 %v360
      %v1256 = vunpack.c.l.b16 %v361
      %v1257 = vunpack.c.h.b16 %v361
      %v1258 = vunpack.c.l.b16 %v362
      %v1259 = vunpack.c.l.b16 %v363
      %v1260 = vunpack.c.h.b16 %v363
      %v1261 = vunpack.c.l.b16 %v364
      %v1262 = vunpack.c.l.b16 %v365
      %v1263 = vunpack.c.h.b16 %v365
      %v1264 = vunpack.c.l.b16 %v366
      %v1265 = vunpack.c.l.b16 %v367
      %v1266 = vunpack.c.h.b16 %v367
      %v1267 = vunpack.c.l.b16 %v368
      %v1268 = vunpack.c.l.b16 %v369
      %v1269 = vunpack.c.h.b16 %v369
      %v1270 = vunpack.c.l.b16 %v370
      %v1271 = vunpack.c.l.b16 %v371
      %v1272 = vunpack.c.h.b16 %v371
      %v1273 = vunpack.c.l.b16 %v372
      %v1274 = vunpack.c.l.b16 %v373
      %v1275 = vunpack.c.h.b16 %v373
      %v1276 = vunpack.c.l.b16 %v374
      %v1277 = vunpack.c.l.b16 %v375
      %v1278 = vunpack.c.h.b16 %v375
      %v1279 = vunpack.c.l.b16 %v376
      %v1280 = vunpack.c.l.b16 %v377
      %v1281 = vunpack.c.h.b16 %v377
      %v1282 = vunpack.c.l.b16 %v378
      %v1283 = vunpack.c.l.b16 %v379
      %v1284 = vunpack.c.h.b16 %v379
      %v1285 = vunpack.c.l.b16 %v380
      %v1286 = vunpack.c.l.b16 %v381
      %v1287 = vunpack.c.h.b16 %v381
      %v1288 = vunpack.c.l.b16 %v382
      %v1289 = vunpack.c.l.b16 %v383
      %v1290 = vunpack.c.h.b16 %v383
      %v1291 = vunpack.c.l.b16 %v384
      %v1292 = vunpack.c.l.b16 %v385
      %v1293 = vunpack.c.h.b16 %v385
      %v1294 = vunpack.c.l.b16 %v386
      %v1295 = vunpack.c.l.b16 %v387
      %v1296 = vunpack.c.h.b16 %v387
      %v1297 = vunpack.c.l.b16 %v388
      %v1298 = vunpack.c.l.b16 %v389
      %v1299 = vunpack.c.h.b16 %v389
      %v1300 = vunpack.c.l.b16 %v390
      %v1301 = vunpack.c.l.b16 %v391
      %v1302 = vunpack.c.h.b16 %v391
      %v1303 = vunpack.c.l.b16 %v392
      %v1304 = vunpack.c.l.b16 %v393
      %v1305 = vunpack.c.h.b16 %v393
      %v1306 = vunpack.c.l.b16 %v394
      %v1307 = vunpack.c.l.b16 %v395
      %v1308 = vunpack.c.h.b16 %v395
      %v1309 = vunpack.c.l.b16 %v396
      %v1310 = vunpack.c.l.b16 %v397
      %v1311 = vunpack.c.h.b16 %v397
      %v1312 = vunpack.c.l.b16 %v398
      %v1313 = vunpack.c.l.b16 %v399
      %v1314 = vunpack.c.h.b16 %v399
      %v1315 = vunpack.c.l.b16 %v400
      %v1316 = vunpack.c.l.b16 %v401
      %v1317 = vunpack.c.h.b16 %v401
      %v1318 = vunpack.c.l.b16 %v402
      %v1319 = vunpack.c.l.b16 %v403
      %v1320 = vunpack.c.h.b16 %v403
      %v1321 = vunpack.c.l.b16 %v404
      %v1322 = vunpack.c.l.b16 %v405
      %v1323 = vunpack.c.h.b16 %v405
      %v1324 = vunpack.c.l.b16 %v406
      %v1325 = vunpack.c.l.b16 %v407
      %v1326 = vunpack.c.h.b16 %v407
      %v1327 = vunpack.c.l.b16 %v408
      %v1328 = vunpack.c.l.b16 %v409
      %v1329 = vunpack.c.h.b16 %v409
      %v1330 = vunpack.c.l.b16 %v410
      %v1331 = vunpack.c.l.b16 %v411
      %v1332 = vunpack.c.h.b16 %v411
      %v1333 = vunpack.c.l.b16 %v412
      %v1334 = vunpack.c.l.b16 %v413
      %v1335 = vunpack.c.h.b16 %v413
      %v1336 = vunpack.c.l.b16 %v414
      %v1337 = vunpack.c.l.b16 %v415
      %v1338 = vunpack.c.h.b16 %v415
      %v1339 = vunpack.c.l.b16 %v416
      %v1340 = vunpack.c.l.b16 %v417
      %v1341 = vunpack.c.h.b16 %v417
      %v1342 = vunpack.c.l.b16 %v418
      %v1343 = vunpack.c.l.b16 %v419
      %v1344 = vunpack.c.h.b16 %v419
      %v1345 = vunpack.c.l.b16 %v420
      %v1346 = vunpack.c.l.b16 %v421
      %v1347 = vunpack.c.h.b16 %v421
      %v1348 = vunpack.c.l.b16 %v422
      %v1349 = vunpack.c.l.b16 %v423
      %v1350 = vunpack.c.h.b16 %v423
      %v1351 = vunpack.c.l.b16 %v424
      %v1352 = vunpack.c.l.b16 %v425
      %v1353 = vunpack.c.h.b16 %v425
      %v1354 = vunpack.c.l.b16 %v426
      %v1355 = vunpack.c.l.b16 %v427
      %v1356 = vunpack.c.h.b16 %v427
      %v1357 = vunpack.c.l.b16 %v428
      %v1358 = vunpack.c.l.b16 %v429
      %v1359 = vunpack.c.h.b16 %v429
      %v1360 = vunpack.c.l.b16 %v430
      %v1361 = vunpack.c.l.b16 %v431
      %v1362 = vunpack.c.h.b16 %v431
      %v1363 = vunpack.c.l.b16 %v432
      %v1364 = vunpack.c.l.b16 %v433
      %v1365 = vunpack.c.h.b16 %v433
      %v1366 = vunpack.c.l.b16 %v434
      %v1367 = vunpack.c.l.b16 %v435
      %v1368 = vunpack.c.h.b16 %v435
      %v1369 = vunpack.c.l.b16 %v436
      %v1370 = vunpack.c.l.b16 %v437
      %v1371 = vunpack.c.h.b16 %v437
      %v1372 = vunpack.c.l.b16 %v438
      %v1373 = vunpack.c.l.b16 %v439
      %v1374 = vunpack.c.h.b16 %v439
      %v1375 = vunpack.c.l.b16 %v440
      %v1376 = vunpack.c.l.b16 %v441
      %v1377 = vunpack.c.h.b16 %v441
      %v1378 = vunpack.c.l.b16 %v442
      %v1379 = vunpack.c.l.b16 %v443
      %v1380 = vunpack.c.h.b16 %v443
      %v1381 = vunpack.c.l.b16 %v444
      %v1382 = vunpack.c.l.b16 %v445
      %v1383 = vunpack.c.h.b16 %v445
      %v1384 = vunpack.c.l.b16 %v446
      %v1385 = vunpack.c.l.b16 %v447
      %v1386 = vunpack.c.h.b16 %v447
      %v1387 = vunpack.c.l.b16 %v448
      %v1388 = vunpack.c.l.b16 %v449
      %v1389 = vunpack.c.h.b16 %v449
      %v1390 = vunpack.c.l.b16 %v450
      %v1391 = vunpack.c.l.b16 %v451
      %v1392 = vunpack.c.h.b16 %v451
      %v1393 = vunpack.c.l.b16 %v452
      %v1394 = vunpack.c.l.b16 %v453
      %v1395 = vunpack.c.h.b16 %v453
      %v1396 = vunpack.c.l.b16 %v454
      %v1397 = vunpack.c.l.b16 %v455
      %v1398 = vunpack.c.h.b16 %v455
      %v1399 = vunpack.c.l.b16 %v456
      %v1400 = vunpack.c.l.b16 %v457
      %v1401 = vunpack.c.h.b16 %v457
      %v1402 = vunpack.c.l.b16 %v458
      %v1403 = vunpack.c.l.b16 %v459
      %v1404 = vunpack.c.h.b16 %v459
      %v1405 = vunpack.c.l.b16 %v460
      %v1406 = vunpack.c.l.b16 %v461
      %v1407 = vunpack.c.h.b16 %v461
      %v1408 = vunpack.c.l.b16 %v462
      %v1409 = vunpack.c.l.b16 %v463
      %v1410 = vunpack.c.h.b16 %v463
      %v1411 = vunpack.c.l.b16 %v464
      %v1412 = vunpack.c.l.b16 %v465
      %v1413 = vunpack.c.h.b16 %v465
      %v1414 = vunpack.c.l.b16 %v466
      %v1415 = vunpack.c.l.b16 %v467
      %v1416 = vunpack.c.h.b16 %v467
      %v1417 = vunpack.c.l.b16 %v468
      %v1418 = vunpack.c.l.b16 %v469
      %v1419 = vunpack.c.h.b16 %v469
      %v1420 = vunpack.c.l.b16 %v470
      %v1421 = vunpack.c.l.b16 %v471
      %v1422 = vunpack.c.h.b16 %v471
      %v1423 = vunpack.c.l.b16 %v472
      %v1424 = vunpack.c.l.b16 %v473
      %v1425 = vunpack.c.h.b16 %v473
      %v1426 = vunpack.c.l.b16 %v474
      %v1427 = vunpack.c.l.b16 %v475
      %v1428 = vunpack.c.h.b16 %v475
      %v1429 = vunpack.c.l.b16 %v476
      %v1430 = vunpack.c.l.b16 %v477
      %v1431 = vunpack.c.h.b16 %v477
      %v1432 = vunpack.c.l.b16 %v478
      %v1433 = vunpack.c.l.b16 %v479
      %v1434 = vunpack.c.h.b16 %v479
      %v1435 = vunpack.c.l.b16 %v480
      %v1436 = vunpack.c.l.b16 %v481
      %v1437 = vunpack.c.h.b16 %v481
      %v1438 = vunpack.c.l.b16 %v482
      %v1439 = vunpack.c.l.b16 %v483
      %v1440 = vunpack.c.h.b16 %v483
      %v1441 = vunpack.c.l.b16 %v484
      %v1442 = vunpack.c.l.b16 %v485
      %v1443 = vunpack.c.h.b16 %v485
      %v1444 = vunpack.c.l.b16 %v486
      %v1445 = vunpack.c.l.b16 %v487
      %v1446 = vunpack.c.h.b16 %v487
      %v1447 = vunpack.c.l.b16 %v488
      %v1448 = vunpack.c.l.b16 %v489
      %v1449 = vunpack.c.h.b16 %v489
      %v1450 = vunpack.c.l.b16 %v490
      %v1451 = vunpack.c.l.b16 %v491
      %v1452 = vunpack.c.h.b16 %v491
      %v1453 = vunpack.c.l.b16 %v492
      %v1454 = vunpack.c.l.b16 %v493
      %v1455 = vunpack.c.h.b16 %v493
      %v1456 = vunpack.c.l.b16 %v494
      %v1457 = vunpack.c.l.b16 %v495
      %v1458 = vunpack.c.h.b16 %v495
      %v1459 = vunpack.c.l.b16 %v496
      %v1460 = vunpack.c.l.b16 %v497
      %v1461 = vunpack.c.h.b16 %v497
      %v1462 = vunpack.c.l.b16 %v498
      %v1463 = vunpack.c.l.b16 %v499
      %v1464 = vunpack.c.h.b16 %v499
      %v1465 = vunpack.c.l.b16 %v500
      %v1466 = vunpack.c.l.b16 %v501
      %v1467 = vunpack.c.h.b16 %v501
      %v1468 = vunpack.c.l.b16 %v502
      %v1469 = vunpack.c.l.b16 %v503
      %v1470 = vunpack.c.h.b16 %v503
      %v1471 = vunpack.c.l.b16 %v504
      %v1472 = vunpack.c.l.b16 %v505
      %v1473 = vunpack.c.h.b16 %v505
      %v1474 = vunpack.c.l.b16 %v506
      %v1475 = vunpack.c.l.b16 %v507
      %v1476 = vunpack.c.h.b16 %v507
      %v1477 = vunpack.c.l.b16 %v508
      %v1478 = vunpack.c.l.b16 %v509
      %v1479 = vunpack.c.h.b16 %v509
      %v1480 = vunpack.c.l.b16 %v510
      %v1481 = vunpack.c.l.b16 %v511
      %v1482 = vunpack.c.h.b16 %v511
      %v1483 = vunpack.c.l.b16 %v512
      %v1484 = vunpack.c.l.b16 %v513
      %v1485 = vunpack.c.h.b16 %v513
      %v1486 = vunpack.c.l.b16 %v514
      %v1487 = vunpack.c.l.b16 %v515
      %v1488 = vunpack.c.h.b16 %v515
      %v1489 = vunpack.c.l.b16 %v516
      %v1490 = vunpack.c.l.b16 %v517
      %v1491 = vunpack.c.h.b16 %v517
      %v1492 = vunpack.c.l.b16 %v518
      %v1493 = vunpack.c.l.b16 %v519
      %v1494 = vunpack.c.h.b16 %v519
      %v1495 = vunpack.c.l.b16 %v520
      %v1496 = vunpack.c.l.b16 %v521
      %v1497 = vunpack.c.h.b16 %v521
      %v1498 = vunpack.c.l.b16 %v522
      %v1499 = vunpack.c.l.b16 %v523
      %v1500 = vunpack.c.h.b16 %v523
      %v1501 = vunpack.c.l.b16 %v524
      %v1502 = vunpack.c.l.b16 %v525
      %v1503 = vunpack.c.h.b16 %v525
      %v1504 = vunpack.c.l.b16 %v526
      %v1505 = vunpack.c.l.b16 %v527
      %v1506 = vunpack.c.h.b16 %v527
      %v1507 = vunpack.c.l.b16 %v528
      %v1508 = vunpack.c.l.b16 %v529
      %v1509 = vunpack.c.h.b16 %v529
      %v1510 = vunpack.c.l.b16 %v530
      %v1511 = vunpack.c.l.b16 %v531
      %v1512 = vunpack.c.h.b16 %v531
      %v1513 = vunpack.c.l.b16 %v532
      %v1514 = vunpack.c.l.b16 %v533
      %v1515 = vunpack.c.h.b16 %v533
      %v1516 = vunpack.c.l.b16 %v534
      %v1517 = vunpack.c.l.b16 %v535
      %v1518 = vunpack.c.h.b16 %v535
      %v1519 = vunpack.c.l.b16 %v536
      %v1520 = vunpack.c.l.b16 %v537
      %v1521 = vunpack.c.h.b16 %v537
      %v1522 = vunpack.c.l.b16 %v538
      %v1523 = vunpack.c.l.b16 %v539
      %v1524 = vunpack.c.h.b16 %v539
      %v1525 = vunpack.c.l.b16 %v540
      %v1526 = vunpack.c.l.b16 %v541
      %v1527 = vunpack.c.h.b16 %v541
      %v1528 = vunpack.c.l.b16 %v542
      %v1529 = vunpack.c.l.b16 %v543
      %v1530 = vunpack.c.h.b16 %v543
      %v1531 = vunpack.c.l.b16 %v544
      %v1532 = vunpack.c.l.b16 %v545
      %v1533 = vunpack.c.h.b16 %v545
      %v1534 = vunpack.c.l.b16 %v546
      %v1535 = vunpack.c.l.b16 %v547
      %v1536 = vunpack.c.h.b16 %v547
      %v1537 = vunpack.c.l.b16 %v548
      %v1538 = vunpack.c.l.b16 %v549
      %v1539 = vunpack.c.h.b16 %v549
      %v1540 = vunpack.c.l.b16 %v550
      %v1541 = vunpack.c.l.b16 %v551
      %v1542 = vunpack.c.h.b16 %v551
      %v1543 = vunpack.c.l.b16 %v552
      %v1544 = vunpack.c.l.b16 %v553
      %v1545 = vunpack.c.h.b16 %v553
      %v1546 = vunpack.c.l.b16 %v554
      %v1547 = vunpack.c.l.b16 %v555
      %v1548 = vunpack.c.h.b16 %v555
      %v1549 = vunpack.c.l.b16 %v556
      %v1550 = vunpack.c.l.b16 %v557
      %v1551 = vunpack.c.h.b16 %v557
      %v1552 = vunpack.c.l.b16 %v558
      %v1553 = vunpack.c.l.b16 %v559
      %v1554 = vunpack.c.h.b16 %v559
      %v1555 = vunpack.c.l.b16 %v560
      %v1556 = vunpack.c.l.b16 %v561
      %v1557 = vunpack.c.h.b16 %v561
      %v1558 = vunpack.c.l.b16 %v562
      %v1559 = vunpack.c.l.b16 %v563
      %v1560 = vunpack.c.h.b16 %v563
      %v1561 = vunpack.c.l.b16 %v564
      %v1562 = vunpack.c.l.b16 %v565
      %v1563 = vunpack.c.h.b16 %v565
      %v1564 = vunpack.c.l.b16 %v566
      %v1565 = vunpack.c.l.b16 %v567
      %v1566 = vunpack.c.h.b16 %v567
      %v1567 = vunpack.c.l.b16 %v568
      %v1568 = vunpack.c.l.b16 %v569
      %v1569 = vunpack.c.h.b16 %v569
      %v1570 = vunpack.c.l.b16 %v570
      %v1571 = vunpack.c.l.b16 %v571
      %v1572 = vunpack.c.h.b16 %v571
      %v1573 = vunpack.c.l.b16 %v572
      %v1574 = vunpack.c.l.b16 %v573
      %v1575 = vunpack.c.h.b16 %v573
      %v1576 = vunpack.c.l.b16 %v574
      %v1577 = vunpack.c.l.b16 %v575
      %v1578 = vunpack.c.h.b16 %v575
      %v1579 = vunpack.c.l.b16 %v576
      %v1580 = vunpack.c.l.b16 %v577
      %v1581 = vunpack.c.h.b16 %v577
      %v1582 = vunpack.c.l.b16 %v578
      %v1583 = vunpack.c.l.b16 %v579
      %v1584 = vunpack.c.h.b16 %v579
      %v1585 = vunpack.c.l.b16 %v580
      %v1586 = vunpack.c.l.b16 %v581
      %v1587 = vunpack.c.h.b16 %v581
      %v1588 = vunpack.c.l.b16 %v582
      %v1589 = vunpack.c.l.b16 %v583
      %v1590 = vunpack.c.h.b16 %v583
      %v1591 = vunpack.c.l.b16 %v584
      %v1592 = vunpack.c.l.b16 %v585
      %v1593 = vunpack.c.h.b16 %v585
      %v1594 = vunpack.c.l.b16 %v586
      %v1595 = vunpack.c.l.b16 %v587
      %v1596 = vunpack.c.h.b16 %v587
      %v1597 = vunpack.c.l.b16 %v588
      %v1598 = vunpack.c.l.b16 %v589
      %v1599 = vunpack.c.h.b16 %v589
      %v1600 = vunpack.c.l.b16 %v590
      %v1601 = vunpack.c.l.b16 %v591
      %v1602 = vunpack.c.h.b16 %v591
      %v1603 = vunpack.c.l.b16 %v592
      %v1604 = vunpack.c.l.b16 %v593
      %v1605 = vunpack.c.h.b16 %v593
      %v1606 = vunpack.c.l.b16 %v594
      %v1607 = vunpack.c.l.b16 %v595
      %v1608 = vunpack.c.h.b16 %v595
      %v1609 = vunpack.c.l.b16 %v596
      %v1610 = vunpack.c.l.b16 %v597
      %v1611 = vunpack.c.h.b16 %v597
      %v1612 = vunpack.c.l.b16 %v598
      %v1613 = vunpack.c.l.b16 %v599
      %v1614 = vunpack.c.h.b16 %v599
      %v1615 = vunpack.c.l.b16 %v600
      %v1616 = vunpack.c.l.b16 %v601
      %v1617 = vunpack.c.h.b16 %v601
      %v1618 = vunpack.c.l.b16 %v602
      %v1619 = vunpack.c.l.b16 %v603
      %v1620 = vunpack.c.h.b16 %v603
      %v1621 = vunpack.c.l.b16 %v604
      %v1622 = vunpack.c.l.b16 %v605
      %v1623 = vunpack.c.h.b16 %v605
      %v1624 = vunpack.c.l.b16 %v606
      %v1625 = vunpack.c.l.b16 %v607
      %v1626 = vunpack.c.h.b16 %v607
      %v1627 = vunpack.c.l.b16 %v608
      %v1628 = vpack.c.b16 %v1055, %v1052
      %v1629 = vpack.c.b16 %v1056, %v1053
      %v1630 = vpack.c.b16 %v1057, %v1054
      %v1631 = vpack.c.b16 %v1061, %v1058
      %v1632 = vpack.c.b16 %v1062, %v1059
      %v1633 = vpack.c.b16 %v1063, %v1060
      %v1634 = vpack.c.b16 %v1067, %v1064
      %v1635 = vpack.c.b16 %v1068, %v1065
      %v1636 = vpack.c.b16 %v1069, %v1066
      %v1637 = vpack.c.b16 %v1073, %v1070
      %v1638 = vpack.c.b16 %v1074, %v1071
      %v1639 = vpack.c.b16 %v1075, %v1072
      %v1640 = vpack.c.b16 %v1079, %v1076
      %v1641 = vpack.c.b16 %v1080, %v1077
      %v1642 = vpack.c.b16 %v1081, %v1078
      %v1643 = vpack.c.b16 %v1085, %v1082
      %v1644 = vpack.c.b16 %v1086, %v1083
      %v1645 = vpack.c.b16 %v1087, %v1084
      %v1646 = vpack.c.b16 %v1091, %v1088
      %v1647 = vpack.c.b16 %v1092, %v1089
      %v1648 = vpack.c.b16 %v1093, %v1090
      %v1649 = vpack.c.b16 %v1097, %v1094
      %v1650 = vpack.c.b16 %v1098, %v1095
      %v1651 = vpack.c.b16 %v1099, %v1096
      %v1652 = vpack.c.b16 %v1103, %v1100
      %v1653 = vpack.c.b16 %v1104, %v1101
      %v1654 = vpack.c.b16 %v1105, %v1102
      %v1655 = vpack.c.b16 %v1109, %v1106
      %v1656 = vpack.c.b16 %v1110, %v1107
      %v1657 = vpack.c.b16 %v1111, %v1108
      %v1658 = vpack.c.b16 %v1115, %v1112
      %v1659 = vpack.c.b16 %v1116, %v1113
      %v1660 = vpack.c.b16 %v1117, %v1114
      %v1661 = vpack.c.b16 %v1121, %v1118
      %v1662 = vpack.c.b16 %v1122, %v1119
      %v1663 = vpack.c.b16 %v1123, %v1120
      %v1664 = vpack.c.b16 %v1127, %v1124
      %v1665 = vpack.c.b16 %v1128, %v1125
      %v1666 = vpack.c.b16 %v1129, %v1126
      %v1667 = vpack.c.b16 %v1133, %v1130
      %v1668 = vpack.c.b16 %v1134, %v1131
      %v1669 = vpack.c.b16 %v1135, %v1132
      %v1670 = vpack.c.b16 %v1139, %v1136
      %v1671 = vpack.c.b16 %v1140, %v1137
      %v1672 = vpack.c.b16 %v1141, %v1138
      %v1673 = vpack.c.b16 %v1145, %v1142
      %v1674 = vpack.c.b16 %v1146, %v1143
      %v1675 = vpack.c.b16 %v1147, %v1144
      %v1676 = vpack.c.b16 %v1151, %v1148
      %v1677 = vpack.c.b16 %v1152, %v1149
      %v1678 = vpack.c.b16 %v1153, %v1150
      %v1679 = vpack.c.b16 %v1157, %v1154
      %v1680 = vpack.c.b16 %v1158, %v1155
      %v1681 = vpack.c.b16 %v1159, %v1156
      %v1682 = vpack.c.b16 %v1163, %v1160
      %v1683 = vpack.c.b16 %v1164, %v1161
      %v1684 = vpack.c.b16 %v1165, %v1162
      %v1685 = vpack.c.b16 %v1169, %v1166
      %v1686 = vpack.c.b16 %v1170, %v1167
      %v1687 = vpack.c.b16 %v1171, %v1168
      %v1688 = vpack.c.b16 %v1175, %v1172
      %v1689 = vpack.c.b16 %v1176, %v1173
      %v1690 = vpack.c.b16 %v1177, %v1174
      %v1691 = vpack.c.b16 %v1181, %v1178
      %v1692 = vpack.c.b16 %v1182, %v1179
      %v1693 = vpack.c.b16 %v1183, %v1180
      %v1694 = vpack.c.b16 %v1187, %v1184
      %v1695 = vpack.c.b16 %v1188, %v1185
      %v1696 = vpack.c.b16 %v1189, %v1186
      %v1697 = vpack.c.b16 %v1193, %v1190
      %v1698 = vpack.c.b16 %v1194, %v1191
      %v1699 = vpack.c.b16 %v1195, %v1192
      %v1700 = vpack.c.b16 %v1199, %v1196
      %v1701 = vpack.c.b16 %v1200, %v1197
      %v1702 = vpack.c.b16 %v1201, %v1198
      %v1703 = vpack.c.b16 %v1205, %v1202
      %v1704 = vpack.c.b16 %v1206, %v1203
      %v1705 = vpack.c.b16 %v1207, %v1204
      %v1706 = vpack.c.b16 %v1211, %v1208
      %v1707 = vpack.c.b16 %v1212, %v1209
      %v1708 = vpack.c.b16 %v1213, %v1210
      %v1709 = vpack.c.b16 %v1217, %v1214
      %v1710 = vpack.c.b16 %v1218, %v1215
      %v1711 = vpack.c.b16 %v1219, %v1216
      %v1712 = vpack.c.b16 %v1223, %v1220
      %v1713 = vpack.c.b16 %v1224, %v1221
      %v1714 = vpack.c.b16 %v1225, %v1222
      %v1715 = vpack.c.b16 %v1229, %v1226
      %v1716 = vpack.c.b16 %v1230, %v1227
      %v1717 = vpack.c.b16 %v1231, %v1228
      %v1718 = vpack.c.b16 %v1235, %v1232
      %v1719 = vpack.c.b16 %v1236, %v1233
      %v1720 = vpack.c.b16 %v1237, %v1234
      %v1721 = vpack.c.b16 %v1241, %v1238
      %v1722 = vpack.c.b16 %v1242, %v1239
      %v1723 = vpack.c.b16 %v1243, %v1240
      %v1724 = vpack.c.b16 %v1247, %v1244
      %v1725 = vpack.c.b16 %v1248, %v1245
      %v1726 = vpack.c.b16 %v1249, %v1246
      %v1727 = vpack.c.b16 %v1253, %v1250
      %v1728 = vpack.c.b16 %v1254, %v1251
      %v1729 = vpack.c.b16 %v1255, %v1252
      %v1730 = vpack.c.b16 %v1259, %v1256
      %v1731 = vpack.c.b16 %v1260, %v1257
      %v1732 = vpack.c.b16 %v1261, %v1258
      %v1733 = vpack.c.b16 %v1265, %v1262
      %v1734 = vpack.c.b16 %v1266, %v1263
      %v1735 = vpack.c.b16 %v1267, %v1264
      %v1736 = vpack.c.b16 %v1271, %v1268
      %v1737 = vpack.c.b16 %v1272, %v1269
      %v1738 = vpack.c.b16 %v1273, %v1270
      %v1739 = vpack.c.b16 %v1277, %v1274
      %v1740 = vpack.c.b16 %v1278, %v1275
      %v1741 = vpack.c.b16 %v1279, %v1276
      %v1742 = vpack.c.b16 %v1283, %v1280
      %v1743 = vpack.c.b16 %v1284, %v1281
      %v1744 = vpack.c.b16 %v1285, %v1282
      %v1745 = vpack.c.b16 %v1289, %v1286
      %v1746 = vpack.c.b16 %v1290, %v1287
      %v1747 = vpack.c.b16 %v1291, %v1288
      %v1748 = vpack.c.b16 %v1295, %v1292
      %v1749 = vpack.c.b16 %v1296, %v1293
      %v1750 = vpack.c.b16 %v1297, %v1294
      %v1751 = vpack.c.b16 %v1301, %v1298
      %v1752 = vpack.c.b16 %v1302, %v1299
      %v1753 = vpack.c.b16 %v1303, %v1300
      %v1754 = vpack.c.b16 %v1307, %v1304
      %v1755 = vpack.c.b16 %v1308, %v1305
      %v1756 = vpack.c.b16 %v1309, %v1306
      %v1757 = vpack.c.b16 %v1313, %v1310
      %v1758 = vpack.c.b16 %v1314, %v1311
      %v1759 = vpack.c.b16 %v1315, %v1312
      %v1760 = vpack.c.b16 %v1319, %v1316
      %v1761 = vpack.c.b16 %v1320, %v1317
      %v1762 = vpack.c.b16 %v1321, %v1318
      %v1763 = vpack.c.b16 %v1325, %v1322
      %v1764 = vpack.c.b16 %v1326, %v1323
      %v1765 = vpack.c.b16 %v1327, %v1324
      %v1766 = vpack.c.b16 %v1331, %v1328
      %v1767 = vpack.c.b16 %v1332, %v1329
      %v1768 = vpack.c.b16 %v1333, %v1330
      %v1769 = vpack.c.b16 %v1337, %v1334
      %v1770 = vpack.c.b16 %v1338, %v1335
      %v1771 = vpack.c.b16 %v1339, %v1336
      %v1772 = vpack.c.b16 %v1343, %v1340
      %v1773 = vpack.c.b16 %v1344, %v1341
      %v1774 = vpack.c.b16 %v1345, %v1342
      %v1775 = vpack.c.b16 %v1349, %v1346
      %v1776 = vpack.c.b16 %v1350, %v1347
      %v1777 = vpack.c.b16 %v1351, %v1348
      %v1778 = vpack.c.b16 %v1355, %v1352
      %v1779 = vpack.c.b16 %v1356, %v1353
      %v1780 = vpack.c.b16 %v1357, %v1354
      %v1781 = vpack.c.b16 %v1361, %v1358
      %v1782 = vpack.c.b16 %v1362, %v1359
      %v1783 = vpack.c.b16 %v1363, %v1360
      %v1784 = vpack.c.b16 %v1367, %v1364
      %v1785 = vpack.c.b16 %v1368, %v1365
      %v1786 = vpack.c.b16 %v1369, %v1366
      %v1787 = vpack.c.b16 %v1373, %v1370
      %v1788 = vpack.c.b16 %v1374, %v1371
      %v1789 = vpack.c.b16 %v1375, %v1372
      %v1790 = vpack.c.b16 %v1379, %v1376
      %v1791 = vpack.c.b16 %v1380, %v1377
      %v1792 = vpack.c.b16 %v1381, %v1378
      %v1793 = vpack.c.b16 %v1385, %v1382
      %v1794 = vpack.c.b16 %v1386, %v1383
      %v1795 = vpack.c.b16 %v1387, %v1384
      %v1796 = vpack.c.b16 %v1391, %v1388
      %v1797 = vpack.c.b16 %v1392, %v1389
      %v1798 = vpack.c.b16 %v1393, %v1390
      %v1799 = vpack.c.b16 %v1397, %v1394
      %v1800 = vpack.c.b16 %v1398, %v1395
      %v1801 = vpack.c.b16 %v1399, %v1396
      %v1802 = vpack.c.b16 %v1403, %v1400
      %v1803 = vpack.c.b16 %v1404, %v1401
      %v1804 = vpack.c.b16 %v1405, %v1402
      %v1805 = vpack.c.b16 %v1409, %v1406
      %v1806 = vpack.c.b16 %v1410, %v1407
      %v1807 = vpack.c.b16 %v1411, %v1408
      %v1808 = vpack.c.b16 %v1415, %v1412
      %v1809 = vpack.c.b16 %v1416, %v1413
      %v1810 = vpack.c.b16 %v1417, %v1414
      %v1811 = vpack.c.b16 %v1421, %v1418
      %v1812 = vpack.c.b16 %v1422, %v1419
      %v1813 = vpack.c.b16 %v1423, %v1420
      %v1814 = vpack.c.b16 %v1427, %v1424
      %v1815 = vpack.c.b16 %v1428, %v1425
      %v1816 = vpack.c.b16 %v1429, %v1426
      %v1817 = vpack.c.b16 %v1433, %v1430
      %v1818 = vpack.c.b16 %v1434, %v1431
      %v1819 = vpack.c.b16 %v1435, %v1432
      %v1820 = vpack.c.b16 %v1439, %v1436
      %v1821 = vpack.c.b16 %v1440, %v1437
      %v1822 = vpack.c.b16 %v1441, %v1438
      %v1823 = vpack.c.b16 %v1445, %v1442
      %v1824 = vpack.c.b16 %v1446, %v1443
      %v1825 = vpack.c.b16 %v1447, %v1444
      %v1826 = vpack.c.b16 %v1451, %v1448
      %v1827 = vpack.c.b16 %v1452, %v1449
      %v1828 = vpack.c.b16 %v1453, %v1450
      %v1829 = vpack.c.b16 %v1457, %v1454
      %v1830 = vpack.c.b16 %v1458, %v1455
      %v1831 = vpack.c.b16 %v1459, %v1456
      %v1832 = vpack.c.b16 %v1463, %v1460
      %v1833 = vpack.c.b16 %v1464, %v1461
      %v1834 = vpack.c.b16 %v1465, %v1462
      %v1835 = vpack.c.b16 %v1469, %v1466
      %v1836 = vpack.c.b16 %v1470, %v1467
      %v1837 = vpack.c.b16 %v1471, %v1468
      %v1838 = vpack.c.b16 %v1475, %v1472
      %v1839 = vpack.c.b16 %v1476, %v1473
      %v1840 = vpack.c.b16 %v1477, %v1474
      %v1841 = vpack.c.b16 %v1481, %v1478
      %v1842 = vpack.c.b16 %v1482, %v1479
      %v1843 = vpack.c.b16 %v1483, %v1480
      %v1844 = vpack.c.b16 %v1487, %v1484
      %v1845 = vpack.c.b16 %v1488, %v1485
      %v1846 = vpack.c.b16 %v1489, %v1486
      %v1847 = vpack.c.b16 %v1493, %v1490
      %v1848 = vpack.c.b16 %v1494, %v1491
      %v1849 = vpack.c.b16 %v1495, %v1492
      %v1850 = vpack.c.b16 %v1499, %v1496
      %v1851 = vpack.c.b16 %v1500, %v1497
      %v1852 = vpack.c.b16 %v1501, %v1498
      %v1853 = vpack.c.b16 %v1505, %v1502
      %v1854 = vpack.c.b16 %v1506, %v1503
      %v1855 = vpack.c.b16 %v1507, %v1504
      %v1856 = vpack.c.b16 %v1511, %v1508
      %v1857 = vpack.c.b16 %v1512, %v1509
      %v1858 = vpack.c.b16 %v1513, %v1510
      %v1859 = vpack.c.b16 %v1517, %v1514
      %v1860 = vpack.c.b16 %v1518, %v1515
      %v1861 = vpack.c.b16 %v1519, %v1516
      %v1862 = vpack.c.b16 %v1523, %v1520
      %v1863 = vpack.c.b16 %v1524, %v1521
      %v1864 = vpack.c.b16 %v1525, %v1522
      %v1865 = vpack.c.b16 %v1529, %v1526
      %v1866 = vpack.c.b16 %v1530, %v1527
      %v1867 = vpack.c.b16 %v1531, %v1528
      %v1868 = vpack.c.b16 %v1535, %v1532
      %v1869 = vpack.c.b16 %v1536, %v1533
      %v1870 = vpack.c.b16 %v1537, %v1534
      %v1871 = vpack.c.b16 %v1541, %v1538
      %v1872 = vpack.c.b16 %v1542, %v1539
      %v1873 = vpack.c.b16 %v1543, %v1540
      %v1874 = vpack.c.b16 %v1547, %v1544
      %v1875 = vpack.c.b16 %v1548, %v1545
      %v1876 = vpack.c.b16 %v1549, %v1546
      %v1877 = vpack.c.b16 %v1553, %v1550
      %v1878 = vpack.c.b16 %v1554, %v1551
      %v1879 = vpack.c.b16 %v1555, %v1552
      %v1880 = vpack.c.b16 %v1559, %v1556
      %v1881 = vpack.c.b16 %v1560, %v1557
      %v1882 = vpack.c.b16 %v1561, %v1558
      %v1883 = vpack.c.b16 %v1565, %v1562
      %v1884 = vpack.c.b16 %v1566, %v1563
      %v1885 = vpack.c.b16 %v1567, %v1564
      %v1886 = vpack.c.b16 %v1571, %v1568
      %v1887 = vpack.c.b16 %v1572, %v1569
      %v1888 = vpack.c.b16 %v1573, %v1570
      %v1889 = vpack.c.b16 %v1577, %v1574
      %v1890 = vpack.c.b16 %v1578, %v1575
      %v1891 = vpack.c.b16 %v1579, %v1576
      %v1892 = vpack.c.b16 %v1583, %v1580
      %v1893 = vpack.c.b16 %v1584, %v1581
      %v1894 = vpack.c.b16 %v1585, %v1582
      %v1895 = vpack.c.b16 %v1589, %v1586
      %v1896 = vpack.c.b16 %v1590, %v1587
      %v1897 = vpack.c.b16 %v1591, %v1588
      %v1898 = vpack.c.b16 %v1595, %v1592
      %v1899 = vpack.c.b16 %v1596, %v1593
      %v1900 = vpack.c.b16 %v1597, %v1594
      %v1901 = vpack.c.b16 %v1601, %v1598
      %v1902 = vpack.c.b16 %v1602, %v1599
      %v1903 = vpack.c.b16 %v1603, %v1600
      %v1904 = vpack.c.b16 %v1607, %v1604
      %v1905 = vpack.c.b16 %v1608, %v1605
      %v1906 = vpack.c.b16 %v1609, %v1606
      %v1907 = vpack.c.b16 %v1613, %v1610
      %v1908 = vpack.c.b16 %v1614, %v1611
      %v1909 = vpack.c.b16 %v1615, %v1612
      %v1910 = vpack.c.b16 %v1619, %v1616
      %v1911 = vpack.c.b16 %v1620, %v1617
      %v1912 = vpack.c.b16 %v1621, %v1618
      %v1913 = vpack.c.b16 %v1625, %v1622
      %v1914 = vpack.c.b16 %v1626, %v1623
      %v1915 = vpack.c.b16 %v1627, %v1624
      %2204 = vmatprep.subr.bf16.mxu0 %v1629
      %2205 = vmatpush1.bf16.msra.mxu0 %v1628
      %2206 = vmatprep.subr.bf16.mxu0 %v1632
      %2207 = vmatpush1.bf16.msra.mxu0 %v1631
      %2208 = vmatprep.subr.bf16.mxu0 %v1635
      %2209 = vmatpush1.bf16.msra.mxu0 %v1634
      %2210 = vmatprep.subr.bf16.mxu0 %v1638
      %2211 = vmatpush1.bf16.msra.mxu0 %v1637
      %2212 = vmatprep.subr.bf16.mxu0 %v1641
      %2213 = vmatpush1.bf16.msra.mxu0 %v1640
      %2214 = vmatprep.subr.bf16.mxu0 %v1644
      %2215 = vmatpush1.bf16.msra.mxu0 %v1643
      %2216 = vmatprep.subr.bf16.mxu0 %v1647
      %2217 = vmatpush1.bf16.msra.mxu0 %v1646
      %2218 = vmatprep.subr.bf16.mxu0 %v1650
      %2219 = vmatpush1.bf16.msra.mxu0 %v1649
      %2220 = vmatprep.subr.bf16.mxu0 %v1653
      %2221 = vmatpush1.bf16.msra.mxu0 %v1652
      %2222 = vmatprep.subr.bf16.mxu0 %v1656
      %2223 = vmatpush1.bf16.msra.mxu0 %v1655
      %2224 = vmatprep.subr.bf16.mxu0 %v1659
      %2225 = vmatpush1.bf16.msra.mxu0 %v1658
      %2226 = vmatprep.subr.bf16.mxu0 %v1662
      %2227 = vmatpush1.bf16.msra.mxu0 %v1661
      %2228 = vmatprep.subr.bf16.mxu0 %v1665
      %2229 = vmatpush1.bf16.msra.mxu0 %v1664
      %2230 = vmatprep.subr.bf16.mxu0 %v1668
      %2231 = vmatpush1.bf16.msra.mxu0 %v1667
      %2232 = vmatprep.subr.bf16.mxu0 %v1671
      %2233 = vmatpush1.bf16.msra.mxu0 %v1670
      %2234 = vmatprep.subr.bf16.mxu0 %v1674
      %2235 = vmatpush1.bf16.msra.mxu0 %v1673
      %2236 = vmatprep.mubr.bf16.mxu0 %v645
      %2237 = vmatmul.mubr.bf16.gmra.mrb[0].mxu0 %v644
      %v2238 = vpop.f32.mrb[0].mxu0
      %v2239 = vadd.f32 %v614, %v2238
      %v2240 = vpop.f32.mrb[0].mxu0
      %v2241 = vadd.f32 %v618, %v2240
      %v2242 = vpop.f32.mrb[0].mxu0
      %v2243 = vpop.f32.mrb[0].mxu0
      %2244 = vdwg.mxu0
      %2245 = vmatprep.subr.bf16.mxu0 %v1677
      %2246 = vmatpush1.bf16.msra.mxu0 %v1676
      %2247 = vmatprep.subr.bf16.mxu0 %v1680
      %2248 = vmatpush1.bf16.msra.mxu0 %v1679
      %2249 = vmatprep.subr.bf16.mxu0 %v1683
      %2250 = vmatpush1.bf16.msra.mxu0 %v1682
      %2251 = vmatprep.subr.bf16.mxu0 %v1686
      %2252 = vmatpush1.bf16.msra.mxu0 %v1685
      %2253 = vmatprep.subr.bf16.mxu0 %v1689
      %2254 = vmatpush1.bf16.msra.mxu0 %v1688
      %2255 = vmatprep.subr.bf16.mxu0 %v1692
      %2256 = vmatpush1.bf16.msra.mxu0 %v1691
      %2257 = vmatprep.subr.bf16.mxu0 %v1695
      %2258 = vmatpush1.bf16.msra.mxu0 %v1694
      %2259 = vmatprep.subr.bf16.mxu0 %v1698
      %2260 = vmatpush1.bf16.msra.mxu0 %v1697
      %2261 = vmatprep.subr.bf16.mxu0 %v1701
      %2262 = vmatpush1.bf16.msra.mxu0 %v1700
      %2263 = vmatprep.subr.bf16.mxu0 %v1704
      %2264 = vmatpush1.bf16.msra.mxu0 %v1703
      %2265 = vmatprep.subr.bf16.mxu0 %v1707
      %2266 = vmatpush1.bf16.msra.mxu0 %v1706
      %2267 = vmatprep.subr.bf16.mxu0 %v1710
      %2268 = vmatpush1.bf16.msra.mxu0 %v1709
      %2269 = vmatprep.subr.bf16.mxu0 %v1713
      %2270 = vmatpush1.bf16.msra.mxu0 %v1712
      %2271 = vmatprep.subr.bf16.mxu0 %v1716
      %2272 = vmatpush1.bf16.msra.mxu0 %v1715
      %2273 = vmatprep.subr.bf16.mxu0 %v1719
      %2274 = vmatpush1.bf16.msra.mxu0 %v1718
      %2275 = vmatprep.subr.bf16.mxu0 %v1722
      %2276 = vmatpush1.bf16.msra.mxu0 %v1721
      %2277 = vmatprep.mubr.bf16.mxu0 %v647
      %2278 = vmatmul.mubr.bf16.gmra.mrb[0].mxu0 %v646
      %v2279 = vpop.f32.mrb[0].mxu0
      %v2280 = vadd.f32 %v2239, %v2279
      %v2281 = vpop.f32.mrb[0].mxu0
      %v2282 = vadd.f32 %v2241, %v2281
      %v2283 = vpop.f32.mrb[0].mxu0
      %v2284 = vpop.f32.mrb[0].mxu0
      %2285 = vdwg.mxu0
      %2286 = vmatprep.subr.bf16.mxu0 %v1725
      %2287 = vmatpush1.bf16.msra.mxu0 %v1724
      %2288 = vmatprep.subr.bf16.mxu0 %v1728
      %2289 = vmatpush1.bf16.msra.mxu0 %v1727
      %2290 = vmatprep.subr.bf16.mxu0 %v1731
      %2291 = vmatpush1.bf16.msra.mxu0 %v1730
      %2292 = vmatprep.subr.bf16.mxu0 %v1734
      %2293 = vmatpush1.bf16.msra.mxu0 %v1733
      %2294 = vmatprep.subr.bf16.mxu0 %v1737
      %2295 = vmatpush1.bf16.msra.mxu0 %v1736
      %2296 = vmatprep.subr.bf16.mxu0 %v1740
      %2297 = vmatpush1.bf16.msra.mxu0 %v1739
      %2298 = vmatprep.subr.bf16.mxu0 %v1743
      %2299 = vmatpush1.bf16.msra.mxu0 %v1742
      %2300 = vmatprep.subr.bf16.mxu0 %v1746
      %2301 = vmatpush1.bf16.msra.mxu0 %v1745
      %2302 = vmatprep.subr.bf16.mxu0 %v1749
      %2303 = vmatpush1.bf16.msra.mxu0 %v1748
      %2304 = vmatprep.subr.bf16.mxu0 %v1752
      %2305 = vmatpush1.bf16.msra.mxu0 %v1751
      %2306 = vmatprep.subr.bf16.mxu0 %v1755
      %2307 = vmatpush1.bf16.msra.mxu0 %v1754
      %2308 = vmatprep.subr.bf16.mxu0 %v1758
      %2309 = vmatpush1.bf16.msra.mxu0 %v1757
      %2310 = vmatprep.subr.bf16.mxu0 %v1761
      %2311 = vmatpush1.bf16.msra.mxu0 %v1760
      %2312 = vmatprep.subr.bf16.mxu0 %v1764
      %2313 = vmatpush1.bf16.msra.mxu0 %v1763
      %2314 = vmatprep.subr.bf16.mxu0 %v1767
      %2315 = vmatpush1.bf16.msra.mxu0 %v1766
      %2316 = vmatprep.subr.bf16.mxu0 %v1770
      %2317 = vmatpush1.bf16.msra.mxu0 %v1769
      %2318 = vmatprep.mubr.bf16.mxu0 %v649
      %2319 = vmatmul.mubr.bf16.gmra.mrb[0].mxu0 %v648
      %v2320 = vpop.f32.mrb[0].mxu0
      %v2321 = vadd.f32 %v2280, %v2320
      %v2322 = vpop.f32.mrb[0].mxu0
      %v2323 = vadd.f32 %v2282, %v2322
      %v2324 = vpop.f32.mrb[0].mxu0
      %v2325 = vpop.f32.mrb[0].mxu0
      %2326 = vdwg.mxu0
      %2327 = vmatprep.subr.bf16.mxu0 %v1773
      %2328 = vmatpush1.bf16.msra.mxu0 %v1772
      %2329 = vmatprep.subr.bf16.mxu0 %v1776
      %2330 = vmatpush1.bf16.msra.mxu0 %v1775
      %2331 = vmatprep.subr.bf16.mxu0 %v1779
      %2332 = vmatpush1.bf16.msra.mxu0 %v1778
      %2333 = vmatprep.subr.bf16.mxu0 %v1782
      %2334 = vmatpush1.bf16.msra.mxu0 %v1781
      %2335 = vmatprep.subr.bf16.mxu0 %v1785
      %2336 = vmatpush1.bf16.msra.mxu0 %v1784
      %2337 = vmatprep.subr.bf16.mxu0 %v1788
      %2338 = vmatpush1.bf16.msra.mxu0 %v1787
      %2339 = vmatprep.subr.bf16.mxu0 %v1791
      %2340 = vmatpush1.bf16.msra.mxu0 %v1790
      %2341 = vmatprep.subr.bf16.mxu0 %v1794
      %2342 = vmatpush1.bf16.msra.mxu0 %v1793
      %2343 = vmatprep.subr.bf16.mxu0 %v1797
      %2344 = vmatpush1.bf16.msra.mxu0 %v1796
      %2345 = vmatprep.subr.bf16.mxu0 %v1800
      %2346 = vmatpush1.bf16.msra.mxu0 %v1799
      %2347 = vmatprep.subr.bf16.mxu0 %v1803
      %2348 = vmatpush1.bf16.msra.mxu0 %v1802
      %2349 = vmatprep.subr.bf16.mxu0 %v1806
      %2350 = vmatpush1.bf16.msra.mxu0 %v1805
      %2351 = vmatprep.subr.bf16.mxu0 %v1809
      %2352 = vmatpush1.bf16.msra.mxu0 %v1808
      %2353 = vmatprep.subr.bf16.mxu0 %v1812
      %2354 = vmatpush1.bf16.msra.mxu0 %v1811
      %2355 = vmatprep.subr.bf16.mxu0 %v1815
      %2356 = vmatpush1.bf16.msra.mxu0 %v1814
      %2357 = vmatprep.subr.bf16.mxu0 %v1818
      %2358 = vmatpush1.bf16.msra.mxu0 %v1817
      %2359 = vmatprep.mubr.bf16.mxu0 %v651
      %2360 = vmatmul.mubr.bf16.gmra.mrb[0].mxu0 %v650
      %v2361 = vpop.f32.mrb[0].mxu0
      %v2362 = vadd.f32 %v2321, %v2361
      %v2363 = vpop.f32.mrb[0].mxu0
      %v2364 = vadd.f32 %v2323, %v2363
      %v2365 = vpop.f32.mrb[0].mxu0
      %v2366 = vpop.f32.mrb[0].mxu0
      %2367 = vdwg.mxu0
      %2368 = vmatprep.subr.bf16.mxu0 %v1821
      %2369 = vmatpush1.bf16.msra.mxu0 %v1820
      %2370 = vmatprep.subr.bf16.mxu0 %v1824
      %2371 = vmatpush1.bf16.msra.mxu0 %v1823
      %2372 = vmatprep.subr.bf16.mxu0 %v1827
      %2373 = vmatpush1.bf16.msra.mxu0 %v1826
      %2374 = vmatprep.subr.bf16.mxu0 %v1830
      %2375 = vmatpush1.bf16.msra.mxu0 %v1829
      %2376 = vmatprep.subr.bf16.mxu0 %v1833
      %2377 = vmatpush1.bf16.msra.mxu0 %v1832
      %2378 = vmatprep.subr.bf16.mxu0 %v1836
      %2379 = vmatpush1.bf16.msra.mxu0 %v1835
      %2380 = vmatprep.subr.bf16.mxu0 %v1839
      %2381 = vmatpush1.bf16.msra.mxu0 %v1838
      %2382 = vmatprep.subr.bf16.mxu0 %v1842
      %2383 = vmatpush1.bf16.msra.mxu0 %v1841
      %2384 = vmatprep.subr.bf16.mxu0 %v1845
      %2385 = vmatpush1.bf16.msra.mxu0 %v1844
      %2386 = vmatprep.subr.bf16.mxu0 %v1848
      %2387 = vmatpush1.bf16.msra.mxu0 %v1847
      %2388 = vmatprep.subr.bf16.mxu0 %v1851
      %2389 = vmatpush1.bf16.msra.mxu0 %v1850
      %2390 = vmatprep.subr.bf16.mxu0 %v1854
      %2391 = vmatpush1.bf16.msra.mxu0 %v1853
      %2392 = vmatprep.subr.bf16.mxu0 %v1857
      %2393 = vmatpush1.bf16.msra.mxu0 %v1856
      %2394 = vmatprep.subr.bf16.mxu0 %v1860
      %2395 = vmatpush1.bf16.msra.mxu0 %v1859
      %2396 = vmatprep.subr.bf16.mxu0 %v1863
      %2397 = vmatpush1.bf16.msra.mxu0 %v1862
      %2398 = vmatprep.subr.bf16.mxu0 %v1866
      %2399 = vmatpush1.bf16.msra.mxu0 %v1865
      %2400 = vmatprep.mubr.bf16.mxu0 %v653
      %2401 = vmatmul.mubr.bf16.gmra.mrb[0].mxu0 %v652
      %v2402 = vpop.f32.mrb[0].mxu0
      %v2403 = vadd.f32 %v2362, %v2402
      %v2404 = vpop.f32.mrb[0].mxu0
      %v2405 = vadd.f32 %v2364, %v2404
      %v2406 = vpop.f32.mrb[0].mxu0
      %v2407 = vpop.f32.mrb[0].mxu0
      %2408 = vdwg.mxu0
      %2409 = vmatprep.subr.bf16.mxu0 %v1869
      %2410 = vmatpush1.bf16.msra.mxu0 %v1868
      %2411 = vmatprep.subr.bf16.mxu0 %v1872
      %2412 = vmatpush1.bf16.msra.mxu0 %v1871
      %2413 = vmatprep.subr.bf16.mxu0 %v1875
      %2414 = vmatpush1.bf16.msra.mxu0 %v1874
      %2415 = vmatprep.subr.bf16.mxu0 %v1878
      %2416 = vmatpush1.bf16.msra.mxu0 %v1877
      %2417 = vmatprep.subr.bf16.mxu0 %v1881
      %2418 = vmatpush1.bf16.msra.mxu0 %v1880
      %2419 = vmatprep.subr.bf16.mxu0 %v1884
      %2420 = vmatpush1.bf16.msra.mxu0 %v1883
      %2421 = vmatprep.subr.bf16.mxu0 %v1887
      %2422 = vmatpush1.bf16.msra.mxu0 %v1886
      %2423 = vmatprep.subr.bf16.mxu0 %v1890
      %2424 = vmatpush1.bf16.msra.mxu0 %v1889
      %2425 = vmatprep.subr.bf16.mxu0 %v1893
      %2426 = vmatpush1.bf16.msra.mxu0 %v1892
      %2427 = vmatprep.subr.bf16.mxu0 %v1896
      %2428 = vmatpush1.bf16.msra.mxu0 %v1895
      %2429 = vmatprep.subr.bf16.mxu0 %v1899
      %2430 = vmatpush1.bf16.msra.mxu0 %v1898
      %2431 = vmatprep.subr.bf16.mxu0 %v1902
      %2432 = vmatpush1.bf16.msra.mxu0 %v1901
      %2433 = vmatprep.subr.bf16.mxu0 %v1905
      %2434 = vmatpush1.bf16.msra.mxu0 %v1904
      %2435 = vmatprep.subr.bf16.mxu0 %v1908
      %2436 = vmatpush1.bf16.msra.mxu0 %v1907
      %2437 = vmatprep.subr.bf16.mxu0 %v1911
      %2438 = vmatpush1.bf16.msra.mxu0 %v1910
      %2439 = vmatprep.subr.bf16.mxu0 %v1914
      %2440 = vmatpush1.bf16.msra.mxu0 %v1913
      %2441 = vmatprep.mubr.bf16.mxu0 %v655
      %2442 = vmatmul.mubr.bf16.gmra.mrb[0].mxu0 %v654
      %v2443 = vpop.f32.mrb[0].mxu0
      %v2444 = vadd.f32 %v2403, %v2443
      %v2445 = vpop.f32.mrb[0].mxu0
      %v2446 = vadd.f32 %v2405, %v2445
      %v2447 = vpop.f32.mrb[0].mxu0
      %v2448 = vpop.f32.mrb[0].mxu0
      %2449 = vdwg.mxu0
      %2450 = vmatprep.subr.bf16.mxu0 0
      %2451 = vmatpush1.bf16.msra.mxu0 %v1630
      %2452 = vmatprep.subr.bf16.mxu0 0
      %2453 = vmatpush1.bf16.msra.mxu0 %v1633
      %2454 = vmatprep.subr.bf16.mxu0 0
      %2455 = vmatpush1.bf16.msra.mxu0 %v1636
      %2456 = vmatprep.subr.bf16.mxu0 0
      %2457 = vmatpush1.bf16.msra.mxu0 %v1639
      %2458 = vmatprep.subr.bf16.mxu0 0
      %2459 = vmatpush1.bf16.msra.mxu0 %v1642
      %2460 = vmatprep.subr.bf16.mxu0 0
      %2461 = vmatpush1.bf16.msra.mxu0 %v1645
      %2462 = vmatprep.subr.bf16.mxu0 0
      %2463 = vmatpush1.bf16.msra.mxu0 %v1648
      %2464 = vmatprep.subr.bf16.mxu0 0
      %2465 = vmatpush1.bf16.msra.mxu0 %v1651
      %2466 = vmatprep.subr.bf16.mxu0 0
      %2467 = vmatpush1.bf16.msra.mxu0 %v1654
      %2468 = vmatprep.subr.bf16.mxu0 0
      %2469 = vmatpush1.bf16.msra.mxu0 %v1657
      %2470 = vmatprep.subr.bf16.mxu0 0
      %2471 = vmatpush1.bf16.msra.mxu0 %v1660
      %2472 = vmatprep.subr.bf16.mxu0 0
      %2473 = vmatpush1.bf16.msra.mxu0 %v1663
      %2474 = vmatprep.subr.bf16.mxu0 0
      %2475 = vmatpush1.bf16.msra.mxu0 %v1666
      %2476 = vmatprep.subr.bf16.mxu0 0
      %2477 = vmatpush1.bf16.msra.mxu0 %v1669
      %2478 = vmatprep.subr.bf16.mxu0 0
      %2479 = vmatpush1.bf16.msra.mxu0 %v1672
      %2480 = vmatprep.subr.bf16.mxu0 0
      %2481 = vmatpush1.bf16.msra.mxu0 %v1675
      %2482 = vmatprep.mubr.bf16.mxu0 %v645
      %2483 = vmatmul.mubr.bf16.gmra.mrb[0].mxu0 %v644
      %v2484 = vpop.f32.mrb[0].mxu0
      %v2485 = vadd.f32 %v622, %v2484
      %v2486 = vpop.f32.mrb[0].mxu0
      %v2487 = vpop.f32.mrb[0].mxu0
      %v2488 = vpop.f32.mrb[0].mxu0
      %2489 = vdwg.mxu0
      %2490 = vmatprep.subr.bf16.mxu0 0
      %2491 = vmatpush1.bf16.msra.mxu0 %v1678
      %2492 = vmatprep.subr.bf16.mxu0 0
      %2493 = vmatpush1.bf16.msra.mxu0 %v1681
      %2494 = vmatprep.subr.bf16.mxu0 0
      %2495 = vmatpush1.bf16.msra.mxu0 %v1684
      %2496 = vmatprep.subr.bf16.mxu0 0
      %2497 = vmatpush1.bf16.msra.mxu0 %v1687
      %2498 = vmatprep.subr.bf16.mxu0 0
      %2499 = vmatpush1.bf16.msra.mxu0 %v1690
      %2500 = vmatprep.subr.bf16.mxu0 0
      %2501 = vmatpush1.bf16.msra.mxu0 %v1693
      %2502 = vmatprep.subr.bf16.mxu0 0
      %2503 = vmatpush1.bf16.msra.mxu0 %v1696
      %2504 = vmatprep.subr.bf16.mxu0 0
      %2505 = vmatpush1.bf16.msra.mxu0 %v1699
      %2506 = vmatprep.subr.bf16.mxu0 0
      %2507 = vmatpush1.bf16.msra.mxu0 %v1702
      %2508 = vmatprep.subr.bf16.mxu0 0
      %2509 = vmatpush1.bf16.msra.mxu0 %v1705
      %2510 = vmatprep.subr.bf16.mxu0 0
      %2511 = vmatpush1.bf16.msra.mxu0 %v1708
      %2512 = vmatprep.subr.bf16.mxu0 0
      %2513 = vmatpush1.bf16.msra.mxu0 %v1711
      %2514 = vmatprep.subr.bf16.mxu0 0
      %2515 = vmatpush1.bf16.msra.mxu0 %v1714
      %2516 = vmatprep.subr.bf16.mxu0 0
      %2517 = vmatpush1.bf16.msra.mxu0 %v1717
      %2518 = vmatprep.subr.bf16.mxu0 0
      %2519 = vmatpush1.bf16.msra.mxu0 %v1720
      %2520 = vmatprep.subr.bf16.mxu0 0
      %2521 = vmatpush1.bf16.msra.mxu0 %v1723
      %2522 = vmatprep.mubr.bf16.mxu0 %v647
      %2523 = vmatmul.mubr.bf16.gmra.mrb[0].mxu0 %v646
      %v2524 = vpop.f32.mrb[0].mxu0
      %v2525 = vadd.f32 %v2485, %v2524
      %v2526 = vpop.f32.mrb[0].mxu0
      %v2527 = vpop.f32.mrb[0].mxu0
      %v2528 = vpop.f32.mrb[0].mxu0
      %2529 = vdwg.mxu0
      %2530 = vmatprep.subr.bf16.mxu0 0
      %2531 = vmatpush1.bf16.msra.mxu0 %v1726
      %2532 = vmatprep.subr.bf16.mxu0 0
      %2533 = vmatpush1.bf16.msra.mxu0 %v1729
      %2534 = vmatprep.subr.bf16.mxu0 0
      %2535 = vmatpush1.bf16.msra.mxu0 %v1732
      %2536 = vmatprep.subr.bf16.mxu0 0
      %2537 = vmatpush1.bf16.msra.mxu0 %v1735
      %2538 = vmatprep.subr.bf16.mxu0 0
      %2539 = vmatpush1.bf16.msra.mxu0 %v1738
      %2540 = vmatprep.subr.bf16.mxu0 0
      %2541 = vmatpush1.bf16.msra.mxu0 %v1741
      %2542 = vmatprep.subr.bf16.mxu0 0
      %2543 = vmatpush1.bf16.msra.mxu0 %v1744
      %2544 = vmatprep.subr.bf16.mxu0 0
      %2545 = vmatpush1.bf16.msra.mxu0 %v1747
      %2546 = vmatprep.subr.bf16.mxu0 0
      %2547 = vmatpush1.bf16.msra.mxu0 %v1750
      %2548 = vmatprep.subr.bf16.mxu0 0
      %2549 = vmatpush1.bf16.msra.mxu0 %v1753
      %2550 = vmatprep.subr.bf16.mxu0 0
      %2551 = vmatpush1.bf16.msra.mxu0 %v1756
      %2552 = vmatprep.subr.bf16.mxu0 0
      %2553 = vmatpush1.bf16.msra.mxu0 %v1759
      %2554 = vmatprep.subr.bf16.mxu0 0
      %2555 = vmatpush1.bf16.msra.mxu0 %v1762
      %2556 = vmatprep.subr.bf16.mxu0 0
      %2557 = vmatpush1.bf16.msra.mxu0 %v1765
      %2558 = vmatprep.subr.bf16.mxu0 0
      %2559 = vmatpush1.bf16.msra.mxu0 %v1768
      %2560 = vmatprep.subr.bf16.mxu0 0
      %2561 = vmatpush1.bf16.msra.mxu0 %v1771
      %2562 = vmatprep.mubr.bf16.mxu0 %v649
      %2563 = vmatmul.mubr.bf16.gmra.mrb[0].mxu0 %v648
      %v2564 = vpop.f32.mrb[0].mxu0
      %v2565 = vadd.f32 %v2525, %v2564
      %v2566 = vpop.f32.mrb[0].mxu0
      %v2567 = vpop.f32.mrb[0].mxu0
      %v2568 = vpop.f32.mrb[0].mxu0
      %2569 = vdwg.mxu0
      %2570 = vmatprep.subr.bf16.mxu0 0
      %2571 = vmatpush1.bf16.msra.mxu0 %v1774
      %2572 = vmatprep.subr.bf16.mxu0 0
      %2573 = vmatpush1.bf16.msra.mxu0 %v1777
      %2574 = vmatprep.subr.bf16.mxu0 0
      %2575 = vmatpush1.bf16.msra.mxu0 %v1780
      %2576 = vmatprep.subr.bf16.mxu0 0
      %2577 = vmatpush1.bf16.msra.mxu0 %v1783
      %2578 = vmatprep.subr.bf16.mxu0 0
      %2579 = vmatpush1.bf16.msra.mxu0 %v1786
      %2580 = vmatprep.subr.bf16.mxu0 0
      %2581 = vmatpush1.bf16.msra.mxu0 %v1789
      %2582 = vmatprep.subr.bf16.mxu0 0
      %2583 = vmatpush1.bf16.msra.mxu0 %v1792
      %2584 = vmatprep.subr.bf16.mxu0 0
      %2585 = vmatpush1.bf16.msra.mxu0 %v1795
      %2586 = vmatprep.subr.bf16.mxu0 0
      %2587 = vmatpush1.bf16.msra.mxu0 %v1798
      %2588 = vmatprep.subr.bf16.mxu0 0
      %2589 = vmatpush1.bf16.msra.mxu0 %v1801
      %2590 = vmatprep.subr.bf16.mxu0 0
      %2591 = vmatpush1.bf16.msra.mxu0 %v1804
      %2592 = vmatprep.subr.bf16.mxu0 0
      %2593 = vmatpush1.bf16.msra.mxu0 %v1807
      %2594 = vmatprep.subr.bf16.mxu0 0
      %2595 = vmatpush1.bf16.msra.mxu0 %v1810
      %2596 = vmatprep.subr.bf16.mxu0 0
      %2597 = vmatpush1.bf16.msra.mxu0 %v1813
      %2598 = vmatprep.subr.bf16.mxu0 0
      %2599 = vmatpush1.bf16.msra.mxu0 %v1816
      %2600 = vmatprep.subr.bf16.mxu0 0
      %2601 = vmatpush1.bf16.msra.mxu0 %v1819
      %2602 = vmatprep.mubr.bf16.mxu0 %v651
      %2603 = vmatmul.mubr.bf16.gmra.mrb[0].mxu0 %v650
      %v2604 = vpop.f32.mrb[0].mxu0
      %v2605 = vadd.f32 %v2565, %v2604
      %v2606 = vpop.f32.mrb[0].mxu0
      %v2607 = vpop.f32.mrb[0].mxu0
      %v2608 = vpop.f32.mrb[0].mxu0
      %2609 = vdwg.mxu0
      %2610 = vmatprep.subr.bf16.mxu0 0
      %2611 = vmatpush1.bf16.msra.mxu0 %v1822
      %2612 = vmatprep.subr.bf16.mxu0 0
      %2613 = vmatpush1.bf16.msra.mxu0 %v1825
      %2614 = vmatprep.subr.bf16.mxu0 0
      %2615 = vmatpush1.bf16.msra.mxu0 %v1828
      %2616 = vmatprep.subr.bf16.mxu0 0
      %2617 = vmatpush1.bf16.msra.mxu0 %v1831
      %2618 = vmatprep.subr.bf16.mxu0 0
      %2619 = vmatpush1.bf16.msra.mxu0 %v1834
      %2620 = vmatprep.subr.bf16.mxu0 0
      %2621 = vmatpush1.bf16.msra.mxu0 %v1837
      %2622 = vmatprep.subr.bf16.mxu0 0
      %2623 = vmatpush1.bf16.msra.mxu0 %v1840
      %2624 = vmatprep.subr.bf16.mxu0 0
      %2625 = vmatpush1.bf16.msra.mxu0 %v1843
      %2626 = vmatprep.subr.bf16.mxu0 0
      %2627 = vmatpush1.bf16.msra.mxu0 %v1846
      %2628 = vmatprep.subr.bf16.mxu0 0
      %2629 = vmatpush1.bf16.msra.mxu0 %v1849
      %2630 = vmatprep.subr.bf16.mxu0 0
      %2631 = vmatpush1.bf16.msra.mxu0 %v1852
      %2632 = vmatprep.subr.bf16.mxu0 0
      %2633 = vmatpush1.bf16.msra.mxu0 %v1855
      %2634 = vmatprep.subr.bf16.mxu0 0
      %2635 = vmatpush1.bf16.msra.mxu0 %v1858
      %2636 = vmatprep.subr.bf16.mxu0 0
      %2637 = vmatpush1.bf16.msra.mxu0 %v1861
      %2638 = vmatprep.subr.bf16.mxu0 0
      %2639 = vmatpush1.bf16.msra.mxu0 %v1864
      %2640 = vmatprep.subr.bf16.mxu0 0
      %2641 = vmatpush1.bf16.msra.mxu0 %v1867
      %2642 = vmatprep.mubr.bf16.mxu0 %v653
      %2643 = vmatmul.mubr.bf16.gmra.mrb[0].mxu0 %v652
      %v2644 = vpop.f32.mrb[0].mxu0
      %v2645 = vadd.f32 %v2605, %v2644
      %v2646 = vpop.f32.mrb[0].mxu0
      %v2647 = vpop.f32.mrb[0].mxu0
      %v2648 = vpop.f32.mrb[0].mxu0
      %2649 = vdwg.mxu0
      %2650 = vmatprep.subr.bf16.mxu0 0
      %2651 = vmatpush1.bf16.msra.mxu0 %v1870
      %2652 = vmatprep.subr.bf16.mxu0 0
      %2653 = vmatpush1.bf16.msra.mxu0 %v1873
      %2654 = vmatprep.subr.bf16.mxu0 0
      %2655 = vmatpush1.bf16.msra.mxu0 %v1876
      %2656 = vmatprep.subr.bf16.mxu0 0
      %2657 = vmatpush1.bf16.msra.mxu0 %v1879
      %2658 = vmatprep.subr.bf16.mxu0 0
      %2659 = vmatpush1.bf16.msra.mxu0 %v1882
      %2660 = vmatprep.subr.bf16.mxu0 0
      %2661 = vmatpush1.bf16.msra.mxu0 %v1885
      %2662 = vmatprep.subr.bf16.mxu0 0
      %2663 = vmatpush1.bf16.msra.mxu0 %v1888
      %2664 = vmatprep.subr.bf16.mxu0 0
      %2665 = vmatpush1.bf16.msra.mxu0 %v1891
      %2666 = vmatprep.subr.bf16.mxu0 0
      %2667 = vmatpush1.bf16.msra.mxu0 %v1894
      %2668 = vmatprep.subr.bf16.mxu0 0
      %2669 = vmatpush1.bf16.msra.mxu0 %v1897
      %2670 = vmatprep.subr.bf16.mxu0 0
      %2671 = vmatpush1.bf16.msra.mxu0 %v1900
      %2672 = vmatprep.subr.bf16.mxu0 0
      %2673 = vmatpush1.bf16.msra.mxu0 %v1903
      %2674 = vmatprep.subr.bf16.mxu0 0
      %2675 = vmatpush1.bf16.msra.mxu0 %v1906
      %2676 = vmatprep.subr.bf16.mxu0 0
      %2677 = vmatpush1.bf16.msra.mxu0 %v1909
      %2678 = vmatprep.subr.bf16.mxu0 0
      %2679 = vmatpush1.bf16.msra.mxu0 %v1912
      %2680 = vmatprep.subr.bf16.mxu0 0
      %2681 = vmatpush1.bf16.msra.mxu0 %v1915
      %2682 = vmatprep.mubr.bf16.mxu0 %v655
      %2683 = vmatmul.mubr.bf16.gmra.mrb[0].mxu0 %v654
      %v2684 = vpop.f32.mrb[0].mxu0
      %v2685 = vadd.f32 %v2645, %v2684
      %v2686 = vpop.f32.mrb[0].mxu0
      %v2687 = vpop.f32.mrb[0].mxu0
      %v2688 = vpop.f32.mrb[0].mxu0
      %2689 = vdwg.mxu0
      %v2690 = vld [vmem:[%s212] sm:$0xff]
      %v2691 = vld [vmem:[%s212 + $0x8] sm:$0xff]
      %v2692 = vld [vmem:[%s212 + $0x10] sm:$0xff]
      %v2693 = vadd.f32 %v2444, %v2690
      %v2694 = vadd.f32 %v2446, %v2691
      %v2695 = vadd.f32 %v2685, %v2692
      %2696 = vst [vmem:[%s217] sm:$0xff] %v2693
      %2697 = vst [vmem:[%s217 + $0x8] sm:$0xff] %v2694
      %2698 = vst [vmem:[%s217 + $0x10] sm:$0xff] %v2695
      %p2699 = scmp.lt.s32.totalorder %s15, 1
      %s2700 = scalar_select %p2699, %s15, 1
      %s2701 = smul.addr %s2700, 3
      %s2702 = smul.addr %s2701, 8
      %s2703 = scalar_lea.vmem %s4, %s2702
      // Predicated region
      $region37: #{build_transformer_forward.17} parent=35 // pred_check
        %p2704 = pneg %p127
      $region38: #{build_transformer_forward.17} parent=35 // pred_check_branch
        %2706 = sbr.rel (%p2704) target = $region40
      $region39: #{build_transformer_forward.17} parent=35 // pred_region
        _
      $region40: #{build_transformer_forward.17} parent=35 // pred_fallthru
        _
    $region36: #{build_transformer_forward.17} parent=5 // pred_fallthru
      _
    %p2707 = scmp.le.s32.totalorder 2, %s10
    // Predicated region
    $region41: #{build_transformer_forward.17} parent=5 // pred_check
      %p2708 = pneg %p2707
    $region42: #{build_transformer_forward.17} parent=5 // pred_check_branch
      %2710 = sbr.rel (%p2708) target = $region44
    $region43: #{build_transformer_forward.17} parent=5 // pred_region
      %s2711 = ssub.s32 %s10, 2
      // Predicated region
      $region45: #{build_transformer_forward.17} parent=43 // pred_check
        %p2712 = pneg %p133
      $region46: #{build_transformer_forward.17} parent=43 // pred_check_branch
        %2714 = sbr.rel (%p2712) target = $region48
      $region47: #{build_transformer_forward.17} parent=43 // pred_region
        %p2715 = scmp.lt.s32.totalorder %s16, 1
        %s2716 = scalar_select %p2715, %s16, 1
        %s2717 = smul.addr %s2716, 3
        %s2718 = smul.addr %s2717, 8
        %s2719 = scalar_lea.vmem %s4, %s2718
      $region48: #{build_transformer_forward.17} parent=43 // pred_fallthru
        _
    $region44: #{build_transformer_forward.17} parent=5 // pred_fallthru
      _
  $region6: #{build_transformer_forward.17} parent=0 // loop_footer
    %s14 = sadd.s32 1, %s10
  $region7: #{build_transformer_forward.17} parent=0 // loop_footer_branch
    %9 = sbr.rel target = $region3
  $region8: #{build_transformer_forward.17} parent=0 // loop_exit
    _

// kernel: build_transformer_forward.16
$region0: #{build_transformer_forward.16}
  #allocation0 [shape = 'u32[]', space=smem, size = 0x4, offset = 0x4, fixed_abs, tag = 'smem constant byte address 0x4 - core index']
  #allocation1 [shape = 'u32[144,128]{1,0:T(1,128)}', space=vmem, size = 0x12000, scoped, tag = 'internal scratch']
  %s0 = inlined_call_operand.vmem [shape: f32[16,384], index: 0, kind: input, shape index: {}]
  %s1 = inlined_call_operand.vmem [shape: bf16[384,1536], index: 1, kind: input, shape index: {}]
  %s2 = inlined_call_operand.vmem [shape: f32[1,1536], index: 2, kind: input, shape index: {}]
  %s3 = inlined_call_operand.vmem [shape: f32[1,384], index: 3, kind: input, shape index: {}]
  %s4 = inlined_call_operand.vmem [shape: f32[1,384], index: 4, kind: input, shape index: {}]
  %s5 = inlined_call_operand.vmem [shape: bf16[16,1536], index: 5, kind: output, shape index: {}]
  %s6 = sld [smem:[#allocation0]]
  $region53: #{build_transformer_forward.16} parent=0
    _
  %s8 = ssub.s32 1, %s6
  %s9 = scalar_select 0, %s8, %s6
  loop: start=0, step=1, limit=4
  $region2: #{build_transformer_forward.16} parent=0 // loop_pre_header
    _
  $region3: #{build_transformer_forward.16} parent=0 // loop_header
    %s11 = sphi 0, %s15
    %p12 = scmp.ge.s32.totalorder %s11, 4
    %s21 = sphi 0, %s23
    %s24 = sphi 0, %s21
    %s25 = sphi 0, %s24
    %s41 = sphi 0, %s25
    %s45 = sphi 0, %s45
    %s47 = sphi 0, %s45
    %s48 = sphi 0, %s47
    %s62 = sphi 0, %s48
    %s66 = sphi 0, %s66
    %s68 = sphi 0, %s66
    %s69 = sphi 0, %s68
    %s83 = sphi 0, %s69
    %s87 = sphi 0, %s87
    %s89 = sphi 0, %s87
    %s90 = sphi 0, %s89
    %s104 = sphi 0, %s90
    %s108 = sphi 0, %s108
    %s110 = sphi 0, %s108
    %s111 = sphi 0, %s110
    %s125 = sphi 0, %s111
    %s131 = sphi 0, %s133
    %s134 = sphi 0, %s131
    %s135 = sphi 0, %s134
    %s151 = sphi 0, %s135
  $region4: #{build_transformer_forward.16} parent=0 // loop_header_branch
    %14 = sbr.rel (%p12) target = $region8
  $region5: #{build_transformer_forward.16} parent=0 // loop_body
    %s16 = ssub.s32 %s11, 1
    %s17 = ssub.s32 %s11, 2
    %s18 = sadd.s32 %s11, 1
    %s19 = ssub.s32 %s11, %s18
    %p20 = scmp.eq.s32.totalorder %s19, 0
    %s22 = sadd.s32 %s21, 1
    %s23 = scalar_select %p20, %s21, %s22
    %p26 = pneg %p20
    %p27 = scmp.eq.s32.totalorder %s11, 1
    %p28 = por %p26, %p27
    %p29 = scmp.ne.s32.totalorder %s21, %s24
    %p30 = scmp.eq.s32.totalorder %s11, 0
    %p31 = por %p29, %p30
    %p32 = scmp.ne.s32.totalorder %s21, %s24
    %p33 = scmp.eq.s32.totalorder %s16, 1
    %p34 = por %p32, %p33
    %p35 = scmp.ne.s32.totalorder %s24, %s25
    %p36 = scmp.eq.s32.totalorder %s16, 0
    %p37 = por %p35, %p36
    %p38 = scmp.ne.s32.totalorder %s24, %s25
    %p39 = scmp.eq.s32.totalorder %s17, 1
    %p40 = por %p38, %p39
    %p42 = scmp.ne.s32.totalorder %s25, %s41
    %p43 = scmp.eq.s32.totalorder %s17, 0
    %p44 = por %p42, %p43
    %s46 = sadd.s32 %s45, 1
    %p49 = scmp.eq.s32.totalorder %s11, 1
    %p50 = scmp.ne.s32.totalorder %s45, %s47
    %p51 = scmp.eq.s32.totalorder %s11, 0
    %p52 = por %p50, %p51
    %p53 = scmp.ne.s32.totalorder %s45, %s47
    %p54 = scmp.eq.s32.totalorder %s16, 1
    %p55 = por %p53, %p54
    %p56 = scmp.ne.s32.totalorder %s47, %s48
    %p57 = scmp.eq.s32.totalorder %s16, 0
    %p58 = por %p56, %p57
    %p59 = scmp.ne.s32.totalorder %s47, %s48
    %p60 = scmp.eq.s32.totalorder %s17, 1
    %p61 = por %p59, %p60
    %p63 = scmp.ne.s32.totalorder %s48, %s62
    %p64 = scmp.eq.s32.totalorder %s17, 0
    %p65 = por %p63, %p64
    %s67 = sadd.s32 %s66, 1
    %p70 = scmp.eq.s32.totalorder %s11, 1
    %p71 = scmp.ne.s32.totalorder %s66, %s68
    %p72 = scmp.eq.s32.totalorder %s11, 0
    %p73 = por %p71, %p72
    %p74 = scmp.ne.s32.totalorder %s66, %s68
    %p75 = scmp.eq.s32.totalorder %s16, 1
    %p76 = por %p74, %p75
    %p77 = scmp.ne.s32.totalorder %s68, %s69
    %p78 = scmp.eq.s32.totalorder %s16, 0
    %p79 = por %p77, %p78
    %p80 = scmp.ne.s32.totalorder %s68, %s69
    %p81 = scmp.eq.s32.totalorder %s17, 1
    %p82 = por %p80, %p81
    %p84 = scmp.ne.s32.totalorder %s69, %s83
    %p85 = scmp.eq.s32.totalorder %s17, 0
    %p86 = por %p84, %p85
    %s88 = sadd.s32 %s87, 1
    %p91 = scmp.eq.s32.totalorder %s11, 1
    %p92 = scmp.ne.s32.totalorder %s87, %s89
    %p93 = scmp.eq.s32.totalorder %s11, 0
    %p94 = por %p92, %p93
    %p95 = scmp.ne.s32.totalorder %s87, %s89
    %p96 = scmp.eq.s32.totalorder %s16, 1
    %p97 = por %p95, %p96
    %p98 = scmp.ne.s32.totalorder %s89, %s90
    %p99 = scmp.eq.s32.totalorder %s16, 0
    %p100 = por %p98, %p99
    %p101 = scmp.ne.s32.totalorder %s89, %s90
    %p102 = scmp.eq.s32.totalorder %s17, 1
    %p103 = por %p101, %p102
    %p105 = scmp.ne.s32.totalorder %s90, %s104
    %p106 = scmp.eq.s32.totalorder %s17, 0
    %p107 = por %p105, %p106
    %s109 = sadd.s32 %s108, 1
    %p112 = scmp.eq.s32.totalorder %s11, 1
    %p113 = scmp.ne.s32.totalorder %s108, %s110
    %p114 = scmp.eq.s32.totalorder %s11, 0
    %p115 = por %p113, %p114
    %p116 = scmp.ne.s32.totalorder %s108, %s110
    %p117 = scmp.eq.s32.totalorder %s16, 1
    %p118 = por %p116, %p117
    %p119 = scmp.ne.s32.totalorder %s110, %s111
    %p120 = scmp.eq.s32.totalorder %s16, 0
    %p121 = por %p119, %p120
    %p122 = scmp.ne.s32.totalorder %s110, %s111
    %p123 = scmp.eq.s32.totalorder %s17, 1
    %p124 = por %p122, %p123
    %p126 = scmp.ne.s32.totalorder %s111, %s125
    %p127 = scmp.eq.s32.totalorder %s17, 0
    %p128 = por %p126, %p127
    %s129 = ssub.s32 %s11, %s18
    %p130 = scmp.eq.s32.totalorder %s129, 0
    %s132 = sadd.s32 %s131, 1
    %s133 = scalar_select %p130, %s131, %s132
    %p136 = pneg %p130
    %p137 = scmp.eq.s32.totalorder %s11, 1
    %p138 = por %p136, %p137
    %p139 = scmp.ne.s32.totalorder %s131, %s134
    %p140 = scmp.eq.s32.totalorder %s11, 0
    %p141 = por %p139, %p140
    %p142 = scmp.ne.s32.totalorder %s131, %s134
    %p143 = scmp.eq.s32.totalorder %s16, 1
    %p144 = por %p142, %p143
    %p145 = scmp.ne.s32.totalorder %s134, %s135
    %p146 = scmp.eq.s32.totalorder %s16, 0
    %p147 = por %p145, %p146
    %p148 = scmp.ne.s32.totalorder %s134, %s135
    %p149 = scmp.eq.s32.totalorder %s17, 1
    %p150 = por %p148, %p149
    %p152 = scmp.ne.s32.totalorder %s135, %s151
    %p153 = scmp.eq.s32.totalorder %s17, 0
    %p154 = por %p152, %p153
    %p155 = scmp.le.s32.totalorder 1, %s11
    %p156 = scmp.lt.s32.totalorder %s11, 3
    %p157 = pnand %p155, %p156
    %p158 = pneg %p157
    // Predicated region
    $region9: #{build_transformer_forward.16} parent=5 // pred_check
      _
    $region10: #{build_transformer_forward.16} parent=5 // pred_check_branch
      %160 = sbr.rel (%p157) target = $region12
    $region11: #{build_transformer_forward.16} parent=5 // pred_region
      %s161 = ssub.s32 %s11, 1
      // Predicated region
      $region13: #{build_transformer_forward.16} parent=11 // pred_check
        %p162 = pneg %p58
      $region14: #{build_transformer_forward.16} parent=11 // pred_check_branch
        %164 = sbr.rel (%p162) target = $region16
      $region15: #{build_transformer_forward.16} parent=11 // pred_region
        _
      $region16: #{build_transformer_forward.16} parent=11 // pred_fallthru
        _
      // Predicated region
      $region17: #{build_transformer_forward.16} parent=11 // pred_check
        %p165 = pneg %p79
      $region18: #{build_transformer_forward.16} parent=11 // pred_check_branch
        %167 = sbr.rel (%p165) target = $region20
      $region19: #{build_transformer_forward.16} parent=11 // pred_region
        _
      $region20: #{build_transformer_forward.16} parent=11 // pred_fallthru
        _
      // Predicated region
      $region21: #{build_transformer_forward.16} parent=11 // pred_check
        %p168 = pneg %p100
      $region22: #{build_transformer_forward.16} parent=11 // pred_check_branch
        %170 = sbr.rel (%p168) target = $region24
      $region23: #{build_transformer_forward.16} parent=11 // pred_region
        _
      $region24: #{build_transformer_forward.16} parent=11 // pred_fallthru
        _
      // Predicated region
      $region25: #{build_transformer_forward.16} parent=11 // pred_check
        %p171 = pneg %p121
      $region26: #{build_transformer_forward.16} parent=11 // pred_check_branch
        %173 = sbr.rel (%p171) target = $region28
      $region27: #{build_transformer_forward.16} parent=11 // pred_region
        _
      $region28: #{build_transformer_forward.16} parent=11 // pred_fallthru
        _
    $region12: #{build_transformer_forward.16} parent=5 // pred_fallthru
      _
    %p174 = scmp.lt.s32.totalorder %s11, 2
    // Predicated region
    $region29: #{build_transformer_forward.16} parent=5 // pred_check
      %p175 = pneg %p174
    $region30: #{build_transformer_forward.16} parent=5 // pred_check_branch
      %177 = sbr.rel (%p175) target = $region32
    $region31: #{build_transformer_forward.16} parent=5 // pred_region
      // Predicated region
      $region33: #{build_transformer_forward.16} parent=31 // pred_check
        %p178 = pneg %p31
      $region34: #{build_transformer_forward.16} parent=31 // pred_check_branch
        %180 = sbr.rel (%p178) target = $region36
      $region35: #{build_transformer_forward.16} parent=31 // pred_region
        %p181 = scmp.lt.s32.totalorder %s11, 1
        %s182 = scalar_select %p181, %s11, 1
        %s183 = smul.addr %s182, 3
        %s184 = smul.addr %s183, 8
        %s185 = scalar_lea.vmem %s0, %s184
      $region36: #{build_transformer_forward.16} parent=31 // pred_fallthru
        _
    $region32: #{build_transformer_forward.16} parent=5 // pred_fallthru
      _
    %p186 = scmp.le.s32.totalorder 1, %s11
    %p187 = scmp.lt.s32.totalorder %s11, 3
    %p188 = pnand %p186, %p187
    %p189 = pneg %p188
    // Predicated region
    $region37: #{build_transformer_forward.16} parent=5 // pred_check
      _
    $region38: #{build_transformer_forward.16} parent=5 // pred_check_branch
      %191 = sbr.rel (%p188) target = $region40
    $region39: #{build_transformer_forward.16} parent=5 // pred_region
      %s192 = ssub.s32 %s11, 1
      %p193 = scmp.lt.s32.totalorder %s16, 1
      %s194 = scalar_select %p193, %s16, 1
      %s195 = smul.addr %s194, 3
      %s196 = smul.addr %s195, 8
      %s197 = scalar_lea.vmem %s0, %s196
      %p198 = pneg %p37
      %p199 = pneg %p34
      %p200 = pneg %p58
      %p201 = pneg %p55
      %p202 = pneg %p79
      %p203 = pneg %p76
      %p204 = pneg %p100
      %p205 = pneg %p97
      %p206 = pneg %p121
      %p207 = pneg %p118
      %p208 = pneg %p147
      %p209 = pneg %p144
      %p210 = scmp.lt.s32.totalorder %s16, 1
      %s211 = scalar_select %p210, %s16, 1
      %s212 = smul.addr %s211, 12
      %s213 = smul.addr %s212, 4
      %s214 = scalar_lea.vmem %s5, %s213
      %p215 = scmp.lt.s32.totalorder %s16, 1
      %s216 = scalar_select %p215, %s16, 1
      %s217 = smul.addr %s216, 3
      %s218 = smul.addr %s217, 8
      %s219 = scalar_lea.vmem %s0, %s218
      %p220 = scmp.lt.s32.totalorder %s16, 1
      %s221 = scalar_select %p220, %s16, 1
      %s222 = smul.addr %s221, 12
      %s223 = smul.addr %s222, 4
      %s224 = scalar_lea.vmem %s5, %s223
      %v230 = vld [vmem:[%s219] sm:$0xff]
      %v231 = vld [vmem:[%s219 + $0x8] sm:$0xff]
      %v232 = vld [vmem:[%s219 + $0x10] sm:$0xff]
      %v233 = vadd.f32 %v230, %v231
      %v234 = vadd.f32 %v233, %v232
      %235 = vadd.xlane.f32.xlu0 %v234
      %v236 = vpop.xlane.xlu0 %235
      %v237 = vrcp.pop 384.0
      %v238 = vmul.f32 %v236, %v237
      %v239 = vsub.f32 %v230, %v238
      %v240 = vsub.f32 %v231, %v238
      %v241 = vsub.f32 %v232, %v238
      %v242 = vmul.f32 %v239, %v239
      %v243 = vmul.f32 %v240, %v240
      %v244 = vmul.f32 %v241, %v241
      %v245 = vadd.f32 %v242, %v243
      %v246 = vadd.f32 %v245, %v244
      %247 = vadd.xlane.f32.xlu0 %v246
      %v248 = vpop.xlane.xlu0 %247
      %v249 = vmul.f32 %v248, %v237
      %v250 = vadd.f32 %v249, 1e-06
      %v251 = vrsqrt.pop %v250
      %v252 = vmul.f32 %v239, %v251
      %v253 = vmul.f32 %v240, %v251
      %v254 = vmul.f32 %v241, %v251
      %v255 = vld [vmem:[%s3] sm:$0x7]
      %v257 = vlaneseq
      %v258 = vshrl.u32 %v257, 7
      %v259 = vsub.s32 0, %v258
      %v260 = vrot.slane %v255, %v259
      %v261 = vlaneseq
      %v262 = vshrl.u32 %v261, 7
      %v263 = vsub.s32 1, %v262
      %v264 = vrot.slane %v255, %v263
      %v265 = vlaneseq
      %v266 = vshrl.u32 %v265, 7
      %v267 = vsub.s32 2, %v266
      %v268 = vrot.slane %v255, %v267
      %v272 = vmul.f32 %v252, %v260
      %v273 = vmul.f32 %v253, %v264
      %v274 = vmul.f32 %v254, %v268
      %v275 = vld [vmem:[%s4] sm:$0x7]
      %v277 = vlaneseq
      %v278 = vshrl.u32 %v277, 7
      %v279 = vsub.s32 0, %v278
      %v280 = vrot.slane %v275, %v279
      %v281 = vlaneseq
      %v282 = vshrl.u32 %v281, 7
      %v283 = vsub.s32 1, %v282
      %v284 = vrot.slane %v275, %v283
      %v285 = vlaneseq
      %v286 = vshrl.u32 %v285, 7
      %v287 = vsub.s32 2, %v286
      %v288 = vrot.slane %v275, %v287
      %v292 = vadd.f32 %v272, %v280
      %v293 = vadd.f32 %v273, %v284
      %v294 = vadd.f32 %v274, %v288
      %v295 = vpack.c.bf16 %v292, %v292
      %v296 = vpack.c.bf16 %v293, %v293
      %v297 = vpack.c.bf16 %v294, %v294
      %v298 = vld [vmem:[%s1] sm:$0xff]
      %v299 = vld [vmem:[%s1 + $0x8] sm:$0xff]
      %v300 = vld [vmem:[%s1 + $0x10] sm:$0xff]
      %v301 = vld [vmem:[%s1 + $0x18] sm:$0xff]
      %v302 = vld [vmem:[%s1 + $0x20] sm:$0xff]
      %v303 = vld [vmem:[%s1 + $0x28] sm:$0xff]
      %v304 = vld [vmem:[%s1 + $0x30] sm:$0xff]
      %v305 = vld [vmem:[%s1 + $0x38] sm:$0xff]
      %v306 = vld [vmem:[%s1 + $0x40] sm:$0xff]
      %v307 = vld [vmem:[%s1 + $0x48] sm:$0xff]
      %v308 = vld [vmem:[%s1 + $0x50] sm:$0xff]
      %v309 = vld [vmem:[%s1 + $0x58] sm:$0xff]
      %v310 = vld [vmem:[%s1 + $0x60] sm:$0xff]
      %v311 = vld [vmem:[%s1 + $0x68] sm:$0xff]
      %v312 = vld [vmem:[%s1 + $0x70] sm:$0xff]
      %v313 = vld [vmem:[%s1 + $0x78] sm:$0xff]
      %v314 = vld [vmem:[%s1 + $0x80] sm:$0xff]
      %v315 = vld [vmem:[%s1 + $0x88] sm:$0xff]
      %v316 = vld [vmem:[%s1 + $0x90] sm:$0xff]
      %v317 = vld [vmem:[%s1 + $0x98] sm:$0xff]
      %v318 = vld [vmem:[%s1 + $0xa0] sm:$0xff]
      %v319 = vld [vmem:[%s1 + $0xa8] sm:$0xff]
      %v320 = vld [vmem:[%s1 + $0xb0] sm:$0xff]
      %v321 = vld [vmem:[%s1 + $0xb8] sm:$0xff]
      %v322 = vld [vmem:[%s1 + $0xc0] sm:$0xff]
      %v323 = vld [vmem:[%s1 + $0xc8] sm:$0xff]
      %v324 = vld [vmem:[%s1 + $0xd0] sm:$0xff]
      %v325 = vld [vmem:[%s1 + $0xd8] sm:$0xff]
      %v326 = vld [vmem:[%s1 + $0xe0] sm:$0xff]
      %v327 = vld [vmem:[%s1 + $0xe8] sm:$0xff]
      %v328 = vld [vmem:[%s1 + $0xf0] sm:$0xff]
      %v329 = vld [vmem:[%s1 + $0xf8] sm:$0xff]
      %v330 = vld [vmem:[%s1 + $0x100] sm:$0xff]
      %v331 = vld [vmem:[%s1 + $0x108] sm:$0xff]
      %v332 = vld [vmem:[%s1 + $0x110] sm:$0xff]
      %v333 = vld [vmem:[%s1 + $0x118] sm:$0xff]
      %v334 = vld [vmem:[%s1 + $0x120] sm:$0xff]
      %v335 = vld [vmem:[%s1 + $0x128] sm:$0xff]
      %v336 = vld [vmem:[%s1 + $0x130] sm:$0xff]
      %v337 = vld [vmem:[%s1 + $0x138] sm:$0xff]
      %v338 = vld [vmem:[%s1 + $0x140] sm:$0xff]
      %v339 = vld [vmem:[%s1 + $0x148] sm:$0xff]
      %v340 = vld [vmem:[%s1 + $0x150] sm:$0xff]
      %v341 = vld [vmem:[%s1 + $0x158] sm:$0xff]
      %v342 = vld [vmem:[%s1 + $0x160] sm:$0xff]
      %v343 = vld [vmem:[%s1 + $0x168] sm:$0xff]
      %v344 = vld [vmem:[%s1 + $0x170] sm:$0xff]
      %v345 = vld [vmem:[%s1 + $0x178] sm:$0xff]
      %v346 = vld [vmem:[%s1 + $0x180] sm:$0xff]
      %v347 = vld [vmem:[%s1 + $0x188] sm:$0xff]
      %v348 = vld [vmem:[%s1 + $0x190] sm:$0xff]
      %v349 = vld [vmem:[%s1 + $0x198] sm:$0xff]
      %v350 = vld [vmem:[%s1 + $0x1a0] sm:$0xff]
      %v351 = vld [vmem:[%s1 + $0x1a8] sm:$0xff]
      %v352 = vld [vmem:[%s1 + $0x1b0] sm:$0xff]
      %v353 = vld [vmem:[%s1 + $0x1b8] sm:$0xff]
      %v354 = vld [vmem:[%s1 + $0x1c0] sm:$0xff]
      %v355 = vld [vmem:[%s1 + $0x1c8] sm:$0xff]
      %v356 = vld [vmem:[%s1 + $0x1d0] sm:$0xff]
      %v357 = vld [vmem:[%s1 + $0x1d8] sm:$0xff]
      %v358 = vld [vmem:[%s1 + $0x1e0] sm:$0xff]
      %v359 = vld [vmem:[%s1 + $0x1e8] sm:$0xff]
      %v360 = vld [vmem:[%s1 + $0x1f0] sm:$0xff]
      %v361 = vld [vmem:[%s1 + $0x1f8] sm:$0xff]
      %v362 = vld [vmem:[%s1 + $0x200] sm:$0xff]
      %v363 = vld [vmem:[%s1 + $0x208] sm:$0xff]
      %v364 = vld [vmem:[%s1 + $0x210] sm:$0xff]
      %v365 = vld [vmem:[%s1 + $0x218] sm:$0xff]
      %v366 = vld [vmem:[%s1 + $0x220] sm:$0xff]
      %v367 = vld [vmem:[%s1 + $0x228] sm:$0xff]
      %v368 = vld [vmem:[%s1 + $0x230] sm:$0xff]
      %v369 = vld [vmem:[%s1 + $0x238] sm:$0xff]
      %v370 = vld [vmem:[%s1 + $0x240] sm:$0xff]
      %v371 = vld [vmem:[%s1 + $0x248] sm:$0xff]
      %v372 = vld [vmem:[%s1 + $0x250] sm:$0xff]
      %v373 = vld [vmem:[%s1 + $0x258] sm:$0xff]
      %v374 = vld [vmem:[%s1 + $0x260] sm:$0xff]
      %v375 = vld [vmem:[%s1 + $0x268] sm:$0xff]
      %v376 = vld [vmem:[%s1 + $0x270] sm:$0xff]
      %v377 = vld [vmem:[%s1 + $0x278] sm:$0xff]
      %v378 = vld [vmem:[%s1 + $0x280] sm:$0xff]
      %v379 = vld [vmem:[%s1 + $0x288] sm:$0xff]
      %v380 = vld [vmem:[%s1 + $0x290] sm:$0xff]
      %v381 = vld [vmem:[%s1 + $0x298] sm:$0xff]
      %v382 = vld [vmem:[%s1 + $0x2a0] sm:$0xff]
      %v383 = vld [vmem:[%s1 + $0x2a8] sm:$0xff]
      %v384 = vld [vmem:[%s1 + $0x2b0] sm:$0xff]
      %v385 = vld [vmem:[%s1 + $0x2b8] sm:$0xff]
      %v386 = vld [vmem:[%s1 + $0x2c0] sm:$0xff]
      %v387 = vld [vmem:[%s1 + $0x2c8] sm:$0xff]
      %v388 = vld [vmem:[%s1 + $0x2d0] sm:$0xff]
      %v389 = vld [vmem:[%s1 + $0x2d8] sm:$0xff]
      %v390 = vld [vmem:[%s1 + $0x2e0] sm:$0xff]
      %v391 = vld [vmem:[%s1 + $0x2e8] sm:$0xff]
      %v392 = vld [vmem:[%s1 + $0x2f0] sm:$0xff]
      %v393 = vld [vmem:[%s1 + $0x2f8] sm:$0xff]
      %v394 = vld [vmem:[%s1 + $0x300] sm:$0xff]
      %v395 = vld [vmem:[%s1 + $0x308] sm:$0xff]
      %v396 = vld [vmem:[%s1 + $0x310] sm:$0xff]
      %v397 = vld [vmem:[%s1 + $0x318] sm:$0xff]
      %v398 = vld [vmem:[%s1 + $0x320] sm:$0xff]
      %v399 = vld [vmem:[%s1 + $0x328] sm:$0xff]
      %v400 = vld [vmem:[%s1 + $0x330] sm:$0xff]
      %v401 = vld [vmem:[%s1 + $0x338] sm:$0xff]
      %v402 = vld [vmem:[%s1 + $0x340] sm:$0xff]
      %v403 = vld [vmem:[%s1 + $0x348] sm:$0xff]
      %v404 = vld [vmem:[%s1 + $0x350] sm:$0xff]
      %v405 = vld [vmem:[%s1 + $0x358] sm:$0xff]
      %v406 = vld [vmem:[%s1 + $0x360] sm:$0xff]
      %v407 = vld [vmem:[%s1 + $0x368] sm:$0xff]
      %v408 = vld [vmem:[%s1 + $0x370] sm:$0xff]
      %v409 = vld [vmem:[%s1 + $0x378] sm:$0xff]
      %v410 = vld [vmem:[%s1 + $0x380] sm:$0xff]
      %v411 = vld [vmem:[%s1 + $0x388] sm:$0xff]
      %v412 = vld [vmem:[%s1 + $0x390] sm:$0xff]
      %v413 = vld [vmem:[%s1 + $0x398] sm:$0xff]
      %v414 = vld [vmem:[%s1 + $0x3a0] sm:$0xff]
      %v415 = vld [vmem:[%s1 + $0x3a8] sm:$0xff]
      %v416 = vld [vmem:[%s1 + $0x3b0] sm:$0xff]
      %v417 = vld [vmem:[%s1 + $0x3b8] sm:$0xff]
      %v418 = vld [vmem:[%s1 + $0x3c0] sm:$0xff]
      %v419 = vld [vmem:[%s1 + $0x3c8] sm:$0xff]
      %v420 = vld [vmem:[%s1 + $0x3d0] sm:$0xff]
      %v421 = vld [vmem:[%s1 + $0x3d8] sm:$0xff]
      %v422 = vld [vmem:[%s1 + $0x3e0] sm:$0xff]
      %v423 = vld [vmem:[%s1 + $0x3e8] sm:$0xff]
      %v424 = vld [vmem:[%s1 + $0x3f0] sm:$0xff]
      %v425 = vld [vmem:[%s1 + $0x3f8] sm:$0xff]
      %v426 = vld [vmem:[%s1 + $0x400] sm:$0xff]
      %v427 = vld [vmem:[%s1 + $0x408] sm:$0xff]
      %v428 = vld [vmem:[%s1 + $0x410] sm:$0xff]
      %v429 = vld [vmem:[%s1 + $0x418] sm:$0xff]
      %v430 = vld [vmem:[%s1 + $0x420] sm:$0xff]
      %v431 = vld [vmem:[%s1 + $0x428] sm:$0xff]
      %v432 = vld [vmem:[%s1 + $0x430] sm:$0xff]
      %v433 = vld [vmem:[%s1 + $0x438] sm:$0xff]
      %v434 = vld [vmem:[%s1 + $0x440] sm:$0xff]
      %v435 = vld [vmem:[%s1 + $0x448] sm:$0xff]
      %v436 = vld [vmem:[%s1 + $0x450] sm:$0xff]
      %v437 = vld [vmem:[%s1 + $0x458] sm:$0xff]
      %v438 = vld [vmem:[%s1 + $0x460] sm:$0xff]
      %v439 = vld [vmem:[%s1 + $0x468] sm:$0xff]
      %v440 = vld [vmem:[%s1 + $0x470] sm:$0xff]
      %v441 = vld [vmem:[%s1 + $0x478] sm:$0xff]
      %v442 = vld [vmem:[%s1 + $0x480] sm:$0xff]
      %v443 = vld [vmem:[%s1 + $0x488] sm:$0xff]
      %v444 = vld [vmem:[%s1 + $0x490] sm:$0xff]
      %v445 = vld [vmem:[%s1 + $0x498] sm:$0xff]
      %v446 = vld [vmem:[%s1 + $0x4a0] sm:$0xff]
      %v447 = vld [vmem:[%s1 + $0x4a8] sm:$0xff]
      %v448 = vld [vmem:[%s1 + $0x4b0] sm:$0xff]
      %v449 = vld [vmem:[%s1 + $0x4b8] sm:$0xff]
      %v450 = vld [vmem:[%s1 + $0x4c0] sm:$0xff]
      %v451 = vld [vmem:[%s1 + $0x4c8] sm:$0xff]
      %v452 = vld [vmem:[%s1 + $0x4d0] sm:$0xff]
      %v453 = vld [vmem:[%s1 + $0x4d8] sm:$0xff]
      %v454 = vld [vmem:[%s1 + $0x4e0] sm:$0xff]
      %v455 = vld [vmem:[%s1 + $0x4e8] sm:$0xff]
      %v456 = vld [vmem:[%s1 + $0x4f0] sm:$0xff]
      %v457 = vld [vmem:[%s1 + $0x4f8] sm:$0xff]
      %v458 = vld [vmem:[%s1 + $0x500] sm:$0xff]
      %v459 = vld [vmem:[%s1 + $0x508] sm:$0xff]
      %v460 = vld [vmem:[%s1 + $0x510] sm:$0xff]
      %v461 = vld [vmem:[%s1 + $0x518] sm:$0xff]
      %v462 = vld [vmem:[%s1 + $0x520] sm:$0xff]
      %v463 = vld [vmem:[%s1 + $0x528] sm:$0xff]
      %v464 = vld [vmem:[%s1 + $0x530] sm:$0xff]
      %v465 = vld [vmem:[%s1 + $0x538] sm:$0xff]
      %v466 = vld [vmem:[%s1 + $0x540] sm:$0xff]
      %v467 = vld [vmem:[%s1 + $0x548] sm:$0xff]
      %v468 = vld [vmem:[%s1 + $0x550] sm:$0xff]
      %v469 = vld [vmem:[%s1 + $0x558] sm:$0xff]
      %v470 = vld [vmem:[%s1 + $0x560] sm:$0xff]
      %v471 = vld [vmem:[%s1 + $0x568] sm:$0xff]
      %v472 = vld [vmem:[%s1 + $0x570] sm:$0xff]
      %v473 = vld [vmem:[%s1 + $0x578] sm:$0xff]
      %v474 = vld [vmem:[%s1 + $0x580] sm:$0xff]
      %v475 = vld [vmem:[%s1 + $0x588] sm:$0xff]
      %v476 = vld [vmem:[%s1 + $0x590] sm:$0xff]
      %v477 = vld [vmem:[%s1 + $0x598] sm:$0xff]
      %v478 = vld [vmem:[%s1 + $0x5a0] sm:$0xff]
      %v479 = vld [vmem:[%s1 + $0x5a8] sm:$0xff]
      %v480 = vld [vmem:[%s1 + $0x5b0] sm:$0xff]
      %v481 = vld [vmem:[%s1 + $0x5b8] sm:$0xff]
      %v482 = vld [vmem:[%s1 + $0x5c0] sm:$0xff]
      %v483 = vld [vmem:[%s1 + $0x5c8] sm:$0xff]
      %v484 = vld [vmem:[%s1 + $0x5d0] sm:$0xff]
      %v485 = vld [vmem:[%s1 + $0x5d8] sm:$0xff]
      %v486 = vld [vmem:[%s1 + $0x5e0] sm:$0xff]
      %v487 = vld [vmem:[%s1 + $0x5e8] sm:$0xff]
      %v488 = vld [vmem:[%s1 + $0x5f0] sm:$0xff]
      %v489 = vld [vmem:[%s1 + $0x5f8] sm:$0xff]
      %v490 = vld [vmem:[%s1 + $0x600] sm:$0xff]
      %v491 = vld [vmem:[%s1 + $0x608] sm:$0xff]
      %v492 = vld [vmem:[%s1 + $0x610] sm:$0xff]
      %v493 = vld [vmem:[%s1 + $0x618] sm:$0xff]
      %v494 = vld [vmem:[%s1 + $0x620] sm:$0xff]
      %v495 = vld [vmem:[%s1 + $0x628] sm:$0xff]
      %v496 = vld [vmem:[%s1 + $0x630] sm:$0xff]
      %v497 = vld [vmem:[%s1 + $0x638] sm:$0xff]
      %v498 = vld [vmem:[%s1 + $0x640] sm:$0xff]
      %v499 = vld [vmem:[%s1 + $0x648] sm:$0xff]
      %v500 = vld [vmem:[%s1 + $0x650] sm:$0xff]
      %v501 = vld [vmem:[%s1 + $0x658] sm:$0xff]
      %v502 = vld [vmem:[%s1 + $0x660] sm:$0xff]
      %v503 = vld [vmem:[%s1 + $0x668] sm:$0xff]
      %v504 = vld [vmem:[%s1 + $0x670] sm:$0xff]
      %v505 = vld [vmem:[%s1 + $0x678] sm:$0xff]
      %v506 = vld [vmem:[%s1 + $0x680] sm:$0xff]
      %v507 = vld [vmem:[%s1 + $0x688] sm:$0xff]
      %v508 = vld [vmem:[%s1 + $0x690] sm:$0xff]
      %v509 = vld [vmem:[%s1 + $0x698] sm:$0xff]
      %v510 = vld [vmem:[%s1 + $0x6a0] sm:$0xff]
      %v511 = vld [vmem:[%s1 + $0x6a8] sm:$0xff]
      %v512 = vld [vmem:[%s1 + $0x6b0] sm:$0xff]
      %v513 = vld [vmem:[%s1 + $0x6b8] sm:$0xff]
      %v514 = vld [vmem:[%s1 + $0x6c0] sm:$0xff]
      %v515 = vld [vmem:[%s1 + $0x6c8] sm:$0xff]
      %v516 = vld [vmem:[%s1 + $0x6d0] sm:$0xff]
      %v517 = vld [vmem:[%s1 + $0x6d8] sm:$0xff]
      %v518 = vld [vmem:[%s1 + $0x6e0] sm:$0xff]
      %v519 = vld [vmem:[%s1 + $0x6e8] sm:$0xff]
      %v520 = vld [vmem:[%s1 + $0x6f0] sm:$0xff]
      %v521 = vld [vmem:[%s1 + $0x6f8] sm:$0xff]
      %v522 = vld [vmem:[%s1 + $0x700] sm:$0xff]
      %v523 = vld [vmem:[%s1 + $0x708] sm:$0xff]
      %v524 = vld [vmem:[%s1 + $0x710] sm:$0xff]
      %v525 = vld [vmem:[%s1 + $0x718] sm:$0xff]
      %v526 = vld [vmem:[%s1 + $0x720] sm:$0xff]
      %v527 = vld [vmem:[%s1 + $0x728] sm:$0xff]
      %v528 = vld [vmem:[%s1 + $0x730] sm:$0xff]
      %v529 = vld [vmem:[%s1 + $0x738] sm:$0xff]
      %v530 = vld [vmem:[%s1 + $0x740] sm:$0xff]
      %v531 = vld [vmem:[%s1 + $0x748] sm:$0xff]
      %v532 = vld [vmem:[%s1 + $0x750] sm:$0xff]
      %v533 = vld [vmem:[%s1 + $0x758] sm:$0xff]
      %v534 = vld [vmem:[%s1 + $0x760] sm:$0xff]
      %v535 = vld [vmem:[%s1 + $0x768] sm:$0xff]
      %v536 = vld [vmem:[%s1 + $0x770] sm:$0xff]
      %v537 = vld [vmem:[%s1 + $0x778] sm:$0xff]
      %v538 = vld [vmem:[%s1 + $0x780] sm:$0xff]
      %v539 = vld [vmem:[%s1 + $0x788] sm:$0xff]
      %v540 = vld [vmem:[%s1 + $0x790] sm:$0xff]
      %v541 = vld [vmem:[%s1 + $0x798] sm:$0xff]
      %v542 = vld [vmem:[%s1 + $0x7a0] sm:$0xff]
      %v543 = vld [vmem:[%s1 + $0x7a8] sm:$0xff]
      %v544 = vld [vmem:[%s1 + $0x7b0] sm:$0xff]
      %v545 = vld [vmem:[%s1 + $0x7b8] sm:$0xff]
      %v546 = vld [vmem:[%s1 + $0x7c0] sm:$0xff]
      %v547 = vld [vmem:[%s1 + $0x7c8] sm:$0xff]
      %v548 = vld [vmem:[%s1 + $0x7d0] sm:$0xff]
      %v549 = vld [vmem:[%s1 + $0x7d8] sm:$0xff]
      %v550 = vld [vmem:[%s1 + $0x7e0] sm:$0xff]
      %v551 = vld [vmem:[%s1 + $0x7e8] sm:$0xff]
      %v552 = vld [vmem:[%s1 + $0x7f0] sm:$0xff]
      %v553 = vld [vmem:[%s1 + $0x7f8] sm:$0xff]
      %v554 = vld [vmem:[%s1 + $0x800] sm:$0xff]
      %v555 = vld [vmem:[%s1 + $0x808] sm:$0xff]
      %v556 = vld [vmem:[%s1 + $0x810] sm:$0xff]
      %v557 = vld [vmem:[%s1 + $0x818] sm:$0xff]
      %v558 = vld [vmem:[%s1 + $0x820] sm:$0xff]
      %v559 = vld [vmem:[%s1 + $0x828] sm:$0xff]
      %v560 = vld [vmem:[%s1 + $0x830] sm:$0xff]
      %v561 = vld [vmem:[%s1 + $0x838] sm:$0xff]
      %v562 = vld [vmem:[%s1 + $0x840] sm:$0xff]
      %v563 = vld [vmem:[%s1 + $0x848] sm:$0xff]
      %v564 = vld [vmem:[%s1 + $0x850] sm:$0xff]
      %v565 = vld [vmem:[%s1 + $0x858] sm:$0xff]
      %v566 = vld [vmem:[%s1 + $0x860] sm:$0xff]
      %v567 = vld [vmem:[%s1 + $0x868] sm:$0xff]
      %v568 = vld [vmem:[%s1 + $0x870] sm:$0xff]
      %v569 = vld [vmem:[%s1 + $0x878] sm:$0xff]
      %v570 = vld [vmem:[%s1 + $0x880] sm:$0xff]
      %v571 = vld [vmem:[%s1 + $0x888] sm:$0xff]
      %v572 = vld [vmem:[%s1 + $0x890] sm:$0xff]
      %v573 = vld [vmem:[%s1 + $0x898] sm:$0xff]
      %v574 = vld [vmem:[%s1 + $0x8a0] sm:$0xff]
      %v575 = vld [vmem:[%s1 + $0x8a8] sm:$0xff]
      %v576 = vld [vmem:[%s1 + $0x8b0] sm:$0xff]
      %v577 = vld [vmem:[%s1 + $0x8b8] sm:$0xff]
      %v578 = vld [vmem:[%s1 + $0x8c0] sm:$0xff]
      %v579 = vld [vmem:[%s1 + $0x8c8] sm:$0xff]
      %v580 = vld [vmem:[%s1 + $0x8d0] sm:$0xff]
      %v581 = vld [vmem:[%s1 + $0x8d8] sm:$0xff]
      %v582 = vld [vmem:[%s1 + $0x8e0] sm:$0xff]
      %v583 = vld [vmem:[%s1 + $0x8e8] sm:$0xff]
      %v584 = vld [vmem:[%s1 + $0x8f0] sm:$0xff]
      %v585 = vld [vmem:[%s1 + $0x8f8] sm:$0xff]
      %v586 = vld [vmem:[%s2] sm:$0xff]
      %v587 = vld [vmem:[%s2 + $0x8] sm:$0xf]
      %v590 = vlaneseq
      %v591 = vshrl.u32 %v590, 7
      %v592 = vsub.s32 0, %v591
      %v593 = vrot.slane %v586, %v592
      %v594 = vlaneseq
      %v595 = vshrl.u32 %v594, 7
      %v596 = vsub.s32 1, %v595
      %v597 = vrot.slane %v586, %v596
      %v598 = vlaneseq
      %v599 = vshrl.u32 %v598, 7
      %v600 = vsub.s32 2, %v599
      %v601 = vrot.slane %v586, %v600
      %v602 = vlaneseq
      %v603 = vshrl.u32 %v602, 7
      %v604 = vsub.s32 3, %v603
      %v605 = vrot.slane %v586, %v604
      %v606 = vlaneseq
      %v607 = vshrl.u32 %v606, 7
      %v608 = vsub.s32 4, %v607
      %v609 = vrot.slane %v586, %v608
      %v610 = vlaneseq
      %v611 = vshrl.u32 %v610, 7
      %v612 = vsub.s32 5, %v611
      %v613 = vrot.slane %v586, %v612
      %v614 = vlaneseq
      %v615 = vshrl.u32 %v614, 7
      %v616 = vsub.s32 6, %v615
      %v617 = vrot.slane %v586, %v616
      %v618 = vlaneseq
      %v619 = vshrl.u32 %v618, 7
      %v620 = vsub.s32 7, %v619
      %v621 = vrot.slane %v586, %v620
      %v622 = vlaneseq
      %v623 = vshrl.u32 %v622, 7
      %v624 = vsub.s32 0, %v623
      %v625 = vrot.slane %v587, %v624
      %v626 = vlaneseq
      %v627 = vshrl.u32 %v626, 7
      %v628 = vsub.s32 1, %v627
      %v629 = vrot.slane %v587, %v628
      %v630 = vlaneseq
      %v631 = vshrl.u32 %v630, 7
      %v632 = vsub.s32 2, %v631
      %v633 = vrot.slane %v587, %v632
      %v634 = vlaneseq
      %v635 = vshrl.u32 %v634, 7
      %v636 = vsub.s32 3, %v635
      %v637 = vrot.slane %v587, %v636
      %v938 = vunpack.c.l.b16 %v298
      %v939 = vunpack.c.h.b16 %v298
      %v940 = vunpack.c.l.b16 %v299
      %v941 = vunpack.c.h.b16 %v299
      %v942 = vunpack.c.l.b16 %v300
      %v943 = vunpack.c.h.b16 %v300
      %v944 = vunpack.c.l.b16 %v301
      %v945 = vunpack.c.h.b16 %v301
      %v946 = vunpack.c.l.b16 %v302
      %v947 = vunpack.c.h.b16 %v302
      %v948 = vunpack.c.l.b16 %v303
      %v949 = vunpack.c.h.b16 %v303
      %v950 = vunpack.c.l.b16 %v304
      %v951 = vunpack.c.h.b16 %v304
      %v952 = vunpack.c.l.b16 %v305
      %v953 = vunpack.c.h.b16 %v305
      %v954 = vunpack.c.l.b16 %v306
      %v955 = vunpack.c.h.b16 %v306
      %v956 = vunpack.c.l.b16 %v307
      %v957 = vunpack.c.h.b16 %v307
      %v958 = vunpack.c.l.b16 %v308
      %v959 = vunpack.c.h.b16 %v308
      %v960 = vunpack.c.l.b16 %v309
      %v961 = vunpack.c.h.b16 %v309
      %v962 = vunpack.c.l.b16 %v310
      %v963 = vunpack.c.h.b16 %v310
      %v964 = vunpack.c.l.b16 %v311
      %v965 = vunpack.c.h.b16 %v311
      %v966 = vunpack.c.l.b16 %v312
      %v967 = vunpack.c.h.b16 %v312
      %v968 = vunpack.c.l.b16 %v313
      %v969 = vunpack.c.h.b16 %v313
      %v970 = vunpack.c.l.b16 %v314
      %v971 = vunpack.c.h.b16 %v314
      %v972 = vunpack.c.l.b16 %v315
      %v973 = vunpack.c.h.b16 %v315
      %v974 = vunpack.c.l.b16 %v316
      %v975 = vunpack.c.h.b16 %v316
      %v976 = vunpack.c.l.b16 %v317
      %v977 = vunpack.c.h.b16 %v317
      %v978 = vunpack.c.l.b16 %v318
      %v979 = vunpack.c.h.b16 %v318
      %v980 = vunpack.c.l.b16 %v319
      %v981 = vunpack.c.h.b16 %v319
      %v982 = vunpack.c.l.b16 %v320
      %v983 = vunpack.c.h.b16 %v320
      %v984 = vunpack.c.l.b16 %v321
      %v985 = vunpack.c.h.b16 %v321
      %v986 = vunpack.c.l.b16 %v322
      %v987 = vunpack.c.h.b16 %v322
      %v988 = vunpack.c.l.b16 %v323
      %v989 = vunpack.c.h.b16 %v323
      %v990 = vunpack.c.l.b16 %v324
      %v991 = vunpack.c.h.b16 %v324
      %v992 = vunpack.c.l.b16 %v325
      %v993 = vunpack.c.h.b16 %v325
      %v994 = vunpack.c.l.b16 %v326
      %v995 = vunpack.c.h.b16 %v326
      %v996 = vunpack.c.l.b16 %v327
      %v997 = vunpack.c.h.b16 %v327
      %v998 = vunpack.c.l.b16 %v328
      %v999 = vunpack.c.h.b16 %v328
      %v1000 = vunpack.c.l.b16 %v329
      %v1001 = vunpack.c.h.b16 %v329
      %v1002 = vunpack.c.l.b16 %v330
      %v1003 = vunpack.c.h.b16 %v330
      %v1004 = vunpack.c.l.b16 %v331
      %v1005 = vunpack.c.h.b16 %v331
      %v1006 = vunpack.c.l.b16 %v332
      %v1007 = vunpack.c.h.b16 %v332
      %v1008 = vunpack.c.l.b16 %v333
      %v1009 = vunpack.c.h.b16 %v333
      %v1010 = vunpack.c.l.b16 %v334
      %v1011 = vunpack.c.h.b16 %v334
      %v1012 = vunpack.c.l.b16 %v335
      %v1013 = vunpack.c.h.b16 %v335
      %v1014 = vunpack.c.l.b16 %v336
      %v1015 = vunpack.c.h.b16 %v336
      %v1016 = vunpack.c.l.b16 %v337
      %v1017 = vunpack.c.h.b16 %v337
      %v1018 = vunpack.c.l.b16 %v338
      %v1019 = vunpack.c.h.b16 %v338
      %v1020 = vunpack.c.l.b16 %v339
      %v1021 = vunpack.c.h.b16 %v339
      %v1022 = vunpack.c.l.b16 %v340
      %v1023 = vunpack.c.h.b16 %v340
      %v1024 = vunpack.c.l.b16 %v341
      %v1025 = vunpack.c.h.b16 %v341
      %v1026 = vunpack.c.l.b16 %v342
      %v1027 = vunpack.c.h.b16 %v342
      %v1028 = vunpack.c.l.b16 %v343
      %v1029 = vunpack.c.h.b16 %v343
      %v1030 = vunpack.c.l.b16 %v344
      %v1031 = vunpack.c.h.b16 %v344
      %v1032 = vunpack.c.l.b16 %v345
      %v1033 = vunpack.c.h.b16 %v345
      %v1034 = vunpack.c.l.b16 %v346
      %v1035 = vunpack.c.h.b16 %v346
      %v1036 = vunpack.c.l.b16 %v347
      %v1037 = vunpack.c.h.b16 %v347
      %v1038 = vunpack.c.l.b16 %v348
      %v1039 = vunpack.c.h.b16 %v348
      %v1040 = vunpack.c.l.b16 %v349
      %v1041 = vunpack.c.h.b16 %v349
      %v1042 = vunpack.c.l.b16 %v350
      %v1043 = vunpack.c.h.b16 %v350
      %v1044 = vunpack.c.l.b16 %v351
      %v1045 = vunpack.c.h.b16 %v351
      %v1046 = vunpack.c.l.b16 %v352
      %v1047 = vunpack.c.h.b16 %v352
      %v1048 = vunpack.c.l.b16 %v353
      %v1049 = vunpack.c.h.b16 %v353
      %v1050 = vunpack.c.l.b16 %v354
      %v1051 = vunpack.c.h.b16 %v354
      %v1052 = vunpack.c.l.b16 %v355
      %v1053 = vunpack.c.h.b16 %v355
      %v1054 = vunpack.c.l.b16 %v356
      %v1055 = vunpack.c.h.b16 %v356
      %v1056 = vunpack.c.l.b16 %v357
      %v1057 = vunpack.c.h.b16 %v357
      %v1058 = vunpack.c.l.b16 %v358
      %v1059 = vunpack.c.h.b16 %v358
      %v1060 = vunpack.c.l.b16 %v359
      %v1061 = vunpack.c.h.b16 %v359
      %v1062 = vunpack.c.l.b16 %v360
      %v1063 = vunpack.c.h.b16 %v360
      %v1064 = vunpack.c.l.b16 %v361
      %v1065 = vunpack.c.h.b16 %v361
      %v1066 = vunpack.c.l.b16 %v362
      %v1067 = vunpack.c.h.b16 %v362
      %v1068 = vunpack.c.l.b16 %v363
      %v1069 = vunpack.c.h.b16 %v363
      %v1070 = vunpack.c.l.b16 %v364
      %v1071 = vunpack.c.h.b16 %v364
      %v1072 = vunpack.c.l.b16 %v365
      %v1073 = vunpack.c.h.b16 %v365
      %v1074 = vunpack.c.l.b16 %v366
      %v1075 = vunpack.c.h.b16 %v366
      %v1076 = vunpack.c.l.b16 %v367
      %v1077 = vunpack.c.h.b16 %v367
      %v1078 = vunpack.c.l.b16 %v368
      %v1079 = vunpack.c.h.b16 %v368
      %v1080 = vunpack.c.l.b16 %v369
      %v1081 = vunpack.c.h.b16 %v369
      %v1082 = vunpack.c.l.b16 %v370
      %v1083 = vunpack.c.h.b16 %v370
      %v1084 = vunpack.c.l.b16 %v371
      %v1085 = vunpack.c.h.b16 %v371
      %v1086 = vunpack.c.l.b16 %v372
      %v1087 = vunpack.c.h.b16 %v372
      %v1088 = vunpack.c.l.b16 %v373
      %v1089 = vunpack.c.h.b16 %v373
      %v1090 = vunpack.c.l.b16 %v374
      %v1091 = vunpack.c.h.b16 %v374
      %v1092 = vunpack.c.l.b16 %v375
      %v1093 = vunpack.c.h.b16 %v375
      %v1094 = vunpack.c.l.b16 %v376
      %v1095 = vunpack.c.h.b16 %v376
      %v1096 = vunpack.c.l.b16 %v377
      %v1097 = vunpack.c.h.b16 %v377
      %v1098 = vunpack.c.l.b16 %v378
      %v1099 = vunpack.c.h.b16 %v378
      %v1100 = vunpack.c.l.b16 %v379
      %v1101 = vunpack.c.h.b16 %v379
      %v1102 = vunpack.c.l.b16 %v380
      %v1103 = vunpack.c.h.b16 %v380
      %v1104 = vunpack.c.l.b16 %v381
      %v1105 = vunpack.c.h.b16 %v381
      %v1106 = vunpack.c.l.b16 %v382
      %v1107 = vunpack.c.h.b16 %v382
      %v1108 = vunpack.c.l.b16 %v383
      %v1109 = vunpack.c.h.b16 %v383
      %v1110 = vunpack.c.l.b16 %v384
      %v1111 = vunpack.c.h.b16 %v384
      %v1112 = vunpack.c.l.b16 %v385
      %v1113 = vunpack.c.h.b16 %v385
      %v1114 = vunpack.c.l.b16 %v386
      %v1115 = vunpack.c.h.b16 %v386
      %v1116 = vunpack.c.l.b16 %v387
      %v1117 = vunpack.c.h.b16 %v387
      %v1118 = vunpack.c.l.b16 %v388
      %v1119 = vunpack.c.h.b16 %v388
      %v1120 = vunpack.c.l.b16 %v389
      %v1121 = vunpack.c.h.b16 %v389
      %v1122 = vunpack.c.l.b16 %v390
      %v1123 = vunpack.c.h.b16 %v390
      %v1124 = vunpack.c.l.b16 %v391
      %v1125 = vunpack.c.h.b16 %v391
      %v1126 = vunpack.c.l.b16 %v392
      %v1127 = vunpack.c.h.b16 %v392
      %v1128 = vunpack.c.l.b16 %v393
      %v1129 = vunpack.c.h.b16 %v393
      %v1130 = vunpack.c.l.b16 %v394
      %v1131 = vunpack.c.h.b16 %v394
      %v1132 = vunpack.c.l.b16 %v395
      %v1133 = vunpack.c.h.b16 %v395
      %v1134 = vunpack.c.l.b16 %v396
      %v1135 = vunpack.c.h.b16 %v396
      %v1136 = vunpack.c.l.b16 %v397
      %v1137 = vunpack.c.h.b16 %v397
      %v1138 = vunpack.c.l.b16 %v398
      %v1139 = vunpack.c.h.b16 %v398
      %v1140 = vunpack.c.l.b16 %v399
      %v1141 = vunpack.c.h.b16 %v399
      %v1142 = vunpack.c.l.b16 %v400
      %v1143 = vunpack.c.h.b16 %v400
      %v1144 = vunpack.c.l.b16 %v401
      %v1145 = vunpack.c.h.b16 %v401
      %v1146 = vunpack.c.l.b16 %v402
      %v1147 = vunpack.c.h.b16 %v402
      %v1148 = vunpack.c.l.b16 %v403
      %v1149 = vunpack.c.h.b16 %v403
      %v1150 = vunpack.c.l.b16 %v404
      %v1151 = vunpack.c.h.b16 %v404
      %v1152 = vunpack.c.l.b16 %v405
      %v1153 = vunpack.c.h.b16 %v405
      %v1154 = vunpack.c.l.b16 %v406
      %v1155 = vunpack.c.h.b16 %v406
      %v1156 = vunpack.c.l.b16 %v407
      %v1157 = vunpack.c.h.b16 %v407
      %v1158 = vunpack.c.l.b16 %v408
      %v1159 = vunpack.c.h.b16 %v408
      %v1160 = vunpack.c.l.b16 %v409
      %v1161 = vunpack.c.h.b16 %v409
      %v1162 = vunpack.c.l.b16 %v410
      %v1163 = vunpack.c.h.b16 %v410
      %v1164 = vunpack.c.l.b16 %v411
      %v1165 = vunpack.c.h.b16 %v411
      %v1166 = vunpack.c.l.b16 %v412
      %v1167 = vunpack.c.h.b16 %v412
      %v1168 = vunpack.c.l.b16 %v413
      %v1169 = vunpack.c.h.b16 %v413
      %v1170 = vunpack.c.l.b16 %v414
      %v1171 = vunpack.c.h.b16 %v414
      %v1172 = vunpack.c.l.b16 %v415
      %v1173 = vunpack.c.h.b16 %v415
      %v1174 = vunpack.c.l.b16 %v416
      %v1175 = vunpack.c.h.b16 %v416
      %v1176 = vunpack.c.l.b16 %v417
      %v1177 = vunpack.c.h.b16 %v417
      %v1178 = vunpack.c.l.b16 %v418
      %v1179 = vunpack.c.h.b16 %v418
      %v1180 = vunpack.c.l.b16 %v419
      %v1181 = vunpack.c.h.b16 %v419
      %v1182 = vunpack.c.l.b16 %v420
      %v1183 = vunpack.c.h.b16 %v420
      %v1184 = vunpack.c.l.b16 %v421
      %v1185 = vunpack.c.h.b16 %v421
      %v1186 = vunpack.c.l.b16 %v422
      %v1187 = vunpack.c.h.b16 %v422
      %v1188 = vunpack.c.l.b16 %v423
      %v1189 = vunpack.c.h.b16 %v423
      %v1190 = vunpack.c.l.b16 %v424
      %v1191 = vunpack.c.h.b16 %v424
      %v1192 = vunpack.c.l.b16 %v425
      %v1193 = vunpack.c.h.b16 %v425
      %v1194 = vunpack.c.l.b16 %v426
      %v1195 = vunpack.c.h.b16 %v426
      %v1196 = vunpack.c.l.b16 %v427
      %v1197 = vunpack.c.h.b16 %v427
      %v1198 = vunpack.c.l.b16 %v428
      %v1199 = vunpack.c.h.b16 %v428
      %v1200 = vunpack.c.l.b16 %v429
      %v1201 = vunpack.c.h.b16 %v429
      %v1202 = vunpack.c.l.b16 %v430
      %v1203 = vunpack.c.h.b16 %v430
      %v1204 = vunpack.c.l.b16 %v431
      %v1205 = vunpack.c.h.b16 %v431
      %v1206 = vunpack.c.l.b16 %v432
      %v1207 = vunpack.c.h.b16 %v432
      %v1208 = vunpack.c.l.b16 %v433
      %v1209 = vunpack.c.h.b16 %v433
      %v1210 = vunpack.c.l.b16 %v434
      %v1211 = vunpack.c.h.b16 %v434
      %v1212 = vunpack.c.l.b16 %v435
      %v1213 = vunpack.c.h.b16 %v435
      %v1214 = vunpack.c.l.b16 %v436
      %v1215 = vunpack.c.h.b16 %v436
      %v1216 = vunpack.c.l.b16 %v437
      %v1217 = vunpack.c.h.b16 %v437
      %v1218 = vunpack.c.l.b16 %v438
      %v1219 = vunpack.c.h.b16 %v438
      %v1220 = vunpack.c.l.b16 %v439
      %v1221 = vunpack.c.h.b16 %v439
      %v1222 = vunpack.c.l.b16 %v440
      %v1223 = vunpack.c.h.b16 %v440
      %v1224 = vunpack.c.l.b16 %v441
      %v1225 = vunpack.c.h.b16 %v441
      %v1226 = vunpack.c.l.b16 %v442
      %v1227 = vunpack.c.h.b16 %v442
      %v1228 = vunpack.c.l.b16 %v443
      %v1229 = vunpack.c.h.b16 %v443
      %v1230 = vunpack.c.l.b16 %v444
      %v1231 = vunpack.c.h.b16 %v444
      %v1232 = vunpack.c.l.b16 %v445
      %v1233 = vunpack.c.h.b16 %v445
      %v1234 = vunpack.c.l.b16 %v446
      %v1235 = vunpack.c.h.b16 %v446
      %v1236 = vunpack.c.l.b16 %v447
      %v1237 = vunpack.c.h.b16 %v447
      %v1238 = vunpack.c.l.b16 %v448
      %v1239 = vunpack.c.h.b16 %v448
      %v1240 = vunpack.c.l.b16 %v449
      %v1241 = vunpack.c.h.b16 %v449
      %v1242 = vunpack.c.l.b16 %v450
      %v1243 = vunpack.c.h.b16 %v450
      %v1244 = vunpack.c.l.b16 %v451
      %v1245 = vunpack.c.h.b16 %v451
      %v1246 = vunpack.c.l.b16 %v452
      %v1247 = vunpack.c.h.b16 %v452
      %v1248 = vunpack.c.l.b16 %v453
      %v1249 = vunpack.c.h.b16 %v453
      %v1250 = vunpack.c.l.b16 %v454
      %v1251 = vunpack.c.h.b16 %v454
      %v1252 = vunpack.c.l.b16 %v455
      %v1253 = vunpack.c.h.b16 %v455
      %v1254 = vunpack.c.l.b16 %v456
      %v1255 = vunpack.c.h.b16 %v456
      %v1256 = vunpack.c.l.b16 %v457
      %v1257 = vunpack.c.h.b16 %v457
      %v1258 = vunpack.c.l.b16 %v458
      %v1259 = vunpack.c.h.b16 %v458
      %v1260 = vunpack.c.l.b16 %v459
      %v1261 = vunpack.c.h.b16 %v459
      %v1262 = vunpack.c.l.b16 %v460
      %v1263 = vunpack.c.h.b16 %v460
      %v1264 = vunpack.c.l.b16 %v461
      %v1265 = vunpack.c.h.b16 %v461
      %v1266 = vunpack.c.l.b16 %v462
      %v1267 = vunpack.c.h.b16 %v462
      %v1268 = vunpack.c.l.b16 %v463
      %v1269 = vunpack.c.h.b16 %v463
      %v1270 = vunpack.c.l.b16 %v464
      %v1271 = vunpack.c.h.b16 %v464
      %v1272 = vunpack.c.l.b16 %v465
      %v1273 = vunpack.c.h.b16 %v465
      %v1274 = vunpack.c.l.b16 %v466
      %v1275 = vunpack.c.h.b16 %v466
      %v1276 = vunpack.c.l.b16 %v467
      %v1277 = vunpack.c.h.b16 %v467
      %v1278 = vunpack.c.l.b16 %v468
      %v1279 = vunpack.c.h.b16 %v468
      %v1280 = vunpack.c.l.b16 %v469
      %v1281 = vunpack.c.h.b16 %v469
      %v1282 = vunpack.c.l.b16 %v470
      %v1283 = vunpack.c.h.b16 %v470
      %v1284 = vunpack.c.l.b16 %v471
      %v1285 = vunpack.c.h.b16 %v471
      %v1286 = vunpack.c.l.b16 %v472
      %v1287 = vunpack.c.h.b16 %v472
      %v1288 = vunpack.c.l.b16 %v473
      %v1289 = vunpack.c.h.b16 %v473
      %v1290 = vunpack.c.l.b16 %v474
      %v1291 = vunpack.c.h.b16 %v474
      %v1292 = vunpack.c.l.b16 %v475
      %v1293 = vunpack.c.h.b16 %v475
      %v1294 = vunpack.c.l.b16 %v476
      %v1295 = vunpack.c.h.b16 %v476
      %v1296 = vunpack.c.l.b16 %v477
      %v1297 = vunpack.c.h.b16 %v477
      %v1298 = vunpack.c.l.b16 %v478
      %v1299 = vunpack.c.h.b16 %v478
      %v1300 = vunpack.c.l.b16 %v479
      %v1301 = vunpack.c.h.b16 %v479
      %v1302 = vunpack.c.l.b16 %v480
      %v1303 = vunpack.c.h.b16 %v480
      %v1304 = vunpack.c.l.b16 %v481
      %v1305 = vunpack.c.h.b16 %v481
      %v1306 = vunpack.c.l.b16 %v482
      %v1307 = vunpack.c.h.b16 %v482
      %v1308 = vunpack.c.l.b16 %v483
      %v1309 = vunpack.c.h.b16 %v483
      %v1310 = vunpack.c.l.b16 %v484
      %v1311 = vunpack.c.h.b16 %v484
      %v1312 = vunpack.c.l.b16 %v485
      %v1313 = vunpack.c.h.b16 %v485
      %v1314 = vunpack.c.l.b16 %v486
      %v1315 = vunpack.c.h.b16 %v486
      %v1316 = vunpack.c.l.b16 %v487
      %v1317 = vunpack.c.h.b16 %v487
      %v1318 = vunpack.c.l.b16 %v488
      %v1319 = vunpack.c.h.b16 %v488
      %v1320 = vunpack.c.l.b16 %v489
      %v1321 = vunpack.c.h.b16 %v489
      %v1322 = vunpack.c.l.b16 %v490
      %v1323 = vunpack.c.h.b16 %v490
      %v1324 = vunpack.c.l.b16 %v491
      %v1325 = vunpack.c.h.b16 %v491
      %v1326 = vunpack.c.l.b16 %v492
      %v1327 = vunpack.c.h.b16 %v492
      %v1328 = vunpack.c.l.b16 %v493
      %v1329 = vunpack.c.h.b16 %v493
      %v1330 = vunpack.c.l.b16 %v494
      %v1331 = vunpack.c.h.b16 %v494
      %v1332 = vunpack.c.l.b16 %v495
      %v1333 = vunpack.c.h.b16 %v495
      %v1334 = vunpack.c.l.b16 %v496
      %v1335 = vunpack.c.h.b16 %v496
      %v1336 = vunpack.c.l.b16 %v497
      %v1337 = vunpack.c.h.b16 %v497
      %v1338 = vunpack.c.l.b16 %v498
      %v1339 = vunpack.c.h.b16 %v498
      %v1340 = vunpack.c.l.b16 %v499
      %v1341 = vunpack.c.h.b16 %v499
      %v1342 = vunpack.c.l.b16 %v500
      %v1343 = vunpack.c.h.b16 %v500
      %v1344 = vunpack.c.l.b16 %v501
      %v1345 = vunpack.c.h.b16 %v501
      %v1346 = vunpack.c.l.b16 %v502
      %v1347 = vunpack.c.h.b16 %v502
      %v1348 = vunpack.c.l.b16 %v503
      %v1349 = vunpack.c.h.b16 %v503
      %v1350 = vunpack.c.l.b16 %v504
      %v1351 = vunpack.c.h.b16 %v504
      %v1352 = vunpack.c.l.b16 %v505
      %v1353 = vunpack.c.h.b16 %v505
      %v1354 = vunpack.c.l.b16 %v506
      %v1355 = vunpack.c.h.b16 %v506
      %v1356 = vunpack.c.l.b16 %v507
      %v1357 = vunpack.c.h.b16 %v507
      %v1358 = vunpack.c.l.b16 %v508
      %v1359 = vunpack.c.h.b16 %v508
      %v1360 = vunpack.c.l.b16 %v509
      %v1361 = vunpack.c.h.b16 %v509
      %v1362 = vunpack.c.l.b16 %v510
      %v1363 = vunpack.c.h.b16 %v510
      %v1364 = vunpack.c.l.b16 %v511
      %v1365 = vunpack.c.h.b16 %v511
      %v1366 = vunpack.c.l.b16 %v512
      %v1367 = vunpack.c.h.b16 %v512
      %v1368 = vunpack.c.l.b16 %v513
      %v1369 = vunpack.c.h.b16 %v513
      %v1370 = vunpack.c.l.b16 %v514
      %v1371 = vunpack.c.h.b16 %v514
      %v1372 = vunpack.c.l.b16 %v515
      %v1373 = vunpack.c.h.b16 %v515
      %v1374 = vunpack.c.l.b16 %v516
      %v1375 = vunpack.c.h.b16 %v516
      %v1376 = vunpack.c.l.b16 %v517
      %v1377 = vunpack.c.h.b16 %v517
      %v1378 = vunpack.c.l.b16 %v518
      %v1379 = vunpack.c.h.b16 %v518
      %v1380 = vunpack.c.l.b16 %v519
      %v1381 = vunpack.c.h.b16 %v519
      %v1382 = vunpack.c.l.b16 %v520
      %v1383 = vunpack.c.h.b16 %v520
      %v1384 = vunpack.c.l.b16 %v521
      %v1385 = vunpack.c.h.b16 %v521
      %v1386 = vunpack.c.l.b16 %v522
      %v1387 = vunpack.c.h.b16 %v522
      %v1388 = vunpack.c.l.b16 %v523
      %v1389 = vunpack.c.h.b16 %v523
      %v1390 = vunpack.c.l.b16 %v524
      %v1391 = vunpack.c.h.b16 %v524
      %v1392 = vunpack.c.l.b16 %v525
      %v1393 = vunpack.c.h.b16 %v525
      %v1394 = vunpack.c.l.b16 %v526
      %v1395 = vunpack.c.h.b16 %v526
      %v1396 = vunpack.c.l.b16 %v527
      %v1397 = vunpack.c.h.b16 %v527
      %v1398 = vunpack.c.l.b16 %v528
      %v1399 = vunpack.c.h.b16 %v528
      %v1400 = vunpack.c.l.b16 %v529
      %v1401 = vunpack.c.h.b16 %v529
      %v1402 = vunpack.c.l.b16 %v530
      %v1403 = vunpack.c.h.b16 %v530
      %v1404 = vunpack.c.l.b16 %v531
      %v1405 = vunpack.c.h.b16 %v531
      %v1406 = vunpack.c.l.b16 %v532
      %v1407 = vunpack.c.h.b16 %v532
      %v1408 = vunpack.c.l.b16 %v533
      %v1409 = vunpack.c.h.b16 %v533
      %v1410 = vunpack.c.l.b16 %v534
      %v1411 = vunpack.c.h.b16 %v534
      %v1412 = vunpack.c.l.b16 %v535
      %v1413 = vunpack.c.h.b16 %v535
      %v1414 = vunpack.c.l.b16 %v536
      %v1415 = vunpack.c.h.b16 %v536
      %v1416 = vunpack.c.l.b16 %v537
      %v1417 = vunpack.c.h.b16 %v537
      %v1418 = vunpack.c.l.b16 %v538
      %v1419 = vunpack.c.h.b16 %v538
      %v1420 = vunpack.c.l.b16 %v539
      %v1421 = vunpack.c.h.b16 %v539
      %v1422 = vunpack.c.l.b16 %v540
      %v1423 = vunpack.c.h.b16 %v540
      %v1424 = vunpack.c.l.b16 %v541
      %v1425 = vunpack.c.h.b16 %v541
      %v1426 = vunpack.c.l.b16 %v542
      %v1427 = vunpack.c.h.b16 %v542
      %v1428 = vunpack.c.l.b16 %v543
      %v1429 = vunpack.c.h.b16 %v543
      %v1430 = vunpack.c.l.b16 %v544
      %v1431 = vunpack.c.h.b16 %v544
      %v1432 = vunpack.c.l.b16 %v545
      %v1433 = vunpack.c.h.b16 %v545
      %v1434 = vunpack.c.l.b16 %v546
      %v1435 = vunpack.c.h.b16 %v546
      %v1436 = vunpack.c.l.b16 %v547
      %v1437 = vunpack.c.h.b16 %v547
      %v1438 = vunpack.c.l.b16 %v548
      %v1439 = vunpack.c.h.b16 %v548
      %v1440 = vunpack.c.l.b16 %v549
      %v1441 = vunpack.c.h.b16 %v549
      %v1442 = vunpack.c.l.b16 %v550
      %v1443 = vunpack.c.h.b16 %v550
      %v1444 = vunpack.c.l.b16 %v551
      %v1445 = vunpack.c.h.b16 %v551
      %v1446 = vunpack.c.l.b16 %v552
      %v1447 = vunpack.c.h.b16 %v552
      %v1448 = vunpack.c.l.b16 %v553
      %v1449 = vunpack.c.h.b16 %v553
      %v1450 = vunpack.c.l.b16 %v554
      %v1451 = vunpack.c.h.b16 %v554
      %v1452 = vunpack.c.l.b16 %v555
      %v1453 = vunpack.c.h.b16 %v555
      %v1454 = vunpack.c.l.b16 %v556
      %v1455 = vunpack.c.h.b16 %v556
      %v1456 = vunpack.c.l.b16 %v557
      %v1457 = vunpack.c.h.b16 %v557
      %v1458 = vunpack.c.l.b16 %v558
      %v1459 = vunpack.c.h.b16 %v558
      %v1460 = vunpack.c.l.b16 %v559
      %v1461 = vunpack.c.h.b16 %v559
      %v1462 = vunpack.c.l.b16 %v560
      %v1463 = vunpack.c.h.b16 %v560
      %v1464 = vunpack.c.l.b16 %v561
      %v1465 = vunpack.c.h.b16 %v561
      %v1466 = vunpack.c.l.b16 %v562
      %v1467 = vunpack.c.h.b16 %v562
      %v1468 = vunpack.c.l.b16 %v563
      %v1469 = vunpack.c.h.b16 %v563
      %v1470 = vunpack.c.l.b16 %v564
      %v1471 = vunpack.c.h.b16 %v564
      %v1472 = vunpack.c.l.b16 %v565
      %v1473 = vunpack.c.h.b16 %v565
      %v1474 = vunpack.c.l.b16 %v566
      %v1475 = vunpack.c.h.b16 %v566
      %v1476 = vunpack.c.l.b16 %v567
      %v1477 = vunpack.c.h.b16 %v567
      %v1478 = vunpack.c.l.b16 %v568
      %v1479 = vunpack.c.h.b16 %v568
      %v1480 = vunpack.c.l.b16 %v569
      %v1481 = vunpack.c.h.b16 %v569
      %v1482 = vunpack.c.l.b16 %v570
      %v1483 = vunpack.c.h.b16 %v570
      %v1484 = vunpack.c.l.b16 %v571
      %v1485 = vunpack.c.h.b16 %v571
      %v1486 = vunpack.c.l.b16 %v572
      %v1487 = vunpack.c.h.b16 %v572
      %v1488 = vunpack.c.l.b16 %v573
      %v1489 = vunpack.c.h.b16 %v573
      %v1490 = vunpack.c.l.b16 %v574
      %v1491 = vunpack.c.h.b16 %v574
      %v1492 = vunpack.c.l.b16 %v575
      %v1493 = vunpack.c.h.b16 %v575
      %v1494 = vunpack.c.l.b16 %v576
      %v1495 = vunpack.c.h.b16 %v576
      %v1496 = vunpack.c.l.b16 %v577
      %v1497 = vunpack.c.h.b16 %v577
      %v1498 = vunpack.c.l.b16 %v578
      %v1499 = vunpack.c.h.b16 %v578
      %v1500 = vunpack.c.l.b16 %v579
      %v1501 = vunpack.c.h.b16 %v579
      %v1502 = vunpack.c.l.b16 %v580
      %v1503 = vunpack.c.h.b16 %v580
      %v1504 = vunpack.c.l.b16 %v581
      %v1505 = vunpack.c.h.b16 %v581
      %v1506 = vunpack.c.l.b16 %v582
      %v1507 = vunpack.c.h.b16 %v582
      %v1508 = vunpack.c.l.b16 %v583
      %v1509 = vunpack.c.h.b16 %v583
      %v1510 = vunpack.c.l.b16 %v584
      %v1511 = vunpack.c.h.b16 %v584
      %v1512 = vunpack.c.l.b16 %v585
      %v1513 = vunpack.c.h.b16 %v585
      %v1514 = vpack.c.b16 %v950, %v938
      %v1515 = vpack.c.b16 %v951, %v939
      %v1516 = vpack.c.b16 %v952, %v940
      %v1517 = vpack.c.b16 %v953, %v941
      %v1518 = vpack.c.b16 %v954, %v942
      %v1519 = vpack.c.b16 %v955, %v943
      %v1520 = vpack.c.b16 %v956, %v944
      %v1521 = vpack.c.b16 %v957, %v945
      %v1522 = vpack.c.b16 %v958, %v946
      %v1523 = vpack.c.b16 %v959, %v947
      %v1524 = vpack.c.b16 %v960, %v948
      %v1525 = vpack.c.b16 %v961, %v949
      %v1526 = vpack.c.b16 %v974, %v962
      %v1527 = vpack.c.b16 %v975, %v963
      %v1528 = vpack.c.b16 %v976, %v964
      %v1529 = vpack.c.b16 %v977, %v965
      %v1530 = vpack.c.b16 %v978, %v966
      %v1531 = vpack.c.b16 %v979, %v967
      %v1532 = vpack.c.b16 %v980, %v968
      %v1533 = vpack.c.b16 %v981, %v969
      %v1534 = vpack.c.b16 %v982, %v970
      %v1535 = vpack.c.b16 %v983, %v971
      %v1536 = vpack.c.b16 %v984, %v972
      %v1537 = vpack.c.b16 %v985, %v973
      %v1538 = vpack.c.b16 %v998, %v986
      %v1539 = vpack.c.b16 %v999, %v987
      %v1540 = vpack.c.b16 %v1000, %v988
      %v1541 = vpack.c.b16 %v1001, %v989
      %v1542 = vpack.c.b16 %v1002, %v990
      %v1543 = vpack.c.b16 %v1003, %v991
      %v1544 = vpack.c.b16 %v1004, %v992
      %v1545 = vpack.c.b16 %v1005, %v993
      %v1546 = vpack.c.b16 %v1006, %v994
      %v1547 = vpack.c.b16 %v1007, %v995
      %v1548 = vpack.c.b16 %v1008, %v996
      %v1549 = vpack.c.b16 %v1009, %v997
      %v1550 = vpack.c.b16 %v1022, %v1010
      %v1551 = vpack.c.b16 %v1023, %v1011
      %v1552 = vpack.c.b16 %v1024, %v1012
      %v1553 = vpack.c.b16 %v1025, %v1013
      %v1554 = vpack.c.b16 %v1026, %v1014
      %v1555 = vpack.c.b16 %v1027, %v1015
      %v1556 = vpack.c.b16 %v1028, %v1016
      %v1557 = vpack.c.b16 %v1029, %v1017
      %v1558 = vpack.c.b16 %v1030, %v1018
      %v1559 = vpack.c.b16 %v1031, %v1019
      %v1560 = vpack.c.b16 %v1032, %v1020
      %v1561 = vpack.c.b16 %v1033, %v1021
      %v1562 = vpack.c.b16 %v1046, %v1034
      %v1563 = vpack.c.b16 %v1047, %v1035
      %v1564 = vpack.c.b16 %v1048, %v1036
      %v1565 = vpack.c.b16 %v1049, %v1037
      %v1566 = vpack.c.b16 %v1050, %v1038
      %v1567 = vpack.c.b16 %v1051, %v1039
      %v1568 = vpack.c.b16 %v1052, %v1040
      %v1569 = vpack.c.b16 %v1053, %v1041
      %v1570 = vpack.c.b16 %v1054, %v1042
      %v1571 = vpack.c.b16 %v1055, %v1043
      %v1572 = vpack.c.b16 %v1056, %v1044
      %v1573 = vpack.c.b16 %v1057, %v1045
      %v1574 = vpack.c.b16 %v1070, %v1058
      %v1575 = vpack.c.b16 %v1071, %v1059
      %v1576 = vpack.c.b16 %v1072, %v1060
      %v1577 = vpack.c.b16 %v1073, %v1061
      %v1578 = vpack.c.b16 %v1074, %v1062
      %v1579 = vpack.c.b16 %v1075, %v1063
      %v1580 = vpack.c.b16 %v1076, %v1064
      %v1581 = vpack.c.b16 %v1077, %v1065
      %v1582 = vpack.c.b16 %v1078, %v1066
      %v1583 = vpack.c.b16 %v1079, %v1067
      %v1584 = vpack.c.b16 %v1080, %v1068
      %v1585 = vpack.c.b16 %v1081, %v1069
      %v1586 = vpack.c.b16 %v1094, %v1082
      %v1587 = vpack.c.b16 %v1095, %v1083
      %v1588 = vpack.c.b16 %v1096, %v1084
      %v1589 = vpack.c.b16 %v1097, %v1085
      %v1590 = vpack.c.b16 %v1098, %v1086
      %v1591 = vpack.c.b16 %v1099, %v1087
      %v1592 = vpack.c.b16 %v1100, %v1088
      %v1593 = vpack.c.b16 %v1101, %v1089
      %v1594 = vpack.c.b16 %v1102, %v1090
      %v1595 = vpack.c.b16 %v1103, %v1091
      %v1596 = vpack.c.b16 %v1104, %v1092
      %v1597 = vpack.c.b16 %v1105, %v1093
      %v1598 = vpack.c.b16 %v1118, %v1106
      %v1599 = vpack.c.b16 %v1119, %v1107
      %v1600 = vpack.c.b16 %v1120, %v1108
      %v1601 = vpack.c.b16 %v1121, %v1109
      %v1602 = vpack.c.b16 %v1122, %v1110
      %v1603 = vpack.c.b16 %v1123, %v1111
      %v1604 = vpack.c.b16 %v1124, %v1112
      %v1605 = vpack.c.b16 %v1125, %v1113
      %v1606 = vpack.c.b16 %v1126, %v1114
      %v1607 = vpack.c.b16 %v1127, %v1115
      %v1608 = vpack.c.b16 %v1128, %v1116
      %v1609 = vpack.c.b16 %v1129, %v1117
      %v1610 = vpack.c.b16 %v1142, %v1130
      %v1611 = vpack.c.b16 %v1143, %v1131
      %v1612 = vpack.c.b16 %v1144, %v1132
      %v1613 = vpack.c.b16 %v1145, %v1133
      %v1614 = vpack.c.b16 %v1146, %v1134
      %v1615 = vpack.c.b16 %v1147, %v1135
      %v1616 = vpack.c.b16 %v1148, %v1136
      %v1617 = vpack.c.b16 %v1149, %v1137
      %v1618 = vpack.c.b16 %v1150, %v1138
      %v1619 = vpack.c.b16 %v1151, %v1139
      %v1620 = vpack.c.b16 %v1152, %v1140
      %v1621 = vpack.c.b16 %v1153, %v1141
      %v1622 = vpack.c.b16 %v1166, %v1154
      %v1623 = vpack.c.b16 %v1167, %v1155
      %v1624 = vpack.c.b16 %v1168, %v1156
      %v1625 = vpack.c.b16 %v1169, %v1157
      %v1626 = vpack.c.b16 %v1170, %v1158
      %v1627 = vpack.c.b16 %v1171, %v1159
      %v1628 = vpack.c.b16 %v1172, %v1160
      %v1629 = vpack.c.b16 %v1173, %v1161
      %v1630 = vpack.c.b16 %v1174, %v1162
      %v1631 = vpack.c.b16 %v1175, %v1163
      %v1632 = vpack.c.b16 %v1176, %v1164
      %v1633 = vpack.c.b16 %v1177, %v1165
      %v1634 = vpack.c.b16 %v1190, %v1178
      %v1635 = vpack.c.b16 %v1191, %v1179
      %v1636 = vpack.c.b16 %v1192, %v1180
      %v1637 = vpack.c.b16 %v1193, %v1181
      %v1638 = vpack.c.b16 %v1194, %v1182
      %v1639 = vpack.c.b16 %v1195, %v1183
      %v1640 = vpack.c.b16 %v1196, %v1184
      %v1641 = vpack.c.b16 %v1197, %v1185
      %v1642 = vpack.c.b16 %v1198, %v1186
      %v1643 = vpack.c.b16 %v1199, %v1187
      %v1644 = vpack.c.b16 %v1200, %v1188
      %v1645 = vpack.c.b16 %v1201, %v1189
      %v1646 = vpack.c.b16 %v1214, %v1202
      %v1647 = vpack.c.b16 %v1215, %v1203
      %v1648 = vpack.c.b16 %v1216, %v1204
      %v1649 = vpack.c.b16 %v1217, %v1205
      %v1650 = vpack.c.b16 %v1218, %v1206
      %v1651 = vpack.c.b16 %v1219, %v1207
      %v1652 = vpack.c.b16 %v1220, %v1208
      %v1653 = vpack.c.b16 %v1221, %v1209
      %v1654 = vpack.c.b16 %v1222, %v1210
      %v1655 = vpack.c.b16 %v1223, %v1211
      %v1656 = vpack.c.b16 %v1224, %v1212
      %v1657 = vpack.c.b16 %v1225, %v1213
      %v1658 = vpack.c.b16 %v1238, %v1226
      %v1659 = vpack.c.b16 %v1239, %v1227
      %v1660 = vpack.c.b16 %v1240, %v1228
      %v1661 = vpack.c.b16 %v1241, %v1229
      %v1662 = vpack.c.b16 %v1242, %v1230
      %v1663 = vpack.c.b16 %v1243, %v1231
      %v1664 = vpack.c.b16 %v1244, %v1232
      %v1665 = vpack.c.b16 %v1245, %v1233
      %v1666 = vpack.c.b16 %v1246, %v1234
      %v1667 = vpack.c.b16 %v1247, %v1235
      %v1668 = vpack.c.b16 %v1248, %v1236
      %v1669 = vpack.c.b16 %v1249, %v1237
      %v1670 = vpack.c.b16 %v1262, %v1250
      %v1671 = vpack.c.b16 %v1263, %v1251
      %v1672 = vpack.c.b16 %v1264, %v1252
      %v1673 = vpack.c.b16 %v1265, %v1253
      %v1674 = vpack.c.b16 %v1266, %v1254
      %v1675 = vpack.c.b16 %v1267, %v1255
      %v1676 = vpack.c.b16 %v1268, %v1256
      %v1677 = vpack.c.b16 %v1269, %v1257
      %v1678 = vpack.c.b16 %v1270, %v1258
      %v1679 = vpack.c.b16 %v1271, %v1259
      %v1680 = vpack.c.b16 %v1272, %v1260
      %v1681 = vpack.c.b16 %v1273, %v1261
      %v1682 = vpack.c.b16 %v1286, %v1274
      %v1683 = vpack.c.b16 %v1287, %v1275
      %v1684 = vpack.c.b16 %v1288, %v1276
      %v1685 = vpack.c.b16 %v1289, %v1277
      %v1686 = vpack.c.b16 %v1290, %v1278
      %v1687 = vpack.c.b16 %v1291, %v1279
      %v1688 = vpack.c.b16 %v1292, %v1280
      %v1689 = vpack.c.b16 %v1293, %v1281
      %v1690 = vpack.c.b16 %v1294, %v1282
      %v1691 = vpack.c.b16 %v1295, %v1283
      %v1692 = vpack.c.b16 %v1296, %v1284
      %v1693 = vpack.c.b16 %v1297, %v1285
      %v1694 = vpack.c.b16 %v1310, %v1298
      %v1695 = vpack.c.b16 %v1311, %v1299
      %v1696 = vpack.c.b16 %v1312, %v1300
      %v1697 = vpack.c.b16 %v1313, %v1301
      %v1698 = vpack.c.b16 %v1314, %v1302
      %v1699 = vpack.c.b16 %v1315, %v1303
      %v1700 = vpack.c.b16 %v1316, %v1304
      %v1701 = vpack.c.b16 %v1317, %v1305
      %v1702 = vpack.c.b16 %v1318, %v1306
      %v1703 = vpack.c.b16 %v1319, %v1307
      %v1704 = vpack.c.b16 %v1320, %v1308
      %v1705 = vpack.c.b16 %v1321, %v1309
      %v1706 = vpack.c.b16 %v1334, %v1322
      %v1707 = vpack.c.b16 %v1335, %v1323
      %v1708 = vpack.c.b16 %v1336, %v1324
      %v1709 = vpack.c.b16 %v1337, %v1325
      %v1710 = vpack.c.b16 %v1338, %v1326
      %v1711 = vpack.c.b16 %v1339, %v1327
      %v1712 = vpack.c.b16 %v1340, %v1328
      %v1713 = vpack.c.b16 %v1341, %v1329
      %v1714 = vpack.c.b16 %v1342, %v1330
      %v1715 = vpack.c.b16 %v1343, %v1331
      %v1716 = vpack.c.b16 %v1344, %v1332
      %v1717 = vpack.c.b16 %v1345, %v1333
      %v1718 = vpack.c.b16 %v1358, %v1346
      %v1719 = vpack.c.b16 %v1359, %v1347
      %v1720 = vpack.c.b16 %v1360, %v1348
      %v1721 = vpack.c.b16 %v1361, %v1349
      %v1722 = vpack.c.b16 %v1362, %v1350
      %v1723 = vpack.c.b16 %v1363, %v1351
      %v1724 = vpack.c.b16 %v1364, %v1352
      %v1725 = vpack.c.b16 %v1365, %v1353
      %v1726 = vpack.c.b16 %v1366, %v1354
      %v1727 = vpack.c.b16 %v1367, %v1355
      %v1728 = vpack.c.b16 %v1368, %v1356
      %v1729 = vpack.c.b16 %v1369, %v1357
      %v1730 = vpack.c.b16 %v1382, %v1370
      %v1731 = vpack.c.b16 %v1383, %v1371
      %v1732 = vpack.c.b16 %v1384, %v1372
      %v1733 = vpack.c.b16 %v1385, %v1373
      %v1734 = vpack.c.b16 %v1386, %v1374
      %v1735 = vpack.c.b16 %v1387, %v1375
      %v1736 = vpack.c.b16 %v1388, %v1376
      %v1737 = vpack.c.b16 %v1389, %v1377
      %v1738 = vpack.c.b16 %v1390, %v1378
      %v1739 = vpack.c.b16 %v1391, %v1379
      %v1740 = vpack.c.b16 %v1392, %v1380
      %v1741 = vpack.c.b16 %v1393, %v1381
      %v1742 = vpack.c.b16 %v1406, %v1394
      %v1743 = vpack.c.b16 %v1407, %v1395
      %v1744 = vpack.c.b16 %v1408, %v1396
      %v1745 = vpack.c.b16 %v1409, %v1397
      %v1746 = vpack.c.b16 %v1410, %v1398
      %v1747 = vpack.c.b16 %v1411, %v1399
      %v1748 = vpack.c.b16 %v1412, %v1400
      %v1749 = vpack.c.b16 %v1413, %v1401
      %v1750 = vpack.c.b16 %v1414, %v1402
      %v1751 = vpack.c.b16 %v1415, %v1403
      %v1752 = vpack.c.b16 %v1416, %v1404
      %v1753 = vpack.c.b16 %v1417, %v1405
      %v1754 = vpack.c.b16 %v1430, %v1418
      %v1755 = vpack.c.b16 %v1431, %v1419
      %v1756 = vpack.c.b16 %v1432, %v1420
      %v1757 = vpack.c.b16 %v1433, %v1421
      %v1758 = vpack.c.b16 %v1434, %v1422
      %v1759 = vpack.c.b16 %v1435, %v1423
      %v1760 = vpack.c.b16 %v1436, %v1424
      %v1761 = vpack.c.b16 %v1437, %v1425
      %v1762 = vpack.c.b16 %v1438, %v1426
      %v1763 = vpack.c.b16 %v1439, %v1427
      %v1764 = vpack.c.b16 %v1440, %v1428
      %v1765 = vpack.c.b16 %v1441, %v1429
      %v1766 = vpack.c.b16 %v1454, %v1442
      %v1767 = vpack.c.b16 %v1455, %v1443
      %v1768 = vpack.c.b16 %v1456, %v1444
      %v1769 = vpack.c.b16 %v1457, %v1445
      %v1770 = vpack.c.b16 %v1458, %v1446
      %v1771 = vpack.c.b16 %v1459, %v1447
      %v1772 = vpack.c.b16 %v1460, %v1448
      %v1773 = vpack.c.b16 %v1461, %v1449
      %v1774 = vpack.c.b16 %v1462, %v1450
      %v1775 = vpack.c.b16 %v1463, %v1451
      %v1776 = vpack.c.b16 %v1464, %v1452
      %v1777 = vpack.c.b16 %v1465, %v1453
      %v1778 = vpack.c.b16 %v1478, %v1466
      %v1779 = vpack.c.b16 %v1479, %v1467
      %v1780 = vpack.c.b16 %v1480, %v1468
      %v1781 = vpack.c.b16 %v1481, %v1469
      %v1782 = vpack.c.b16 %v1482, %v1470
      %v1783 = vpack.c.b16 %v1483, %v1471
      %v1784 = vpack.c.b16 %v1484, %v1472
      %v1785 = vpack.c.b16 %v1485, %v1473
      %v1786 = vpack.c.b16 %v1486, %v1474
      %v1787 = vpack.c.b16 %v1487, %v1475
      %v1788 = vpack.c.b16 %v1488, %v1476
      %v1789 = vpack.c.b16 %v1489, %v1477
      %v1790 = vpack.c.b16 %v1502, %v1490
      %v1791 = vpack.c.b16 %v1503, %v1491
      %v1792 = vpack.c.b16 %v1504, %v1492
      %v1793 = vpack.c.b16 %v1505, %v1493
      %v1794 = vpack.c.b16 %v1506, %v1494
      %v1795 = vpack.c.b16 %v1507, %v1495
      %v1796 = vpack.c.b16 %v1508, %v1496
      %v1797 = vpack.c.b16 %v1509, %v1497
      %v1798 = vpack.c.b16 %v1510, %v1498
      %v1799 = vpack.c.b16 %v1511, %v1499
      %v1800 = vpack.c.b16 %v1512, %v1500
      %v1801 = vpack.c.b16 %v1513, %v1501
      %2090 = vmatprep.subr.bf16.mxu0 %v1515
      %2091 = vmatpush1.bf16.msra.mxu0 %v1514
      %2092 = vmatprep.subr.bf16.mxu0 %v1527
      %2093 = vmatpush1.bf16.msra.mxu0 %v1526
      %2094 = vmatprep.subr.bf16.mxu0 %v1539
      %2095 = vmatpush1.bf16.msra.mxu0 %v1538
      %2096 = vmatprep.subr.bf16.mxu0 %v1551
      %2097 = vmatpush1.bf16.msra.mxu0 %v1550
      %2098 = vmatprep.subr.bf16.mxu0 %v1563
      %2099 = vmatpush1.bf16.msra.mxu0 %v1562
      %2100 = vmatprep.subr.bf16.mxu0 %v1575
      %2101 = vmatpush1.bf16.msra.mxu0 %v1574
      %2102 = vmatprep.subr.bf16.mxu0 %v1587
      %2103 = vmatpush1.bf16.msra.mxu0 %v1586
      %2104 = vmatprep.subr.bf16.mxu0 %v1599
      %2105 = vmatpush1.bf16.msra.mxu0 %v1598
      %2106 = vmatprep.subr.bf16.mxu0 %v1611
      %2107 = vmatpush1.bf16.msra.mxu0 %v1610
      %2108 = vmatprep.subr.bf16.mxu0 %v1623
      %2109 = vmatpush1.bf16.msra.mxu0 %v1622
      %2110 = vmatprep.subr.bf16.mxu0 %v1635
      %2111 = vmatpush1.bf16.msra.mxu0 %v1634
      %2112 = vmatprep.subr.bf16.mxu0 %v1647
      %2113 = vmatpush1.bf16.msra.mxu0 %v1646
      %2114 = vmatprep.subr.bf16.mxu0 %v1659
      %2115 = vmatpush1.bf16.msra.mxu0 %v1658
      %2116 = vmatprep.subr.bf16.mxu0 %v1671
      %2117 = vmatpush1.bf16.msra.mxu0 %v1670
      %2118 = vmatprep.subr.bf16.mxu0 %v1683
      %2119 = vmatpush1.bf16.msra.mxu0 %v1682
      %2120 = vmatprep.subr.bf16.mxu0 %v1695
      %2121 = vmatpush1.bf16.msra.mxu0 %v1694
      %2122 = vmatprep.mubr.bf16.mxu0 %v296
      %2123 = vmatmul.mubr.bf16.gmra.mrb[0].mxu0 %v295
      %v2124 = vpop.f32.mrb[0].mxu0
      %v2125 = vadd.f32 %v593, %v2124
      %v2126 = vpop.f32.mrb[0].mxu0
      %v2127 = vadd.f32 %v597, %v2126
      %v2128 = vpop.f32.mrb[0].mxu0
      %v2129 = vpop.f32.mrb[0].mxu0
      %2130 = vdwg.mxu0
      %2131 = vmatprep.subr.bf16.mxu0 %v1707
      %2132 = vmatpush1.bf16.msra.mxu0 %v1706
      %2133 = vmatprep.subr.bf16.mxu0 %v1719
      %2134 = vmatpush1.bf16.msra.mxu0 %v1718
      %2135 = vmatprep.subr.bf16.mxu0 %v1731
      %2136 = vmatpush1.bf16.msra.mxu0 %v1730
      %2137 = vmatprep.subr.bf16.mxu0 %v1743
      %2138 = vmatpush1.bf16.msra.mxu0 %v1742
      %2139 = vmatprep.subr.bf16.mxu0 %v1755
      %2140 = vmatpush1.bf16.msra.mxu0 %v1754
      %2141 = vmatprep.subr.bf16.mxu0 %v1767
      %2142 = vmatpush1.bf16.msra.mxu0 %v1766
      %2143 = vmatprep.subr.bf16.mxu0 %v1779
      %2144 = vmatpush1.bf16.msra.mxu0 %v1778
      %2145 = vmatprep.subr.bf16.mxu0 %v1791
      %2146 = vmatpush1.bf16.msra.mxu0 %v1790
      %2147 = vmatprep.subr.bf16.mxu0 0
      %2148 = vmatpush1.bf16.msra.mxu0 0
      %2149 = vmatprep.subr.bf16.mxu0 0
      %2150 = vmatpush1.bf16.msra.mxu0 0
      %2151 = vmatprep.subr.bf16.mxu0 0
      %2152 = vmatpush1.bf16.msra.mxu0 0
      %2153 = vmatprep.subr.bf16.mxu0 0
      %2154 = vmatpush1.bf16.msra.mxu0 0
      %2155 = vmatprep.subr.bf16.mxu0 0
      %2156 = vmatpush1.bf16.msra.mxu0 0
      %2157 = vmatprep.subr.bf16.mxu0 0
      %2158 = vmatpush1.bf16.msra.mxu0 0
      %2159 = vmatprep.subr.bf16.mxu0 0
      %2160 = vmatpush1.bf16.msra.mxu0 0
      %2161 = vmatprep.subr.bf16.mxu0 0
      %2162 = vmatpush1.bf16.msra.mxu0 0
      %2163 = vmatprep.mubr.bf16.mxu0 0
      %2164 = vmatmul.mubr.bf16.gmra.mrb[0].mxu0 %v297
      %v2165 = vpop.f32.mrb[0].mxu0
      %v2166 = vadd.f32 %v2125, %v2165
      %v2167 = vpop.f32.mrb[0].mxu0
      %v2168 = vadd.f32 %v2127, %v2167
      %v2169 = vpop.f32.mrb[0].mxu0
      %v2170 = vpop.f32.mrb[0].mxu0
      %2171 = vdwg.mxu0
      %2172 = vmatprep.subr.bf16.mxu0 %v1517
      %2173 = vmatpush1.bf16.msra.mxu0 %v1516
      %2174 = vmatprep.subr.bf16.mxu0 %v1529
      %2175 = vmatpush1.bf16.msra.mxu0 %v1528
      %2176 = vmatprep.subr.bf16.mxu0 %v1541
      %2177 = vmatpush1.bf16.msra.mxu0 %v1540
      %2178 = vmatprep.subr.bf16.mxu0 %v1553
      %2179 = vmatpush1.bf16.msra.mxu0 %v1552
      %2180 = vmatprep.subr.bf16.mxu0 %v1565
      %2181 = vmatpush1.bf16.msra.mxu0 %v1564
      %2182 = vmatprep.subr.bf16.mxu0 %v1577
      %2183 = vmatpush1.bf16.msra.mxu0 %v1576
      %2184 = vmatprep.subr.bf16.mxu0 %v1589
      %2185 = vmatpush1.bf16.msra.mxu0 %v1588
      %2186 = vmatprep.subr.bf16.mxu0 %v1601
      %2187 = vmatpush1.bf16.msra.mxu0 %v1600
      %2188 = vmatprep.subr.bf16.mxu0 %v1613
      %2189 = vmatpush1.bf16.msra.mxu0 %v1612
      %2190 = vmatprep.subr.bf16.mxu0 %v1625
      %2191 = vmatpush1.bf16.msra.mxu0 %v1624
      %2192 = vmatprep.subr.bf16.mxu0 %v1637
      %2193 = vmatpush1.bf16.msra.mxu0 %v1636
      %2194 = vmatprep.subr.bf16.mxu0 %v1649
      %2195 = vmatpush1.bf16.msra.mxu0 %v1648
      %2196 = vmatprep.subr.bf16.mxu0 %v1661
      %2197 = vmatpush1.bf16.msra.mxu0 %v1660
      %2198 = vmatprep.subr.bf16.mxu0 %v1673
      %2199 = vmatpush1.bf16.msra.mxu0 %v1672
      %2200 = vmatprep.subr.bf16.mxu0 %v1685
      %2201 = vmatpush1.bf16.msra.mxu0 %v1684
      %2202 = vmatprep.subr.bf16.mxu0 %v1697
      %2203 = vmatpush1.bf16.msra.mxu0 %v1696
      %2204 = vmatprep.mubr.bf16.mxu0 %v296
      %2205 = vmatmul.mubr.bf16.gmra.mrb[0].mxu0 %v295
      %v2206 = vpop.f32.mrb[0].mxu0
      %v2207 = vadd.f32 %v601, %v2206
      %v2208 = vpop.f32.mrb[0].mxu0
      %v2209 = vadd.f32 %v605, %v2208
      %v2210 = vpop.f32.mrb[0].mxu0
      %v2211 = vpop.f32.mrb[0].mxu0
      %2212 = vdwg.mxu0
      %2213 = vmatprep.subr.bf16.mxu0 %v1709
      %2214 = vmatpush1.bf16.msra.mxu0 %v1708
      %2215 = vmatprep.subr.bf16.mxu0 %v1721
      %2216 = vmatpush1.bf16.msra.mxu0 %v1720
      %2217 = vmatprep.subr.bf16.mxu0 %v1733
      %2218 = vmatpush1.bf16.msra.mxu0 %v1732
      %2219 = vmatprep.subr.bf16.mxu0 %v1745
      %2220 = vmatpush1.bf16.msra.mxu0 %v1744
      %2221 = vmatprep.subr.bf16.mxu0 %v1757
      %2222 = vmatpush1.bf16.msra.mxu0 %v1756
      %2223 = vmatprep.subr.bf16.mxu0 %v1769
      %2224 = vmatpush1.bf16.msra.mxu0 %v1768
      %2225 = vmatprep.subr.bf16.mxu0 %v1781
      %2226 = vmatpush1.bf16.msra.mxu0 %v1780
      %2227 = vmatprep.subr.bf16.mxu0 %v1793
      %2228 = vmatpush1.bf16.msra.mxu0 %v1792
      %2229 = vmatprep.subr.bf16.mxu0 0
      %2230 = vmatpush1.bf16.msra.mxu0 0
      %2231 = vmatprep.subr.bf16.mxu0 0
      %2232 = vmatpush1.bf16.msra.mxu0 0
      %2233 = vmatprep.subr.bf16.mxu0 0
      %2234 = vmatpush1.bf16.msra.mxu0 0
      %2235 = vmatprep.subr.bf16.mxu0 0
      %2236 = vmatpush1.bf16.msra.mxu0 0
      %2237 = vmatprep.subr.bf16.mxu0 0
      %2238 = vmatpush1.bf16.msra.mxu0 0
      %2239 = vmatprep.subr.bf16.mxu0 0
      %2240 = vmatpush1.bf16.msra.mxu0 0
      %2241 = vmatprep.subr.bf16.mxu0 0
      %2242 = vmatpush1.bf16.msra.mxu0 0
      %2243 = vmatprep.subr.bf16.mxu0 0
      %2244 = vmatpush1.bf16.msra.mxu0 0
      %2245 = vmatprep.mubr.bf16.mxu0 0
      %2246 = vmatmul.mubr.bf16.gmra.mrb[0].mxu0 %v297
      %v2247 = vpop.f32.mrb[0].mxu0
      %v2248 = vadd.f32 %v2207, %v2247
      %v2249 = vpop.f32.mrb[0].mxu0
      %v2250 = vadd.f32 %v2209, %v2249
      %v2251 = vpop.f32.mrb[0].mxu0
      %v2252 = vpop.f32.mrb[0].mxu0
      %2253 = vdwg.mxu0
      %2254 = vmatprep.subr.bf16.mxu0 %v1519
      %2255 = vmatpush1.bf16.msra.mxu0 %v1518
      %2256 = vmatprep.subr.bf16.mxu0 %v1531
      %2257 = vmatpush1.bf16.msra.mxu0 %v1530
      %2258 = vmatprep.subr.bf16.mxu0 %v1543
      %2259 = vmatpush1.bf16.msra.mxu0 %v1542
      %2260 = vmatprep.subr.bf16.mxu0 %v1555
      %2261 = vmatpush1.bf16.msra.mxu0 %v1554
      %2262 = vmatprep.subr.bf16.mxu0 %v1567
      %2263 = vmatpush1.bf16.msra.mxu0 %v1566
      %2264 = vmatprep.subr.bf16.mxu0 %v1579
      %2265 = vmatpush1.bf16.msra.mxu0 %v1578
      %2266 = vmatprep.subr.bf16.mxu0 %v1591
      %2267 = vmatpush1.bf16.msra.mxu0 %v1590
      %2268 = vmatprep.subr.bf16.mxu0 %v1603
      %2269 = vmatpush1.bf16.msra.mxu0 %v1602
      %2270 = vmatprep.subr.bf16.mxu0 %v1615
      %2271 = vmatpush1.bf16.msra.mxu0 %v1614
      %2272 = vmatprep.subr.bf16.mxu0 %v1627
      %2273 = vmatpush1.bf16.msra.mxu0 %v1626
      %2274 = vmatprep.subr.bf16.mxu0 %v1639
      %2275 = vmatpush1.bf16.msra.mxu0 %v1638
      %2276 = vmatprep.subr.bf16.mxu0 %v1651
      %2277 = vmatpush1.bf16.msra.mxu0 %v1650
      %2278 = vmatprep.subr.bf16.mxu0 %v1663
      %2279 = vmatpush1.bf16.msra.mxu0 %v1662
      %2280 = vmatprep.subr.bf16.mxu0 %v1675
      %2281 = vmatpush1.bf16.msra.mxu0 %v1674
      %2282 = vmatprep.subr.bf16.mxu0 %v1687
      %2283 = vmatpush1.bf16.msra.mxu0 %v1686
      %2284 = vmatprep.subr.bf16.mxu0 %v1699
      %2285 = vmatpush1.bf16.msra.mxu0 %v1698
      %2286 = vmatprep.mubr.bf16.mxu0 %v296
      %2287 = vmatmul.mubr.bf16.gmra.mrb[0].mxu0 %v295
      %v2288 = vpop.f32.mrb[0].mxu0
      %v2289 = vadd.f32 %v609, %v2288
      %v2290 = vpop.f32.mrb[0].mxu0
      %v2291 = vadd.f32 %v613, %v2290
      %v2292 = vpop.f32.mrb[0].mxu0
      %v2293 = vpop.f32.mrb[0].mxu0
      %2294 = vdwg.mxu0
      %2295 = vmatprep.subr.bf16.mxu0 %v1711
      %2296 = vmatpush1.bf16.msra.mxu0 %v1710
      %2297 = vmatprep.subr.bf16.mxu0 %v1723
      %2298 = vmatpush1.bf16.msra.mxu0 %v1722
      %2299 = vmatprep.subr.bf16.mxu0 %v1735
      %2300 = vmatpush1.bf16.msra.mxu0 %v1734
      %2301 = vmatprep.subr.bf16.mxu0 %v1747
      %2302 = vmatpush1.bf16.msra.mxu0 %v1746
      %2303 = vmatprep.subr.bf16.mxu0 %v1759
      %2304 = vmatpush1.bf16.msra.mxu0 %v1758
      %2305 = vmatprep.subr.bf16.mxu0 %v1771
      %2306 = vmatpush1.bf16.msra.mxu0 %v1770
      %2307 = vmatprep.subr.bf16.mxu0 %v1783
      %2308 = vmatpush1.bf16.msra.mxu0 %v1782
      %2309 = vmatprep.subr.bf16.mxu0 %v1795
      %2310 = vmatpush1.bf16.msra.mxu0 %v1794
      %2311 = vmatprep.subr.bf16.mxu0 0
      %2312 = vmatpush1.bf16.msra.mxu0 0
      %2313 = vmatprep.subr.bf16.mxu0 0
      %2314 = vmatpush1.bf16.msra.mxu0 0
      %2315 = vmatprep.subr.bf16.mxu0 0
      %2316 = vmatpush1.bf16.msra.mxu0 0
      %2317 = vmatprep.subr.bf16.mxu0 0
      %2318 = vmatpush1.bf16.msra.mxu0 0
      %2319 = vmatprep.subr.bf16.mxu0 0
      %2320 = vmatpush1.bf16.msra.mxu0 0
      %2321 = vmatprep.subr.bf16.mxu0 0
      %2322 = vmatpush1.bf16.msra.mxu0 0
      %2323 = vmatprep.subr.bf16.mxu0 0
      %2324 = vmatpush1.bf16.msra.mxu0 0
      %2325 = vmatprep.subr.bf16.mxu0 0
      %2326 = vmatpush1.bf16.msra.mxu0 0
      %2327 = vmatprep.mubr.bf16.mxu0 0
      %2328 = vmatmul.mubr.bf16.gmra.mrb[0].mxu0 %v297
      %v2329 = vpop.f32.mrb[0].mxu0
      %v2330 = vadd.f32 %v2289, %v2329
      %v2331 = vpop.f32.mrb[0].mxu0
      %v2332 = vadd.f32 %v2291, %v2331
      %v2333 = vpop.f32.mrb[0].mxu0
      %v2334 = vpop.f32.mrb[0].mxu0
      %2335 = vdwg.mxu0
      %2336 = vmatprep.subr.bf16.mxu0 %v1521
      %2337 = vmatpush1.bf16.msra.mxu0 %v1520
      %2338 = vmatprep.subr.bf16.mxu0 %v1533
      %2339 = vmatpush1.bf16.msra.mxu0 %v1532
      %2340 = vmatprep.subr.bf16.mxu0 %v1545
      %2341 = vmatpush1.bf16.msra.mxu0 %v1544
      %2342 = vmatprep.subr.bf16.mxu0 %v1557
      %2343 = vmatpush1.bf16.msra.mxu0 %v1556
      %2344 = vmatprep.subr.bf16.mxu0 %v1569
      %2345 = vmatpush1.bf16.msra.mxu0 %v1568
      %2346 = vmatprep.subr.bf16.mxu0 %v1581
      %2347 = vmatpush1.bf16.msra.mxu0 %v1580
      %2348 = vmatprep.subr.bf16.mxu0 %v1593
      %2349 = vmatpush1.bf16.msra.mxu0 %v1592
      %2350 = vmatprep.subr.bf16.mxu0 %v1605
      %2351 = vmatpush1.bf16.msra.mxu0 %v1604
      %2352 = vmatprep.subr.bf16.mxu0 %v1617
      %2353 = vmatpush1.bf16.msra.mxu0 %v1616
      %2354 = vmatprep.subr.bf16.mxu0 %v1629
      %2355 = vmatpush1.bf16.msra.mxu0 %v1628
      %2356 = vmatprep.subr.bf16.mxu0 %v1641
      %2357 = vmatpush1.bf16.msra.mxu0 %v1640
      %2358 = vmatprep.subr.bf16.mxu0 %v1653
      %2359 = vmatpush1.bf16.msra.mxu0 %v1652
      %2360 = vmatprep.subr.bf16.mxu0 %v1665
      %2361 = vmatpush1.bf16.msra.mxu0 %v1664
      %2362 = vmatprep.subr.bf16.mxu0 %v1677
      %2363 = vmatpush1.bf16.msra.mxu0 %v1676
      %2364 = vmatprep.subr.bf16.mxu0 %v1689
      %2365 = vmatpush1.bf16.msra.mxu0 %v1688
      %2366 = vmatprep.subr.bf16.mxu0 %v1701
      %2367 = vmatpush1.bf16.msra.mxu0 %v1700
      %2368 = vmatprep.mubr.bf16.mxu0 %v296
      %2369 = vmatmul.mubr.bf16.gmra.mrb[0].mxu0 %v295
      %v2370 = vpop.f32.mrb[0].mxu0
      %v2371 = vadd.f32 %v617, %v2370
      %v2372 = vpop.f32.mrb[0].mxu0
      %v2373 = vadd.f32 %v621, %v2372
      %v2374 = vpop.f32.mrb[0].mxu0
      %v2375 = vpop.f32.mrb[0].mxu0
      %2376 = vdwg.mxu0
      %2377 = vmatprep.subr.bf16.mxu0 %v1713
      %2378 = vmatpush1.bf16.msra.mxu0 %v1712
      %2379 = vmatprep.subr.bf16.mxu0 %v1725
      %2380 = vmatpush1.bf16.msra.mxu0 %v1724
      %2381 = vmatprep.subr.bf16.mxu0 %v1737
      %2382 = vmatpush1.bf16.msra.mxu0 %v1736
      %2383 = vmatprep.subr.bf16.mxu0 %v1749
      %2384 = vmatpush1.bf16.msra.mxu0 %v1748
      %2385 = vmatprep.subr.bf16.mxu0 %v1761
      %2386 = vmatpush1.bf16.msra.mxu0 %v1760
      %2387 = vmatprep.subr.bf16.mxu0 %v1773
      %2388 = vmatpush1.bf16.msra.mxu0 %v1772
      %2389 = vmatprep.subr.bf16.mxu0 %v1785
      %2390 = vmatpush1.bf16.msra.mxu0 %v1784
      %2391 = vmatprep.subr.bf16.mxu0 %v1797
      %2392 = vmatpush1.bf16.msra.mxu0 %v1796
      %2393 = vmatprep.subr.bf16.mxu0 0
      %2394 = vmatpush1.bf16.msra.mxu0 0
      %2395 = vmatprep.subr.bf16.mxu0 0
      %2396 = vmatpush1.bf16.msra.mxu0 0
      %2397 = vmatprep.subr.bf16.mxu0 0
      %2398 = vmatpush1.bf16.msra.mxu0 0
      %2399 = vmatprep.subr.bf16.mxu0 0
      %2400 = vmatpush1.bf16.msra.mxu0 0
      %2401 = vmatprep.subr.bf16.mxu0 0
      %2402 = vmatpush1.bf16.msra.mxu0 0
      %2403 = vmatprep.subr.bf16.mxu0 0
      %2404 = vmatpush1.bf16.msra.mxu0 0
      %2405 = vmatprep.subr.bf16.mxu0 0
      %2406 = vmatpush1.bf16.msra.mxu0 0
      %2407 = vmatprep.subr.bf16.mxu0 0
      %2408 = vmatpush1.bf16.msra.mxu0 0
      %2409 = vmatprep.mubr.bf16.mxu0 0
      %2410 = vmatmul.mubr.bf16.gmra.mrb[0].mxu0 %v297
      %v2411 = vpop.f32.mrb[0].mxu0
      %v2412 = vadd.f32 %v2371, %v2411
      %v2413 = vpop.f32.mrb[0].mxu0
      %v2414 = vadd.f32 %v2373, %v2413
      %v2415 = vpop.f32.mrb[0].mxu0
      %v2416 = vpop.f32.mrb[0].mxu0
      %2417 = vdwg.mxu0
      %2418 = vmatprep.subr.bf16.mxu0 %v1523
      %2419 = vmatpush1.bf16.msra.mxu0 %v1522
      %2420 = vmatprep.subr.bf16.mxu0 %v1535
      %2421 = vmatpush1.bf16.msra.mxu0 %v1534
      %2422 = vmatprep.subr.bf16.mxu0 %v1547
      %2423 = vmatpush1.bf16.msra.mxu0 %v1546
      %2424 = vmatprep.subr.bf16.mxu0 %v1559
      %2425 = vmatpush1.bf16.msra.mxu0 %v1558
      %2426 = vmatprep.subr.bf16.mxu0 %v1571
      %2427 = vmatpush1.bf16.msra.mxu0 %v1570
      %2428 = vmatprep.subr.bf16.mxu0 %v1583
      %2429 = vmatpush1.bf16.msra.mxu0 %v1582
      %2430 = vmatprep.subr.bf16.mxu0 %v1595
      %2431 = vmatpush1.bf16.msra.mxu0 %v1594
      %2432 = vmatprep.subr.bf16.mxu0 %v1607
      %2433 = vmatpush1.bf16.msra.mxu0 %v1606
      %2434 = vmatprep.subr.bf16.mxu0 %v1619
      %2435 = vmatpush1.bf16.msra.mxu0 %v1618
      %2436 = vmatprep.subr.bf16.mxu0 %v1631
      %2437 = vmatpush1.bf16.msra.mxu0 %v1630
      %2438 = vmatprep.subr.bf16.mxu0 %v1643
      %2439 = vmatpush1.bf16.msra.mxu0 %v1642
      %2440 = vmatprep.subr.bf16.mxu0 %v1655
      %2441 = vmatpush1.bf16.msra.mxu0 %v1654
      %2442 = vmatprep.subr.bf16.mxu0 %v1667
      %2443 = vmatpush1.bf16.msra.mxu0 %v1666
      %2444 = vmatprep.subr.bf16.mxu0 %v1679
      %2445 = vmatpush1.bf16.msra.mxu0 %v1678
      %2446 = vmatprep.subr.bf16.mxu0 %v1691
      %2447 = vmatpush1.bf16.msra.mxu0 %v1690
      %2448 = vmatprep.subr.bf16.mxu0 %v1703
      %2449 = vmatpush1.bf16.msra.mxu0 %v1702
      %2450 = vmatprep.mubr.bf16.mxu0 %v296
      %2451 = vmatmul.mubr.bf16.gmra.mrb[0].mxu0 %v295
      %v2452 = vpop.f32.mrb[0].mxu0
      %v2453 = vadd.f32 %v625, %v2452
      %v2454 = vpop.f32.mrb[0].mxu0
      %v2455 = vadd.f32 %v629, %v2454
      %v2456 = vpop.f32.mrb[0].mxu0
      %v2457 = vpop.f32.mrb[0].mxu0
      %2458 = vdwg.mxu0
      %2459 = vmatprep.subr.bf16.mxu0 %v1715
      %2460 = vmatpush1.bf16.msra.mxu0 %v1714
      %2461 = vmatprep.subr.bf16.mxu0 %v1727
      %2462 = vmatpush1.bf16.msra.mxu0 %v1726
      %2463 = vmatprep.subr.bf16.mxu0 %v1739
      %2464 = vmatpush1.bf16.msra.mxu0 %v1738
      %2465 = vmatprep.subr.bf16.mxu0 %v1751
      %2466 = vmatpush1.bf16.msra.mxu0 %v1750
      %2467 = vmatprep.subr.bf16.mxu0 %v1763
      %2468 = vmatpush1.bf16.msra.mxu0 %v1762
      %2469 = vmatprep.subr.bf16.mxu0 %v1775
      %2470 = vmatpush1.bf16.msra.mxu0 %v1774
      %2471 = vmatprep.subr.bf16.mxu0 %v1787
      %2472 = vmatpush1.bf16.msra.mxu0 %v1786
      %2473 = vmatprep.subr.bf16.mxu0 %v1799
      %2474 = vmatpush1.bf16.msra.mxu0 %v1798
      %2475 = vmatprep.subr.bf16.mxu0 0
      %2476 = vmatpush1.bf16.msra.mxu0 0
      %2477 = vmatprep.subr.bf16.mxu0 0
      %2478 = vmatpush1.bf16.msra.mxu0 0
      %2479 = vmatprep.subr.bf16.mxu0 0
      %2480 = vmatpush1.bf16.msra.mxu0 0
      %2481 = vmatprep.subr.bf16.mxu0 0
      %2482 = vmatpush1.bf16.msra.mxu0 0
      %2483 = vmatprep.subr.bf16.mxu0 0
      %2484 = vmatpush1.bf16.msra.mxu0 0
      %2485 = vmatprep.subr.bf16.mxu0 0
      %2486 = vmatpush1.bf16.msra.mxu0 0
      %2487 = vmatprep.subr.bf16.mxu0 0
      %2488 = vmatpush1.bf16.msra.mxu0 0
      %2489 = vmatprep.subr.bf16.mxu0 0
      %2490 = vmatpush1.bf16.msra.mxu0 0
      %2491 = vmatprep.mubr.bf16.mxu0 0
      %2492 = vmatmul.mubr.bf16.gmra.mrb[0].mxu0 %v297
      %v2493 = vpop.f32.mrb[0].mxu0
      %v2494 = vadd.f32 %v2453, %v2493
      %v2495 = vpop.f32.mrb[0].mxu0
      %v2496 = vadd.f32 %v2455, %v2495
      %v2497 = vpop.f32.mrb[0].mxu0
      %v2498 = vpop.f32.mrb[0].mxu0
      %2499 = vdwg.mxu0
      %2500 = vmatprep.subr.bf16.mxu0 %v1525
      %2501 = vmatpush1.bf16.msra.mxu0 %v1524
      %2502 = vmatprep.subr.bf16.mxu0 %v1537
      %2503 = vmatpush1.bf16.msra.mxu0 %v1536
      %2504 = vmatprep.subr.bf16.mxu0 %v1549
      %2505 = vmatpush1.bf16.msra.mxu0 %v1548
      %2506 = vmatprep.subr.bf16.mxu0 %v1561
      %2507 = vmatpush1.bf16.msra.mxu0 %v1560
      %2508 = vmatprep.subr.bf16.mxu0 %v1573
      %2509 = vmatpush1.bf16.msra.mxu0 %v1572
      %2510 = vmatprep.subr.bf16.mxu0 %v1585
      %2511 = vmatpush1.bf16.msra.mxu0 %v1584
      %2512 = vmatprep.subr.bf16.mxu0 %v1597
      %2513 = vmatpush1.bf16.msra.mxu0 %v1596
      %2514 = vmatprep.subr.bf16.mxu0 %v1609
      %2515 = vmatpush1.bf16.msra.mxu0 %v1608
      %2516 = vmatprep.subr.bf16.mxu0 %v1621
      %2517 = vmatpush1.bf16.msra.mxu0 %v1620
      %2518 = vmatprep.subr.bf16.mxu0 %v1633
      %2519 = vmatpush1.bf16.msra.mxu0 %v1632
      %2520 = vmatprep.subr.bf16.mxu0 %v1645
      %2521 = vmatpush1.bf16.msra.mxu0 %v1644
      %2522 = vmatprep.subr.bf16.mxu0 %v1657
      %2523 = vmatpush1.bf16.msra.mxu0 %v1656
      %2524 = vmatprep.subr.bf16.mxu0 %v1669
      %2525 = vmatpush1.bf16.msra.mxu0 %v1668
      %2526 = vmatprep.subr.bf16.mxu0 %v1681
      %2527 = vmatpush1.bf16.msra.mxu0 %v1680
      %2528 = vmatprep.subr.bf16.mxu0 %v1693
      %2529 = vmatpush1.bf16.msra.mxu0 %v1692
      %2530 = vmatprep.subr.bf16.mxu0 %v1705
      %2531 = vmatpush1.bf16.msra.mxu0 %v1704
      %2532 = vmatprep.mubr.bf16.mxu0 %v296
      %2533 = vmatmul.mubr.bf16.gmra.mrb[0].mxu0 %v295
      %v2534 = vpop.f32.mrb[0].mxu0
      %v2535 = vadd.f32 %v633, %v2534
      %v2536 = vpop.f32.mrb[0].mxu0
      %v2537 = vadd.f32 %v637, %v2536
      %v2538 = vpop.f32.mrb[0].mxu0
      %v2539 = vpop.f32.mrb[0].mxu0
      %2540 = vdwg.mxu0
      %2541 = vmatprep.subr.bf16.mxu0 %v1717
      %2542 = vmatpush1.bf16.msra.mxu0 %v1716
      %2543 = vmatprep.subr.bf16.mxu0 %v1729
      %2544 = vmatpush1.bf16.msra.mxu0 %v1728
      %2545 = vmatprep.subr.bf16.mxu0 %v1741
      %2546 = vmatpush1.bf16.msra.mxu0 %v1740
      %2547 = vmatprep.subr.bf16.mxu0 %v1753
      %2548 = vmatpush1.bf16.msra.mxu0 %v1752
      %2549 = vmatprep.subr.bf16.mxu0 %v1765
      %2550 = vmatpush1.bf16.msra.mxu0 %v1764
      %2551 = vmatprep.subr.bf16.mxu0 %v1777
      %2552 = vmatpush1.bf16.msra.mxu0 %v1776
      %2553 = vmatprep.subr.bf16.mxu0 %v1789
      %2554 = vmatpush1.bf16.msra.mxu0 %v1788
      %2555 = vmatprep.subr.bf16.mxu0 %v1801
      %2556 = vmatpush1.bf16.msra.mxu0 %v1800
      %2557 = vmatprep.subr.bf16.mxu0 0
      %2558 = vmatpush1.bf16.msra.mxu0 0
      %2559 = vmatprep.subr.bf16.mxu0 0
      %2560 = vmatpush1.bf16.msra.mxu0 0
      %2561 = vmatprep.subr.bf16.mxu0 0
      %2562 = vmatpush1.bf16.msra.mxu0 0
      %2563 = vmatprep.subr.bf16.mxu0 0
      %2564 = vmatpush1.bf16.msra.mxu0 0
      %2565 = vmatprep.subr.bf16.mxu0 0
      %2566 = vmatpush1.bf16.msra.mxu0 0
      %2567 = vmatprep.subr.bf16.mxu0 0
      %2568 = vmatpush1.bf16.msra.mxu0 0
      %2569 = vmatprep.subr.bf16.mxu0 0
      %2570 = vmatpush1.bf16.msra.mxu0 0
      %2571 = vmatprep.subr.bf16.mxu0 0
      %2572 = vmatpush1.bf16.msra.mxu0 0
      %2573 = vmatprep.mubr.bf16.mxu0 0
      %2574 = vmatmul.mubr.bf16.gmra.mrb[0].mxu0 %v297
      %v2575 = vpop.f32.mrb[0].mxu0
      %v2576 = vadd.f32 %v2535, %v2575
      %v2577 = vpop.f32.mrb[0].mxu0
      %v2578 = vadd.f32 %v2537, %v2577
      %v2579 = vpop.f32.mrb[0].mxu0
      %v2580 = vpop.f32.mrb[0].mxu0
      %2581 = vdwg.mxu0
      %v2582 = vpack.c.bf16 %v2166, %v2166
      %v2583 = vpack.c.bf16 %v2168, %v2168
      %v2584 = vpack.c.bf16 %v2248, %v2248
      %v2585 = vpack.c.bf16 %v2250, %v2250
      %v2586 = vpack.c.bf16 %v2330, %v2330
      %v2587 = vpack.c.bf16 %v2332, %v2332
      %v2588 = vpack.c.bf16 %v2412, %v2412
      %v2589 = vpack.c.bf16 %v2414, %v2414
      %v2590 = vpack.c.bf16 %v2494, %v2494
      %v2591 = vpack.c.bf16 %v2496, %v2496
      %v2592 = vpack.c.bf16 %v2576, %v2576
      %v2593 = vpack.c.bf16 %v2578, %v2578
      %v2594 = vmul.bf16 %v2582, 1056980736
      %v2595 = vmul.bf16 %v2583, 1056980736
      %v2596 = vmul.bf16 %v2584, 1056980736
      %v2597 = vmul.bf16 %v2585, 1056980736
      %v2598 = vmul.bf16 %v2586, 1056980736
      %v2599 = vmul.bf16 %v2587, 1056980736
      %v2600 = vmul.bf16 %v2588, 1056980736
      %v2601 = vmul.bf16 %v2589, 1056980736
      %v2602 = vmul.bf16 %v2590, 1056980736
      %v2603 = vmul.bf16 %v2591, 1056980736
      %v2604 = vmul.bf16 %v2592, 1056980736
      %v2605 = vmul.bf16 %v2593, 1056980736
      %v2606 = vmul.bf16 %v2582, 1027030327
      %v2607 = vmul.bf16 %v2583, 1027030327
      %v2608 = vmul.bf16 %v2584, 1027030327
      %v2609 = vmul.bf16 %v2585, 1027030327
      %v2610 = vmul.bf16 %v2586, 1027030327
      %v2611 = vmul.bf16 %v2587, 1027030327
      %v2612 = vmul.bf16 %v2588, 1027030327
      %v2613 = vmul.bf16 %v2589, 1027030327
      %v2614 = vmul.bf16 %v2590, 1027030327
      %v2615 = vmul.bf16 %v2591, 1027030327
      %v2616 = vmul.bf16 %v2592, 1027030327
      %v2617 = vmul.bf16 %v2593, 1027030327
      %v2618 = vmul.bf16 %v2606, %v2582
      %v2619 = vmul.bf16 %v2607, %v2583
      %v2620 = vmul.bf16 %v2608, %v2584
      %v2621 = vmul.bf16 %v2609, %v2585
      %v2622 = vmul.bf16 %v2610, %v2586
      %v2623 = vmul.bf16 %v2611, %v2587
      %v2624 = vmul.bf16 %v2612, %v2588
      %v2625 = vmul.bf16 %v2613, %v2589
      %v2626 = vmul.bf16 %v2614, %v2590
      %v2627 = vmul.bf16 %v2615, %v2591
      %v2628 = vmul.bf16 %v2616, %v2592
      %v2629 = vmul.bf16 %v2617, %v2593
      %v2630 = vmul.bf16 %v2618, %v2582
      %v2631 = vmul.bf16 %v2619, %v2583
      %v2632 = vmul.bf16 %v2620, %v2584
      %v2633 = vmul.bf16 %v2621, %v2585
      %v2634 = vmul.bf16 %v2622, %v2586
      %v2635 = vmul.bf16 %v2623, %v2587
      %v2636 = vmul.bf16 %v2624, %v2588
      %v2637 = vmul.bf16 %v2625, %v2589
      %v2638 = vmul.bf16 %v2626, %v2590
      %v2639 = vmul.bf16 %v2627, %v2591
      %v2640 = vmul.bf16 %v2628, %v2592
      %v2641 = vmul.bf16 %v2629, %v2593
      %v2642 = vadd.bf16 %v2582, %v2630
      %v2643 = vadd.bf16 %v2583, %v2631
      %v2644 = vadd.bf16 %v2584, %v2632
      %v2645 = vadd.bf16 %v2585, %v2633
      %v2646 = vadd.bf16 %v2586, %v2634
      %v2647 = vadd.bf16 %v2587, %v2635
      %v2648 = vadd.bf16 %v2588, %v2636
      %v2649 = vadd.bf16 %v2589, %v2637
      %v2650 = vadd.bf16 %v2590, %v2638
      %v2651 = vadd.bf16 %v2591, %v2639
      %v2652 = vadd.bf16 %v2592, %v2640
      %v2653 = vadd.bf16 %v2593, %v2641
      %v2654 = vmul.bf16 %v2642, 1061961548
      %v2655 = vmul.bf16 %v2643, 1061961548
      %v2656 = vmul.bf16 %v2644, 1061961548
      %v2657 = vmul.bf16 %v2645, 1061961548
      %v2658 = vmul.bf16 %v2646, 1061961548
      %v2659 = vmul.bf16 %v2647, 1061961548
      %v2660 = vmul.bf16 %v2648, 1061961548
      %v2661 = vmul.bf16 %v2649, 1061961548
      %v2662 = vmul.bf16 %v2650, 1061961548
      %v2663 = vmul.bf16 %v2651, 1061961548
      %v2664 = vmul.bf16 %v2652, 1061961548
      %v2665 = vmul.bf16 %v2653, 1061961548
      %v2666 = vtanh.bf16.pop %v2654
      %v2667 = vtanh.bf16.pop %v2655
      %v2668 = vtanh.bf16.pop %v2656
      %v2669 = vtanh.bf16.pop %v2657
      %v2670 = vtanh.bf16.pop %v2658
      %v2671 = vtanh.bf16.pop %v2659
      %v2672 = vtanh.bf16.pop %v2660
      %v2673 = vtanh.bf16.pop %v2661
      %v2674 = vtanh.bf16.pop %v2662
      %v2675 = vtanh.bf16.pop %v2663
      %v2676 = vtanh.bf16.pop %v2664
      %v2677 = vtanh.bf16.pop %v2665
      %v2678 = vadd.bf16 %v2666, 1065369472
      %v2679 = vadd.bf16 %v2667, 1065369472
      %v2680 = vadd.bf16 %v2668, 1065369472
      %v2681 = vadd.bf16 %v2669, 1065369472
      %v2682 = vadd.bf16 %v2670, 1065369472
      %v2683 = vadd.bf16 %v2671, 1065369472
      %v2684 = vadd.bf16 %v2672, 1065369472
      %v2685 = vadd.bf16 %v2673, 1065369472
      %v2686 = vadd.bf16 %v2674, 1065369472
      %v2687 = vadd.bf16 %v2675, 1065369472
      %v2688 = vadd.bf16 %v2676, 1065369472
      %v2689 = vadd.bf16 %v2677, 1065369472
      %v2690 = vmul.bf16 %v2594, %v2678
      %v2691 = vmul.bf16 %v2595, %v2679
      %v2692 = vmul.bf16 %v2596, %v2680
      %v2693 = vmul.bf16 %v2597, %v2681
      %v2694 = vmul.bf16 %v2598, %v2682
      %v2695 = vmul.bf16 %v2599, %v2683
      %v2696 = vmul.bf16 %v2600, %v2684
      %v2697 = vmul.bf16 %v2601, %v2685
      %v2698 = vmul.bf16 %v2602, %v2686
      %v2699 = vmul.bf16 %v2603, %v2687
      %v2700 = vmul.bf16 %v2604, %v2688
      %v2701 = vmul.bf16 %v2605, %v2689
      %v2714 = vunpack.c.l.b16 %v2690
      %v2715 = vunpack.c.l.b16 %v2691
      %v2716 = vunpack.c.l.b16 %v2692
      %v2717 = vunpack.c.l.b16 %v2693
      %v2718 = vunpack.c.l.b16 %v2694
      %v2719 = vunpack.c.l.b16 %v2695
      %v2720 = vunpack.c.l.b16 %v2696
      %v2721 = vunpack.c.l.b16 %v2697
      %v2722 = vunpack.c.l.b16 %v2698
      %v2723 = vunpack.c.l.b16 %v2699
      %v2724 = vunpack.c.l.b16 %v2700
      %v2725 = vunpack.c.l.b16 %v2701
      %v2726 = vpack.c.b16 %v2715, %v2714
      %v2727 = vpack.c.b16 %v2717, %v2716
      %v2728 = vpack.c.b16 %v2719, %v2718
      %v2729 = vpack.c.b16 %v2721, %v2720
      %v2730 = vpack.c.b16 %v2723, %v2722
      %v2731 = vpack.c.b16 %v2725, %v2724
      %2738 = vst [vmem:[%s224] sm:$0xff] %v2726
      %2739 = vst [vmem:[%s224 + $0x8] sm:$0xff] %v2727
      %2740 = vst [vmem:[%s224 + $0x10] sm:$0xff] %v2728
      %2741 = vst [vmem:[%s224 + $0x18] sm:$0xff] %v2729
      %2742 = vst [vmem:[%s224 + $0x20] sm:$0xff] %v2730
      %2743 = vst [vmem:[%s224 + $0x28] sm:$0xff] %v2731
      %p2744 = scmp.lt.s32.totalorder %s16, 1
      %s2745 = scalar_select %p2744, %s16, 1
      %s2746 = smul.addr %s2745, 12
      %s2747 = smul.addr %s2746, 4
      %s2748 = scalar_lea.vmem %s5, %s2747
      // Predicated region
      $region41: #{build_transformer_forward.16} parent=39 // pred_check
        %p2749 = pneg %p144
      $region42: #{build_transformer_forward.16} parent=39 // pred_check_branch
        %2751 = sbr.rel (%p2749) target = $region44
      $region43: #{build_transformer_forward.16} parent=39 // pred_region
        _
      $region44: #{build_transformer_forward.16} parent=39 // pred_fallthru
        _
    $region40: #{build_transformer_forward.16} parent=5 // pred_fallthru
      _
    %p2752 = scmp.le.s32.totalorder 2, %s11
    // Predicated region
    $region45: #{build_transformer_forward.16} parent=5 // pred_check
      %p2753 = pneg %p2752
    $region46: #{build_transformer_forward.16} parent=5 // pred_check_branch
      %2755 = sbr.rel (%p2753) target = $region48
    $region47: #{build_transformer_forward.16} parent=5 // pred_region
      %s2756 = ssub.s32 %s11, 2
      // Predicated region
      $region49: #{build_transformer_forward.16} parent=47 // pred_check
        %p2757 = pneg %p150
      $region50: #{build_transformer_forward.16} parent=47 // pred_check_branch
        %2759 = sbr.rel (%p2757) target = $region52
      $region51: #{build_transformer_forward.16} parent=47 // pred_region
        %p2760 = scmp.lt.s32.totalorder %s17, 1
        %s2761 = scalar_select %p2760, %s17, 1
        %s2762 = smul.addr %s2761, 12
        %s2763 = smul.addr %s2762, 4
        %s2764 = scalar_lea.vmem %s5, %s2763
      $region52: #{build_transformer_forward.16} parent=47 // pred_fallthru
        _
    $region48: #{build_transformer_forward.16} parent=5 // pred_fallthru
      _
  $region6: #{build_transformer_forward.16} parent=0 // loop_footer
    %s15 = sadd.s32 1, %s11
  $region7: #{build_transformer_forward.16} parent=0 // loop_footer_branch
    %10 = sbr.rel target = $region3
  $region8: #{build_transformer_forward.16} parent=0 // loop_exit
    _

</llo_original>
